<compile_context>
chip_gen: v5e
topology: v5e:2x2
jax: 0.10.0
libtpu: 0.0.40
codegen_flags: <defaults>
</compile_context>

<pallas_src>
import numpy as np

import jax
import jax.numpy as jnp
from jax.experimental import pallas as pl
from jax.experimental.pallas import tpu as pltpu

# ----------------------------- scaled-down config -----------------------------
N_FFT   = 64                 # orig 512
HOP     = 32                 # orig 256
F_BINS  = N_FFT // 2 + 1     # 33  (orig 257)
N_CHAN  = F_BINS - 1         # 32  NSNet num_channels (kept consistent with n_fft)
GRU_H   = 64                 # orig 400
AFTER_H = 96                 # orig 600
B_PAD   = 8                  # batch rows padded to one (8,*) sublane tile


# ================================ fused kernel ================================

def _fft_model_kernel(
    # inputs
    frames_ref, basis_ref, ibasis_ref, idc_ref, inv_env_ref,
    w_lb_ref, b_lb_ref,
    w_ih0_ref, b_ih0_ref, w_hh0_ref, b_hh0_ref,
    w_ih1_ref, b_ih1_ref, w_hh1_ref, b_hh1_ref,
    w_a1_ref, b_a1_ref, w_a2_ref, b_a2_ref, w_a3_ref, b_a3_ref,
    # output
    y_ref,
    # scratch
    reim_scr, xp_scr, hseq0_scr, hseq1_scr, ev_scr, od_scr,
):
    f32 = jnp.float32
    M = frames_ref.shape[0]              # T * B_PAD (time-major rows t*B_PAD + b)
    T = M // B_PAD
    L = y_ref.shape[1]
    H = GRU_H

    # ---- STFT: one matmul, window folded in, layout [re1..32 | im1..32 | re0] ----
    reim = jnp.dot(frames_ref[...], basis_ref[...], preferred_element_type=f32)  # (M, 65)
    reim_scr[...] = reim                                     # kept for the masked ISTFT

    # ---- power + log10 floor features (bins 0..31, Nyquist dropped) ----
    main = reim[:, :2 * N_CHAN]                              # (M, 64)
    sq = main * main
    p_main = sq[:, :N_CHAN] + sq[:, N_CHAN:2 * N_CHAN]       # lane j = |X_{j+1}|^2
    dc = reim[:, 2 * N_CHAN:2 * N_CHAN + 1]                  # (M, 1) = re0
    p0 = jnp.broadcast_to(dc * dc, p_main.shape)
    lane = jax.lax.broadcasted_iota(jnp.int32, p_main.shape, 1)
    power = jnp.where(lane == N_CHAN - 1, p0, p_main)        # lane 31 -> |X_0|^2
    feat = jnp.log10(jnp.maximum(power, 1e-6))               # (M, 32) in permuted lane order

    # ---- linear_before + relu (rows of w_lb pre-permuted to match lane order) ----
    h_in = jnp.maximum(
        jnp.dot(feat, w_lb_ref[...], preferred_element_type=f32) + b_lb_ref[...], 0.0)

    # ---- 2-layer GRU (PyTorch semantics, h0 = 0), fused gates, fully unrolled ----
    def gru_layer(x_rows, w_ih_ref, b_ih_ref, w_hh_ref, b_hh_ref, hseq_scr):
        # fused input projection for all steps: one (M,64)@(64,192) matmul
        xp_scr[...] = (jnp.dot(x_rows, w_ih_ref[...], preferred_element_type=f32)
                       + b_ih_ref[...])
        w_hh = w_hh_ref[...]                                  # (64, 192) hoisted
        b_hh = b_hh_ref[...]                                  # (1, 192)  hoisted
        h = jnp.zeros((B_PAD, H), f32)
        for t in range(T):                                    # fully unrolled, static T
            lo = t * B_PAD                                    # sublane-aligned (multiple of 8)
            xp = xp_scr[lo:lo + B_PAD, :]                     # (8, 192) single aligned load
            gh = jnp.dot(h, w_hh, preferred_element_type=f32) + b_hh     # ONE MXU push
            rz = jax.nn.sigmoid(xp[:, :2 * H] + gh[:, :2 * H])           # one 128-lane sigmoid
            r = rz[:, :H]
            z = rz[:, H:2 * H]
            n = jnp.tanh(xp[:, 2 * H:] + r * gh[:, 2 * H:])
            h = (1.0 - z) * n + z * h
            hseq_scr[lo:lo + B_PAD, :] = h                    # aligned (8,64) store
        return hseq_scr[...]

    h0_seq = gru_layer(h_in, w_ih0_ref, b_ih0_ref, w_hh0_ref, b_hh0_ref, hseq0_scr)
    h1_seq = gru_layer(h0_seq, w_ih1_ref, b_ih1_ref, w_hh1_ref, b_hh1_ref, hseq1_scr)

    # ---- linear_after x2 (relu) + linear_after3 emitting [mask|mask] directly ----
    a1 = jnp.maximum(
        jnp.dot(h1_seq, w_a1_ref[...], preferred_element_type=f32) + b_a1_ref[...], 0.0)
    a2 = jnp.maximum(
        jnp.dot(a1, w_a2_ref[...], preferred_element_type=f32) + b_a2_ref[...], 0.0)
    mask2 = jax.nn.sigmoid(
        jnp.dot(a2, w_a3_ref[...], preferred_element_type=f32) + b_a3_ref[...])   # (M, 64)

    # ---- masked ISTFT (synthesis window folded), DC bin passes through unmasked ----
    spec = reim_scr[...]
    dc_col = jnp.broadcast_to(spec[:, 2 * N_CHAN:2 * N_CHAN + 1], (M, N_FFT))
    frames_out = (jnp.dot(spec[:, :2 * N_CHAN] * mask2, ibasis_ref[...],
                          preferred_element_type=f32)
                  + dc_col * idc_ref[...])                    # (M, N_FFT)

    # ---- overlap-add via parity slabs (independent aligned stores, no RMW chain) ----
    n_even = (T + 1) // 2
    n_odd = T // 2
    for j in range(n_even):                                   # even frames t = 2j
        ev_scr[:, j * N_FFT:(j + 1) * N_FFT] = \
            frames_out[(2 * j) * B_PAD:(2 * j + 1) * B_PAD, :]
    for j in range(n_odd):                                    # odd frames t = 2j + 1
        od_scr[:, j * N_FFT:(j + 1) * N_FFT] = \
            frames_out[(2 * j + 1) * B_PAD:(2 * j + 2) * B_PAD, :]
    ev = ev_scr[...]
    # center trim (pad = HOP) + win^2-envelope normalization, lane-dense output
    y_ref[...] = (ev[:, HOP:HOP + L] + od_scr[...]) * inv_env_ref[...]


# ============================ compile-time constants ==========================

def _dft_constants(T, L):
    """Windowed DFT / inverse-DFT bases (permuted layout) + inverse OLA envelope."""
    n = np.arange(N_FFT, dtype=np.float64)
    win = 0.5 * (1.0 - np.cos(2.0 * np.pi * n / N_FFT))          # periodic hann
    k = np.arange(F_BINS, dtype=np.float64)
    ang = 2.0 * np.pi * np.outer(n, k) / N_FFT                   # (N_FFT, F)
    cosw = win[:, None] * np.cos(ang)                            # analysis window folded in
    sinw = win[:, None] * np.sin(ang)
    # analysis basis columns: [re1..32 | im1..32 | re0]
    basis = np.concatenate([cosw[:, 1:], -sinw[:, 1:], cosw[:, 0:1]], axis=1)   # (64, 65)
    # synthesis basis rows: [re1..32 | im1..32]; conj-sym weights, 1/N, window folded in
    wk = np.ones(F_BINS); wk[1:F_BINS - 1] = 2.0
    icos = (wk[:, None] * np.cos(ang).T) * (win[None, :] / N_FFT)   # (F, N_FFT)
    isin = (wk[:, None] * np.sin(ang).T) * (win[None, :] / N_FFT)
    ibasis = np.concatenate([icos[1:], -isin[1:]], axis=0)          # (64, 64)
    idc = icos[0:1]                                                 # (1, 64) DC passthrough row
    pad = N_FFT // 2
    env = np.zeros((T - 1) * HOP + N_FFT)
    for t in range(T):
        env[t * HOP:t * HOP + N_FFT] += win * win
    inv_env = (1.0 / np.maximum(env[pad:pad + L], 1e-11))[None, :]  # (1, L)
    return (basis.astype(np.float32), ibasis.astype(np.float32),
            idc.astype(np.float32), inv_env.astype(np.float32))


# ================================ full forward ================================

def fft_model_forward(x, kp):
    """x: (B, L) waveform; kp: kernel-layout params from prepare_params()."""
    B, L = x.shape
    assert B <= B_PAD and L % HOP == 0
    T = L // HOP + 1                           # torch.stft(center=True) frame count
    pad = N_FFT // 2
    M = T * B_PAD

    # batch padding + center reflect padding + framing (tiny XLA ops)
    x8 = jnp.pad(x, ((0, B_PAD - B), (0, 0)))
    xpad = jnp.pad(x8, ((0, 0), (pad, pad)), mode="reflect")        # (B_PAD, L + N_FFT)
    frames = jnp.concatenate(
        [xpad[:, t * HOP:t * HOP + N_FFT] for t in range(T)], axis=0)   # (M, N_FFT), time-major

    basis, ibasis, idc, inv_env = _dft_constants(T, L)
    n_even, n_odd = (T + 1) // 2, T // 2

    y = pl.pallas_call(
        _fft_model_kernel,
        out_shape=jax.ShapeDtypeStruct((B_PAD, L), jnp.float32),
        scratch_shapes=[
            pltpu.VMEM((M, 2 * N_CHAN + 1), jnp.float32),   # spectrum [re|im|dc]
            pltpu.VMEM((M, 3 * GRU_H), jnp.float32),        # fused GRU input projections
            pltpu.VMEM((M, GRU_H), jnp.float32),            # layer-0 hidden sequence
            pltpu.VMEM((M, GRU_H), jnp.float32),            # layer-1 hidden sequence
            pltpu.VMEM((B_PAD, n_even * N_FFT), jnp.float32),   # even OLA slab (576)
            pltpu.VMEM((B_PAD, n_odd * N_FFT), jnp.float32),    # odd  OLA slab (512)
        ],
    )(
        frames,
        jnp.asarray(basis), jnp.asarray(ibasis), jnp.asarray(idc), jnp.asarray(inv_env),
        kp["w_lb"], kp["b_lb"],
        kp["w_ih0"], kp["b_ih0"], kp["w_hh0"], kp["b_hh0"],
        kp["w_ih1"], kp["b_ih1"], kp["w_hh1"], kp["b_hh1"],
        kp["w_a1"], kp["b_a1"], kp["w_a2"], kp["b_a2"], kp["w_a3"], kp["b_a3"],
    )
    return y[:B]


# ============================== parameter plumbing =============================

def init_params(key):
    """Random parameters in PyTorch convention (weight: (out, in), bias: (out,))."""
    ks = jax.random.split(key, 16)

    def w(k, shape, scale=0.08):
        return scale * jax.random.normal(k, shape, jnp.float32)

    p = {}
    p["linear_before.weight"] = w(ks[0], (GRU_H, N_CHAN))
    p["linear_before.bias"]   = w(ks[1], (GRU_H,))
    i = 2
    for l in range(2):
        p[f"gru.weight_ih_l{l}"] = w(ks[i + 0], (3 * GRU_H, GRU_H))   # gate rows [r|z|n]
        p[f"gru.weight_hh_l{l}"] = w(ks[i + 1], (3 * GRU_H, GRU_H))
        p[f"gru.bias_ih_l{l}"]   = w(ks[i + 2], (3 * GRU_H,))
        p[f"gru.bias_hh_l{l}"]   = w(ks[i + 3], (3 * GRU_H,))
        i += 4
    p["linear_after.weight"]  = w(ks[10], (AFTER_H, GRU_H))
    p["linear_after.bias"]    = w(ks[11], (AFTER_H,))
    p["linear_after2.weight"] = w(ks[12], (AFTER_H, AFTER_H))
    p["linear_after2.bias"]   = w(ks[13], (AFTER_H,))
    p["linear_after3.weight"] = w(ks[14], (N_CHAN, AFTER_H))
    p["linear_after3.bias"]   = w(ks[15], (N_CHAN,))
    return p


def prepare_params(p):
    """PyTorch-convention params -> kernel layout (fused gates, permuted/duplicated)."""
    f32 = jnp.float32
    # feature lanes are [bin1..bin31, bin0] -> permute linear_before rows accordingly
    perm = np.concatenate([np.arange(1, N_CHAN), [0]])
    kp = {
        "w_lb": jnp.asarray(p["linear_before.weight"], f32).T[perm, :],   # (32, 64)
        "b_lb": jnp.asarray(p["linear_before.bias"], f32)[None, :],
        "w_a1": jnp.asarray(p["linear_after.weight"], f32).T,
        "b_a1": jnp.asarray(p["linear_after.bias"], f32)[None, :],
        "w_a2": jnp.asarray(p["linear_after2.weight"], f32).T,
        "b_a2": jnp.asarray(p["linear_after2.bias"], f32)[None, :],
    }
    # final linear duplicated so the kernel emits [mask | mask] for [re | im] directly
    w_a3 = jnp.asarray(p["linear_after3.weight"], f32).T                  # (AFTER_H, 32)
    b_a3 = jnp.asarray(p["linear_after3.bias"], f32)[None, :]
    kp["w_a3"] = jnp.concatenate([w_a3, w_a3], axis=1)                    # (AFTER_H, 64)
    kp["b_a3"] = jnp.concatenate([b_a3, b_a3], axis=1)
    # GRU: transpose to (in, 3H); PyTorch row blocks (r,z,n) become column blocks [r|z|n]
    for l in range(2):
        kp[f"w_ih{l}"] = jnp.asarray(p[f"gru.weight_ih_l{l}"], f32).T     # (64, 192)
        kp[f"w_hh{l}"] = jnp.asarray(p[f"gru.weight_hh_l{l}"], f32).T     # (64, 192)
        kp[f"b_ih{l}"] = jnp.asarray(p[f"gru.bias_ih_l{l}"], f32)[None, :]
        kp[f"b_hh{l}"] = jnp.asarray(p[f"gru.bias_hh_l{l}"], f32)[None, :]
    return kp


# ==================================== main ====================================

if __name__ == "__main__":
    key = jax.random.PRNGKey(0)
    pkey, xkey = jax.random.split(key)
    params = init_params(pkey)
    kparams = prepare_params(params)

    B, L = 2, 512                        # small waveform (fs*signal_length scaled down)
    x = jax.random.normal(xkey, (B, L), jnp.float32)

    y = jax.jit(fft_model_forward)(x, kparams)
    y = jax.block_until_ready(y)
    assert y.shape == (B, L) and y.dtype == jnp.float32
    assert bool(jnp.all(jnp.isfinite(y)))
    print("KERNEL_OK")
</pallas_src>

<mosaic_0001>
module attributes {stable_mosaic.version = 11 : i64} {
  func.func @_fft_model_kernel(%arg0: memref<136x64xf32, #tpu.memory_space<vmem>>, %arg1: memref<64x65xf32, #tpu.memory_space<vmem>>, %arg2: memref<64x64xf32, #tpu.memory_space<vmem>>, %arg3: memref<1x64xf32, #tpu.memory_space<vmem>>, %arg4: memref<1x512xf32, #tpu.memory_space<vmem>>, %arg5: memref<32x64xf32, #tpu.memory_space<vmem>>, %arg6: memref<1x64xf32, #tpu.memory_space<vmem>>, %arg7: memref<64x192xf32, #tpu.memory_space<vmem>>, %arg8: memref<1x192xf32, #tpu.memory_space<vmem>>, %arg9: memref<64x192xf32, #tpu.memory_space<vmem>>, %arg10: memref<1x192xf32, #tpu.memory_space<vmem>>, %arg11: memref<64x192xf32, #tpu.memory_space<vmem>>, %arg12: memref<1x192xf32, #tpu.memory_space<vmem>>, %arg13: memref<64x192xf32, #tpu.memory_space<vmem>>, %arg14: memref<1x192xf32, #tpu.memory_space<vmem>>, %arg15: memref<64x96xf32, #tpu.memory_space<vmem>>, %arg16: memref<1x96xf32, #tpu.memory_space<vmem>>, %arg17: memref<96x96xf32, #tpu.memory_space<vmem>>, %arg18: memref<1x96xf32, #tpu.memory_space<vmem>>, %arg19: memref<96x64xf32, #tpu.memory_space<vmem>>, %arg20: memref<1x64xf32, #tpu.memory_space<vmem>>, %arg21: memref<8x512xf32, #tpu.memory_space<vmem>>, %arg22: memref<136x65xf32, #tpu.memory_space<vmem>>, %arg23: memref<136x192xf32, #tpu.memory_space<vmem>>, %arg24: memref<136x64xf32, #tpu.memory_space<vmem>>, %arg25: memref<136x64xf32, #tpu.memory_space<vmem>>, %arg26: memref<8x576xf32, #tpu.memory_space<vmem>>, %arg27: memref<8x512xf32, #tpu.memory_space<vmem>>) attributes {dimension_semantics = [], scalar_prefetch = 0 : i64, scratch_operands = 6 : i64, tpu.core_type = #tpu.core_type<tc>} {
    %c0 = arith.constant 0 : index
    %c0_0 = arith.constant 0 : index
    %0 = vector.load %arg0[%c0, %c0_0] : memref<136x64xf32, #tpu.memory_space<vmem>>, vector<136x64xf32>
    %c0_1 = arith.constant 0 : index
    %c0_2 = arith.constant 0 : index
    %1 = vector.load %arg1[%c0_1, %c0_2] : memref<64x65xf32, #tpu.memory_space<vmem>>, vector<64x65xf32>
    %cst = arith.constant dense<0.000000e+00> : vector<136x65xf32>
    %2 = tpu.matmul %0, %1, %cst {dimension_numbers = #tpu.dot_dimension_numbers<[1], [0], [0], [1], [0, 0, 1, 1], [], []>} : vector<136x64xf32>, vector<64x65xf32>, vector<136x65xf32> -> vector<136x65xf32>
    %c0_3 = arith.constant 0 : index
    %c0_4 = arith.constant 0 : index
    %3 = vector.load %arg22[%c0_3, %c0_4] : memref<136x65xf32, #tpu.memory_space<vmem>>, vector<136x65xf32>
    tpu.vector_store %arg22[%c0_3, %c0_4], %2 {strides = array<i32>} : memref<136x65xf32, #tpu.memory_space<vmem>>, vector<136x65xf32>,
    %4 = vector.extract_strided_slice %2 {offsets = [0, 0], sizes = [136, 64], strides = [1, 1]} : vector<136x65xf32> to vector<136x64xf32>
    %5 = arith.mulf %4, %4 : vector<136x64xf32>
    %6 = vector.extract_strided_slice %5 {offsets = [0, 0], sizes = [136, 32], strides = [1, 1]} : vector<136x64xf32> to vector<136x32xf32>
    %7 = vector.extract_strided_slice %5 {offsets = [0, 32], sizes = [136, 32], strides = [1, 1]} : vector<136x64xf32> to vector<136x32xf32>
    %8 = arith.addf %6, %7 : vector<136x32xf32>
    %9 = vector.extract_strided_slice %2 {offsets = [0, 64], sizes = [136, 1], strides = [1, 1]} : vector<136x65xf32> to vector<136x1xf32>
    %10 = arith.mulf %9, %9 : vector<136x1xf32>
    %11 = vector.shape_cast %10 : vector<136x1xf32> to vector<136x1xf32>
    %12 = vector.broadcast %11 : vector<136x1xf32> to vector<136x32xf32>
    %13 = tpu.iota {dimensions = array<i32: 1>} : vector<136x32xi32>
    %c31_i32 = arith.constant 31 : i32
    %14 = vector.broadcast %c31_i32 : i32 to vector<136x32xi32>
    %15 = arith.cmpi eq, %13, %14 : vector<136x32xi32>
    %16 = arith.select %15, %12, %8 : vector<136x32xi1>, vector<136x32xf32>
    %cst_5 = arith.constant 9.99999997E-7 : f32
    %17 = vector.broadcast %cst_5 : f32 to vector<136x32xf32>
    %18 = arith.maximumf %16, %17 : vector<136x32xf32>
    %19 = math.log %18 : vector<136x32xf32>
    %cst_6 = arith.constant 0.434294492 : f32
    %20 = vector.broadcast %cst_6 : f32 to vector<136x32xf32>
    %21 = arith.mulf %19, %20 : vector<136x32xf32>
    %c0_7 = arith.constant 0 : index
    %c0_8 = arith.constant 0 : index
    %22 = vector.load %arg5[%c0_7, %c0_8] : memref<32x64xf32, #tpu.memory_space<vmem>>, vector<32x64xf32>
    %cst_9 = arith.constant dense<0.000000e+00> : vector<136x64xf32>
    %23 = tpu.matmul %21, %22, %cst_9 {dimension_numbers = #tpu.dot_dimension_numbers<[1], [0], [0], [1], [0, 0, 1, 1], [], []>} : vector<136x32xf32>, vector<32x64xf32>, vector<136x64xf32> -> vector<136x64xf32>
    %c0_10 = arith.constant 0 : index
    %c0_11 = arith.constant 0 : index
    %24 = vector.load %arg6[%c0_10, %c0_11] : memref<1x64xf32, #tpu.memory_space<vmem>>, vector<1x64xf32>
    %25 = vector.broadcast %24 : vector<1x64xf32> to vector<136x64xf32>
    %26 = arith.addf %23, %25 : vector<136x64xf32>
    %cst_12 = arith.constant 0.000000e+00 : f32
    %27 = vector.broadcast %cst_12 : f32 to vector<136x64xf32>
    %28 = arith.maximumf %26, %27 : vector<136x64xf32>
    %c0_13 = arith.constant 0 : index
    %c0_14 = arith.constant 0 : index
    %29 = vector.load %arg7[%c0_13, %c0_14] : memref<64x192xf32, #tpu.memory_space<vmem>>, vector<64x192xf32>
    %cst_15 = arith.constant dense<0.000000e+00> : vector<136x192xf32>
    %30 = tpu.matmul %28, %29, %cst_15 {dimension_numbers = #tpu.dot_dimension_numbers<[1], [0], [0], [1], [0, 0, 1, 1], [], []>} : vector<136x64xf32>, vector<64x192xf32>, vector<136x192xf32> -> vector<136x192xf32>
    %c0_16 = arith.constant 0 : index
    %c0_17 = arith.constant 0 : index
    %31 = vector.load %arg8[%c0_16, %c0_17] : memref<1x192xf32, #tpu.memory_space<vmem>>, vector<1x192xf32>
    %32 = vector.broadcast %31 : vector<1x192xf32> to vector<136x192xf32>
    %33 = arith.addf %30, %32 : vector<136x192xf32>
    %c0_18 = arith.constant 0 : index
    %c0_19 = arith.constant 0 : index
    %34 = vector.load %arg23[%c0_18, %c0_19] : memref<136x192xf32, #tpu.memory_space<vmem>>, vector<136x192xf32>
    tpu.vector_store %arg23[%c0_18, %c0_19], %33 {strides = array<i32>} : memref<136x192xf32, #tpu.memory_space<vmem>>, vector<136x192xf32>,
    %c0_20 = arith.constant 0 : index
    %c0_21 = arith.constant 0 : index
    %35 = vector.load %arg9[%c0_20, %c0_21] : memref<64x192xf32, #tpu.memory_space<vmem>>, vector<64x192xf32>
    %c0_22 = arith.constant 0 : index
    %c0_23 = arith.constant 0 : index
    %36 = vector.load %arg10[%c0_22, %c0_23] : memref<1x192xf32, #tpu.memory_space<vmem>>, vector<1x192xf32>
    %cst_24 = arith.constant 0.000000e+00 : f32
    %37 = vector.broadcast %cst_24 : f32 to vector<8x64xf32>
    %c0_25 = arith.constant 0 : index
    %c0_26 = arith.constant 0 : index
    %38 = vector.load %arg23[%c0_25, %c0_26] : memref<136x192xf32, #tpu.memory_space<vmem>>, vector<8x192xf32>
    %cst_27 = arith.constant dense<0.000000e+00> : vector<8x192xf32>
    %39 = tpu.matmul %37, %35, %cst_27 {dimension_numbers = #tpu.dot_dimension_numbers<[1], [0], [0], [1], [0, 0, 1, 1], [], []>} : vector<8x64xf32>, vector<64x192xf32>, vector<8x192xf32> -> vector<8x192xf32>
    %40 = vector.broadcast %36 : vector<1x192xf32> to vector<8x192xf32>
    %41 = arith.addf %39, %40 : vector<8x192xf32>
    %42 = vector.extract_strided_slice %38 {offsets = [0, 0], sizes = [8, 128], strides = [1, 1]} : vector<8x192xf32> to vector<8x128xf32>
    %43 = vector.extract_strided_slice %41 {offsets = [0, 0], sizes = [8, 128], strides = [1, 1]} : vector<8x192xf32> to vector<8x128xf32>
    %44 = arith.addf %42, %43 : vector<8x128xf32>
    %45 = arith.negf %44 : vector<8x128xf32>
    %46 = math.exp %45 : vector<8x128xf32>
    %cst_28 = arith.constant 1.000000e+00 : f32
    %47 = vector.broadcast %cst_28 : f32 to vector<8x128xf32>
    %48 = arith.addf %47, %46 : vector<8x128xf32>
    %49 = arith.divf %47, %48 : vector<8x128xf32>
    %50 = vector.extract_strided_slice %49 {offsets = [0, 0], sizes = [8, 64], strides = [1, 1]} : vector<8x128xf32> to vector<8x64xf32>
    %51 = vector.extract_strided_slice %49 {offsets = [0, 64], sizes = [8, 64], strides = [1, 1]} : vector<8x128xf32> to vector<8x64xf32>
    %52 = vector.extract_strided_slice %38 {offsets = [0, 128], sizes = [8, 64], strides = [1, 1]} : vector<8x192xf32> to vector<8x64xf32>
    %53 = vector.extract_strided_slice %41 {offsets = [0, 128], sizes = [8, 64], strides = [1, 1]} : vector<8x192xf32> to vector<8x64xf32>
    %54 = arith.mulf %50, %53 : vector<8x64xf32>
    %55 = arith.addf %52, %54 : vector<8x64xf32>
    %56 = math.tanh %55 : vector<8x64xf32>
    %cst_29 = arith.constant 1.000000e+00 : f32
    %57 = vector.broadcast %cst_29 : f32 to vector<8x64xf32>
    %58 = arith.subf %57, %51 : vector<8x64xf32>
    %59 = arith.mulf %58, %56 : vector<8x64xf32>
    %60 = arith.mulf %51, %37 : vector<8x64xf32>
    %61 = arith.addf %59, %60 : vector<8x64xf32>
    %c0_30 = arith.constant 0 : index
    %c0_31 = arith.constant 0 : index
    %62 = vector.load %arg24[%c0_30, %c0_31] : memref<136x64xf32, #tpu.memory_space<vmem>>, vector<8x64xf32>
    tpu.vector_store %arg24[%c0_30, %c0_31], %61 {strides = array<i32>} : memref<136x64xf32, #tpu.memory_space<vmem>>, vector<8x64xf32>,
    %c8 = arith.constant 8 : index
    %c0_32 = arith.constant 0 : index
    %63 = vector.load %arg23[%c8, %c0_32] : memref<136x192xf32, #tpu.memory_space<vmem>>, vector<8x192xf32>
    %cst_33 = arith.constant dense<0.000000e+00> : vector<8x192xf32>
    %64 = tpu.matmul %61, %35, %cst_33 {dimension_numbers = #tpu.dot_dimension_numbers<[1], [0], [0], [1], [0, 0, 1, 1], [], []>} : vector<8x64xf32>, vector<64x192xf32>, vector<8x192xf32> -> vector<8x192xf32>
    %65 = vector.broadcast %36 : vector<1x192xf32> to vector<8x192xf32>
    %66 = arith.addf %64, %65 : vector<8x192xf32>
    %67 = vector.extract_strided_slice %63 {offsets = [0, 0], sizes = [8, 128], strides = [1, 1]} : vector<8x192xf32> to vector<8x128xf32>
    %68 = vector.extract_strided_slice %66 {offsets = [0, 0], sizes = [8, 128], strides = [1, 1]} : vector<8x192xf32> to vector<8x128xf32>
    %69 = arith.addf %67, %68 : vector<8x128xf32>
    %70 = arith.negf %69 : vector<8x128xf32>
    %71 = math.exp %70 : vector<8x128xf32>
    %cst_34 = arith.constant 1.000000e+00 : f32
    %72 = vector.broadcast %cst_34 : f32 to vector<8x128xf32>
    %73 = arith.addf %72, %71 : vector<8x128xf32>
    %74 = arith.divf %72, %73 : vector<8x128xf32>
    %75 = vector.extract_strided_slice %74 {offsets = [0, 0], sizes = [8, 64], strides = [1, 1]} : vector<8x128xf32> to vector<8x64xf32>
    %76 = vector.extract_strided_slice %74 {offsets = [0, 64], sizes = [8, 64], strides = [1, 1]} : vector<8x128xf32> to vector<8x64xf32>
    %77 = vector.extract_strided_slice %63 {offsets = [0, 128], sizes = [8, 64], strides = [1, 1]} : vector<8x192xf32> to vector<8x64xf32>
    %78 = vector.extract_strided_slice %66 {offsets = [0, 128], sizes = [8, 64], strides = [1, 1]} : vector<8x192xf32> to vector<8x64xf32>
    %79 = arith.mulf %75, %78 : vector<8x64xf32>
    %80 = arith.addf %77, %79 : vector<8x64xf32>
    %81 = math.tanh %80 : vector<8x64xf32>
    %cst_35 = arith.constant 1.000000e+00 : f32
    %82 = vector.broadcast %cst_35 : f32 to vector<8x64xf32>
    %83 = arith.subf %82, %76 : vector<8x64xf32>
    %84 = arith.mulf %83, %81 : vector<8x64xf32>
    %85 = arith.mulf %76, %61 : vector<8x64xf32>
    %86 = arith.addf %84, %85 : vector<8x64xf32>
    %c8_36 = arith.constant 8 : index
    %c0_37 = arith.constant 0 : index
    %87 = vector.load %arg24[%c8_36, %c0_37] : memref<136x64xf32, #tpu.memory_space<vmem>>, vector<8x64xf32>
    tpu.vector_store %arg24[%c8_36, %c0_37], %86 {strides = array<i32>} : memref<136x64xf32, #tpu.memory_space<vmem>>, vector<8x64xf32>,
    %c16 = arith.constant 16 : index
    %c0_38 = arith.constant 0 : index
    %88 = vector.load %arg23[%c16, %c0_38] : memref<136x192xf32, #tpu.memory_space<vmem>>, vector<8x192xf32>
    %cst_39 = arith.constant dense<0.000000e+00> : vector<8x192xf32>
    %89 = tpu.matmul %86, %35, %cst_39 {dimension_numbers = #tpu.dot_dimension_numbers<[1], [0], [0], [1], [0, 0, 1, 1], [], []>} : vector<8x64xf32>, vector<64x192xf32>, vector<8x192xf32> -> vector<8x192xf32>
    %90 = vector.broadcast %36 : vector<1x192xf32> to vector<8x192xf32>
    %91 = arith.addf %89, %90 : vector<8x192xf32>
    %92 = vector.extract_strided_slice %88 {offsets = [0, 0], sizes = [8, 128], strides = [1, 1]} : vector<8x192xf32> to vector<8x128xf32>
    %93 = vector.extract_strided_slice %91 {offsets = [0, 0], sizes = [8, 128], strides = [1, 1]} : vector<8x192xf32> to vector<8x128xf32>
    %94 = arith.addf %92, %93 : vector<8x128xf32>
    %95 = arith.negf %94 : vector<8x128xf32>
    %96 = math.exp %95 : vector<8x128xf32>
    %cst_40 = arith.constant 1.000000e+00 : f32
    %97 = vector.broadcast %cst_40 : f32 to vector<8x128xf32>
    %98 = arith.addf %97, %96 : vector<8x128xf32>
    %99 = arith.divf %97, %98 : vector<8x128xf32>
    %100 = vector.extract_strided_slice %99 {offsets = [0, 0], sizes = [8, 64], strides = [1, 1]} : vector<8x128xf32> to vector<8x64xf32>
    %101 = vector.extract_strided_slice %99 {offsets = [0, 64], sizes = [8, 64], strides = [1, 1]} : vector<8x128xf32> to vector<8x64xf32>
    %102 = vector.extract_strided_slice %88 {offsets = [0, 128], sizes = [8, 64], strides = [1, 1]} : vector<8x192xf32> to vector<8x64xf32>
    %103 = vector.extract_strided_slice %91 {offsets = [0, 128], sizes = [8, 64], strides = [1, 1]} : vector<8x192xf32> to vector<8x64xf32>
    %104 = arith.mulf %100, %103 : vector<8x64xf32>
    %105 = arith.addf %102, %104 : vector<8x64xf32>
    %106 = math.tanh %105 : vector<8x64xf32>
    %cst_41 = arith.constant 1.000000e+00 : f32
    %107 = vector.broadcast %cst_41 : f32 to vector<8x64xf32>
    %108 = arith.subf %107, %101 : vector<8x64xf32>
    %109 = arith.mulf %108, %106 : vector<8x64xf32>
    %110 = arith.mulf %101, %86 : vector<8x64xf32>
    %111 = arith.addf %109, %110 : vector<8x64xf32>
    %c16_42 = arith.constant 16 : index
    %c0_43 = arith.constant 0 : index
    %112 = vector.load %arg24[%c16_42, %c0_43] : memref<136x64xf32, #tpu.memory_space<vmem>>, vector<8x64xf32>
    tpu.vector_store %arg24[%c16_42, %c0_43], %111 {strides = array<i32>} : memref<136x64xf32, #tpu.memory_space<vmem>>, vector<8x64xf32>,
    %c24 = arith.constant 24 : index
    %c0_44 = arith.constant 0 : index
    %113 = vector.load %arg23[%c24, %c0_44] : memref<136x192xf32, #tpu.memory_space<vmem>>, vector<8x192xf32>
    %cst_45 = arith.constant dense<0.000000e+00> : vector<8x192xf32>
    %114 = tpu.matmul %111, %35, %cst_45 {dimension_numbers = #tpu.dot_dimension_numbers<[1], [0], [0], [1], [0, 0, 1, 1], [], []>} : vector<8x64xf32>, vector<64x192xf32>, vector<8x192xf32> -> vector<8x192xf32>
    %115 = vector.broadcast %36 : vector<1x192xf32> to vector<8x192xf32>
    %116 = arith.addf %114, %115 : vector<8x192xf32>
    %117 = vector.extract_strided_slice %113 {offsets = [0, 0], sizes = [8, 128], strides = [1, 1]} : vector<8x192xf32> to vector<8x128xf32>
    %118 = vector.extract_strided_slice %116 {offsets = [0, 0], sizes = [8, 128], strides = [1, 1]} : vector<8x192xf32> to vector<8x128xf32>
    %119 = arith.addf %117, %118 : vector<8x128xf32>
    %120 = arith.negf %119 : vector<8x128xf32>
    %121 = math.exp %120 : vector<8x128xf32>
    %cst_46 = arith.constant 1.000000e+00 : f32
    %122 = vector.broadcast %cst_46 : f32 to vector<8x128xf32>
    %123 = arith.addf %122, %121 : vector<8x128xf32>
    %124 = arith.divf %122, %123 : vector<8x128xf32>
    %125 = vector.extract_strided_slice %124 {offsets = [0, 0], sizes = [8, 64], strides = [1, 1]} : vector<8x128xf32> to vector<8x64xf32>
    %126 = vector.extract_strided_slice %124 {offsets = [0, 64], sizes = [8, 64], strides = [1, 1]} : vector<8x128xf32> to vector<8x64xf32>
    %127 = vector.extract_strided_slice %113 {offsets = [0, 128], sizes = [8, 64], strides = [1, 1]} : vector<8x192xf32> to vector<8x64xf32>
    %128 = vector.extract_strided_slice %116 {offsets = [0, 128], sizes = [8, 64], strides = [1, 1]} : vector<8x192xf32> to vector<8x64xf32>
    %129 = arith.mulf %125, %128 : vector<8x64xf32>
    %130 = arith.addf %127, %129 : vector<8x64xf32>
    %131 = math.tanh %130 : vector<8x64xf32>
    %cst_47 = arith.constant 1.000000e+00 : f32
    %132 = vector.broadcast %cst_47 : f32 to vector<8x64xf32>
    %133 = arith.subf %132, %126 : vector<8x64xf32>
    %134 = arith.mulf %133, %131 : vector<8x64xf32>
    %135 = arith.mulf %126, %111 : vector<8x64xf32>
    %136 = arith.addf %134, %135 : vector<8x64xf32>
    %c24_48 = arith.constant 24 : index
    %c0_49 = arith.constant 0 : index
    %137 = vector.load %arg24[%c24_48, %c0_49] : memref<136x64xf32, #tpu.memory_space<vmem>>, vector<8x64xf32>
    tpu.vector_store %arg24[%c24_48, %c0_49], %136 {strides = array<i32>} : memref<136x64xf32, #tpu.memory_space<vmem>>, vector<8x64xf32>,
    %c32 = arith.constant 32 : index
    %c0_50 = arith.constant 0 : index
    %138 = vector.load %arg23[%c32, %c0_50] : memref<136x192xf32, #tpu.memory_space<vmem>>, vector<8x192xf32>
    %cst_51 = arith.constant dense<0.000000e+00> : vector<8x192xf32>
    %139 = tpu.matmul %136, %35, %cst_51 {dimension_numbers = #tpu.dot_dimension_numbers<[1], [0], [0], [1], [0, 0, 1, 1], [], []>} : vector<8x64xf32>, vector<64x192xf32>, vector<8x192xf32> -> vector<8x192xf32>
    %140 = vector.broadcast %36 : vector<1x192xf32> to vector<8x192xf32>
    %141 = arith.addf %139, %140 : vector<8x192xf32>
    %142 = vector.extract_strided_slice %138 {offsets = [0, 0], sizes = [8, 128], strides = [1, 1]} : vector<8x192xf32> to vector<8x128xf32>
    %143 = vector.extract_strided_slice %141 {offsets = [0, 0], sizes = [8, 128], strides = [1, 1]} : vector<8x192xf32> to vector<8x128xf32>
    %144 = arith.addf %142, %143 : vector<8x128xf32>
    %145 = arith.negf %144 : vector<8x128xf32>
    %146 = math.exp %145 : vector<8x128xf32>
    %cst_52 = arith.constant 1.000000e+00 : f32
    %147 = vector.broadcast %cst_52 : f32 to vector<8x128xf32>
    %148 = arith.addf %147, %146 : vector<8x128xf32>
    %149 = arith.divf %147, %148 : vector<8x128xf32>
    %150 = vector.extract_strided_slice %149 {offsets = [0, 0], sizes = [8, 64], strides = [1, 1]} : vector<8x128xf32> to vector<8x64xf32>
    %151 = vector.extract_strided_slice %149 {offsets = [0, 64], sizes = [8, 64], strides = [1, 1]} : vector<8x128xf32> to vector<8x64xf32>
    %152 = vector.extract_strided_slice %138 {offsets = [0, 128], sizes = [8, 64], strides = [1, 1]} : vector<8x192xf32> to vector<8x64xf32>
    %153 = vector.extract_strided_slice %141 {offsets = [0, 128], sizes = [8, 64], strides = [1, 1]} : vector<8x192xf32> to vector<8x64xf32>
    %154 = arith.mulf %150, %153 : vector<8x64xf32>
    %155 = arith.addf %152, %154 : vector<8x64xf32>
    %156 = math.tanh %155 : vector<8x64xf32>
    %cst_53 = arith.constant 1.000000e+00 : f32
    %157 = vector.broadcast %cst_53 : f32 to vector<8x64xf32>
    %158 = arith.subf %157, %151 : vector<8x64xf32>
    %159 = arith.mulf %158, %156 : vector<8x64xf32>
    %160 = arith.mulf %151, %136 : vector<8x64xf32>
    %161 = arith.addf %159, %160 : vector<8x64xf32>
    %c32_54 = arith.constant 32 : index
    %c0_55 = arith.constant 0 : index
    %162 = vector.load %arg24[%c32_54, %c0_55] : memref<136x64xf32, #tpu.memory_space<vmem>>, vector<8x64xf32>
    tpu.vector_store %arg24[%c32_54, %c0_55], %161 {strides = array<i32>} : memref<136x64xf32, #tpu.memory_space<vmem>>, vector<8x64xf32>,
    %c40 = arith.constant 40 : index
    %c0_56 = arith.constant 0 : index
    %163 = vector.load %arg23[%c40, %c0_56] : memref<136x192xf32, #tpu.memory_space<vmem>>, vector<8x192xf32>
    %cst_57 = arith.constant dense<0.000000e+00> : vector<8x192xf32>
    %164 = tpu.matmul %161, %35, %cst_57 {dimension_numbers = #tpu.dot_dimension_numbers<[1], [0], [0], [1], [0, 0, 1, 1], [], []>} : vector<8x64xf32>, vector<64x192xf32>, vector<8x192xf32> -> vector<8x192xf32>
    %165 = vector.broadcast %36 : vector<1x192xf32> to vector<8x192xf32>
    %166 = arith.addf %164, %165 : vector<8x192xf32>
    %167 = vector.extract_strided_slice %163 {offsets = [0, 0], sizes = [8, 128], strides = [1, 1]} : vector<8x192xf32> to vector<8x128xf32>
    %168 = vector.extract_strided_slice %166 {offsets = [0, 0], sizes = [8, 128], strides = [1, 1]} : vector<8x192xf32> to vector<8x128xf32>
    %169 = arith.addf %167, %168 : vector<8x128xf32>
    %170 = arith.negf %169 : vector<8x128xf32>
    %171 = math.exp %170 : vector<8x128xf32>
    %cst_58 = arith.constant 1.000000e+00 : f32
    %172 = vector.broadcast %cst_58 : f32 to vector<8x128xf32>
    %173 = arith.addf %172, %171 : vector<8x128xf32>
    %174 = arith.divf %172, %173 : vector<8x128xf32>
    %175 = vector.extract_strided_slice %174 {offsets = [0, 0], sizes = [8, 64], strides = [1, 1]} : vector<8x128xf32> to vector<8x64xf32>
    %176 = vector.extract_strided_slice %174 {offsets = [0, 64], sizes = [8, 64], strides = [1, 1]} : vector<8x128xf32> to vector<8x64xf32>
    %177 = vector.extract_strided_slice %163 {offsets = [0, 128], sizes = [8, 64], strides = [1, 1]} : vector<8x192xf32> to vector<8x64xf32>
    %178 = vector.extract_strided_slice %166 {offsets = [0, 128], sizes = [8, 64], strides = [1, 1]} : vector<8x192xf32> to vector<8x64xf32>
    %179 = arith.mulf %175, %178 : vector<8x64xf32>
    %180 = arith.addf %177, %179 : vector<8x64xf32>
    %181 = math.tanh %180 : vector<8x64xf32>
    %cst_59 = arith.constant 1.000000e+00 : f32
    %182 = vector.broadcast %cst_59 : f32 to vector<8x64xf32>
    %183 = arith.subf %182, %176 : vector<8x64xf32>
    %184 = arith.mulf %183, %181 : vector<8x64xf32>
    %185 = arith.mulf %176, %161 : vector<8x64xf32>
    %186 = arith.addf %184, %185 : vector<8x64xf32>
    %c40_60 = arith.constant 40 : index
    %c0_61 = arith.constant 0 : index
    %187 = vector.load %arg24[%c40_60, %c0_61] : memref<136x64xf32, #tpu.memory_space<vmem>>, vector<8x64xf32>
    tpu.vector_store %arg24[%c40_60, %c0_61], %186 {strides = array<i32>} : memref<136x64xf32, #tpu.memory_space<vmem>>, vector<8x64xf32>,
    %c48 = arith.constant 48 : index
    %c0_62 = arith.constant 0 : index
    %188 = vector.load %arg23[%c48, %c0_62] : memref<136x192xf32, #tpu.memory_space<vmem>>, vector<8x192xf32>
    %cst_63 = arith.constant dense<0.000000e+00> : vector<8x192xf32>
    %189 = tpu.matmul %186, %35, %cst_63 {dimension_numbers = #tpu.dot_dimension_numbers<[1], [0], [0], [1], [0, 0, 1, 1], [], []>} : vector<8x64xf32>, vector<64x192xf32>, vector<8x192xf32> -> vector<8x192xf32>
    %190 = vector.broadcast %36 : vector<1x192xf32> to vector<8x192xf32>
    %191 = arith.addf %189, %190 : vector<8x192xf32>
    %192 = vector.extract_strided_slice %188 {offsets = [0, 0], sizes = [8, 128], strides = [1, 1]} : vector<8x192xf32> to vector<8x128xf32>
    %193 = vector.extract_strided_slice %191 {offsets = [0, 0], sizes = [8, 128], strides = [1, 1]} : vector<8x192xf32> to vector<8x128xf32>
    %194 = arith.addf %192, %193 : vector<8x128xf32>
    %195 = arith.negf %194 : vector<8x128xf32>
    %196 = math.exp %195 : vector<8x128xf32>
    %cst_64 = arith.constant 1.000000e+00 : f32
    %197 = vector.broadcast %cst_64 : f32 to vector<8x128xf32>
    %198 = arith.addf %197, %196 : vector<8x128xf32>
    %199 = arith.divf %197, %198 : vector<8x128xf32>
    %200 = vector.extract_strided_slice %199 {offsets = [0, 0], sizes = [8, 64], strides = [1, 1]} : vector<8x128xf32> to vector<8x64xf32>
    %201 = vector.extract_strided_slice %199 {offsets = [0, 64], sizes = [8, 64], strides = [1, 1]} : vector<8x128xf32> to vector<8x64xf32>
    %202 = vector.extract_strided_slice %188 {offsets = [0, 128], sizes = [8, 64], strides = [1, 1]} : vector<8x192xf32> to vector<8x64xf32>
    %203 = vector.extract_strided_slice %191 {offsets = [0, 128], sizes = [8, 64], strides = [1, 1]} : vector<8x192xf32> to vector<8x64xf32>
    %204 = arith.mulf %200, %203 : vector<8x64xf32>
    %205 = arith.addf %202, %204 : vector<8x64xf32>
    %206 = math.tanh %205 : vector<8x64xf32>
    %cst_65 = arith.constant 1.000000e+00 : f32
    %207 = vector.broadcast %cst_65 : f32 to vector<8x64xf32>
    %208 = arith.subf %207, %201 : vector<8x64xf32>
    %209 = arith.mulf %208, %206 : vector<8x64xf32>
    %210 = arith.mulf %201, %186 : vector<8x64xf32>
    %211 = arith.addf %209, %210 : vector<8x64xf32>
    %c48_66 = arith.constant 48 : index
    %c0_67 = arith.constant 0 : index
    %212 = vector.load %arg24[%c48_66, %c0_67] : memref<136x64xf32, #tpu.memory_space<vmem>>, vector<8x64xf32>
    tpu.vector_store %arg24[%c48_66, %c0_67], %211 {strides = array<i32>} : memref<136x64xf32, #tpu.memory_space<vmem>>, vector<8x64xf32>,
    %c56 = arith.constant 56 : index
    %c0_68 = arith.constant 0 : index
    %213 = vector.load %arg23[%c56, %c0_68] : memref<136x192xf32, #tpu.memory_space<vmem>>, vector<8x192xf32>
    %cst_69 = arith.constant dense<0.000000e+00> : vector<8x192xf32>
    %214 = tpu.matmul %211, %35, %cst_69 {dimension_numbers = #tpu.dot_dimension_numbers<[1], [0], [0], [1], [0, 0, 1, 1], [], []>} : vector<8x64xf32>, vector<64x192xf32>, vector<8x192xf32> -> vector<8x192xf32>
    %215 = vector.broadcast %36 : vector<1x192xf32> to vector<8x192xf32>
    %216 = arith.addf %214, %215 : vector<8x192xf32>
    %217 = vector.extract_strided_slice %213 {offsets = [0, 0], sizes = [8, 128], strides = [1, 1]} : vector<8x192xf32> to vector<8x128xf32>
    %218 = vector.extract_strided_slice %216 {offsets = [0, 0], sizes = [8, 128], strides = [1, 1]} : vector<8x192xf32> to vector<8x128xf32>
    %219 = arith.addf %217, %218 : vector<8x128xf32>
    %220 = arith.negf %219 : vector<8x128xf32>
    %221 = math.exp %220 : vector<8x128xf32>
    %cst_70 = arith.constant 1.000000e+00 : f32
    %222 = vector.broadcast %cst_70 : f32 to vector<8x128xf32>
    %223 = arith.addf %222, %221 : vector<8x128xf32>
    %224 = arith.divf %222, %223 : vector<8x128xf32>
    %225 = vector.extract_strided_slice %224 {offsets = [0, 0], sizes = [8, 64], strides = [1, 1]} : vector<8x128xf32> to vector<8x64xf32>
    %226 = vector.extract_strided_slice %224 {offsets = [0, 64], sizes = [8, 64], strides = [1, 1]} : vector<8x128xf32> to vector<8x64xf32>
    %227 = vector.extract_strided_slice %213 {offsets = [0, 128], sizes = [8, 64], strides = [1, 1]} : vector<8x192xf32> to vector<8x64xf32>
    %228 = vector.extract_strided_slice %216 {offsets = [0, 128], sizes = [8, 64], strides = [1, 1]} : vector<8x192xf32> to vector<8x64xf32>
    %229 = arith.mulf %225, %228 : vector<8x64xf32>
    %230 = arith.addf %227, %229 : vector<8x64xf32>
    %231 = math.tanh %230 : vector<8x64xf32>
    %cst_71 = arith.constant 1.000000e+00 : f32
    %232 = vector.broadcast %cst_71 : f32 to vector<8x64xf32>
    %233 = arith.subf %232, %226 : vector<8x64xf32>
    %234 = arith.mulf %233, %231 : vector<8x64xf32>
    %235 = arith.mulf %226, %211 : vector<8x64xf32>
    %236 = arith.addf %234, %235 : vector<8x64xf32>
    %c56_72 = arith.constant 56 : index
    %c0_73 = arith.constant 0 : index
    %237 = vector.load %arg24[%c56_72, %c0_73] : memref<136x64xf32, #tpu.memory_space<vmem>>, vector<8x64xf32>
    tpu.vector_store %arg24[%c56_72, %c0_73], %236 {strides = array<i32>} : memref<136x64xf32, #tpu.memory_space<vmem>>, vector<8x64xf32>,
    %c64 = arith.constant 64 : index
    %c0_74 = arith.constant 0 : index
    %238 = vector.load %arg23[%c64, %c0_74] : memref<136x192xf32, #tpu.memory_space<vmem>>, vector<8x192xf32>
    %cst_75 = arith.constant dense<0.000000e+00> : vector<8x192xf32>
    %239 = tpu.matmul %236, %35, %cst_75 {dimension_numbers = #tpu.dot_dimension_numbers<[1], [0], [0], [1], [0, 0, 1, 1], [], []>} : vector<8x64xf32>, vector<64x192xf32>, vector<8x192xf32> -> vector<8x192xf32>
    %240 = vector.broadcast %36 : vector<1x192xf32> to vector<8x192xf32>
    %241 = arith.addf %239, %240 : vector<8x192xf32>
    %242 = vector.extract_strided_slice %238 {offsets = [0, 0], sizes = [8, 128], strides = [1, 1]} : vector<8x192xf32> to vector<8x128xf32>
    %243 = vector.extract_strided_slice %241 {offsets = [0, 0], sizes = [8, 128], strides = [1, 1]} : vector<8x192xf32> to vector<8x128xf32>
    %244 = arith.addf %242, %243 : vector<8x128xf32>
    %245 = arith.negf %244 : vector<8x128xf32>
    %246 = math.exp %245 : vector<8x128xf32>
    %cst_76 = arith.constant 1.000000e+00 : f32
    %247 = vector.broadcast %cst_76 : f32 to vector<8x128xf32>
    %248 = arith.addf %247, %246 : vector<8x128xf32>
    %249 = arith.divf %247, %248 : vector<8x128xf32>
    %250 = vector.extract_strided_slice %249 {offsets = [0, 0], sizes = [8, 64], strides = [1, 1]} : vector<8x128xf32> to vector<8x64xf32>
    %251 = vector.extract_strided_slice %249 {offsets = [0, 64], sizes = [8, 64], strides = [1, 1]} : vector<8x128xf32> to vector<8x64xf32>
    %252 = vector.extract_strided_slice %238 {offsets = [0, 128], sizes = [8, 64], strides = [1, 1]} : vector<8x192xf32> to vector<8x64xf32>
    %253 = vector.extract_strided_slice %241 {offsets = [0, 128], sizes = [8, 64], strides = [1, 1]} : vector<8x192xf32> to vector<8x64xf32>
    %254 = arith.mulf %250, %253 : vector<8x64xf32>
    %255 = arith.addf %252, %254 : vector<8x64xf32>
    %256 = math.tanh %255 : vector<8x64xf32>
    %cst_77 = arith.constant 1.000000e+00 : f32
    %257 = vector.broadcast %cst_77 : f32 to vector<8x64xf32>
    %258 = arith.subf %257, %251 : vector<8x64xf32>
    %259 = arith.mulf %258, %256 : vector<8x64xf32>
    %260 = arith.mulf %251, %236 : vector<8x64xf32>
    %261 = arith.addf %259, %260 : vector<8x64xf32>
    %c64_78 = arith.constant 64 : index
    %c0_79 = arith.constant 0 : index
    %262 = vector.load %arg24[%c64_78, %c0_79] : memref<136x64xf32, #tpu.memory_space<vmem>>, vector<8x64xf32>
    tpu.vector_store %arg24[%c64_78, %c0_79], %261 {strides = array<i32>} : memref<136x64xf32, #tpu.memory_space<vmem>>, vector<8x64xf32>,
    %c72 = arith.constant 72 : index
    %c0_80 = arith.constant 0 : index
    %263 = vector.load %arg23[%c72, %c0_80] : memref<136x192xf32, #tpu.memory_space<vmem>>, vector<8x192xf32>
    %cst_81 = arith.constant dense<0.000000e+00> : vector<8x192xf32>
    %264 = tpu.matmul %261, %35, %cst_81 {dimension_numbers = #tpu.dot_dimension_numbers<[1], [0], [0], [1], [0, 0, 1, 1], [], []>} : vector<8x64xf32>, vector<64x192xf32>, vector<8x192xf32> -> vector<8x192xf32>
    %265 = vector.broadcast %36 : vector<1x192xf32> to vector<8x192xf32>
    %266 = arith.addf %264, %265 : vector<8x192xf32>
    %267 = vector.extract_strided_slice %263 {offsets = [0, 0], sizes = [8, 128], strides = [1, 1]} : vector<8x192xf32> to vector<8x128xf32>
    %268 = vector.extract_strided_slice %266 {offsets = [0, 0], sizes = [8, 128], strides = [1, 1]} : vector<8x192xf32> to vector<8x128xf32>
    %269 = arith.addf %267, %268 : vector<8x128xf32>
    %270 = arith.negf %269 : vector<8x128xf32>
    %271 = math.exp %270 : vector<8x128xf32>
    %cst_82 = arith.constant 1.000000e+00 : f32
    %272 = vector.broadcast %cst_82 : f32 to vector<8x128xf32>
    %273 = arith.addf %272, %271 : vector<8x128xf32>
    %274 = arith.divf %272, %273 : vector<8x128xf32>
    %275 = vector.extract_strided_slice %274 {offsets = [0, 0], sizes = [8, 64], strides = [1, 1]} : vector<8x128xf32> to vector<8x64xf32>
    %276 = vector.extract_strided_slice %274 {offsets = [0, 64], sizes = [8, 64], strides = [1, 1]} : vector<8x128xf32> to vector<8x64xf32>
    %277 = vector.extract_strided_slice %263 {offsets = [0, 128], sizes = [8, 64], strides = [1, 1]} : vector<8x192xf32> to vector<8x64xf32>
    %278 = vector.extract_strided_slice %266 {offsets = [0, 128], sizes = [8, 64], strides = [1, 1]} : vector<8x192xf32> to vector<8x64xf32>
    %279 = arith.mulf %275, %278 : vector<8x64xf32>
    %280 = arith.addf %277, %279 : vector<8x64xf32>
    %281 = math.tanh %280 : vector<8x64xf32>
    %cst_83 = arith.constant 1.000000e+00 : f32
    %282 = vector.broadcast %cst_83 : f32 to vector<8x64xf32>
    %283 = arith.subf %282, %276 : vector<8x64xf32>
    %284 = arith.mulf %283, %281 : vector<8x64xf32>
    %285 = arith.mulf %276, %261 : vector<8x64xf32>
    %286 = arith.addf %284, %285 : vector<8x64xf32>
    %c72_84 = arith.constant 72 : index
    %c0_85 = arith.constant 0 : index
    %287 = vector.load %arg24[%c72_84, %c0_85] : memref<136x64xf32, #tpu.memory_space<vmem>>, vector<8x64xf32>
    tpu.vector_store %arg24[%c72_84, %c0_85], %286 {strides = array<i32>} : memref<136x64xf32, #tpu.memory_space<vmem>>, vector<8x64xf32>,
    %c80 = arith.constant 80 : index
    %c0_86 = arith.constant 0 : index
    %288 = vector.load %arg23[%c80, %c0_86] : memref<136x192xf32, #tpu.memory_space<vmem>>, vector<8x192xf32>
    %cst_87 = arith.constant dense<0.000000e+00> : vector<8x192xf32>
    %289 = tpu.matmul %286, %35, %cst_87 {dimension_numbers = #tpu.dot_dimension_numbers<[1], [0], [0], [1], [0, 0, 1, 1], [], []>} : vector<8x64xf32>, vector<64x192xf32>, vector<8x192xf32> -> vector<8x192xf32>
    %290 = vector.broadcast %36 : vector<1x192xf32> to vector<8x192xf32>
    %291 = arith.addf %289, %290 : vector<8x192xf32>
    %292 = vector.extract_strided_slice %288 {offsets = [0, 0], sizes = [8, 128], strides = [1, 1]} : vector<8x192xf32> to vector<8x128xf32>
    %293 = vector.extract_strided_slice %291 {offsets = [0, 0], sizes = [8, 128], strides = [1, 1]} : vector<8x192xf32> to vector<8x128xf32>
    %294 = arith.addf %292, %293 : vector<8x128xf32>
    %295 = arith.negf %294 : vector<8x128xf32>
    %296 = math.exp %295 : vector<8x128xf32>
    %cst_88 = arith.constant 1.000000e+00 : f32
    %297 = vector.broadcast %cst_88 : f32 to vector<8x128xf32>
    %298 = arith.addf %297, %296 : vector<8x128xf32>
    %299 = arith.divf %297, %298 : vector<8x128xf32>
    %300 = vector.extract_strided_slice %299 {offsets = [0, 0], sizes = [8, 64], strides = [1, 1]} : vector<8x128xf32> to vector<8x64xf32>
    %301 = vector.extract_strided_slice %299 {offsets = [0, 64], sizes = [8, 64], strides = [1, 1]} : vector<8x128xf32> to vector<8x64xf32>
    %302 = vector.extract_strided_slice %288 {offsets = [0, 128], sizes = [8, 64], strides = [1, 1]} : vector<8x192xf32> to vector<8x64xf32>
    %303 = vector.extract_strided_slice %291 {offsets = [0, 128], sizes = [8, 64], strides = [1, 1]} : vector<8x192xf32> to vector<8x64xf32>
    %304 = arith.mulf %300, %303 : vector<8x64xf32>
    %305 = arith.addf %302, %304 : vector<8x64xf32>
    %306 = math.tanh %305 : vector<8x64xf32>
    %cst_89 = arith.constant 1.000000e+00 : f32
    %307 = vector.broadcast %cst_89 : f32 to vector<8x64xf32>
    %308 = arith.subf %307, %301 : vector<8x64xf32>
    %309 = arith.mulf %308, %306 : vector<8x64xf32>
    %310 = arith.mulf %301, %286 : vector<8x64xf32>
    %311 = arith.addf %309, %310 : vector<8x64xf32>
    %c80_90 = arith.constant 80 : index
    %c0_91 = arith.constant 0 : index
    %312 = vector.load %arg24[%c80_90, %c0_91] : memref<136x64xf32, #tpu.memory_space<vmem>>, vector<8x64xf32>
    tpu.vector_store %arg24[%c80_90, %c0_91], %311 {strides = array<i32>} : memref<136x64xf32, #tpu.memory_space<vmem>>, vector<8x64xf32>,
    %c88 = arith.constant 88 : index
    %c0_92 = arith.constant 0 : index
    %313 = vector.load %arg23[%c88, %c0_92] : memref<136x192xf32, #tpu.memory_space<vmem>>, vector<8x192xf32>
    %cst_93 = arith.constant dense<0.000000e+00> : vector<8x192xf32>
    %314 = tpu.matmul %311, %35, %cst_93 {dimension_numbers = #tpu.dot_dimension_numbers<[1], [0], [0], [1], [0, 0, 1, 1], [], []>} : vector<8x64xf32>, vector<64x192xf32>, vector<8x192xf32> -> vector<8x192xf32>
    %315 = vector.broadcast %36 : vector<1x192xf32> to vector<8x192xf32>
    %316 = arith.addf %314, %315 : vector<8x192xf32>
    %317 = vector.extract_strided_slice %313 {offsets = [0, 0], sizes = [8, 128], strides = [1, 1]} : vector<8x192xf32> to vector<8x128xf32>
    %318 = vector.extract_strided_slice %316 {offsets = [0, 0], sizes = [8, 128], strides = [1, 1]} : vector<8x192xf32> to vector<8x128xf32>
    %319 = arith.addf %317, %318 : vector<8x128xf32>
    %320 = arith.negf %319 : vector<8x128xf32>
    %321 = math.exp %320 : vector<8x128xf32>
    %cst_94 = arith.constant 1.000000e+00 : f32
    %322 = vector.broadcast %cst_94 : f32 to vector<8x128xf32>
    %323 = arith.addf %322, %321 : vector<8x128xf32>
    %324 = arith.divf %322, %323 : vector<8x128xf32>
    %325 = vector.extract_strided_slice %324 {offsets = [0, 0], sizes = [8, 64], strides = [1, 1]} : vector<8x128xf32> to vector<8x64xf32>
    %326 = vector.extract_strided_slice %324 {offsets = [0, 64], sizes = [8, 64], strides = [1, 1]} : vector<8x128xf32> to vector<8x64xf32>
    %327 = vector.extract_strided_slice %313 {offsets = [0, 128], sizes = [8, 64], strides = [1, 1]} : vector<8x192xf32> to vector<8x64xf32>
    %328 = vector.extract_strided_slice %316 {offsets = [0, 128], sizes = [8, 64], strides = [1, 1]} : vector<8x192xf32> to vector<8x64xf32>
    %329 = arith.mulf %325, %328 : vector<8x64xf32>
    %330 = arith.addf %327, %329 : vector<8x64xf32>
    %331 = math.tanh %330 : vector<8x64xf32>
    %cst_95 = arith.constant 1.000000e+00 : f32
    %332 = vector.broadcast %cst_95 : f32 to vector<8x64xf32>
    %333 = arith.subf %332, %326 : vector<8x64xf32>
    %334 = arith.mulf %333, %331 : vector<8x64xf32>
    %335 = arith.mulf %326, %311 : vector<8x64xf32>
    %336 = arith.addf %334, %335 : vector<8x64xf32>
    %c88_96 = arith.constant 88 : index
    %c0_97 = arith.constant 0 : index
    %337 = vector.load %arg24[%c88_96, %c0_97] : memref<136x64xf32, #tpu.memory_space<vmem>>, vector<8x64xf32>
    tpu.vector_store %arg24[%c88_96, %c0_97], %336 {strides = array<i32>} : memref<136x64xf32, #tpu.memory_space<vmem>>, vector<8x64xf32>,
    %c96 = arith.constant 96 : index
    %c0_98 = arith.constant 0 : index
    %338 = vector.load %arg23[%c96, %c0_98] : memref<136x192xf32, #tpu.memory_space<vmem>>, vector<8x192xf32>
    %cst_99 = arith.constant dense<0.000000e+00> : vector<8x192xf32>
    %339 = tpu.matmul %336, %35, %cst_99 {dimension_numbers = #tpu.dot_dimension_numbers<[1], [0], [0], [1], [0, 0, 1, 1], [], []>} : vector<8x64xf32>, vector<64x192xf32>, vector<8x192xf32> -> vector<8x192xf32>
    %340 = vector.broadcast %36 : vector<1x192xf32> to vector<8x192xf32>
    %341 = arith.addf %339, %340 : vector<8x192xf32>
    %342 = vector.extract_strided_slice %338 {offsets = [0, 0], sizes = [8, 128], strides = [1, 1]} : vector<8x192xf32> to vector<8x128xf32>
    %343 = vector.extract_strided_slice %341 {offsets = [0, 0], sizes = [8, 128], strides = [1, 1]} : vector<8x192xf32> to vector<8x128xf32>
    %344 = arith.addf %342, %343 : vector<8x128xf32>
    %345 = arith.negf %344 : vector<8x128xf32>
    %346 = math.exp %345 : vector<8x128xf32>
    %cst_100 = arith.constant 1.000000e+00 : f32
    %347 = vector.broadcast %cst_100 : f32 to vector<8x128xf32>
    %348 = arith.addf %347, %346 : vector<8x128xf32>
    %349 = arith.divf %347, %348 : vector<8x128xf32>
    %350 = vector.extract_strided_slice %349 {offsets = [0, 0], sizes = [8, 64], strides = [1, 1]} : vector<8x128xf32> to vector<8x64xf32>
    %351 = vector.extract_strided_slice %349 {offsets = [0, 64], sizes = [8, 64], strides = [1, 1]} : vector<8x128xf32> to vector<8x64xf32>
    %352 = vector.extract_strided_slice %338 {offsets = [0, 128], sizes = [8, 64], strides = [1, 1]} : vector<8x192xf32> to vector<8x64xf32>
    %353 = vector.extract_strided_slice %341 {offsets = [0, 128], sizes = [8, 64], strides = [1, 1]} : vector<8x192xf32> to vector<8x64xf32>
    %354 = arith.mulf %350, %353 : vector<8x64xf32>
    %355 = arith.addf %352, %354 : vector<8x64xf32>
    %356 = math.tanh %355 : vector<8x64xf32>
    %cst_101 = arith.constant 1.000000e+00 : f32
    %357 = vector.broadcast %cst_101 : f32 to vector<8x64xf32>
    %358 = arith.subf %357, %351 : vector<8x64xf32>
    %359 = arith.mulf %358, %356 : vector<8x64xf32>
    %360 = arith.mulf %351, %336 : vector<8x64xf32>
    %361 = arith.addf %359, %360 : vector<8x64xf32>
    %c96_102 = arith.constant 96 : index
    %c0_103 = arith.constant 0 : index
    %362 = vector.load %arg24[%c96_102, %c0_103] : memref<136x64xf32, #tpu.memory_space<vmem>>, vector<8x64xf32>
    tpu.vector_store %arg24[%c96_102, %c0_103], %361 {strides = array<i32>} : memref<136x64xf32, #tpu.memory_space<vmem>>, vector<8x64xf32>,
    %c104 = arith.constant 104 : index
    %c0_104 = arith.constant 0 : index
    %363 = vector.load %arg23[%c104, %c0_104] : memref<136x192xf32, #tpu.memory_space<vmem>>, vector<8x192xf32>
    %cst_105 = arith.constant dense<0.000000e+00> : vector<8x192xf32>
    %364 = tpu.matmul %361, %35, %cst_105 {dimension_numbers = #tpu.dot_dimension_numbers<[1], [0], [0], [1], [0, 0, 1, 1], [], []>} : vector<8x64xf32>, vector<64x192xf32>, vector<8x192xf32> -> vector<8x192xf32>
    %365 = vector.broadcast %36 : vector<1x192xf32> to vector<8x192xf32>
    %366 = arith.addf %364, %365 : vector<8x192xf32>
    %367 = vector.extract_strided_slice %363 {offsets = [0, 0], sizes = [8, 128], strides = [1, 1]} : vector<8x192xf32> to vector<8x128xf32>
    %368 = vector.extract_strided_slice %366 {offsets = [0, 0], sizes = [8, 128], strides = [1, 1]} : vector<8x192xf32> to vector<8x128xf32>
    %369 = arith.addf %367, %368 : vector<8x128xf32>
    %370 = arith.negf %369 : vector<8x128xf32>
    %371 = math.exp %370 : vector<8x128xf32>
    %cst_106 = arith.constant 1.000000e+00 : f32
    %372 = vector.broadcast %cst_106 : f32 to vector<8x128xf32>
    %373 = arith.addf %372, %371 : vector<8x128xf32>
    %374 = arith.divf %372, %373 : vector<8x128xf32>
    %375 = vector.extract_strided_slice %374 {offsets = [0, 0], sizes = [8, 64], strides = [1, 1]} : vector<8x128xf32> to vector<8x64xf32>
    %376 = vector.extract_strided_slice %374 {offsets = [0, 64], sizes = [8, 64], strides = [1, 1]} : vector<8x128xf32> to vector<8x64xf32>
    %377 = vector.extract_strided_slice %363 {offsets = [0, 128], sizes = [8, 64], strides = [1, 1]} : vector<8x192xf32> to vector<8x64xf32>
    %378 = vector.extract_strided_slice %366 {offsets = [0, 128], sizes = [8, 64], strides = [1, 1]} : vector<8x192xf32> to vector<8x64xf32>
    %379 = arith.mulf %375, %378 : vector<8x64xf32>
    %380 = arith.addf %377, %379 : vector<8x64xf32>
    %381 = math.tanh %380 : vector<8x64xf32>
    %cst_107 = arith.constant 1.000000e+00 : f32
    %382 = vector.broadcast %cst_107 : f32 to vector<8x64xf32>
    %383 = arith.subf %382, %376 : vector<8x64xf32>
    %384 = arith.mulf %383, %381 : vector<8x64xf32>
    %385 = arith.mulf %376, %361 : vector<8x64xf32>
    %386 = arith.addf %384, %385 : vector<8x64xf32>
    %c104_108 = arith.constant 104 : index
    %c0_109 = arith.constant 0 : index
    %387 = vector.load %arg24[%c104_108, %c0_109] : memref<136x64xf32, #tpu.memory_space<vmem>>, vector<8x64xf32>
    tpu.vector_store %arg24[%c104_108, %c0_109], %386 {strides = array<i32>} : memref<136x64xf32, #tpu.memory_space<vmem>>, vector<8x64xf32>,
    %c112 = arith.constant 112 : index
    %c0_110 = arith.constant 0 : index
    %388 = vector.load %arg23[%c112, %c0_110] : memref<136x192xf32, #tpu.memory_space<vmem>>, vector<8x192xf32>
    %cst_111 = arith.constant dense<0.000000e+00> : vector<8x192xf32>
    %389 = tpu.matmul %386, %35, %cst_111 {dimension_numbers = #tpu.dot_dimension_numbers<[1], [0], [0], [1], [0, 0, 1, 1], [], []>} : vector<8x64xf32>, vector<64x192xf32>, vector<8x192xf32> -> vector<8x192xf32>
    %390 = vector.broadcast %36 : vector<1x192xf32> to vector<8x192xf32>
    %391 = arith.addf %389, %390 : vector<8x192xf32>
    %392 = vector.extract_strided_slice %388 {offsets = [0, 0], sizes = [8, 128], strides = [1, 1]} : vector<8x192xf32> to vector<8x128xf32>
    %393 = vector.extract_strided_slice %391 {offsets = [0, 0], sizes = [8, 128], strides = [1, 1]} : vector<8x192xf32> to vector<8x128xf32>
    %394 = arith.addf %392, %393 : vector<8x128xf32>
    %395 = arith.negf %394 : vector<8x128xf32>
    %396 = math.exp %395 : vector<8x128xf32>
    %cst_112 = arith.constant 1.000000e+00 : f32
    %397 = vector.broadcast %cst_112 : f32 to vector<8x128xf32>
    %398 = arith.addf %397, %396 : vector<8x128xf32>
    %399 = arith.divf %397, %398 : vector<8x128xf32>
    %400 = vector.extract_strided_slice %399 {offsets = [0, 0], sizes = [8, 64], strides = [1, 1]} : vector<8x128xf32> to vector<8x64xf32>
    %401 = vector.extract_strided_slice %399 {offsets = [0, 64], sizes = [8, 64], strides = [1, 1]} : vector<8x128xf32> to vector<8x64xf32>
    %402 = vector.extract_strided_slice %388 {offsets = [0, 128], sizes = [8, 64], strides = [1, 1]} : vector<8x192xf32> to vector<8x64xf32>
    %403 = vector.extract_strided_slice %391 {offsets = [0, 128], sizes = [8, 64], strides = [1, 1]} : vector<8x192xf32> to vector<8x64xf32>
    %404 = arith.mulf %400, %403 : vector<8x64xf32>
    %405 = arith.addf %402, %404 : vector<8x64xf32>
    %406 = math.tanh %405 : vector<8x64xf32>
    %cst_113 = arith.constant 1.000000e+00 : f32
    %407 = vector.broadcast %cst_113 : f32 to vector<8x64xf32>
    %408 = arith.subf %407, %401 : vector<8x64xf32>
    %409 = arith.mulf %408, %406 : vector<8x64xf32>
    %410 = arith.mulf %401, %386 : vector<8x64xf32>
    %411 = arith.addf %409, %410 : vector<8x64xf32>
    %c112_114 = arith.constant 112 : index
    %c0_115 = arith.constant 0 : index
    %412 = vector.load %arg24[%c112_114, %c0_115] : memref<136x64xf32, #tpu.memory_space<vmem>>, vector<8x64xf32>
    tpu.vector_store %arg24[%c112_114, %c0_115], %411 {strides = array<i32>} : memref<136x64xf32, #tpu.memory_space<vmem>>, vector<8x64xf32>,
    %c120 = arith.constant 120 : index
    %c0_116 = arith.constant 0 : index
    %413 = vector.load %arg23[%c120, %c0_116] : memref<136x192xf32, #tpu.memory_space<vmem>>, vector<8x192xf32>
    %cst_117 = arith.constant dense<0.000000e+00> : vector<8x192xf32>
    %414 = tpu.matmul %411, %35, %cst_117 {dimension_numbers = #tpu.dot_dimension_numbers<[1], [0], [0], [1], [0, 0, 1, 1], [], []>} : vector<8x64xf32>, vector<64x192xf32>, vector<8x192xf32> -> vector<8x192xf32>
    %415 = vector.broadcast %36 : vector<1x192xf32> to vector<8x192xf32>
    %416 = arith.addf %414, %415 : vector<8x192xf32>
    %417 = vector.extract_strided_slice %413 {offsets = [0, 0], sizes = [8, 128], strides = [1, 1]} : vector<8x192xf32> to vector<8x128xf32>
    %418 = vector.extract_strided_slice %416 {offsets = [0, 0], sizes = [8, 128], strides = [1, 1]} : vector<8x192xf32> to vector<8x128xf32>
    %419 = arith.addf %417, %418 : vector<8x128xf32>
    %420 = arith.negf %419 : vector<8x128xf32>
    %421 = math.exp %420 : vector<8x128xf32>
    %cst_118 = arith.constant 1.000000e+00 : f32
    %422 = vector.broadcast %cst_118 : f32 to vector<8x128xf32>
    %423 = arith.addf %422, %421 : vector<8x128xf32>
    %424 = arith.divf %422, %423 : vector<8x128xf32>
    %425 = vector.extract_strided_slice %424 {offsets = [0, 0], sizes = [8, 64], strides = [1, 1]} : vector<8x128xf32> to vector<8x64xf32>
    %426 = vector.extract_strided_slice %424 {offsets = [0, 64], sizes = [8, 64], strides = [1, 1]} : vector<8x128xf32> to vector<8x64xf32>
    %427 = vector.extract_strided_slice %413 {offsets = [0, 128], sizes = [8, 64], strides = [1, 1]} : vector<8x192xf32> to vector<8x64xf32>
    %428 = vector.extract_strided_slice %416 {offsets = [0, 128], sizes = [8, 64], strides = [1, 1]} : vector<8x192xf32> to vector<8x64xf32>
    %429 = arith.mulf %425, %428 : vector<8x64xf32>
    %430 = arith.addf %427, %429 : vector<8x64xf32>
    %431 = math.tanh %430 : vector<8x64xf32>
    %cst_119 = arith.constant 1.000000e+00 : f32
    %432 = vector.broadcast %cst_119 : f32 to vector<8x64xf32>
    %433 = arith.subf %432, %426 : vector<8x64xf32>
    %434 = arith.mulf %433, %431 : vector<8x64xf32>
    %435 = arith.mulf %426, %411 : vector<8x64xf32>
    %436 = arith.addf %434, %435 : vector<8x64xf32>
    %c120_120 = arith.constant 120 : index
    %c0_121 = arith.constant 0 : index
    %437 = vector.load %arg24[%c120_120, %c0_121] : memref<136x64xf32, #tpu.memory_space<vmem>>, vector<8x64xf32>
    tpu.vector_store %arg24[%c120_120, %c0_121], %436 {strides = array<i32>} : memref<136x64xf32, #tpu.memory_space<vmem>>, vector<8x64xf32>,
    %c128 = arith.constant 128 : index
    %c0_122 = arith.constant 0 : index
    %438 = vector.load %arg23[%c128, %c0_122] : memref<136x192xf32, #tpu.memory_space<vmem>>, vector<8x192xf32>
    %cst_123 = arith.constant dense<0.000000e+00> : vector<8x192xf32>
    %439 = tpu.matmul %436, %35, %cst_123 {dimension_numbers = #tpu.dot_dimension_numbers<[1], [0], [0], [1], [0, 0, 1, 1], [], []>} : vector<8x64xf32>, vector<64x192xf32>, vector<8x192xf32> -> vector<8x192xf32>
    %440 = vector.broadcast %36 : vector<1x192xf32> to vector<8x192xf32>
    %441 = arith.addf %439, %440 : vector<8x192xf32>
    %442 = vector.extract_strided_slice %438 {offsets = [0, 0], sizes = [8, 128], strides = [1, 1]} : vector<8x192xf32> to vector<8x128xf32>
    %443 = vector.extract_strided_slice %441 {offsets = [0, 0], sizes = [8, 128], strides = [1, 1]} : vector<8x192xf32> to vector<8x128xf32>
    %444 = arith.addf %442, %443 : vector<8x128xf32>
    %445 = arith.negf %444 : vector<8x128xf32>
    %446 = math.exp %445 : vector<8x128xf32>
    %cst_124 = arith.constant 1.000000e+00 : f32
    %447 = vector.broadcast %cst_124 : f32 to vector<8x128xf32>
    %448 = arith.addf %447, %446 : vector<8x128xf32>
    %449 = arith.divf %447, %448 : vector<8x128xf32>
    %450 = vector.extract_strided_slice %449 {offsets = [0, 0], sizes = [8, 64], strides = [1, 1]} : vector<8x128xf32> to vector<8x64xf32>
    %451 = vector.extract_strided_slice %449 {offsets = [0, 64], sizes = [8, 64], strides = [1, 1]} : vector<8x128xf32> to vector<8x64xf32>
    %452 = vector.extract_strided_slice %438 {offsets = [0, 128], sizes = [8, 64], strides = [1, 1]} : vector<8x192xf32> to vector<8x64xf32>
    %453 = vector.extract_strided_slice %441 {offsets = [0, 128], sizes = [8, 64], strides = [1, 1]} : vector<8x192xf32> to vector<8x64xf32>
    %454 = arith.mulf %450, %453 : vector<8x64xf32>
    %455 = arith.addf %452, %454 : vector<8x64xf32>
    %456 = math.tanh %455 : vector<8x64xf32>
    %cst_125 = arith.constant 1.000000e+00 : f32
    %457 = vector.broadcast %cst_125 : f32 to vector<8x64xf32>
    %458 = arith.subf %457, %451 : vector<8x64xf32>
    %459 = arith.mulf %458, %456 : vector<8x64xf32>
    %460 = arith.mulf %451, %436 : vector<8x64xf32>
    %461 = arith.addf %459, %460 : vector<8x64xf32>
    %c128_126 = arith.constant 128 : index
    %c0_127 = arith.constant 0 : index
    %462 = vector.load %arg24[%c128_126, %c0_127] : memref<136x64xf32, #tpu.memory_space<vmem>>, vector<8x64xf32>
    tpu.vector_store %arg24[%c128_126, %c0_127], %461 {strides = array<i32>} : memref<136x64xf32, #tpu.memory_space<vmem>>, vector<8x64xf32>,
    %c0_128 = arith.constant 0 : index
    %c0_129 = arith.constant 0 : index
    %463 = vector.load %arg24[%c0_128, %c0_129] : memref<136x64xf32, #tpu.memory_space<vmem>>, vector<136x64xf32>
    %c0_130 = arith.constant 0 : index
    %c0_131 = arith.constant 0 : index
    %464 = vector.load %arg11[%c0_130, %c0_131] : memref<64x192xf32, #tpu.memory_space<vmem>>, vector<64x192xf32>
    %cst_132 = arith.constant dense<0.000000e+00> : vector<136x192xf32>
    %465 = tpu.matmul %463, %464, %cst_132 {dimension_numbers = #tpu.dot_dimension_numbers<[1], [0], [0], [1], [0, 0, 1, 1], [], []>} : vector<136x64xf32>, vector<64x192xf32>, vector<136x192xf32> -> vector<136x192xf32>
    %c0_133 = arith.constant 0 : index
    %c0_134 = arith.constant 0 : index
    %466 = vector.load %arg12[%c0_133, %c0_134] : memref<1x192xf32, #tpu.memory_space<vmem>>, vector<1x192xf32>
    %467 = vector.broadcast %466 : vector<1x192xf32> to vector<136x192xf32>
    %468 = arith.addf %465, %467 : vector<136x192xf32>
    %c0_135 = arith.constant 0 : index
    %c0_136 = arith.constant 0 : index
    %469 = vector.load %arg23[%c0_135, %c0_136] : memref<136x192xf32, #tpu.memory_space<vmem>>, vector<136x192xf32>
    tpu.vector_store %arg23[%c0_135, %c0_136], %468 {strides = array<i32>} : memref<136x192xf32, #tpu.memory_space<vmem>>, vector<136x192xf32>,
    %c0_137 = arith.constant 0 : index
    %c0_138 = arith.constant 0 : index
    %470 = vector.load %arg13[%c0_137, %c0_138] : memref<64x192xf32, #tpu.memory_space<vmem>>, vector<64x192xf32>
    %c0_139 = arith.constant 0 : index
    %c0_140 = arith.constant 0 : index
    %471 = vector.load %arg14[%c0_139, %c0_140] : memref<1x192xf32, #tpu.memory_space<vmem>>, vector<1x192xf32>
    %cst_141 = arith.constant 0.000000e+00 : f32
    %472 = vector.broadcast %cst_141 : f32 to vector<8x64xf32>
    %c0_142 = arith.constant 0 : index
    %c0_143 = arith.constant 0 : index
    %473 = vector.load %arg23[%c0_142, %c0_143] : memref<136x192xf32, #tpu.memory_space<vmem>>, vector<8x192xf32>
    %cst_144 = arith.constant dense<0.000000e+00> : vector<8x192xf32>
    %474 = tpu.matmul %472, %470, %cst_144 {dimension_numbers = #tpu.dot_dimension_numbers<[1], [0], [0], [1], [0, 0, 1, 1], [], []>} : vector<8x64xf32>, vector<64x192xf32>, vector<8x192xf32> -> vector<8x192xf32>
    %475 = vector.broadcast %471 : vector<1x192xf32> to vector<8x192xf32>
    %476 = arith.addf %474, %475 : vector<8x192xf32>
    %477 = vector.extract_strided_slice %473 {offsets = [0, 0], sizes = [8, 128], strides = [1, 1]} : vector<8x192xf32> to vector<8x128xf32>
    %478 = vector.extract_strided_slice %476 {offsets = [0, 0], sizes = [8, 128], strides = [1, 1]} : vector<8x192xf32> to vector<8x128xf32>
    %479 = arith.addf %477, %478 : vector<8x128xf32>
    %480 = arith.negf %479 : vector<8x128xf32>
    %481 = math.exp %480 : vector<8x128xf32>
    %cst_145 = arith.constant 1.000000e+00 : f32
    %482 = vector.broadcast %cst_145 : f32 to vector<8x128xf32>
    %483 = arith.addf %482, %481 : vector<8x128xf32>
    %484 = arith.divf %482, %483 : vector<8x128xf32>
    %485 = vector.extract_strided_slice %484 {offsets = [0, 0], sizes = [8, 64], strides = [1, 1]} : vector<8x128xf32> to vector<8x64xf32>
    %486 = vector.extract_strided_slice %484 {offsets = [0, 64], sizes = [8, 64], strides = [1, 1]} : vector<8x128xf32> to vector<8x64xf32>
    %487 = vector.extract_strided_slice %473 {offsets = [0, 128], sizes = [8, 64], strides = [1, 1]} : vector<8x192xf32> to vector<8x64xf32>
    %488 = vector.extract_strided_slice %476 {offsets = [0, 128], sizes = [8, 64], strides = [1, 1]} : vector<8x192xf32> to vector<8x64xf32>
    %489 = arith.mulf %485, %488 : vector<8x64xf32>
    %490 = arith.addf %487, %489 : vector<8x64xf32>
    %491 = math.tanh %490 : vector<8x64xf32>
    %cst_146 = arith.constant 1.000000e+00 : f32
    %492 = vector.broadcast %cst_146 : f32 to vector<8x64xf32>
    %493 = arith.subf %492, %486 : vector<8x64xf32>
    %494 = arith.mulf %493, %491 : vector<8x64xf32>
    %495 = arith.mulf %486, %472 : vector<8x64xf32>
    %496 = arith.addf %494, %495 : vector<8x64xf32>
    %c0_147 = arith.constant 0 : index
    %c0_148 = arith.constant 0 : index
    %497 = vector.load %arg25[%c0_147, %c0_148] : memref<136x64xf32, #tpu.memory_space<vmem>>, vector<8x64xf32>
    tpu.vector_store %arg25[%c0_147, %c0_148], %496 {strides = array<i32>} : memref<136x64xf32, #tpu.memory_space<vmem>>, vector<8x64xf32>,
    %c8_149 = arith.constant 8 : index
    %c0_150 = arith.constant 0 : index
    %498 = vector.load %arg23[%c8_149, %c0_150] : memref<136x192xf32, #tpu.memory_space<vmem>>, vector<8x192xf32>
    %cst_151 = arith.constant dense<0.000000e+00> : vector<8x192xf32>
    %499 = tpu.matmul %496, %470, %cst_151 {dimension_numbers = #tpu.dot_dimension_numbers<[1], [0], [0], [1], [0, 0, 1, 1], [], []>} : vector<8x64xf32>, vector<64x192xf32>, vector<8x192xf32> -> vector<8x192xf32>
    %500 = vector.broadcast %471 : vector<1x192xf32> to vector<8x192xf32>
    %501 = arith.addf %499, %500 : vector<8x192xf32>
    %502 = vector.extract_strided_slice %498 {offsets = [0, 0], sizes = [8, 128], strides = [1, 1]} : vector<8x192xf32> to vector<8x128xf32>
    %503 = vector.extract_strided_slice %501 {offsets = [0, 0], sizes = [8, 128], strides = [1, 1]} : vector<8x192xf32> to vector<8x128xf32>
    %504 = arith.addf %502, %503 : vector<8x128xf32>
    %505 = arith.negf %504 : vector<8x128xf32>
    %506 = math.exp %505 : vector<8x128xf32>
    %cst_152 = arith.constant 1.000000e+00 : f32
    %507 = vector.broadcast %cst_152 : f32 to vector<8x128xf32>
    %508 = arith.addf %507, %506 : vector<8x128xf32>
    %509 = arith.divf %507, %508 : vector<8x128xf32>
    %510 = vector.extract_strided_slice %509 {offsets = [0, 0], sizes = [8, 64], strides = [1, 1]} : vector<8x128xf32> to vector<8x64xf32>
    %511 = vector.extract_strided_slice %509 {offsets = [0, 64], sizes = [8, 64], strides = [1, 1]} : vector<8x128xf32> to vector<8x64xf32>
    %512 = vector.extract_strided_slice %498 {offsets = [0, 128], sizes = [8, 64], strides = [1, 1]} : vector<8x192xf32> to vector<8x64xf32>
    %513 = vector.extract_strided_slice %501 {offsets = [0, 128], sizes = [8, 64], strides = [1, 1]} : vector<8x192xf32> to vector<8x64xf32>
    %514 = arith.mulf %510, %513 : vector<8x64xf32>
    %515 = arith.addf %512, %514 : vector<8x64xf32>
    %516 = math.tanh %515 : vector<8x64xf32>
    %cst_153 = arith.constant 1.000000e+00 : f32
    %517 = vector.broadcast %cst_153 : f32 to vector<8x64xf32>
    %518 = arith.subf %517, %511 : vector<8x64xf32>
    %519 = arith.mulf %518, %516 : vector<8x64xf32>
    %520 = arith.mulf %511, %496 : vector<8x64xf32>
    %521 = arith.addf %519, %520 : vector<8x64xf32>
    %c8_154 = arith.constant 8 : index
    %c0_155 = arith.constant 0 : index
    %522 = vector.load %arg25[%c8_154, %c0_155] : memref<136x64xf32, #tpu.memory_space<vmem>>, vector<8x64xf32>
    tpu.vector_store %arg25[%c8_154, %c0_155], %521 {strides = array<i32>} : memref<136x64xf32, #tpu.memory_space<vmem>>, vector<8x64xf32>,
    %c16_156 = arith.constant 16 : index
    %c0_157 = arith.constant 0 : index
    %523 = vector.load %arg23[%c16_156, %c0_157] : memref<136x192xf32, #tpu.memory_space<vmem>>, vector<8x192xf32>
    %cst_158 = arith.constant dense<0.000000e+00> : vector<8x192xf32>
    %524 = tpu.matmul %521, %470, %cst_158 {dimension_numbers = #tpu.dot_dimension_numbers<[1], [0], [0], [1], [0, 0, 1, 1], [], []>} : vector<8x64xf32>, vector<64x192xf32>, vector<8x192xf32> -> vector<8x192xf32>
    %525 = vector.broadcast %471 : vector<1x192xf32> to vector<8x192xf32>
    %526 = arith.addf %524, %525 : vector<8x192xf32>
    %527 = vector.extract_strided_slice %523 {offsets = [0, 0], sizes = [8, 128], strides = [1, 1]} : vector<8x192xf32> to vector<8x128xf32>
    %528 = vector.extract_strided_slice %526 {offsets = [0, 0], sizes = [8, 128], strides = [1, 1]} : vector<8x192xf32> to vector<8x128xf32>
    %529 = arith.addf %527, %528 : vector<8x128xf32>
    %530 = arith.negf %529 : vector<8x128xf32>
    %531 = math.exp %530 : vector<8x128xf32>
    %cst_159 = arith.constant 1.000000e+00 : f32
    %532 = vector.broadcast %cst_159 : f32 to vector<8x128xf32>
    %533 = arith.addf %532, %531 : vector<8x128xf32>
    %534 = arith.divf %532, %533 : vector<8x128xf32>
    %535 = vector.extract_strided_slice %534 {offsets = [0, 0], sizes = [8, 64], strides = [1, 1]} : vector<8x128xf32> to vector<8x64xf32>
    %536 = vector.extract_strided_slice %534 {offsets = [0, 64], sizes = [8, 64], strides = [1, 1]} : vector<8x128xf32> to vector<8x64xf32>
    %537 = vector.extract_strided_slice %523 {offsets = [0, 128], sizes = [8, 64], strides = [1, 1]} : vector<8x192xf32> to vector<8x64xf32>
    %538 = vector.extract_strided_slice %526 {offsets = [0, 128], sizes = [8, 64], strides = [1, 1]} : vector<8x192xf32> to vector<8x64xf32>
    %539 = arith.mulf %535, %538 : vector<8x64xf32>
    %540 = arith.addf %537, %539 : vector<8x64xf32>
    %541 = math.tanh %540 : vector<8x64xf32>
    %cst_160 = arith.constant 1.000000e+00 : f32
    %542 = vector.broadcast %cst_160 : f32 to vector<8x64xf32>
    %543 = arith.subf %542, %536 : vector<8x64xf32>
    %544 = arith.mulf %543, %541 : vector<8x64xf32>
    %545 = arith.mulf %536, %521 : vector<8x64xf32>
    %546 = arith.addf %544, %545 : vector<8x64xf32>
    %c16_161 = arith.constant 16 : index
    %c0_162 = arith.constant 0 : index
    %547 = vector.load %arg25[%c16_161, %c0_162] : memref<136x64xf32, #tpu.memory_space<vmem>>, vector<8x64xf32>
    tpu.vector_store %arg25[%c16_161, %c0_162], %546 {strides = array<i32>} : memref<136x64xf32, #tpu.memory_space<vmem>>, vector<8x64xf32>,
    %c24_163 = arith.constant 24 : index
    %c0_164 = arith.constant 0 : index
    %548 = vector.load %arg23[%c24_163, %c0_164] : memref<136x192xf32, #tpu.memory_space<vmem>>, vector<8x192xf32>
    %cst_165 = arith.constant dense<0.000000e+00> : vector<8x192xf32>
    %549 = tpu.matmul %546, %470, %cst_165 {dimension_numbers = #tpu.dot_dimension_numbers<[1], [0], [0], [1], [0, 0, 1, 1], [], []>} : vector<8x64xf32>, vector<64x192xf32>, vector<8x192xf32> -> vector<8x192xf32>
    %550 = vector.broadcast %471 : vector<1x192xf32> to vector<8x192xf32>
    %551 = arith.addf %549, %550 : vector<8x192xf32>
    %552 = vector.extract_strided_slice %548 {offsets = [0, 0], sizes = [8, 128], strides = [1, 1]} : vector<8x192xf32> to vector<8x128xf32>
    %553 = vector.extract_strided_slice %551 {offsets = [0, 0], sizes = [8, 128], strides = [1, 1]} : vector<8x192xf32> to vector<8x128xf32>
    %554 = arith.addf %552, %553 : vector<8x128xf32>
    %555 = arith.negf %554 : vector<8x128xf32>
    %556 = math.exp %555 : vector<8x128xf32>
    %cst_166 = arith.constant 1.000000e+00 : f32
    %557 = vector.broadcast %cst_166 : f32 to vector<8x128xf32>
    %558 = arith.addf %557, %556 : vector<8x128xf32>
    %559 = arith.divf %557, %558 : vector<8x128xf32>
    %560 = vector.extract_strided_slice %559 {offsets = [0, 0], sizes = [8, 64], strides = [1, 1]} : vector<8x128xf32> to vector<8x64xf32>
    %561 = vector.extract_strided_slice %559 {offsets = [0, 64], sizes = [8, 64], strides = [1, 1]} : vector<8x128xf32> to vector<8x64xf32>
    %562 = vector.extract_strided_slice %548 {offsets = [0, 128], sizes = [8, 64], strides = [1, 1]} : vector<8x192xf32> to vector<8x64xf32>
    %563 = vector.extract_strided_slice %551 {offsets = [0, 128], sizes = [8, 64], strides = [1, 1]} : vector<8x192xf32> to vector<8x64xf32>
    %564 = arith.mulf %560, %563 : vector<8x64xf32>
    %565 = arith.addf %562, %564 : vector<8x64xf32>
    %566 = math.tanh %565 : vector<8x64xf32>
    %cst_167 = arith.constant 1.000000e+00 : f32
    %567 = vector.broadcast %cst_167 : f32 to vector<8x64xf32>
    %568 = arith.subf %567, %561 : vector<8x64xf32>
    %569 = arith.mulf %568, %566 : vector<8x64xf32>
    %570 = arith.mulf %561, %546 : vector<8x64xf32>
    %571 = arith.addf %569, %570 : vector<8x64xf32>
    %c24_168 = arith.constant 24 : index
    %c0_169 = arith.constant 0 : index
    %572 = vector.load %arg25[%c24_168, %c0_169] : memref<136x64xf32, #tpu.memory_space<vmem>>, vector<8x64xf32>
    tpu.vector_store %arg25[%c24_168, %c0_169], %571 {strides = array<i32>} : memref<136x64xf32, #tpu.memory_space<vmem>>, vector<8x64xf32>,
    %c32_170 = arith.constant 32 : index
    %c0_171 = arith.constant 0 : index
    %573 = vector.load %arg23[%c32_170, %c0_171] : memref<136x192xf32, #tpu.memory_space<vmem>>, vector<8x192xf32>
    %cst_172 = arith.constant dense<0.000000e+00> : vector<8x192xf32>
    %574 = tpu.matmul %571, %470, %cst_172 {dimension_numbers = #tpu.dot_dimension_numbers<[1], [0], [0], [1], [0, 0, 1, 1], [], []>} : vector<8x64xf32>, vector<64x192xf32>, vector<8x192xf32> -> vector<8x192xf32>
    %575 = vector.broadcast %471 : vector<1x192xf32> to vector<8x192xf32>
    %576 = arith.addf %574, %575 : vector<8x192xf32>
    %577 = vector.extract_strided_slice %573 {offsets = [0, 0], sizes = [8, 128], strides = [1, 1]} : vector<8x192xf32> to vector<8x128xf32>
    %578 = vector.extract_strided_slice %576 {offsets = [0, 0], sizes = [8, 128], strides = [1, 1]} : vector<8x192xf32> to vector<8x128xf32>
    %579 = arith.addf %577, %578 : vector<8x128xf32>
    %580 = arith.negf %579 : vector<8x128xf32>
    %581 = math.exp %580 : vector<8x128xf32>
    %cst_173 = arith.constant 1.000000e+00 : f32
    %582 = vector.broadcast %cst_173 : f32 to vector<8x128xf32>
    %583 = arith.addf %582, %581 : vector<8x128xf32>
    %584 = arith.divf %582, %583 : vector<8x128xf32>
    %585 = vector.extract_strided_slice %584 {offsets = [0, 0], sizes = [8, 64], strides = [1, 1]} : vector<8x128xf32> to vector<8x64xf32>
    %586 = vector.extract_strided_slice %584 {offsets = [0, 64], sizes = [8, 64], strides = [1, 1]} : vector<8x128xf32> to vector<8x64xf32>
    %587 = vector.extract_strided_slice %573 {offsets = [0, 128], sizes = [8, 64], strides = [1, 1]} : vector<8x192xf32> to vector<8x64xf32>
    %588 = vector.extract_strided_slice %576 {offsets = [0, 128], sizes = [8, 64], strides = [1, 1]} : vector<8x192xf32> to vector<8x64xf32>
    %589 = arith.mulf %585, %588 : vector<8x64xf32>
    %590 = arith.addf %587, %589 : vector<8x64xf32>
    %591 = math.tanh %590 : vector<8x64xf32>
    %cst_174 = arith.constant 1.000000e+00 : f32
    %592 = vector.broadcast %cst_174 : f32 to vector<8x64xf32>
    %593 = arith.subf %592, %586 : vector<8x64xf32>
    %594 = arith.mulf %593, %591 : vector<8x64xf32>
    %595 = arith.mulf %586, %571 : vector<8x64xf32>
    %596 = arith.addf %594, %595 : vector<8x64xf32>
    %c32_175 = arith.constant 32 : index
    %c0_176 = arith.constant 0 : index
    %597 = vector.load %arg25[%c32_175, %c0_176] : memref<136x64xf32, #tpu.memory_space<vmem>>, vector<8x64xf32>
    tpu.vector_store %arg25[%c32_175, %c0_176], %596 {strides = array<i32>} : memref<136x64xf32, #tpu.memory_space<vmem>>, vector<8x64xf32>,
    %c40_177 = arith.constant 40 : index
    %c0_178 = arith.constant 0 : index
    %598 = vector.load %arg23[%c40_177, %c0_178] : memref<136x192xf32, #tpu.memory_space<vmem>>, vector<8x192xf32>
    %cst_179 = arith.constant dense<0.000000e+00> : vector<8x192xf32>
    %599 = tpu.matmul %596, %470, %cst_179 {dimension_numbers = #tpu.dot_dimension_numbers<[1], [0], [0], [1], [0, 0, 1, 1], [], []>} : vector<8x64xf32>, vector<64x192xf32>, vector<8x192xf32> -> vector<8x192xf32>
    %600 = vector.broadcast %471 : vector<1x192xf32> to vector<8x192xf32>
    %601 = arith.addf %599, %600 : vector<8x192xf32>
    %602 = vector.extract_strided_slice %598 {offsets = [0, 0], sizes = [8, 128], strides = [1, 1]} : vector<8x192xf32> to vector<8x128xf32>
    %603 = vector.extract_strided_slice %601 {offsets = [0, 0], sizes = [8, 128], strides = [1, 1]} : vector<8x192xf32> to vector<8x128xf32>
    %604 = arith.addf %602, %603 : vector<8x128xf32>
    %605 = arith.negf %604 : vector<8x128xf32>
    %606 = math.exp %605 : vector<8x128xf32>
    %cst_180 = arith.constant 1.000000e+00 : f32
    %607 = vector.broadcast %cst_180 : f32 to vector<8x128xf32>
    %608 = arith.addf %607, %606 : vector<8x128xf32>
    %609 = arith.divf %607, %608 : vector<8x128xf32>
    %610 = vector.extract_strided_slice %609 {offsets = [0, 0], sizes = [8, 64], strides = [1, 1]} : vector<8x128xf32> to vector<8x64xf32>
    %611 = vector.extract_strided_slice %609 {offsets = [0, 64], sizes = [8, 64], strides = [1, 1]} : vector<8x128xf32> to vector<8x64xf32>
    %612 = vector.extract_strided_slice %598 {offsets = [0, 128], sizes = [8, 64], strides = [1, 1]} : vector<8x192xf32> to vector<8x64xf32>
    %613 = vector.extract_strided_slice %601 {offsets = [0, 128], sizes = [8, 64], strides = [1, 1]} : vector<8x192xf32> to vector<8x64xf32>
    %614 = arith.mulf %610, %613 : vector<8x64xf32>
    %615 = arith.addf %612, %614 : vector<8x64xf32>
    %616 = math.tanh %615 : vector<8x64xf32>
    %cst_181 = arith.constant 1.000000e+00 : f32
    %617 = vector.broadcast %cst_181 : f32 to vector<8x64xf32>
    %618 = arith.subf %617, %611 : vector<8x64xf32>
    %619 = arith.mulf %618, %616 : vector<8x64xf32>
    %620 = arith.mulf %611, %596 : vector<8x64xf32>
    %621 = arith.addf %619, %620 : vector<8x64xf32>
    %c40_182 = arith.constant 40 : index
    %c0_183 = arith.constant 0 : index
    %622 = vector.load %arg25[%c40_182, %c0_183] : memref<136x64xf32, #tpu.memory_space<vmem>>, vector<8x64xf32>
    tpu.vector_store %arg25[%c40_182, %c0_183], %621 {strides = array<i32>} : memref<136x64xf32, #tpu.memory_space<vmem>>, vector<8x64xf32>,
    %c48_184 = arith.constant 48 : index
    %c0_185 = arith.constant 0 : index
    %623 = vector.load %arg23[%c48_184, %c0_185] : memref<136x192xf32, #tpu.memory_space<vmem>>, vector<8x192xf32>
    %cst_186 = arith.constant dense<0.000000e+00> : vector<8x192xf32>
    %624 = tpu.matmul %621, %470, %cst_186 {dimension_numbers = #tpu.dot_dimension_numbers<[1], [0], [0], [1], [0, 0, 1, 1], [], []>} : vector<8x64xf32>, vector<64x192xf32>, vector<8x192xf32> -> vector<8x192xf32>
    %625 = vector.broadcast %471 : vector<1x192xf32> to vector<8x192xf32>
    %626 = arith.addf %624, %625 : vector<8x192xf32>
    %627 = vector.extract_strided_slice %623 {offsets = [0, 0], sizes = [8, 128], strides = [1, 1]} : vector<8x192xf32> to vector<8x128xf32>
    %628 = vector.extract_strided_slice %626 {offsets = [0, 0], sizes = [8, 128], strides = [1, 1]} : vector<8x192xf32> to vector<8x128xf32>
    %629 = arith.addf %627, %628 : vector<8x128xf32>
    %630 = arith.negf %629 : vector<8x128xf32>
    %631 = math.exp %630 : vector<8x128xf32>
    %cst_187 = arith.constant 1.000000e+00 : f32
    %632 = vector.broadcast %cst_187 : f32 to vector<8x128xf32>
    %633 = arith.addf %632, %631 : vector<8x128xf32>
    %634 = arith.divf %632, %633 : vector<8x128xf32>
    %635 = vector.extract_strided_slice %634 {offsets = [0, 0], sizes = [8, 64], strides = [1, 1]} : vector<8x128xf32> to vector<8x64xf32>
    %636 = vector.extract_strided_slice %634 {offsets = [0, 64], sizes = [8, 64], strides = [1, 1]} : vector<8x128xf32> to vector<8x64xf32>
    %637 = vector.extract_strided_slice %623 {offsets = [0, 128], sizes = [8, 64], strides = [1, 1]} : vector<8x192xf32> to vector<8x64xf32>
    %638 = vector.extract_strided_slice %626 {offsets = [0, 128], sizes = [8, 64], strides = [1, 1]} : vector<8x192xf32> to vector<8x64xf32>
    %639 = arith.mulf %635, %638 : vector<8x64xf32>
    %640 = arith.addf %637, %639 : vector<8x64xf32>
    %641 = math.tanh %640 : vector<8x64xf32>
    %cst_188 = arith.constant 1.000000e+00 : f32
    %642 = vector.broadcast %cst_188 : f32 to vector<8x64xf32>
    %643 = arith.subf %642, %636 : vector<8x64xf32>
    %644 = arith.mulf %643, %641 : vector<8x64xf32>
    %645 = arith.mulf %636, %621 : vector<8x64xf32>
    %646 = arith.addf %644, %645 : vector<8x64xf32>
    %c48_189 = arith.constant 48 : index
    %c0_190 = arith.constant 0 : index
    %647 = vector.load %arg25[%c48_189, %c0_190] : memref<136x64xf32, #tpu.memory_space<vmem>>, vector<8x64xf32>
    tpu.vector_store %arg25[%c48_189, %c0_190], %646 {strides = array<i32>} : memref<136x64xf32, #tpu.memory_space<vmem>>, vector<8x64xf32>,
    %c56_191 = arith.constant 56 : index
    %c0_192 = arith.constant 0 : index
    %648 = vector.load %arg23[%c56_191, %c0_192] : memref<136x192xf32, #tpu.memory_space<vmem>>, vector<8x192xf32>
    %cst_193 = arith.constant dense<0.000000e+00> : vector<8x192xf32>
    %649 = tpu.matmul %646, %470, %cst_193 {dimension_numbers = #tpu.dot_dimension_numbers<[1], [0], [0], [1], [0, 0, 1, 1], [], []>} : vector<8x64xf32>, vector<64x192xf32>, vector<8x192xf32> -> vector<8x192xf32>
    %650 = vector.broadcast %471 : vector<1x192xf32> to vector<8x192xf32>
    %651 = arith.addf %649, %650 : vector<8x192xf32>
    %652 = vector.extract_strided_slice %648 {offsets = [0, 0], sizes = [8, 128], strides = [1, 1]} : vector<8x192xf32> to vector<8x128xf32>
    %653 = vector.extract_strided_slice %651 {offsets = [0, 0], sizes = [8, 128], strides = [1, 1]} : vector<8x192xf32> to vector<8x128xf32>
    %654 = arith.addf %652, %653 : vector<8x128xf32>
    %655 = arith.negf %654 : vector<8x128xf32>
    %656 = math.exp %655 : vector<8x128xf32>
    %cst_194 = arith.constant 1.000000e+00 : f32
    %657 = vector.broadcast %cst_194 : f32 to vector<8x128xf32>
    %658 = arith.addf %657, %656 : vector<8x128xf32>
    %659 = arith.divf %657, %658 : vector<8x128xf32>
    %660 = vector.extract_strided_slice %659 {offsets = [0, 0], sizes = [8, 64], strides = [1, 1]} : vector<8x128xf32> to vector<8x64xf32>
    %661 = vector.extract_strided_slice %659 {offsets = [0, 64], sizes = [8, 64], strides = [1, 1]} : vector<8x128xf32> to vector<8x64xf32>
    %662 = vector.extract_strided_slice %648 {offsets = [0, 128], sizes = [8, 64], strides = [1, 1]} : vector<8x192xf32> to vector<8x64xf32>
    %663 = vector.extract_strided_slice %651 {offsets = [0, 128], sizes = [8, 64], strides = [1, 1]} : vector<8x192xf32> to vector<8x64xf32>
    %664 = arith.mulf %660, %663 : vector<8x64xf32>
    %665 = arith.addf %662, %664 : vector<8x64xf32>
    %666 = math.tanh %665 : vector<8x64xf32>
    %cst_195 = arith.constant 1.000000e+00 : f32
    %667 = vector.broadcast %cst_195 : f32 to vector<8x64xf32>
    %668 = arith.subf %667, %661 : vector<8x64xf32>
    %669 = arith.mulf %668, %666 : vector<8x64xf32>
    %670 = arith.mulf %661, %646 : vector<8x64xf32>
    %671 = arith.addf %669, %670 : vector<8x64xf32>
    %c56_196 = arith.constant 56 : index
    %c0_197 = arith.constant 0 : index
    %672 = vector.load %arg25[%c56_196, %c0_197] : memref<136x64xf32, #tpu.memory_space<vmem>>, vector<8x64xf32>
    tpu.vector_store %arg25[%c56_196, %c0_197], %671 {strides = array<i32>} : memref<136x64xf32, #tpu.memory_space<vmem>>, vector<8x64xf32>,
    %c64_198 = arith.constant 64 : index
    %c0_199 = arith.constant 0 : index
    %673 = vector.load %arg23[%c64_198, %c0_199] : memref<136x192xf32, #tpu.memory_space<vmem>>, vector<8x192xf32>
    %cst_200 = arith.constant dense<0.000000e+00> : vector<8x192xf32>
    %674 = tpu.matmul %671, %470, %cst_200 {dimension_numbers = #tpu.dot_dimension_numbers<[1], [0], [0], [1], [0, 0, 1, 1], [], []>} : vector<8x64xf32>, vector<64x192xf32>, vector<8x192xf32> -> vector<8x192xf32>
    %675 = vector.broadcast %471 : vector<1x192xf32> to vector<8x192xf32>
    %676 = arith.addf %674, %675 : vector<8x192xf32>
    %677 = vector.extract_strided_slice %673 {offsets = [0, 0], sizes = [8, 128], strides = [1, 1]} : vector<8x192xf32> to vector<8x128xf32>
    %678 = vector.extract_strided_slice %676 {offsets = [0, 0], sizes = [8, 128], strides = [1, 1]} : vector<8x192xf32> to vector<8x128xf32>
    %679 = arith.addf %677, %678 : vector<8x128xf32>
    %680 = arith.negf %679 : vector<8x128xf32>
    %681 = math.exp %680 : vector<8x128xf32>
    %cst_201 = arith.constant 1.000000e+00 : f32
    %682 = vector.broadcast %cst_201 : f32 to vector<8x128xf32>
    %683 = arith.addf %682, %681 : vector<8x128xf32>
    %684 = arith.divf %682, %683 : vector<8x128xf32>
    %685 = vector.extract_strided_slice %684 {offsets = [0, 0], sizes = [8, 64], strides = [1, 1]} : vector<8x128xf32> to vector<8x64xf32>
    %686 = vector.extract_strided_slice %684 {offsets = [0, 64], sizes = [8, 64], strides = [1, 1]} : vector<8x128xf32> to vector<8x64xf32>
    %687 = vector.extract_strided_slice %673 {offsets = [0, 128], sizes = [8, 64], strides = [1, 1]} : vector<8x192xf32> to vector<8x64xf32>
    %688 = vector.extract_strided_slice %676 {offsets = [0, 128], sizes = [8, 64], strides = [1, 1]} : vector<8x192xf32> to vector<8x64xf32>
    %689 = arith.mulf %685, %688 : vector<8x64xf32>
    %690 = arith.addf %687, %689 : vector<8x64xf32>
    %691 = math.tanh %690 : vector<8x64xf32>
    %cst_202 = arith.constant 1.000000e+00 : f32
    %692 = vector.broadcast %cst_202 : f32 to vector<8x64xf32>
    %693 = arith.subf %692, %686 : vector<8x64xf32>
    %694 = arith.mulf %693, %691 : vector<8x64xf32>
    %695 = arith.mulf %686, %671 : vector<8x64xf32>
    %696 = arith.addf %694, %695 : vector<8x64xf32>
    %c64_203 = arith.constant 64 : index
    %c0_204 = arith.constant 0 : index
    %697 = vector.load %arg25[%c64_203, %c0_204] : memref<136x64xf32, #tpu.memory_space<vmem>>, vector<8x64xf32>
    tpu.vector_store %arg25[%c64_203, %c0_204], %696 {strides = array<i32>} : memref<136x64xf32, #tpu.memory_space<vmem>>, vector<8x64xf32>,
    %c72_205 = arith.constant 72 : index
    %c0_206 = arith.constant 0 : index
    %698 = vector.load %arg23[%c72_205, %c0_206] : memref<136x192xf32, #tpu.memory_space<vmem>>, vector<8x192xf32>
    %cst_207 = arith.constant dense<0.000000e+00> : vector<8x192xf32>
    %699 = tpu.matmul %696, %470, %cst_207 {dimension_numbers = #tpu.dot_dimension_numbers<[1], [0], [0], [1], [0, 0, 1, 1], [], []>} : vector<8x64xf32>, vector<64x192xf32>, vector<8x192xf32> -> vector<8x192xf32>
    %700 = vector.broadcast %471 : vector<1x192xf32> to vector<8x192xf32>
    %701 = arith.addf %699, %700 : vector<8x192xf32>
    %702 = vector.extract_strided_slice %698 {offsets = [0, 0], sizes = [8, 128], strides = [1, 1]} : vector<8x192xf32> to vector<8x128xf32>
    %703 = vector.extract_strided_slice %701 {offsets = [0, 0], sizes = [8, 128], strides = [1, 1]} : vector<8x192xf32> to vector<8x128xf32>
    %704 = arith.addf %702, %703 : vector<8x128xf32>
    %705 = arith.negf %704 : vector<8x128xf32>
    %706 = math.exp %705 : vector<8x128xf32>
    %cst_208 = arith.constant 1.000000e+00 : f32
    %707 = vector.broadcast %cst_208 : f32 to vector<8x128xf32>
    %708 = arith.addf %707, %706 : vector<8x128xf32>
    %709 = arith.divf %707, %708 : vector<8x128xf32>
    %710 = vector.extract_strided_slice %709 {offsets = [0, 0], sizes = [8, 64], strides = [1, 1]} : vector<8x128xf32> to vector<8x64xf32>
    %711 = vector.extract_strided_slice %709 {offsets = [0, 64], sizes = [8, 64], strides = [1, 1]} : vector<8x128xf32> to vector<8x64xf32>
    %712 = vector.extract_strided_slice %698 {offsets = [0, 128], sizes = [8, 64], strides = [1, 1]} : vector<8x192xf32> to vector<8x64xf32>
    %713 = vector.extract_strided_slice %701 {offsets = [0, 128], sizes = [8, 64], strides = [1, 1]} : vector<8x192xf32> to vector<8x64xf32>
    %714 = arith.mulf %710, %713 : vector<8x64xf32>
    %715 = arith.addf %712, %714 : vector<8x64xf32>
    %716 = math.tanh %715 : vector<8x64xf32>
    %cst_209 = arith.constant 1.000000e+00 : f32
    %717 = vector.broadcast %cst_209 : f32 to vector<8x64xf32>
    %718 = arith.subf %717, %711 : vector<8x64xf32>
    %719 = arith.mulf %718, %716 : vector<8x64xf32>
    %720 = arith.mulf %711, %696 : vector<8x64xf32>
    %721 = arith.addf %719, %720 : vector<8x64xf32>
    %c72_210 = arith.constant 72 : index
    %c0_211 = arith.constant 0 : index
    %722 = vector.load %arg25[%c72_210, %c0_211] : memref<136x64xf32, #tpu.memory_space<vmem>>, vector<8x64xf32>
    tpu.vector_store %arg25[%c72_210, %c0_211], %721 {strides = array<i32>} : memref<136x64xf32, #tpu.memory_space<vmem>>, vector<8x64xf32>,
    %c80_212 = arith.constant 80 : index
    %c0_213 = arith.constant 0 : index
    %723 = vector.load %arg23[%c80_212, %c0_213] : memref<136x192xf32, #tpu.memory_space<vmem>>, vector<8x192xf32>
    %cst_214 = arith.constant dense<0.000000e+00> : vector<8x192xf32>
    %724 = tpu.matmul %721, %470, %cst_214 {dimension_numbers = #tpu.dot_dimension_numbers<[1], [0], [0], [1], [0, 0, 1, 1], [], []>} : vector<8x64xf32>, vector<64x192xf32>, vector<8x192xf32> -> vector<8x192xf32>
    %725 = vector.broadcast %471 : vector<1x192xf32> to vector<8x192xf32>
    %726 = arith.addf %724, %725 : vector<8x192xf32>
    %727 = vector.extract_strided_slice %723 {offsets = [0, 0], sizes = [8, 128], strides = [1, 1]} : vector<8x192xf32> to vector<8x128xf32>
    %728 = vector.extract_strided_slice %726 {offsets = [0, 0], sizes = [8, 128], strides = [1, 1]} : vector<8x192xf32> to vector<8x128xf32>
    %729 = arith.addf %727, %728 : vector<8x128xf32>
    %730 = arith.negf %729 : vector<8x128xf32>
    %731 = math.exp %730 : vector<8x128xf32>
    %cst_215 = arith.constant 1.000000e+00 : f32
    %732 = vector.broadcast %cst_215 : f32 to vector<8x128xf32>
    %733 = arith.addf %732, %731 : vector<8x128xf32>
    %734 = arith.divf %732, %733 : vector<8x128xf32>
    %735 = vector.extract_strided_slice %734 {offsets = [0, 0], sizes = [8, 64], strides = [1, 1]} : vector<8x128xf32> to vector<8x64xf32>
    %736 = vector.extract_strided_slice %734 {offsets = [0, 64], sizes = [8, 64], strides = [1, 1]} : vector<8x128xf32> to vector<8x64xf32>
    %737 = vector.extract_strided_slice %723 {offsets = [0, 128], sizes = [8, 64], strides = [1, 1]} : vector<8x192xf32> to vector<8x64xf32>
    %738 = vector.extract_strided_slice %726 {offsets = [0, 128], sizes = [8, 64], strides = [1, 1]} : vector<8x192xf32> to vector<8x64xf32>
    %739 = arith.mulf %735, %738 : vector<8x64xf32>
    %740 = arith.addf %737, %739 : vector<8x64xf32>
    %741 = math.tanh %740 : vector<8x64xf32>
    %cst_216 = arith.constant 1.000000e+00 : f32
    %742 = vector.broadcast %cst_216 : f32 to vector<8x64xf32>
    %743 = arith.subf %742, %736 : vector<8x64xf32>
    %744 = arith.mulf %743, %741 : vector<8x64xf32>
    %745 = arith.mulf %736, %721 : vector<8x64xf32>
    %746 = arith.addf %744, %745 : vector<8x64xf32>
    %c80_217 = arith.constant 80 : index
    %c0_218 = arith.constant 0 : index
    %747 = vector.load %arg25[%c80_217, %c0_218] : memref<136x64xf32, #tpu.memory_space<vmem>>, vector<8x64xf32>
    tpu.vector_store %arg25[%c80_217, %c0_218], %746 {strides = array<i32>} : memref<136x64xf32, #tpu.memory_space<vmem>>, vector<8x64xf32>,
    %c88_219 = arith.constant 88 : index
    %c0_220 = arith.constant 0 : index
    %748 = vector.load %arg23[%c88_219, %c0_220] : memref<136x192xf32, #tpu.memory_space<vmem>>, vector<8x192xf32>
    %cst_221 = arith.constant dense<0.000000e+00> : vector<8x192xf32>
    %749 = tpu.matmul %746, %470, %cst_221 {dimension_numbers = #tpu.dot_dimension_numbers<[1], [0], [0], [1], [0, 0, 1, 1], [], []>} : vector<8x64xf32>, vector<64x192xf32>, vector<8x192xf32> -> vector<8x192xf32>
    %750 = vector.broadcast %471 : vector<1x192xf32> to vector<8x192xf32>
    %751 = arith.addf %749, %750 : vector<8x192xf32>
    %752 = vector.extract_strided_slice %748 {offsets = [0, 0], sizes = [8, 128], strides = [1, 1]} : vector<8x192xf32> to vector<8x128xf32>
    %753 = vector.extract_strided_slice %751 {offsets = [0, 0], sizes = [8, 128], strides = [1, 1]} : vector<8x192xf32> to vector<8x128xf32>
    %754 = arith.addf %752, %753 : vector<8x128xf32>
    %755 = arith.negf %754 : vector<8x128xf32>
    %756 = math.exp %755 : vector<8x128xf32>
    %cst_222 = arith.constant 1.000000e+00 : f32
    %757 = vector.broadcast %cst_222 : f32 to vector<8x128xf32>
    %758 = arith.addf %757, %756 : vector<8x128xf32>
    %759 = arith.divf %757, %758 : vector<8x128xf32>
    %760 = vector.extract_strided_slice %759 {offsets = [0, 0], sizes = [8, 64], strides = [1, 1]} : vector<8x128xf32> to vector<8x64xf32>
    %761 = vector.extract_strided_slice %759 {offsets = [0, 64], sizes = [8, 64], strides = [1, 1]} : vector<8x128xf32> to vector<8x64xf32>
    %762 = vector.extract_strided_slice %748 {offsets = [0, 128], sizes = [8, 64], strides = [1, 1]} : vector<8x192xf32> to vector<8x64xf32>
    %763 = vector.extract_strided_slice %751 {offsets = [0, 128], sizes = [8, 64], strides = [1, 1]} : vector<8x192xf32> to vector<8x64xf32>
    %764 = arith.mulf %760, %763 : vector<8x64xf32>
    %765 = arith.addf %762, %764 : vector<8x64xf32>
    %766 = math.tanh %765 : vector<8x64xf32>
    %cst_223 = arith.constant 1.000000e+00 : f32
    %767 = vector.broadcast %cst_223 : f32 to vector<8x64xf32>
    %768 = arith.subf %767, %761 : vector<8x64xf32>
    %769 = arith.mulf %768, %766 : vector<8x64xf32>
    %770 = arith.mulf %761, %746 : vector<8x64xf32>
    %771 = arith.addf %769, %770 : vector<8x64xf32>
    %c88_224 = arith.constant 88 : index
    %c0_225 = arith.constant 0 : index
    %772 = vector.load %arg25[%c88_224, %c0_225] : memref<136x64xf32, #tpu.memory_space<vmem>>, vector<8x64xf32>
    tpu.vector_store %arg25[%c88_224, %c0_225], %771 {strides = array<i32>} : memref<136x64xf32, #tpu.memory_space<vmem>>, vector<8x64xf32>,
    %c96_226 = arith.constant 96 : index
    %c0_227 = arith.constant 0 : index
    %773 = vector.load %arg23[%c96_226, %c0_227] : memref<136x192xf32, #tpu.memory_space<vmem>>, vector<8x192xf32>
    %cst_228 = arith.constant dense<0.000000e+00> : vector<8x192xf32>
    %774 = tpu.matmul %771, %470, %cst_228 {dimension_numbers = #tpu.dot_dimension_numbers<[1], [0], [0], [1], [0, 0, 1, 1], [], []>} : vector<8x64xf32>, vector<64x192xf32>, vector<8x192xf32> -> vector<8x192xf32>
    %775 = vector.broadcast %471 : vector<1x192xf32> to vector<8x192xf32>
    %776 = arith.addf %774, %775 : vector<8x192xf32>
    %777 = vector.extract_strided_slice %773 {offsets = [0, 0], sizes = [8, 128], strides = [1, 1]} : vector<8x192xf32> to vector<8x128xf32>
    %778 = vector.extract_strided_slice %776 {offsets = [0, 0], sizes = [8, 128], strides = [1, 1]} : vector<8x192xf32> to vector<8x128xf32>
    %779 = arith.addf %777, %778 : vector<8x128xf32>
    %780 = arith.negf %779 : vector<8x128xf32>
    %781 = math.exp %780 : vector<8x128xf32>
    %cst_229 = arith.constant 1.000000e+00 : f32
    %782 = vector.broadcast %cst_229 : f32 to vector<8x128xf32>
    %783 = arith.addf %782, %781 : vector<8x128xf32>
    %784 = arith.divf %782, %783 : vector<8x128xf32>
    %785 = vector.extract_strided_slice %784 {offsets = [0, 0], sizes = [8, 64], strides = [1, 1]} : vector<8x128xf32> to vector<8x64xf32>
    %786 = vector.extract_strided_slice %784 {offsets = [0, 64], sizes = [8, 64], strides = [1, 1]} : vector<8x128xf32> to vector<8x64xf32>
    %787 = vector.extract_strided_slice %773 {offsets = [0, 128], sizes = [8, 64], strides = [1, 1]} : vector<8x192xf32> to vector<8x64xf32>
    %788 = vector.extract_strided_slice %776 {offsets = [0, 128], sizes = [8, 64], strides = [1, 1]} : vector<8x192xf32> to vector<8x64xf32>
    %789 = arith.mulf %785, %788 : vector<8x64xf32>
    %790 = arith.addf %787, %789 : vector<8x64xf32>
    %791 = math.tanh %790 : vector<8x64xf32>
    %cst_230 = arith.constant 1.000000e+00 : f32
    %792 = vector.broadcast %cst_230 : f32 to vector<8x64xf32>
    %793 = arith.subf %792, %786 : vector<8x64xf32>
    %794 = arith.mulf %793, %791 : vector<8x64xf32>
    %795 = arith.mulf %786, %771 : vector<8x64xf32>
    %796 = arith.addf %794, %795 : vector<8x64xf32>
    %c96_231 = arith.constant 96 : index
    %c0_232 = arith.constant 0 : index
    %797 = vector.load %arg25[%c96_231, %c0_232] : memref<136x64xf32, #tpu.memory_space<vmem>>, vector<8x64xf32>
    tpu.vector_store %arg25[%c96_231, %c0_232], %796 {strides = array<i32>} : memref<136x64xf32, #tpu.memory_space<vmem>>, vector<8x64xf32>,
    %c104_233 = arith.constant 104 : index
    %c0_234 = arith.constant 0 : index
    %798 = vector.load %arg23[%c104_233, %c0_234] : memref<136x192xf32, #tpu.memory_space<vmem>>, vector<8x192xf32>
    %cst_235 = arith.constant dense<0.000000e+00> : vector<8x192xf32>
    %799 = tpu.matmul %796, %470, %cst_235 {dimension_numbers = #tpu.dot_dimension_numbers<[1], [0], [0], [1], [0, 0, 1, 1], [], []>} : vector<8x64xf32>, vector<64x192xf32>, vector<8x192xf32> -> vector<8x192xf32>
    %800 = vector.broadcast %471 : vector<1x192xf32> to vector<8x192xf32>
    %801 = arith.addf %799, %800 : vector<8x192xf32>
    %802 = vector.extract_strided_slice %798 {offsets = [0, 0], sizes = [8, 128], strides = [1, 1]} : vector<8x192xf32> to vector<8x128xf32>
    %803 = vector.extract_strided_slice %801 {offsets = [0, 0], sizes = [8, 128], strides = [1, 1]} : vector<8x192xf32> to vector<8x128xf32>
    %804 = arith.addf %802, %803 : vector<8x128xf32>
    %805 = arith.negf %804 : vector<8x128xf32>
    %806 = math.exp %805 : vector<8x128xf32>
    %cst_236 = arith.constant 1.000000e+00 : f32
    %807 = vector.broadcast %cst_236 : f32 to vector<8x128xf32>
    %808 = arith.addf %807, %806 : vector<8x128xf32>
    %809 = arith.divf %807, %808 : vector<8x128xf32>
    %810 = vector.extract_strided_slice %809 {offsets = [0, 0], sizes = [8, 64], strides = [1, 1]} : vector<8x128xf32> to vector<8x64xf32>
    %811 = vector.extract_strided_slice %809 {offsets = [0, 64], sizes = [8, 64], strides = [1, 1]} : vector<8x128xf32> to vector<8x64xf32>
    %812 = vector.extract_strided_slice %798 {offsets = [0, 128], sizes = [8, 64], strides = [1, 1]} : vector<8x192xf32> to vector<8x64xf32>
    %813 = vector.extract_strided_slice %801 {offsets = [0, 128], sizes = [8, 64], strides = [1, 1]} : vector<8x192xf32> to vector<8x64xf32>
    %814 = arith.mulf %810, %813 : vector<8x64xf32>
    %815 = arith.addf %812, %814 : vector<8x64xf32>
    %816 = math.tanh %815 : vector<8x64xf32>
    %cst_237 = arith.constant 1.000000e+00 : f32
    %817 = vector.broadcast %cst_237 : f32 to vector<8x64xf32>
    %818 = arith.subf %817, %811 : vector<8x64xf32>
    %819 = arith.mulf %818, %816 : vector<8x64xf32>
    %820 = arith.mulf %811, %796 : vector<8x64xf32>
    %821 = arith.addf %819, %820 : vector<8x64xf32>
    %c104_238 = arith.constant 104 : index
    %c0_239 = arith.constant 0 : index
    %822 = vector.load %arg25[%c104_238, %c0_239] : memref<136x64xf32, #tpu.memory_space<vmem>>, vector<8x64xf32>
    tpu.vector_store %arg25[%c104_238, %c0_239], %821 {strides = array<i32>} : memref<136x64xf32, #tpu.memory_space<vmem>>, vector<8x64xf32>,
    %c112_240 = arith.constant 112 : index
    %c0_241 = arith.constant 0 : index
    %823 = vector.load %arg23[%c112_240, %c0_241] : memref<136x192xf32, #tpu.memory_space<vmem>>, vector<8x192xf32>
    %cst_242 = arith.constant dense<0.000000e+00> : vector<8x192xf32>
    %824 = tpu.matmul %821, %470, %cst_242 {dimension_numbers = #tpu.dot_dimension_numbers<[1], [0], [0], [1], [0, 0, 1, 1], [], []>} : vector<8x64xf32>, vector<64x192xf32>, vector<8x192xf32> -> vector<8x192xf32>
    %825 = vector.broadcast %471 : vector<1x192xf32> to vector<8x192xf32>
    %826 = arith.addf %824, %825 : vector<8x192xf32>
    %827 = vector.extract_strided_slice %823 {offsets = [0, 0], sizes = [8, 128], strides = [1, 1]} : vector<8x192xf32> to vector<8x128xf32>
    %828 = vector.extract_strided_slice %826 {offsets = [0, 0], sizes = [8, 128], strides = [1, 1]} : vector<8x192xf32> to vector<8x128xf32>
    %829 = arith.addf %827, %828 : vector<8x128xf32>
    %830 = arith.negf %829 : vector<8x128xf32>
    %831 = math.exp %830 : vector<8x128xf32>
    %cst_243 = arith.constant 1.000000e+00 : f32
    %832 = vector.broadcast %cst_243 : f32 to vector<8x128xf32>
    %833 = arith.addf %832, %831 : vector<8x128xf32>
    %834 = arith.divf %832, %833 : vector<8x128xf32>
    %835 = vector.extract_strided_slice %834 {offsets = [0, 0], sizes = [8, 64], strides = [1, 1]} : vector<8x128xf32> to vector<8x64xf32>
    %836 = vector.extract_strided_slice %834 {offsets = [0, 64], sizes = [8, 64], strides = [1, 1]} : vector<8x128xf32> to vector<8x64xf32>
    %837 = vector.extract_strided_slice %823 {offsets = [0, 128], sizes = [8, 64], strides = [1, 1]} : vector<8x192xf32> to vector<8x64xf32>
    %838 = vector.extract_strided_slice %826 {offsets = [0, 128], sizes = [8, 64], strides = [1, 1]} : vector<8x192xf32> to vector<8x64xf32>
    %839 = arith.mulf %835, %838 : vector<8x64xf32>
    %840 = arith.addf %837, %839 : vector<8x64xf32>
    %841 = math.tanh %840 : vector<8x64xf32>
    %cst_244 = arith.constant 1.000000e+00 : f32
    %842 = vector.broadcast %cst_244 : f32 to vector<8x64xf32>
    %843 = arith.subf %842, %836 : vector<8x64xf32>
    %844 = arith.mulf %843, %841 : vector<8x64xf32>
    %845 = arith.mulf %836, %821 : vector<8x64xf32>
    %846 = arith.addf %844, %845 : vector<8x64xf32>
    %c112_245 = arith.constant 112 : index
    %c0_246 = arith.constant 0 : index
    %847 = vector.load %arg25[%c112_245, %c0_246] : memref<136x64xf32, #tpu.memory_space<vmem>>, vector<8x64xf32>
    tpu.vector_store %arg25[%c112_245, %c0_246], %846 {strides = array<i32>} : memref<136x64xf32, #tpu.memory_space<vmem>>, vector<8x64xf32>,
    %c120_247 = arith.constant 120 : index
    %c0_248 = arith.constant 0 : index
    %848 = vector.load %arg23[%c120_247, %c0_248] : memref<136x192xf32, #tpu.memory_space<vmem>>, vector<8x192xf32>
    %cst_249 = arith.constant dense<0.000000e+00> : vector<8x192xf32>
    %849 = tpu.matmul %846, %470, %cst_249 {dimension_numbers = #tpu.dot_dimension_numbers<[1], [0], [0], [1], [0, 0, 1, 1], [], []>} : vector<8x64xf32>, vector<64x192xf32>, vector<8x192xf32> -> vector<8x192xf32>
    %850 = vector.broadcast %471 : vector<1x192xf32> to vector<8x192xf32>
    %851 = arith.addf %849, %850 : vector<8x192xf32>
    %852 = vector.extract_strided_slice %848 {offsets = [0, 0], sizes = [8, 128], strides = [1, 1]} : vector<8x192xf32> to vector<8x128xf32>
    %853 = vector.extract_strided_slice %851 {offsets = [0, 0], sizes = [8, 128], strides = [1, 1]} : vector<8x192xf32> to vector<8x128xf32>
    %854 = arith.addf %852, %853 : vector<8x128xf32>
    %855 = arith.negf %854 : vector<8x128xf32>
    %856 = math.exp %855 : vector<8x128xf32>
    %cst_250 = arith.constant 1.000000e+00 : f32
    %857 = vector.broadcast %cst_250 : f32 to vector<8x128xf32>
    %858 = arith.addf %857, %856 : vector<8x128xf32>
    %859 = arith.divf %857, %858 : vector<8x128xf32>
    %860 = vector.extract_strided_slice %859 {offsets = [0, 0], sizes = [8, 64], strides = [1, 1]} : vector<8x128xf32> to vector<8x64xf32>
    %861 = vector.extract_strided_slice %859 {offsets = [0, 64], sizes = [8, 64], strides = [1, 1]} : vector<8x128xf32> to vector<8x64xf32>
    %862 = vector.extract_strided_slice %848 {offsets = [0, 128], sizes = [8, 64], strides = [1, 1]} : vector<8x192xf32> to vector<8x64xf32>
    %863 = vector.extract_strided_slice %851 {offsets = [0, 128], sizes = [8, 64], strides = [1, 1]} : vector<8x192xf32> to vector<8x64xf32>
    %864 = arith.mulf %860, %863 : vector<8x64xf32>
    %865 = arith.addf %862, %864 : vector<8x64xf32>
    %866 = math.tanh %865 : vector<8x64xf32>
    %cst_251 = arith.constant 1.000000e+00 : f32
    %867 = vector.broadcast %cst_251 : f32 to vector<8x64xf32>
    %868 = arith.subf %867, %861 : vector<8x64xf32>
    %869 = arith.mulf %868, %866 : vector<8x64xf32>
    %870 = arith.mulf %861, %846 : vector<8x64xf32>
    %871 = arith.addf %869, %870 : vector<8x64xf32>
    %c120_252 = arith.constant 120 : index
    %c0_253 = arith.constant 0 : index
    %872 = vector.load %arg25[%c120_252, %c0_253] : memref<136x64xf32, #tpu.memory_space<vmem>>, vector<8x64xf32>
    tpu.vector_store %arg25[%c120_252, %c0_253], %871 {strides = array<i32>} : memref<136x64xf32, #tpu.memory_space<vmem>>, vector<8x64xf32>,
    %c128_254 = arith.constant 128 : index
    %c0_255 = arith.constant 0 : index
    %873 = vector.load %arg23[%c128_254, %c0_255] : memref<136x192xf32, #tpu.memory_space<vmem>>, vector<8x192xf32>
    %cst_256 = arith.constant dense<0.000000e+00> : vector<8x192xf32>
    %874 = tpu.matmul %871, %470, %cst_256 {dimension_numbers = #tpu.dot_dimension_numbers<[1], [0], [0], [1], [0, 0, 1, 1], [], []>} : vector<8x64xf32>, vector<64x192xf32>, vector<8x192xf32> -> vector<8x192xf32>
    %875 = vector.broadcast %471 : vector<1x192xf32> to vector<8x192xf32>
    %876 = arith.addf %874, %875 : vector<8x192xf32>
    %877 = vector.extract_strided_slice %873 {offsets = [0, 0], sizes = [8, 128], strides = [1, 1]} : vector<8x192xf32> to vector<8x128xf32>
    %878 = vector.extract_strided_slice %876 {offsets = [0, 0], sizes = [8, 128], strides = [1, 1]} : vector<8x192xf32> to vector<8x128xf32>
    %879 = arith.addf %877, %878 : vector<8x128xf32>
    %880 = arith.negf %879 : vector<8x128xf32>
    %881 = math.exp %880 : vector<8x128xf32>
    %cst_257 = arith.constant 1.000000e+00 : f32
    %882 = vector.broadcast %cst_257 : f32 to vector<8x128xf32>
    %883 = arith.addf %882, %881 : vector<8x128xf32>
    %884 = arith.divf %882, %883 : vector<8x128xf32>
    %885 = vector.extract_strided_slice %884 {offsets = [0, 0], sizes = [8, 64], strides = [1, 1]} : vector<8x128xf32> to vector<8x64xf32>
    %886 = vector.extract_strided_slice %884 {offsets = [0, 64], sizes = [8, 64], strides = [1, 1]} : vector<8x128xf32> to vector<8x64xf32>
    %887 = vector.extract_strided_slice %873 {offsets = [0, 128], sizes = [8, 64], strides = [1, 1]} : vector<8x192xf32> to vector<8x64xf32>
    %888 = vector.extract_strided_slice %876 {offsets = [0, 128], sizes = [8, 64], strides = [1, 1]} : vector<8x192xf32> to vector<8x64xf32>
    %889 = arith.mulf %885, %888 : vector<8x64xf32>
    %890 = arith.addf %887, %889 : vector<8x64xf32>
    %891 = math.tanh %890 : vector<8x64xf32>
    %cst_258 = arith.constant 1.000000e+00 : f32
    %892 = vector.broadcast %cst_258 : f32 to vector<8x64xf32>
    %893 = arith.subf %892, %886 : vector<8x64xf32>
    %894 = arith.mulf %893, %891 : vector<8x64xf32>
    %895 = arith.mulf %886, %871 : vector<8x64xf32>
    %896 = arith.addf %894, %895 : vector<8x64xf32>
    %c128_259 = arith.constant 128 : index
    %c0_260 = arith.constant 0 : index
    %897 = vector.load %arg25[%c128_259, %c0_260] : memref<136x64xf32, #tpu.memory_space<vmem>>, vector<8x64xf32>
    tpu.vector_store %arg25[%c128_259, %c0_260], %896 {strides = array<i32>} : memref<136x64xf32, #tpu.memory_space<vmem>>, vector<8x64xf32>,
    %c0_261 = arith.constant 0 : index
    %c0_262 = arith.constant 0 : index
    %898 = vector.load %arg25[%c0_261, %c0_262] : memref<136x64xf32, #tpu.memory_space<vmem>>, vector<136x64xf32>
    %c0_263 = arith.constant 0 : index
    %c0_264 = arith.constant 0 : index
    %899 = vector.load %arg15[%c0_263, %c0_264] : memref<64x96xf32, #tpu.memory_space<vmem>>, vector<64x96xf32>
    %cst_265 = arith.constant dense<0.000000e+00> : vector<136x96xf32>
    %900 = tpu.matmul %898, %899, %cst_265 {dimension_numbers = #tpu.dot_dimension_numbers<[1], [0], [0], [1], [0, 0, 1, 1], [], []>} : vector<136x64xf32>, vector<64x96xf32>, vector<136x96xf32> -> vector<136x96xf32>
    %c0_266 = arith.constant 0 : index
    %c0_267 = arith.constant 0 : index
    %901 = vector.load %arg16[%c0_266, %c0_267] : memref<1x96xf32, #tpu.memory_space<vmem>>, vector<1x96xf32>
    %902 = vector.broadcast %901 : vector<1x96xf32> to vector<136x96xf32>
    %903 = arith.addf %900, %902 : vector<136x96xf32>
    %cst_268 = arith.constant 0.000000e+00 : f32
    %904 = vector.broadcast %cst_268 : f32 to vector<136x96xf32>
    %905 = arith.maximumf %903, %904 : vector<136x96xf32>
    %c0_269 = arith.constant 0 : index
    %c0_270 = arith.constant 0 : index
    %906 = vector.load %arg17[%c0_269, %c0_270] : memref<96x96xf32, #tpu.memory_space<vmem>>, vector<96x96xf32>
    %cst_271 = arith.constant dense<0.000000e+00> : vector<136x96xf32>
    %907 = tpu.matmul %905, %906, %cst_271 {dimension_numbers = #tpu.dot_dimension_numbers<[1], [0], [0], [1], [0, 0, 1, 1], [], []>} : vector<136x96xf32>, vector<96x96xf32>, vector<136x96xf32> -> vector<136x96xf32>
    %c0_272 = arith.constant 0 : index
    %c0_273 = arith.constant 0 : index
    %908 = vector.load %arg18[%c0_272, %c0_273] : memref<1x96xf32, #tpu.memory_space<vmem>>, vector<1x96xf32>
    %909 = vector.broadcast %908 : vector<1x96xf32> to vector<136x96xf32>
    %910 = arith.addf %907, %909 : vector<136x96xf32>
    %cst_274 = arith.constant 0.000000e+00 : f32
    %911 = vector.broadcast %cst_274 : f32 to vector<136x96xf32>
    %912 = arith.maximumf %910, %911 : vector<136x96xf32>
    %c0_275 = arith.constant 0 : index
    %c0_276 = arith.constant 0 : index
    %913 = vector.load %arg19[%c0_275, %c0_276] : memref<96x64xf32, #tpu.memory_space<vmem>>, vector<96x64xf32>
    %cst_277 = arith.constant dense<0.000000e+00> : vector<136x64xf32>
    %914 = tpu.matmul %912, %913, %cst_277 {dimension_numbers = #tpu.dot_dimension_numbers<[1], [0], [0], [1], [0, 0, 1, 1], [], []>} : vector<136x96xf32>, vector<96x64xf32>, vector<136x64xf32> -> vector<136x64xf32>
    %c0_278 = arith.constant 0 : index
    %c0_279 = arith.constant 0 : index
    %915 = vector.load %arg20[%c0_278, %c0_279] : memref<1x64xf32, #tpu.memory_space<vmem>>, vector<1x64xf32>
    %916 = vector.broadcast %915 : vector<1x64xf32> to vector<136x64xf32>
    %917 = arith.addf %914, %916 : vector<136x64xf32>
    %918 = arith.negf %917 : vector<136x64xf32>
    %919 = math.exp %918 : vector<136x64xf32>
    %cst_280 = arith.constant 1.000000e+00 : f32
    %920 = vector.broadcast %cst_280 : f32 to vector<136x64xf32>
    %921 = arith.addf %920, %919 : vector<136x64xf32>
    %922 = arith.divf %920, %921 : vector<136x64xf32>
    %c0_281 = arith.constant 0 : index
    %c0_282 = arith.constant 0 : index
    %923 = vector.load %arg22[%c0_281, %c0_282] : memref<136x65xf32, #tpu.memory_space<vmem>>, vector<136x65xf32>
    %924 = vector.extract_strided_slice %923 {offsets = [0, 64], sizes = [136, 1], strides = [1, 1]} : vector<136x65xf32> to vector<136x1xf32>
    %925 = vector.shape_cast %924 : vector<136x1xf32> to vector<136x1xf32>
    %926 = vector.broadcast %925 : vector<136x1xf32> to vector<136x64xf32>
    %927 = vector.extract_strided_slice %923 {offsets = [0, 0], sizes = [136, 64], strides = [1, 1]} : vector<136x65xf32> to vector<136x64xf32>
    %928 = arith.mulf %927, %922 : vector<136x64xf32>
    %c0_283 = arith.constant 0 : index
    %c0_284 = arith.constant 0 : index
    %929 = vector.load %arg2[%c0_283, %c0_284] : memref<64x64xf32, #tpu.memory_space<vmem>>, vector<64x64xf32>
    %cst_285 = arith.constant dense<0.000000e+00> : vector<136x64xf32>
    %930 = tpu.matmul %928, %929, %cst_285 {dimension_numbers = #tpu.dot_dimension_numbers<[1], [0], [0], [1], [0, 0, 1, 1], [], []>} : vector<136x64xf32>, vector<64x64xf32>, vector<136x64xf32> -> vector<136x64xf32>
    %c0_286 = arith.constant 0 : index
    %c0_287 = arith.constant 0 : index
    %931 = vector.load %arg3[%c0_286, %c0_287] : memref<1x64xf32, #tpu.memory_space<vmem>>, vector<1x64xf32>
    %932 = vector.broadcast %931 : vector<1x64xf32> to vector<136x64xf32>
    %933 = arith.mulf %926, %932 : vector<136x64xf32>
    %934 = arith.addf %930, %933 : vector<136x64xf32>
    %935 = vector.extract_strided_slice %934 {offsets = [0, 0], sizes = [8, 64], strides = [1, 1]} : vector<136x64xf32> to vector<8x64xf32>
    %c0_288 = arith.constant 0 : index
    %c0_289 = arith.constant 0 : index
    %936 = vector.load %arg26[%c0_288, %c0_289] : memref<8x576xf32, #tpu.memory_space<vmem>>, vector<8x64xf32>
    tpu.vector_store %arg26[%c0_288, %c0_289], %935 {strides = array<i32>} : memref<8x576xf32, #tpu.memory_space<vmem>>, vector<8x64xf32>,
    %937 = vector.extract_strided_slice %934 {offsets = [16, 0], sizes = [8, 64], strides = [1, 1]} : vector<136x64xf32> to vector<8x64xf32>
    %c0_290 = arith.constant 0 : index
    %c64_291 = arith.constant 64 : index
    %938 = vector.load %arg26[%c0_290, %c64_291] : memref<8x576xf32, #tpu.memory_space<vmem>>, vector<8x64xf32>
    tpu.vector_store %arg26[%c0_290, %c64_291], %937 {strides = array<i32>} : memref<8x576xf32, #tpu.memory_space<vmem>>, vector<8x64xf32>,
    %939 = vector.extract_strided_slice %934 {offsets = [32, 0], sizes = [8, 64], strides = [1, 1]} : vector<136x64xf32> to vector<8x64xf32>
    %c0_292 = arith.constant 0 : index
    %c128_293 = arith.constant 128 : index
    %940 = vector.load %arg26[%c0_292, %c128_293] : memref<8x576xf32, #tpu.memory_space<vmem>>, vector<8x64xf32>
    tpu.vector_store %arg26[%c0_292, %c128_293], %939 {strides = array<i32>} : memref<8x576xf32, #tpu.memory_space<vmem>>, vector<8x64xf32>,
    %941 = vector.extract_strided_slice %934 {offsets = [48, 0], sizes = [8, 64], strides = [1, 1]} : vector<136x64xf32> to vector<8x64xf32>
    %c0_294 = arith.constant 0 : index
    %c192 = arith.constant 192 : index
    %942 = vector.load %arg26[%c0_294, %c192] : memref<8x576xf32, #tpu.memory_space<vmem>>, vector<8x64xf32>
    tpu.vector_store %arg26[%c0_294, %c192], %941 {strides = array<i32>} : memref<8x576xf32, #tpu.memory_space<vmem>>, vector<8x64xf32>,
    %943 = vector.extract_strided_slice %934 {offsets = [64, 0], sizes = [8, 64], strides = [1, 1]} : vector<136x64xf32> to vector<8x64xf32>
    %c0_295 = arith.constant 0 : index
    %c256 = arith.constant 256 : index
    %944 = vector.load %arg26[%c0_295, %c256] : memref<8x576xf32, #tpu.memory_space<vmem>>, vector<8x64xf32>
    tpu.vector_store %arg26[%c0_295, %c256], %943 {strides = array<i32>} : memref<8x576xf32, #tpu.memory_space<vmem>>, vector<8x64xf32>,
    %945 = vector.extract_strided_slice %934 {offsets = [80, 0], sizes = [8, 64], strides = [1, 1]} : vector<136x64xf32> to vector<8x64xf32>
    %c0_296 = arith.constant 0 : index
    %c320 = arith.constant 320 : index
    %946 = vector.load %arg26[%c0_296, %c320] : memref<8x576xf32, #tpu.memory_space<vmem>>, vector<8x64xf32>
    tpu.vector_store %arg26[%c0_296, %c320], %945 {strides = array<i32>} : memref<8x576xf32, #tpu.memory_space<vmem>>, vector<8x64xf32>,
    %947 = vector.extract_strided_slice %934 {offsets = [96, 0], sizes = [8, 64], strides = [1, 1]} : vector<136x64xf32> to vector<8x64xf32>
    %c0_297 = arith.constant 0 : index
    %c384 = arith.constant 384 : index
    %948 = vector.load %arg26[%c0_297, %c384] : memref<8x576xf32, #tpu.memory_space<vmem>>, vector<8x64xf32>
    tpu.vector_store %arg26[%c0_297, %c384], %947 {strides = array<i32>} : memref<8x576xf32, #tpu.memory_space<vmem>>, vector<8x64xf32>,
    %949 = vector.extract_strided_slice %934 {offsets = [112, 0], sizes = [8, 64], strides = [1, 1]} : vector<136x64xf32> to vector<8x64xf32>
    %c0_298 = arith.constant 0 : index
    %c448 = arith.constant 448 : index
    %950 = vector.load %arg26[%c0_298, %c448] : memref<8x576xf32, #tpu.memory_space<vmem>>, vector<8x64xf32>
    tpu.vector_store %arg26[%c0_298, %c448], %949 {strides = array<i32>} : memref<8x576xf32, #tpu.memory_space<vmem>>, vector<8x64xf32>,
    %951 = vector.extract_strided_slice %934 {offsets = [128, 0], sizes = [8, 64], strides = [1, 1]} : vector<136x64xf32> to vector<8x64xf32>
    %c0_299 = arith.constant 0 : index
    %c512 = arith.constant 512 : index
    %952 = vector.load %arg26[%c0_299, %c512] : memref<8x576xf32, #tpu.memory_space<vmem>>, vector<8x64xf32>
    tpu.vector_store %arg26[%c0_299, %c512], %951 {strides = array<i32>} : memref<8x576xf32, #tpu.memory_space<vmem>>, vector<8x64xf32>,
    %953 = vector.extract_strided_slice %934 {offsets = [8, 0], sizes = [8, 64], strides = [1, 1]} : vector<136x64xf32> to vector<8x64xf32>
    %c0_300 = arith.constant 0 : index
    %c0_301 = arith.constant 0 : index
    %954 = vector.load %arg27[%c0_300, %c0_301] : memref<8x512xf32, #tpu.memory_space<vmem>>, vector<8x64xf32>
    tpu.vector_store %arg27[%c0_300, %c0_301], %953 {strides = array<i32>} : memref<8x512xf32, #tpu.memory_space<vmem>>, vector<8x64xf32>,
    %955 = vector.extract_strided_slice %934 {offsets = [24, 0], sizes = [8, 64], strides = [1, 1]} : vector<136x64xf32> to vector<8x64xf32>
    %c0_302 = arith.constant 0 : index
    %c64_303 = arith.constant 64 : index
    %956 = vector.load %arg27[%c0_302, %c64_303] : memref<8x512xf32, #tpu.memory_space<vmem>>, vector<8x64xf32>
    tpu.vector_store %arg27[%c0_302, %c64_303], %955 {strides = array<i32>} : memref<8x512xf32, #tpu.memory_space<vmem>>, vector<8x64xf32>,
    %957 = vector.extract_strided_slice %934 {offsets = [40, 0], sizes = [8, 64], strides = [1, 1]} : vector<136x64xf32> to vector<8x64xf32>
    %c0_304 = arith.constant 0 : index
    %c128_305 = arith.constant 128 : index
    %958 = vector.load %arg27[%c0_304, %c128_305] : memref<8x512xf32, #tpu.memory_space<vmem>>, vector<8x64xf32>
    tpu.vector_store %arg27[%c0_304, %c128_305], %957 {strides = array<i32>} : memref<8x512xf32, #tpu.memory_space<vmem>>, vector<8x64xf32>,
    %959 = vector.extract_strided_slice %934 {offsets = [56, 0], sizes = [8, 64], strides = [1, 1]} : vector<136x64xf32> to vector<8x64xf32>
    %c0_306 = arith.constant 0 : index
    %c192_307 = arith.constant 192 : index
    %960 = vector.load %arg27[%c0_306, %c192_307] : memref<8x512xf32, #tpu.memory_space<vmem>>, vector<8x64xf32>
    tpu.vector_store %arg27[%c0_306, %c192_307], %959 {strides = array<i32>} : memref<8x512xf32, #tpu.memory_space<vmem>>, vector<8x64xf32>,
    %961 = vector.extract_strided_slice %934 {offsets = [72, 0], sizes = [8, 64], strides = [1, 1]} : vector<136x64xf32> to vector<8x64xf32>
    %c0_308 = arith.constant 0 : index
    %c256_309 = arith.constant 256 : index
    %962 = vector.load %arg27[%c0_308, %c256_309] : memref<8x512xf32, #tpu.memory_space<vmem>>, vector<8x64xf32>
    tpu.vector_store %arg27[%c0_308, %c256_309], %961 {strides = array<i32>} : memref<8x512xf32, #tpu.memory_space<vmem>>, vector<8x64xf32>,
    %963 = vector.extract_strided_slice %934 {offsets = [88, 0], sizes = [8, 64], strides = [1, 1]} : vector<136x64xf32> to vector<8x64xf32>
    %c0_310 = arith.constant 0 : index
    %c320_311 = arith.constant 320 : index
    %964 = vector.load %arg27[%c0_310, %c320_311] : memref<8x512xf32, #tpu.memory_space<vmem>>, vector<8x64xf32>
    tpu.vector_store %arg27[%c0_310, %c320_311], %963 {strides = array<i32>} : memref<8x512xf32, #tpu.memory_space<vmem>>, vector<8x64xf32>,
    %965 = vector.extract_strided_slice %934 {offsets = [104, 0], sizes = [8, 64], strides = [1, 1]} : vector<136x64xf32> to vector<8x64xf32>
    %c0_312 = arith.constant 0 : index
    %c384_313 = arith.constant 384 : index
    %966 = vector.load %arg27[%c0_312, %c384_313] : memref<8x512xf32, #tpu.memory_space<vmem>>, vector<8x64xf32>
    tpu.vector_store %arg27[%c0_312, %c384_313], %965 {strides = array<i32>} : memref<8x512xf32, #tpu.memory_space<vmem>>, vector<8x64xf32>,
    %967 = vector.extract_strided_slice %934 {offsets = [120, 0], sizes = [8, 64], strides = [1, 1]} : vector<136x64xf32> to vector<8x64xf32>
    %c0_314 = arith.constant 0 : index
    %c448_315 = arith.constant 448 : index
    %968 = vector.load %arg27[%c0_314, %c448_315] : memref<8x512xf32, #tpu.memory_space<vmem>>, vector<8x64xf32>
    tpu.vector_store %arg27[%c0_314, %c448_315], %967 {strides = array<i32>} : memref<8x512xf32, #tpu.memory_space<vmem>>, vector<8x64xf32>,
    %c0_316 = arith.constant 0 : index
    %c0_317 = arith.constant 0 : index
    %969 = vector.load %arg26[%c0_316, %c0_317] : memref<8x576xf32, #tpu.memory_space<vmem>>, vector<8x576xf32>
    %970 = vector.extract_strided_slice %969 {offsets = [0, 32], sizes = [8, 512], strides = [1, 1]} : vector<8x576xf32> to vector<8x512xf32>
    %c0_318 = arith.constant 0 : index
    %c0_319 = arith.constant 0 : index
    %971 = vector.load %arg27[%c0_318, %c0_319] : memref<8x512xf32, #tpu.memory_space<vmem>>, vector<8x512xf32>
    %972 = arith.addf %970, %971 : vector<8x512xf32>
    %c0_320 = arith.constant 0 : index
    %c0_321 = arith.constant 0 : index
    %973 = vector.load %arg4[%c0_320, %c0_321] : memref<1x512xf32, #tpu.memory_space<vmem>>, vector<1x512xf32>
    %974 = vector.broadcast %973 : vector<1x512xf32> to vector<8x512xf32>
    %975 = arith.mulf %972, %974 : vector<8x512xf32>
    %c0_322 = arith.constant 0 : index
    %c0_323 = arith.constant 0 : index
    %976 = vector.load %arg21[%c0_322, %c0_323] : memref<8x512xf32, #tpu.memory_space<vmem>>, vector<8x512xf32>
    tpu.vector_store %arg21[%c0_322, %c0_323], %975 {strides = array<i32>} : memref<8x512xf32, #tpu.memory_space<vmem>>, vector<8x512xf32>,
    return
  }
}

</mosaic_0001>

<llo_original>
// kernel: fft_model_forward.1
$region0: #{fft_model_forward.1}
  #allocation0 [shape = 'u32[]', space=smem, size = 0x4, offset = 0x4, fixed_abs, tag = 'smem constant byte address 0x4 - core index']
  #allocation1 [shape = 'u32[72,128]{1,0:T(1,128)}', space=vmem, size = 0x9000, scoped, tag = 'internal scratch']
  #allocation2 [shape = 'f32[136,65]{1,0:T(8,128)}', space=vmem, size = 0x11000, scoped, tag = 'scratch operand']
  #allocation3 [shape = 'f32[136,192]{1,0:T(8,128)}', space=vmem, size = 0x22000, scoped, tag = 'scratch operand']
  #allocation4 [shape = 'f32[136,64]{1,0:T(8,128)}', space=vmem, size = 0x11000, scoped, tag = 'scratch operand']
  #allocation5 [shape = 'f32[136,64]{1,0:T(8,128)}', space=vmem, size = 0x11000, scoped, tag = 'scratch operand']
  #allocation6 [shape = 'f32[8,576]{1,0:T(8,128)}', space=vmem, size = 0x5000, scoped, tag = 'scratch operand']
  #allocation7 [shape = 'f32[8,512]{1,0:T(8,128)}', space=vmem, size = 0x4000, scoped, tag = 'scratch operand']
  %s0 = inlined_call_operand.vmem [shape: f32[136,64], index: 0, kind: input, shape index: {}]
  %s1 = inlined_call_operand.hbm [shape: f32[64,65], index: 1, kind: input, shape index: {}]
  %s2 = inlined_call_operand.hbm [shape: f32[64,64], index: 2, kind: input, shape index: {}]
  %s3 = inlined_call_operand.vmem [shape: f32[1,64], index: 3, kind: input, shape index: {}]
  %s4 = inlined_call_operand.vmem [shape: f32[1,512], index: 4, kind: input, shape index: {}]
  %s5 = inlined_call_operand.vmem [shape: f32[32,64], index: 5, kind: input, shape index: {}]
  %s6 = inlined_call_operand.vmem [shape: f32[1,64], index: 6, kind: input, shape index: {}]
  %s7 = inlined_call_operand.vmem [shape: f32[64,192], index: 7, kind: input, shape index: {}]
  %s8 = inlined_call_operand.vmem [shape: f32[1,192], index: 8, kind: input, shape index: {}]
  %s9 = inlined_call_operand.vmem [shape: f32[64,192], index: 9, kind: input, shape index: {}]
  %s10 = inlined_call_operand.vmem [shape: f32[1,192], index: 10, kind: input, shape index: {}]
  %s11 = inlined_call_operand.vmem [shape: f32[64,192], index: 11, kind: input, shape index: {}]
  %s12 = inlined_call_operand.vmem [shape: f32[1,192], index: 12, kind: input, shape index: {}]
  %s13 = inlined_call_operand.hbm [shape: f32[64,192], index: 13, kind: input, shape index: {}]
  %s14 = inlined_call_operand.vmem [shape: f32[1,192], index: 14, kind: input, shape index: {}]
  %s15 = inlined_call_operand.hbm [shape: f32[64,96], index: 15, kind: input, shape index: {}]
  %s16 = inlined_call_operand.vmem [shape: f32[1,96], index: 16, kind: input, shape index: {}]
  %s17 = inlined_call_operand.vmem [shape: f32[96,96], index: 17, kind: input, shape index: {}]
  %s18 = inlined_call_operand.vmem [shape: f32[1,96], index: 18, kind: input, shape index: {}]
  %s19 = inlined_call_operand.vmem [shape: f32[96,64], index: 19, kind: input, shape index: {}]
  %s20 = inlined_call_operand.vmem [shape: f32[1,64], index: 20, kind: input, shape index: {}]
  %s21 = inlined_call_operand.vmem [shape: f32[8,512], index: 21, kind: output, shape index: {}]
  %s22 = sld [smem:[#allocation0]]
  $region110: #{fft_model_forward.1} parent=0
    _
  %s24 = ssub.s32 1, %s22
  %s25 = scalar_select 0, %s24, %s22
  $region1: #{fft_model_forward.1} parent=0
    #allocation8 [shape = 'u8[32768]{0}', space=vmem, size = 0x8000, scoped, tag = 'input window, operand 1, single buffered']
    #allocation9 [shape = 's32[1]{0}', space=sflag, size = 0x4, scoped, tag = 'scoped memory for fft_model_forward.1']
    #allocation10 [shape = 'u8[32768]{0}', space=vmem, size = 0x8000, scoped, tag = 'input window, operand 2, single buffered']
    #allocation11 [shape = 's32[1]{0}', space=sflag, size = 0x4, scoped, tag = 'scoped memory for fft_model_forward.1']
    #allocation12 [shape = 'u8[65536]{0}', space=vmem, size = 0x10000, scoped, tag = 'input window, operand 13, single buffered']
    #allocation13 [shape = 'u8[32768]{0}', space=vmem, size = 0x8000, scoped, tag = 'input window, operand 15, single buffered']
    #allocation14 [shape = 's32[1]{0}', space=sflag, size = 0x4, scoped, tag = 'scoped memory for fft_model_forward.1']
    %26 = vsyncpa [#allocation9], 0
    %27 = vsyncpa [#allocation11], 0
    %28 = vsyncpa [#allocation14], 0
    // Predicated region
    $region2: #{fft_model_forward.1} parent=1 // pred_check
      _
    $region3: #{fft_model_forward.1} parent=1 // pred_check_branch
      %30 = sbr.rel (0) target = $region5
    $region4: #{fft_model_forward.1} parent=1 // pred_region
      _
    $region5: #{fft_model_forward.1} parent=1 // pred_fallthru
      _
    // Predicated region
    $region6: #{fft_model_forward.1} parent=1 // pred_check
      _
    $region7: #{fft_model_forward.1} parent=1 // pred_check_branch
      %32 = sbr.rel (0) target = $region9
    $region8: #{fft_model_forward.1} parent=1 // pred_region
      %34 = vsyncadd [#allocation9], 0
      %s35 = sshll.u32 %s1, 4
      %s36 = int_to_ptr.hbm [resolvable:$true] %s35
      %s37 = sshll.u32 [#allocation8], 4
      %s38 = int_to_ptr.vmem [resolvable:$true] %s37
      %43 = dma.hbm_to_vmem [thread:$0]  %s36, 1024, %s38, [#allocation9], 128, 128, 8
    $region9: #{fft_model_forward.1} parent=1 // pred_fallthru
      _
    // Predicated region
    $region10: #{fft_model_forward.1} parent=1 // pred_check
      _
    $region11: #{fft_model_forward.1} parent=1 // pred_check_branch
      %45 = sbr.rel (0) target = $region13
    $region12: #{fft_model_forward.1} parent=1 // pred_region
      %47 = vsyncadd [#allocation11], 0
      %s48 = sshll.u32 %s2, 4
      %s49 = int_to_ptr.hbm [resolvable:$true] %s48
      %s50 = sshll.u32 [#allocation10], 4
      %s51 = int_to_ptr.vmem [resolvable:$true] %s50
      %56 = dma.hbm_to_vmem [thread:$0]  %s49, 1024, %s51, [#allocation11], 128, 128, 8
    $region13: #{fft_model_forward.1} parent=1 // pred_fallthru
      _
    // Predicated region
    $region14: #{fft_model_forward.1} parent=1 // pred_check
      _
    $region15: #{fft_model_forward.1} parent=1 // pred_check_branch
      %58 = sbr.rel (0) target = $region17
    $region16: #{fft_model_forward.1} parent=1 // pred_region
      _
    $region17: #{fft_model_forward.1} parent=1 // pred_fallthru
      _
    // Predicated region
    $region18: #{fft_model_forward.1} parent=1 // pred_check
      _
    $region19: #{fft_model_forward.1} parent=1 // pred_check_branch
      %60 = sbr.rel (0) target = $region21
    $region20: #{fft_model_forward.1} parent=1 // pred_region
      _
    $region21: #{fft_model_forward.1} parent=1 // pred_fallthru
      _
    // Predicated region
    $region22: #{fft_model_forward.1} parent=1 // pred_check
      _
    $region23: #{fft_model_forward.1} parent=1 // pred_check_branch
      %62 = sbr.rel (0) target = $region25
    $region24: #{fft_model_forward.1} parent=1 // pred_region
      _
    $region25: #{fft_model_forward.1} parent=1 // pred_fallthru
      _
    // Predicated region
    $region26: #{fft_model_forward.1} parent=1 // pred_check
      _
    $region27: #{fft_model_forward.1} parent=1 // pred_check_branch
      %64 = sbr.rel (0) target = $region29
    $region28: #{fft_model_forward.1} parent=1 // pred_region
      _
    $region29: #{fft_model_forward.1} parent=1 // pred_fallthru
      _
    // Predicated region
    $region30: #{fft_model_forward.1} parent=1 // pred_check
      _
    $region31: #{fft_model_forward.1} parent=1 // pred_check_branch
      %66 = sbr.rel (0) target = $region33
    $region32: #{fft_model_forward.1} parent=1 // pred_region
      _
    $region33: #{fft_model_forward.1} parent=1 // pred_fallthru
      _
    // Predicated region
    $region34: #{fft_model_forward.1} parent=1 // pred_check
      _
    $region35: #{fft_model_forward.1} parent=1 // pred_check_branch
      %68 = sbr.rel (0) target = $region37
    $region36: #{fft_model_forward.1} parent=1 // pred_region
      _
    $region37: #{fft_model_forward.1} parent=1 // pred_fallthru
      _
    // Predicated region
    $region38: #{fft_model_forward.1} parent=1 // pred_check
      _
    $region39: #{fft_model_forward.1} parent=1 // pred_check_branch
      %70 = sbr.rel (0) target = $region41
    $region40: #{fft_model_forward.1} parent=1 // pred_region
      _
    $region41: #{fft_model_forward.1} parent=1 // pred_fallthru
      _
    // Predicated region
    $region42: #{fft_model_forward.1} parent=1 // pred_check
      _
    $region43: #{fft_model_forward.1} parent=1 // pred_check_branch
      %72 = sbr.rel (0) target = $region45
    $region44: #{fft_model_forward.1} parent=1 // pred_region
      _
    $region45: #{fft_model_forward.1} parent=1 // pred_fallthru
      _
    // Predicated region
    $region46: #{fft_model_forward.1} parent=1 // pred_check
      _
    $region47: #{fft_model_forward.1} parent=1 // pred_check_branch
      %74 = sbr.rel (0) target = $region49
    $region48: #{fft_model_forward.1} parent=1 // pred_region
      _
    $region49: #{fft_model_forward.1} parent=1 // pred_fallthru
      _
    // Predicated region
    $region50: #{fft_model_forward.1} parent=1 // pred_check
      _
    $region51: #{fft_model_forward.1} parent=1 // pred_check_branch
      %76 = sbr.rel (0) target = $region53
    $region52: #{fft_model_forward.1} parent=1 // pred_region
      _
    $region53: #{fft_model_forward.1} parent=1 // pred_fallthru
      _
    // Predicated region
    $region54: #{fft_model_forward.1} parent=1 // pred_check
      _
    $region55: #{fft_model_forward.1} parent=1 // pred_check_branch
      %78 = sbr.rel (0) target = $region57
    $region56: #{fft_model_forward.1} parent=1 // pred_region
      %80 = vsyncadd [#allocation11], 0
      %s81 = sshll.u32 %s13, 4
      %s82 = int_to_ptr.hbm [resolvable:$true] %s81
      %s83 = sshll.u32 [#allocation12], 4
      %s84 = int_to_ptr.vmem [resolvable:$true] %s83
      %89 = dma.hbm_to_vmem [thread:$0]  %s82, 2048, %s84, [#allocation11], 256, 256, 16
    $region57: #{fft_model_forward.1} parent=1 // pred_fallthru
      _
    // Predicated region
    $region58: #{fft_model_forward.1} parent=1 // pred_check
      _
    $region59: #{fft_model_forward.1} parent=1 // pred_check_branch
      %91 = sbr.rel (0) target = $region61
    $region60: #{fft_model_forward.1} parent=1 // pred_region
      _
    $region61: #{fft_model_forward.1} parent=1 // pred_fallthru
      _
    // Predicated region
    $region62: #{fft_model_forward.1} parent=1 // pred_check
      _
    $region63: #{fft_model_forward.1} parent=1 // pred_check_branch
      %93 = sbr.rel (0) target = $region65
    $region64: #{fft_model_forward.1} parent=1 // pred_region
      %95 = vsyncadd [#allocation14], 0
      %s96 = sshll.u32 %s15, 4
      %s97 = int_to_ptr.hbm [resolvable:$true] %s96
      %s98 = sshll.u32 [#allocation13], 4
      %s99 = int_to_ptr.vmem [resolvable:$true] %s98
      %104 = dma.hbm_to_vmem [thread:$0]  %s97, 1024, %s99, [#allocation14], 128, 128, 8
    $region65: #{fft_model_forward.1} parent=1 // pred_fallthru
      _
    // Predicated region
    $region66: #{fft_model_forward.1} parent=1 // pred_check
      _
    $region67: #{fft_model_forward.1} parent=1 // pred_check_branch
      %106 = sbr.rel (0) target = $region69
    $region68: #{fft_model_forward.1} parent=1 // pred_region
      _
    $region69: #{fft_model_forward.1} parent=1 // pred_fallthru
      _
    // Predicated region
    $region70: #{fft_model_forward.1} parent=1 // pred_check
      _
    $region71: #{fft_model_forward.1} parent=1 // pred_check_branch
      %108 = sbr.rel (0) target = $region73
    $region72: #{fft_model_forward.1} parent=1 // pred_region
      _
    $region73: #{fft_model_forward.1} parent=1 // pred_fallthru
      _
    // Predicated region
    $region74: #{fft_model_forward.1} parent=1 // pred_check
      _
    $region75: #{fft_model_forward.1} parent=1 // pred_check_branch
      %110 = sbr.rel (0) target = $region77
    $region76: #{fft_model_forward.1} parent=1 // pred_region
      _
    $region77: #{fft_model_forward.1} parent=1 // pred_fallthru
      _
    // Predicated region
    $region78: #{fft_model_forward.1} parent=1 // pred_check
      _
    $region79: #{fft_model_forward.1} parent=1 // pred_check_branch
      %112 = sbr.rel (0) target = $region81
    $region80: #{fft_model_forward.1} parent=1 // pred_region
      _
    $region81: #{fft_model_forward.1} parent=1 // pred_fallthru
      _
    // Predicated region
    $region82: #{fft_model_forward.1} parent=1 // pred_check
      _
    $region83: #{fft_model_forward.1} parent=1 // pred_check_branch
      %114 = sbr.rel (0) target = $region85
    $region84: #{fft_model_forward.1} parent=1 // pred_region
      _
    $region85: #{fft_model_forward.1} parent=1 // pred_fallthru
      _
    // Predicated region
    $region86: #{fft_model_forward.1} parent=1 // pred_check
      _
    $region87: #{fft_model_forward.1} parent=1 // pred_check_branch
      %116 = sbr.rel (0) target = $region89
    $region88: #{fft_model_forward.1} parent=1 // pred_region
      %118 = dma.done [#allocation9], 1024
    $region89: #{fft_model_forward.1} parent=1 // pred_fallthru
      _
    // Predicated region
    $region90: #{fft_model_forward.1} parent=1 // pred_check
      _
    $region91: #{fft_model_forward.1} parent=1 // pred_check_branch
      %120 = sbr.rel (0) target = $region93
    $region92: #{fft_model_forward.1} parent=1 // pred_region
      %122 = dma.done [#allocation11], 1024
    $region93: #{fft_model_forward.1} parent=1 // pred_fallthru
      _
    // Predicated region
    $region94: #{fft_model_forward.1} parent=1 // pred_check
      _
    $region95: #{fft_model_forward.1} parent=1 // pred_check_branch
      %124 = sbr.rel (0) target = $region97
    $region96: #{fft_model_forward.1} parent=1 // pred_region
      %126 = dma.done [#allocation11], 2048
    $region97: #{fft_model_forward.1} parent=1 // pred_fallthru
      _
    // Predicated region
    $region98: #{fft_model_forward.1} parent=1 // pred_check
      _
    $region99: #{fft_model_forward.1} parent=1 // pred_check_branch
      %128 = sbr.rel (0) target = $region101
    $region100: #{fft_model_forward.1} parent=1 // pred_region
      %130 = dma.done [#allocation14], 1024
    $region101: #{fft_model_forward.1} parent=1 // pred_fallthru
      _
    %v131 = vld [vmem:[%s0] sm:$0xff]
    %v132 = vld [vmem:[%s0 + $0x8] sm:$0xff]
    %v133 = vld [vmem:[%s0 + $0x10] sm:$0xff]
    %v134 = vld [vmem:[%s0 + $0x18] sm:$0xff]
    %v135 = vld [vmem:[%s0 + $0x20] sm:$0xff]
    %v136 = vld [vmem:[%s0 + $0x28] sm:$0xff]
    %v137 = vld [vmem:[%s0 + $0x30] sm:$0xff]
    %v138 = vld [vmem:[%s0 + $0x38] sm:$0xff]
    %v139 = vld [vmem:[%s0 + $0x40] sm:$0xff]
    %v140 = vld [vmem:[%s0 + $0x48] sm:$0xff]
    %v141 = vld [vmem:[%s0 + $0x50] sm:$0xff]
    %v142 = vld [vmem:[%s0 + $0x58] sm:$0xff]
    %v143 = vld [vmem:[%s0 + $0x60] sm:$0xff]
    %v144 = vld [vmem:[%s0 + $0x68] sm:$0xff]
    %v145 = vld [vmem:[%s0 + $0x70] sm:$0xff]
    %v146 = vld [vmem:[%s0 + $0x78] sm:$0xff]
    %v147 = vld [vmem:[%s0 + $0x80] sm:$0xff]
    %v148 = vld [vmem:[#allocation8] sm:$0xff]
    %v149 = vld [vmem:[#allocation8 + $0x8] sm:$0xff]
    %v150 = vld [vmem:[#allocation8 + $0x10] sm:$0xff]
    %v151 = vld [vmem:[#allocation8 + $0x18] sm:$0xff]
    %v152 = vld [vmem:[#allocation8 + $0x20] sm:$0xff]
    %v153 = vld [vmem:[#allocation8 + $0x28] sm:$0xff]
    %v154 = vld [vmem:[#allocation8 + $0x30] sm:$0xff]
    %v155 = vld [vmem:[#allocation8 + $0x38] sm:$0xff]
    %vm156 = vcmask 523264
    %v158 = vsel %vm156, %v131, 0
    %v161 = vsel %vm156, %v132, 0
    %v164 = vsel %vm156, %v133, 0
    %v167 = vsel %vm156, %v134, 0
    %v170 = vsel %vm156, %v135, 0
    %v173 = vsel %vm156, %v136, 0
    %v176 = vsel %vm156, %v137, 0
    %v179 = vsel %vm156, %v138, 0
    %v182 = vsel %vm156, %v139, 0
    %v185 = vsel %vm156, %v140, 0
    %v188 = vsel %vm156, %v141, 0
    %v191 = vsel %vm156, %v142, 0
    %v194 = vsel %vm156, %v143, 0
    %v197 = vsel %vm156, %v144, 0
    %v200 = vsel %vm156, %v145, 0
    %v203 = vsel %vm156, %v146, 0
    %v206 = vsel %vm156, %v147, 0
    %208 = vmatpush.msra.mxu0 0.0
    %209 = vmatpush.msra.mxu0 0.0
    %210 = vmatpush.msra.mxu0 0.0
    %211 = vmatpush.msra.mxu0 0.0
    %212 = vmatpush.msra.mxu0 0.0
    %213 = vmatpush.msra.mxu0 0.0
    %214 = vmatpush.msra.mxu0 0.0
    %215 = vmatpush.msra.mxu0 0.0
    %216 = vmatpush.msra.mxu0 %v155
    %217 = vmatpush.msra.mxu0 %v154
    %218 = vmatpush.msra.mxu0 %v153
    %219 = vmatpush.msra.mxu0 %v152
    %220 = vmatpush.msra.mxu0 %v151
    %221 = vmatpush.msra.mxu0 %v150
    %222 = vmatpush.msra.mxu0 %v149
    %223 = vmatpush.msra.mxu0 %v148
    %224 = vmatmul.f32.gmra.mxu0 %v158
    %v225 = vpop.f32.mrf.mxu0
    %v226 = vadd.f32 0.0, %v225
    %227 = vmatmul.f32.gmra.mxu0 %v161
    %v228 = vpop.f32.mrf.mxu0
    %v229 = vadd.f32 0.0, %v228
    %230 = vmatmul.f32.gmra.mxu0 %v164
    %v231 = vpop.f32.mrf.mxu0
    %v232 = vadd.f32 0.0, %v231
    %233 = vmatmul.f32.gmra.mxu0 %v167
    %v234 = vpop.f32.mrf.mxu0
    %v235 = vadd.f32 0.0, %v234
    %236 = vmatmul.f32.gmra.mxu0 %v170
    %v237 = vpop.f32.mrf.mxu0
    %v238 = vadd.f32 0.0, %v237
    %239 = vmatmul.f32.gmra.mxu0 %v173
    %v240 = vpop.f32.mrf.mxu0
    %v241 = vadd.f32 0.0, %v240
    %242 = vmatmul.f32.gmra.mxu0 %v176
    %v243 = vpop.f32.mrf.mxu0
    %v244 = vadd.f32 0.0, %v243
    %245 = vmatmul.f32.gmra.mxu0 %v179
    %v246 = vpop.f32.mrf.mxu0
    %v247 = vadd.f32 0.0, %v246
    %248 = vmatmul.f32.gmra.mxu0 %v182
    %v249 = vpop.f32.mrf.mxu0
    %v250 = vadd.f32 0.0, %v249
    %251 = vmatmul.f32.gmra.mxu0 %v185
    %v252 = vpop.f32.mrf.mxu0
    %v253 = vadd.f32 0.0, %v252
    %254 = vmatmul.f32.gmra.mxu0 %v188
    %v255 = vpop.f32.mrf.mxu0
    %v256 = vadd.f32 0.0, %v255
    %257 = vmatmul.f32.gmra.mxu0 %v191
    %v258 = vpop.f32.mrf.mxu0
    %v259 = vadd.f32 0.0, %v258
    %260 = vmatmul.f32.gmra.mxu0 %v194
    %v261 = vpop.f32.mrf.mxu0
    %v262 = vadd.f32 0.0, %v261
    %263 = vmatmul.f32.gmra.mxu0 %v197
    %v264 = vpop.f32.mrf.mxu0
    %v265 = vadd.f32 0.0, %v264
    %266 = vmatmul.f32.gmra.mxu0 %v200
    %v267 = vpop.f32.mrf.mxu0
    %v268 = vadd.f32 0.0, %v267
    %269 = vmatmul.f32.gmra.mxu0 %v203
    %v270 = vpop.f32.mrf.mxu0
    %v271 = vadd.f32 0.0, %v270
    %272 = vmatmul.f32.gmra.mxu0 %v206
    %v273 = vpop.f32.mrf.mxu0
    %v274 = vadd.f32 0.0, %v273
    %275 = vdwg.mxu0
    %vm276 = vcmask 531456
    %277 = vst.msk [vmem:[#allocation2] sm:$0xff] %vm276, %v226
    %278 = vst.msk [vmem:[#allocation2 + $0x8] sm:$0xff] %vm276, %v229
    %279 = vst.msk [vmem:[#allocation2 + $0x10] sm:$0xff] %vm276, %v232
    %280 = vst.msk [vmem:[#allocation2 + $0x18] sm:$0xff] %vm276, %v235
    %281 = vst.msk [vmem:[#allocation2 + $0x20] sm:$0xff] %vm276, %v238
    %282 = vst.msk [vmem:[#allocation2 + $0x28] sm:$0xff] %vm276, %v241
    %283 = vst.msk [vmem:[#allocation2 + $0x30] sm:$0xff] %vm276, %v244
    %284 = vst.msk [vmem:[#allocation2 + $0x38] sm:$0xff] %vm276, %v247
    %285 = vst.msk [vmem:[#allocation2 + $0x40] sm:$0xff] %vm276, %v250
    %286 = vst.msk [vmem:[#allocation2 + $0x48] sm:$0xff] %vm276, %v253
    %287 = vst.msk [vmem:[#allocation2 + $0x50] sm:$0xff] %vm276, %v256
    %288 = vst.msk [vmem:[#allocation2 + $0x58] sm:$0xff] %vm276, %v259
    %289 = vst.msk [vmem:[#allocation2 + $0x60] sm:$0xff] %vm276, %v262
    %290 = vst.msk [vmem:[#allocation2 + $0x68] sm:$0xff] %vm276, %v265
    %291 = vst.msk [vmem:[#allocation2 + $0x70] sm:$0xff] %vm276, %v268
    %292 = vst.msk [vmem:[#allocation2 + $0x78] sm:$0xff] %vm276, %v271
    %293 = vst.msk [vmem:[#allocation2 + $0x80] sm:$0xff] %vm276, %v274
    %v294 = vmul.f32 %v226, %v226
    %v295 = vmul.f32 %v229, %v229
    %v296 = vmul.f32 %v232, %v232
    %v297 = vmul.f32 %v235, %v235
    %v298 = vmul.f32 %v238, %v238
    %v299 = vmul.f32 %v241, %v241
    %v300 = vmul.f32 %v244, %v244
    %v301 = vmul.f32 %v247, %v247
    %v302 = vmul.f32 %v250, %v250
    %v303 = vmul.f32 %v253, %v253
    %v304 = vmul.f32 %v256, %v256
    %v305 = vmul.f32 %v259, %v259
    %v306 = vmul.f32 %v262, %v262
    %v307 = vmul.f32 %v265, %v265
    %v308 = vmul.f32 %v268, %v268
    %v309 = vmul.f32 %v271, %v271
    %v310 = vmul.f32 %v274, %v274
    %328 = vrot.lane.b32.xlu0 %v294, 96
    %v329 = vpop.permute.xlu0 %328
    %330 = vrot.lane.b32.xlu0 %v295, 96
    %v331 = vpop.permute.xlu0 %330
    %332 = vrot.lane.b32.xlu0 %v296, 96
    %v333 = vpop.permute.xlu0 %332
    %334 = vrot.lane.b32.xlu0 %v297, 96
    %v335 = vpop.permute.xlu0 %334
    %336 = vrot.lane.b32.xlu0 %v298, 96
    %v337 = vpop.permute.xlu0 %336
    %338 = vrot.lane.b32.xlu0 %v299, 96
    %v339 = vpop.permute.xlu0 %338
    %340 = vrot.lane.b32.xlu0 %v300, 96
    %v341 = vpop.permute.xlu0 %340
    %342 = vrot.lane.b32.xlu0 %v301, 96
    %v343 = vpop.permute.xlu0 %342
    %344 = vrot.lane.b32.xlu0 %v302, 96
    %v345 = vpop.permute.xlu0 %344
    %346 = vrot.lane.b32.xlu0 %v303, 96
    %v347 = vpop.permute.xlu0 %346
    %348 = vrot.lane.b32.xlu0 %v304, 96
    %v349 = vpop.permute.xlu0 %348
    %350 = vrot.lane.b32.xlu0 %v305, 96
    %v351 = vpop.permute.xlu0 %350
    %352 = vrot.lane.b32.xlu0 %v306, 96
    %v353 = vpop.permute.xlu0 %352
    %354 = vrot.lane.b32.xlu0 %v307, 96
    %v355 = vpop.permute.xlu0 %354
    %356 = vrot.lane.b32.xlu0 %v308, 96
    %v357 = vpop.permute.xlu0 %356
    %358 = vrot.lane.b32.xlu0 %v309, 96
    %v359 = vpop.permute.xlu0 %358
    %360 = vrot.lane.b32.xlu0 %v310, 96
    %v361 = vpop.permute.xlu0 %360
    %v379 = vadd.f32 %v294, %v329
    %v380 = vadd.f32 %v295, %v331
    %v381 = vadd.f32 %v296, %v333
    %v382 = vadd.f32 %v297, %v335
    %v383 = vadd.f32 %v298, %v337
    %v384 = vadd.f32 %v299, %v339
    %v385 = vadd.f32 %v300, %v341
    %v386 = vadd.f32 %v301, %v343
    %v387 = vadd.f32 %v302, %v345
    %v388 = vadd.f32 %v303, %v347
    %v389 = vadd.f32 %v304, %v349
    %v390 = vadd.f32 %v305, %v351
    %v391 = vadd.f32 %v306, %v353
    %v392 = vadd.f32 %v307, %v355
    %v393 = vadd.f32 %v308, %v357
    %v394 = vadd.f32 %v309, %v359
    %v395 = vadd.f32 %v310, %v361
    %396 = vset.pattern.permute.xlu0 64
    %397 = vperm.xlu0 %396, %v294
    %v398 = vpop.permute.xlu0 %397
    %400 = vset.pattern.permute.xlu0 64
    %401 = vperm.xlu0 %400, %v295
    %v402 = vpop.permute.xlu0 %401
    %404 = vset.pattern.permute.xlu0 64
    %405 = vperm.xlu0 %404, %v296
    %v406 = vpop.permute.xlu0 %405
    %408 = vset.pattern.permute.xlu0 64
    %409 = vperm.xlu0 %408, %v297
    %v410 = vpop.permute.xlu0 %409
    %412 = vset.pattern.permute.xlu0 64
    %413 = vperm.xlu0 %412, %v298
    %v414 = vpop.permute.xlu0 %413
    %416 = vset.pattern.permute.xlu0 64
    %417 = vperm.xlu0 %416, %v299
    %v418 = vpop.permute.xlu0 %417
    %420 = vset.pattern.permute.xlu0 64
    %421 = vperm.xlu0 %420, %v300
    %v422 = vpop.permute.xlu0 %421
    %424 = vset.pattern.permute.xlu0 64
    %425 = vperm.xlu0 %424, %v301
    %v426 = vpop.permute.xlu0 %425
    %428 = vset.pattern.permute.xlu0 64
    %429 = vperm.xlu0 %428, %v302
    %v430 = vpop.permute.xlu0 %429
    %432 = vset.pattern.permute.xlu0 64
    %433 = vperm.xlu0 %432, %v303
    %v434 = vpop.permute.xlu0 %433
    %436 = vset.pattern.permute.xlu0 64
    %437 = vperm.xlu0 %436, %v304
    %v438 = vpop.permute.xlu0 %437
    %440 = vset.pattern.permute.xlu0 64
    %441 = vperm.xlu0 %440, %v305
    %v442 = vpop.permute.xlu0 %441
    %444 = vset.pattern.permute.xlu0 64
    %445 = vperm.xlu0 %444, %v306
    %v446 = vpop.permute.xlu0 %445
    %448 = vset.pattern.permute.xlu0 64
    %449 = vperm.xlu0 %448, %v307
    %v450 = vpop.permute.xlu0 %449
    %452 = vset.pattern.permute.xlu0 64
    %453 = vperm.xlu0 %452, %v308
    %v454 = vpop.permute.xlu0 %453
    %456 = vset.pattern.permute.xlu0 64
    %457 = vperm.xlu0 %456, %v309
    %v458 = vpop.permute.xlu0 %457
    %460 = vset.pattern.permute.xlu0 64
    %461 = vperm.xlu0 %460, %v310
    %v462 = vpop.permute.xlu0 %461
    %v464 = vlaneseq
    %v465 = vand.u32 %v464, 127
    %vm466 = vcmp.eq.s32.totalorder %v465, 31
    %v467 = vsel %vm466, %v398, %v379
    %v468 = vsel %vm466, %v402, %v380
    %v469 = vsel %vm466, %v406, %v381
    %v470 = vsel %vm466, %v410, %v382
    %v471 = vsel %vm466, %v414, %v383
    %v472 = vsel %vm466, %v418, %v384
    %v473 = vsel %vm466, %v422, %v385
    %v474 = vsel %vm466, %v426, %v386
    %v475 = vsel %vm466, %v430, %v387
    %v476 = vsel %vm466, %v434, %v388
    %v477 = vsel %vm466, %v438, %v389
    %v478 = vsel %vm466, %v442, %v390
    %v479 = vsel %vm466, %v446, %v391
    %v480 = vsel %vm466, %v450, %v392
    %v481 = vsel %vm466, %v454, %v393
    %v482 = vsel %vm466, %v458, %v394
    %v483 = vsel %vm466, %v462, %v395
    %v484 = vmax.f32 %v467, 1e-06
    %v485 = vmax.f32 %v468, 1e-06
    %v486 = vmax.f32 %v469, 1e-06
    %v487 = vmax.f32 %v470, 1e-06
    %v488 = vmax.f32 %v471, 1e-06
    %v489 = vmax.f32 %v472, 1e-06
    %v490 = vmax.f32 %v473, 1e-06
    %v491 = vmax.f32 %v474, 1e-06
    %v492 = vmax.f32 %v475, 1e-06
    %v493 = vmax.f32 %v476, 1e-06
    %v494 = vmax.f32 %v477, 1e-06
    %v495 = vmax.f32 %v478, 1e-06
    %v496 = vmax.f32 %v479, 1e-06
    %v497 = vmax.f32 %v480, 1e-06
    %v498 = vmax.f32 %v481, 1e-06
    %v499 = vmax.f32 %v482, 1e-06
    %v500 = vmax.f32 %v483, 1e-06
    %v501 = vlog2.pop %v484
    %v502 = vmul.f32 %v501, 0.6931472
    %v503 = vlog2.pop %v485
    %v504 = vmul.f32 %v503, 0.6931472
    %v505 = vlog2.pop %v486
    %v506 = vmul.f32 %v505, 0.6931472
    %v507 = vlog2.pop %v487
    %v508 = vmul.f32 %v507, 0.6931472
    %v509 = vlog2.pop %v488
    %v510 = vmul.f32 %v509, 0.6931472
    %v511 = vlog2.pop %v489
    %v512 = vmul.f32 %v511, 0.6931472
    %v513 = vlog2.pop %v490
    %v514 = vmul.f32 %v513, 0.6931472
    %v515 = vlog2.pop %v491
    %v516 = vmul.f32 %v515, 0.6931472
    %v517 = vlog2.pop %v492
    %v518 = vmul.f32 %v517, 0.6931472
    %v519 = vlog2.pop %v493
    %v520 = vmul.f32 %v519, 0.6931472
    %v521 = vlog2.pop %v494
    %v522 = vmul.f32 %v521, 0.6931472
    %v523 = vlog2.pop %v495
    %v524 = vmul.f32 %v523, 0.6931472
    %v525 = vlog2.pop %v496
    %v526 = vmul.f32 %v525, 0.6931472
    %v527 = vlog2.pop %v497
    %v528 = vmul.f32 %v527, 0.6931472
    %v529 = vlog2.pop %v498
    %v530 = vmul.f32 %v529, 0.6931472
    %v531 = vlog2.pop %v499
    %v532 = vmul.f32 %v531, 0.6931472
    %v533 = vlog2.pop %v500
    %v534 = vmul.f32 %v533, 0.6931472
    %v535 = vmul.f32 %v502, 0.4342945
    %v536 = vmul.f32 %v504, 0.4342945
    %v537 = vmul.f32 %v506, 0.4342945
    %v538 = vmul.f32 %v508, 0.4342945
    %v539 = vmul.f32 %v510, 0.4342945
    %v540 = vmul.f32 %v512, 0.4342945
    %v541 = vmul.f32 %v514, 0.4342945
    %v542 = vmul.f32 %v516, 0.4342945
    %v543 = vmul.f32 %v518, 0.4342945
    %v544 = vmul.f32 %v520, 0.4342945
    %v545 = vmul.f32 %v522, 0.4342945
    %v546 = vmul.f32 %v524, 0.4342945
    %v547 = vmul.f32 %v526, 0.4342945
    %v548 = vmul.f32 %v528, 0.4342945
    %v549 = vmul.f32 %v530, 0.4342945
    %v550 = vmul.f32 %v532, 0.4342945
    %v551 = vmul.f32 %v534, 0.4342945
    %v552 = vld [vmem:[%s5] sm:$0xff]
    %v553 = vld [vmem:[%s5 + $0x8] sm:$0xff]
    %v554 = vld [vmem:[%s5 + $0x10] sm:$0xff]
    %v555 = vld [vmem:[%s5 + $0x18] sm:$0xff]
    %v556 = vld [vmem:[%s6] sm:$0x1]
    %v558 = vperm.slane %v556, 0
    %vm560 = vcmask 261120
    %v562 = vsel %vm560, %v535, 0
    %v565 = vsel %vm560, %v536, 0
    %v568 = vsel %vm560, %v537, 0
    %v571 = vsel %vm560, %v538, 0
    %v574 = vsel %vm560, %v539, 0
    %v577 = vsel %vm560, %v540, 0
    %v580 = vsel %vm560, %v541, 0
    %v583 = vsel %vm560, %v542, 0
    %v586 = vsel %vm560, %v543, 0
    %v589 = vsel %vm560, %v544, 0
    %v592 = vsel %vm560, %v545, 0
    %v595 = vsel %vm560, %v546, 0
    %v598 = vsel %vm560, %v547, 0
    %v601 = vsel %vm560, %v548, 0
    %v604 = vsel %vm560, %v549, 0
    %v607 = vsel %vm560, %v550, 0
    %v610 = vsel %vm560, %v551, 0
    %612 = vmatpush.msra.mxu0 0.0
    %613 = vmatpush.msra.mxu0 0.0
    %614 = vmatpush.msra.mxu0 0.0
    %615 = vmatpush.msra.mxu0 0.0
    %616 = vmatpush.msra.mxu0 0.0
    %617 = vmatpush.msra.mxu0 0.0
    %618 = vmatpush.msra.mxu0 0.0
    %619 = vmatpush.msra.mxu0 0.0
    %620 = vmatpush.msra.mxu0 0.0
    %621 = vmatpush.msra.mxu0 0.0
    %622 = vmatpush.msra.mxu0 0.0
    %623 = vmatpush.msra.mxu0 0.0
    %624 = vmatpush.msra.mxu0 %v555
    %625 = vmatpush.msra.mxu0 %v554
    %626 = vmatpush.msra.mxu0 %v553
    %627 = vmatpush.msra.mxu0 %v552
    %628 = vmatmul.f32.gmra.mxu0 %v562
    %v629 = vpop.f32.mrf.mxu0
    %v630 = vadd.f32 %v558, %v629
    %631 = vmatmul.f32.gmra.mxu0 %v565
    %v632 = vpop.f32.mrf.mxu0
    %v633 = vadd.f32 %v558, %v632
    %634 = vmatmul.f32.gmra.mxu0 %v568
    %v635 = vpop.f32.mrf.mxu0
    %v636 = vadd.f32 %v558, %v635
    %637 = vmatmul.f32.gmra.mxu0 %v571
    %v638 = vpop.f32.mrf.mxu0
    %v639 = vadd.f32 %v558, %v638
    %640 = vmatmul.f32.gmra.mxu0 %v574
    %v641 = vpop.f32.mrf.mxu0
    %v642 = vadd.f32 %v558, %v641
    %643 = vmatmul.f32.gmra.mxu0 %v577
    %v644 = vpop.f32.mrf.mxu0
    %v645 = vadd.f32 %v558, %v644
    %646 = vmatmul.f32.gmra.mxu0 %v580
    %v647 = vpop.f32.mrf.mxu0
    %v648 = vadd.f32 %v558, %v647
    %649 = vmatmul.f32.gmra.mxu0 %v583
    %v650 = vpop.f32.mrf.mxu0
    %v651 = vadd.f32 %v558, %v650
    %652 = vmatmul.f32.gmra.mxu0 %v586
    %v653 = vpop.f32.mrf.mxu0
    %v654 = vadd.f32 %v558, %v653
    %655 = vmatmul.f32.gmra.mxu0 %v589
    %v656 = vpop.f32.mrf.mxu0
    %v657 = vadd.f32 %v558, %v656
    %658 = vmatmul.f32.gmra.mxu0 %v592
    %v659 = vpop.f32.mrf.mxu0
    %v660 = vadd.f32 %v558, %v659
    %661 = vmatmul.f32.gmra.mxu0 %v595
    %v662 = vpop.f32.mrf.mxu0
    %v663 = vadd.f32 %v558, %v662
    %664 = vmatmul.f32.gmra.mxu0 %v598
    %v665 = vpop.f32.mrf.mxu0
    %v666 = vadd.f32 %v558, %v665
    %667 = vmatmul.f32.gmra.mxu0 %v601
    %v668 = vpop.f32.mrf.mxu0
    %v669 = vadd.f32 %v558, %v668
    %670 = vmatmul.f32.gmra.mxu0 %v604
    %v671 = vpop.f32.mrf.mxu0
    %v672 = vadd.f32 %v558, %v671
    %673 = vmatmul.f32.gmra.mxu0 %v607
    %v674 = vpop.f32.mrf.mxu0
    %v675 = vadd.f32 %v558, %v674
    %676 = vmatmul.f32.gmra.mxu0 %v610
    %v677 = vpop.f32.mrf.mxu0
    %v678 = vadd.f32 %v558, %v677
    %679 = vdwg.mxu0
    %v680 = vmax.f32 %v630, 0.0
    %v681 = vmax.f32 %v633, 0.0
    %v682 = vmax.f32 %v636, 0.0
    %v683 = vmax.f32 %v639, 0.0
    %v684 = vmax.f32 %v642, 0.0
    %v685 = vmax.f32 %v645, 0.0
    %v686 = vmax.f32 %v648, 0.0
    %v687 = vmax.f32 %v651, 0.0
    %v688 = vmax.f32 %v654, 0.0
    %v689 = vmax.f32 %v657, 0.0
    %v690 = vmax.f32 %v660, 0.0
    %v691 = vmax.f32 %v663, 0.0
    %v692 = vmax.f32 %v666, 0.0
    %v693 = vmax.f32 %v669, 0.0
    %v694 = vmax.f32 %v672, 0.0
    %v695 = vmax.f32 %v675, 0.0
    %v696 = vmax.f32 %v678, 0.0
    %v697 = vld [vmem:[%s7] sm:$0xff]
    %v698 = vld [vmem:[%s7 + $0x8] sm:$0xff]
    %v699 = vld [vmem:[%s7 + $0x10] sm:$0xff]
    %v700 = vld [vmem:[%s7 + $0x18] sm:$0xff]
    %v701 = vld [vmem:[%s7 + $0x20] sm:$0xff]
    %v702 = vld [vmem:[%s7 + $0x28] sm:$0xff]
    %v703 = vld [vmem:[%s7 + $0x30] sm:$0xff]
    %v704 = vld [vmem:[%s7 + $0x38] sm:$0xff]
    %v705 = vld [vmem:[%s7 + $0x40] sm:$0xff]
    %v706 = vld [vmem:[%s7 + $0x48] sm:$0xff]
    %v707 = vld [vmem:[%s7 + $0x50] sm:$0xff]
    %v708 = vld [vmem:[%s7 + $0x58] sm:$0xff]
    %v709 = vld [vmem:[%s7 + $0x60] sm:$0xff]
    %v710 = vld [vmem:[%s7 + $0x68] sm:$0xff]
    %v711 = vld [vmem:[%s7 + $0x70] sm:$0xff]
    %v712 = vld [vmem:[%s7 + $0x78] sm:$0xff]
    %v713 = vld [vmem:[%s8] sm:$0x3]
    %v715 = vperm.slane %v713, 0
    %v716 = vperm.slane %v713, 1
    %v720 = vsel %vm156, %v680, 0
    %v723 = vsel %vm156, %v681, 0
    %v726 = vsel %vm156, %v682, 0
    %v729 = vsel %vm156, %v683, 0
    %v732 = vsel %vm156, %v684, 0
    %v735 = vsel %vm156, %v685, 0
    %v738 = vsel %vm156, %v686, 0
    %v741 = vsel %vm156, %v687, 0
    %v744 = vsel %vm156, %v688, 0
    %v747 = vsel %vm156, %v689, 0
    %v750 = vsel %vm156, %v690, 0
    %v753 = vsel %vm156, %v691, 0
    %v756 = vsel %vm156, %v692, 0
    %v759 = vsel %vm156, %v693, 0
    %v762 = vsel %vm156, %v694, 0
    %v765 = vsel %vm156, %v695, 0
    %v768 = vsel %vm156, %v696, 0
    %770 = vmatpush.msra.mxu0 0.0
    %771 = vmatpush.msra.mxu0 0.0
    %772 = vmatpush.msra.mxu0 0.0
    %773 = vmatpush.msra.mxu0 0.0
    %774 = vmatpush.msra.mxu0 0.0
    %775 = vmatpush.msra.mxu0 0.0
    %776 = vmatpush.msra.mxu0 0.0
    %777 = vmatpush.msra.mxu0 0.0
    %778 = vmatpush.msra.mxu0 %v711
    %779 = vmatpush.msra.mxu0 %v709
    %780 = vmatpush.msra.mxu0 %v707
    %781 = vmatpush.msra.mxu0 %v705
    %782 = vmatpush.msra.mxu0 %v703
    %783 = vmatpush.msra.mxu0 %v701
    %784 = vmatpush.msra.mxu0 %v699
    %785 = vmatpush.msra.mxu0 %v697
    %786 = vmatmul.f32.gmra.mxu0 %v720
    %v787 = vpop.f32.mrf.mxu0
    %v788 = vadd.f32 %v715, %v787
    %789 = vmatmul.f32.gmra.mxu0 %v723
    %v790 = vpop.f32.mrf.mxu0
    %v791 = vadd.f32 %v715, %v790
    %792 = vmatmul.f32.gmra.mxu0 %v726
    %v793 = vpop.f32.mrf.mxu0
    %v794 = vadd.f32 %v715, %v793
    %795 = vmatmul.f32.gmra.mxu0 %v729
    %v796 = vpop.f32.mrf.mxu0
    %v797 = vadd.f32 %v715, %v796
    %798 = vmatmul.f32.gmra.mxu0 %v732
    %v799 = vpop.f32.mrf.mxu0
    %v800 = vadd.f32 %v715, %v799
    %801 = vmatmul.f32.gmra.mxu0 %v735
    %v802 = vpop.f32.mrf.mxu0
    %v803 = vadd.f32 %v715, %v802
    %804 = vmatmul.f32.gmra.mxu0 %v738
    %v805 = vpop.f32.mrf.mxu0
    %v806 = vadd.f32 %v715, %v805
    %807 = vmatmul.f32.gmra.mxu0 %v741
    %v808 = vpop.f32.mrf.mxu0
    %v809 = vadd.f32 %v715, %v808
    %810 = vmatmul.f32.gmra.mxu0 %v744
    %v811 = vpop.f32.mrf.mxu0
    %v812 = vadd.f32 %v715, %v811
    %813 = vmatmul.f32.gmra.mxu0 %v747
    %v814 = vpop.f32.mrf.mxu0
    %v815 = vadd.f32 %v715, %v814
    %816 = vmatmul.f32.gmra.mxu0 %v750
    %v817 = vpop.f32.mrf.mxu0
    %v818 = vadd.f32 %v715, %v817
    %819 = vmatmul.f32.gmra.mxu0 %v753
    %v820 = vpop.f32.mrf.mxu0
    %v821 = vadd.f32 %v715, %v820
    %822 = vmatmul.f32.gmra.mxu0 %v756
    %v823 = vpop.f32.mrf.mxu0
    %v824 = vadd.f32 %v715, %v823
    %825 = vmatmul.f32.gmra.mxu0 %v759
    %v826 = vpop.f32.mrf.mxu0
    %v827 = vadd.f32 %v715, %v826
    %828 = vmatmul.f32.gmra.mxu0 %v762
    %v829 = vpop.f32.mrf.mxu0
    %v830 = vadd.f32 %v715, %v829
    %831 = vmatmul.f32.gmra.mxu0 %v765
    %v832 = vpop.f32.mrf.mxu0
    %v833 = vadd.f32 %v715, %v832
    %834 = vmatmul.f32.gmra.mxu0 %v768
    %v835 = vpop.f32.mrf.mxu0
    %v836 = vadd.f32 %v715, %v835
    %837 = vdwg.mxu0
    %838 = vmatpush.msra.mxu0 0.0
    %839 = vmatpush.msra.mxu0 0.0
    %840 = vmatpush.msra.mxu0 0.0
    %841 = vmatpush.msra.mxu0 0.0
    %842 = vmatpush.msra.mxu0 0.0
    %843 = vmatpush.msra.mxu0 0.0
    %844 = vmatpush.msra.mxu0 0.0
    %845 = vmatpush.msra.mxu0 0.0
    %846 = vmatpush.msra.mxu0 %v712
    %847 = vmatpush.msra.mxu0 %v710
    %848 = vmatpush.msra.mxu0 %v708
    %849 = vmatpush.msra.mxu0 %v706
    %850 = vmatpush.msra.mxu0 %v704
    %851 = vmatpush.msra.mxu0 %v702
    %852 = vmatpush.msra.mxu0 %v700
    %853 = vmatpush.msra.mxu0 %v698
    %854 = vmatmul.f32.gmra.mxu0 %v720
    %v855 = vpop.f32.mrf.mxu0
    %v856 = vadd.f32 %v716, %v855
    %857 = vmatmul.f32.gmra.mxu0 %v723
    %v858 = vpop.f32.mrf.mxu0
    %v859 = vadd.f32 %v716, %v858
    %860 = vmatmul.f32.gmra.mxu0 %v726
    %v861 = vpop.f32.mrf.mxu0
    %v862 = vadd.f32 %v716, %v861
    %863 = vmatmul.f32.gmra.mxu0 %v729
    %v864 = vpop.f32.mrf.mxu0
    %v865 = vadd.f32 %v716, %v864
    %866 = vmatmul.f32.gmra.mxu0 %v732
    %v867 = vpop.f32.mrf.mxu0
    %v868 = vadd.f32 %v716, %v867
    %869 = vmatmul.f32.gmra.mxu0 %v735
    %v870 = vpop.f32.mrf.mxu0
    %v871 = vadd.f32 %v716, %v870
    %872 = vmatmul.f32.gmra.mxu0 %v738
    %v873 = vpop.f32.mrf.mxu0
    %v874 = vadd.f32 %v716, %v873
    %875 = vmatmul.f32.gmra.mxu0 %v741
    %v876 = vpop.f32.mrf.mxu0
    %v877 = vadd.f32 %v716, %v876
    %878 = vmatmul.f32.gmra.mxu0 %v744
    %v879 = vpop.f32.mrf.mxu0
    %v880 = vadd.f32 %v716, %v879
    %881 = vmatmul.f32.gmra.mxu0 %v747
    %v882 = vpop.f32.mrf.mxu0
    %v883 = vadd.f32 %v716, %v882
    %884 = vmatmul.f32.gmra.mxu0 %v750
    %v885 = vpop.f32.mrf.mxu0
    %v886 = vadd.f32 %v716, %v885
    %887 = vmatmul.f32.gmra.mxu0 %v753
    %v888 = vpop.f32.mrf.mxu0
    %v889 = vadd.f32 %v716, %v888
    %890 = vmatmul.f32.gmra.mxu0 %v756
    %v891 = vpop.f32.mrf.mxu0
    %v892 = vadd.f32 %v716, %v891
    %893 = vmatmul.f32.gmra.mxu0 %v759
    %v894 = vpop.f32.mrf.mxu0
    %v895 = vadd.f32 %v716, %v894
    %896 = vmatmul.f32.gmra.mxu0 %v762
    %v897 = vpop.f32.mrf.mxu0
    %v898 = vadd.f32 %v716, %v897
    %899 = vmatmul.f32.gmra.mxu0 %v765
    %v900 = vpop.f32.mrf.mxu0
    %v901 = vadd.f32 %v716, %v900
    %902 = vmatmul.f32.gmra.mxu0 %v768
    %v903 = vpop.f32.mrf.mxu0
    %v904 = vadd.f32 %v716, %v903
    %905 = vdwg.mxu0
    %906 = vst [vmem:[#allocation3] sm:$0xff] %v788
    %907 = vst.msk [vmem:[#allocation3 + $0x8] sm:$0xff] %vm156, %v856
    %908 = vst [vmem:[#allocation3 + $0x10] sm:$0xff] %v791
    %909 = vst.msk [vmem:[#allocation3 + $0x18] sm:$0xff] %vm156, %v859
    %910 = vst [vmem:[#allocation3 + $0x20] sm:$0xff] %v794
    %911 = vst.msk [vmem:[#allocation3 + $0x28] sm:$0xff] %vm156, %v862
    %912 = vst [vmem:[#allocation3 + $0x30] sm:$0xff] %v797
    %913 = vst.msk [vmem:[#allocation3 + $0x38] sm:$0xff] %vm156, %v865
    %914 = vst [vmem:[#allocation3 + $0x40] sm:$0xff] %v800
    %915 = vst.msk [vmem:[#allocation3 + $0x48] sm:$0xff] %vm156, %v868
    %916 = vst [vmem:[#allocation3 + $0x50] sm:$0xff] %v803
    %917 = vst.msk [vmem:[#allocation3 + $0x58] sm:$0xff] %vm156, %v871
    %918 = vst [vmem:[#allocation3 + $0x60] sm:$0xff] %v806
    %919 = vst.msk [vmem:[#allocation3 + $0x68] sm:$0xff] %vm156, %v874
    %920 = vst [vmem:[#allocation3 + $0x70] sm:$0xff] %v809
    %921 = vst.msk [vmem:[#allocation3 + $0x78] sm:$0xff] %vm156, %v877
    %922 = vst [vmem:[#allocation3 + $0x80] sm:$0xff] %v812
    %923 = vst.msk [vmem:[#allocation3 + $0x88] sm:$0xff] %vm156, %v880
    %924 = vst [vmem:[#allocation3 + $0x90] sm:$0xff] %v815
    %925 = vst.msk [vmem:[#allocation3 + $0x98] sm:$0xff] %vm156, %v883
    %926 = vst [vmem:[#allocation3 + $0xa0] sm:$0xff] %v818
    %927 = vst.msk [vmem:[#allocation3 + $0xa8] sm:$0xff] %vm156, %v886
    %928 = vst [vmem:[#allocation3 + $0xb0] sm:$0xff] %v821
    %929 = vst.msk [vmem:[#allocation3 + $0xb8] sm:$0xff] %vm156, %v889
    %930 = vst [vmem:[#allocation3 + $0xc0] sm:$0xff] %v824
    %931 = vst.msk [vmem:[#allocation3 + $0xc8] sm:$0xff] %vm156, %v892
    %932 = vst [vmem:[#allocation3 + $0xd0] sm:$0xff] %v827
    %933 = vst.msk [vmem:[#allocation3 + $0xd8] sm:$0xff] %vm156, %v895
    %934 = vst [vmem:[#allocation3 + $0xe0] sm:$0xff] %v830
    %935 = vst.msk [vmem:[#allocation3 + $0xe8] sm:$0xff] %vm156, %v898
    %936 = vst [vmem:[#allocation3 + $0xf0] sm:$0xff] %v833
    %937 = vst.msk [vmem:[#allocation3 + $0xf8] sm:$0xff] %vm156, %v901
    %938 = vst [vmem:[#allocation3 + $0x100] sm:$0xff] %v836
    %939 = vst.msk [vmem:[#allocation3 + $0x108] sm:$0xff] %vm156, %v904
    %v940 = vld [vmem:[%s9] sm:$0xff]
    %v941 = vld [vmem:[%s9 + $0x8] sm:$0xff]
    %v942 = vld [vmem:[%s9 + $0x10] sm:$0xff]
    %v943 = vld [vmem:[%s9 + $0x18] sm:$0xff]
    %v944 = vld [vmem:[%s9 + $0x20] sm:$0xff]
    %v945 = vld [vmem:[%s9 + $0x28] sm:$0xff]
    %v946 = vld [vmem:[%s9 + $0x30] sm:$0xff]
    %v947 = vld [vmem:[%s9 + $0x38] sm:$0xff]
    %v948 = vld [vmem:[%s9 + $0x40] sm:$0xff]
    %v949 = vld [vmem:[%s9 + $0x48] sm:$0xff]
    %v950 = vld [vmem:[%s9 + $0x50] sm:$0xff]
    %v951 = vld [vmem:[%s9 + $0x58] sm:$0xff]
    %v952 = vld [vmem:[%s9 + $0x60] sm:$0xff]
    %v953 = vld [vmem:[%s9 + $0x68] sm:$0xff]
    %v954 = vld [vmem:[%s9 + $0x70] sm:$0xff]
    %v955 = vld [vmem:[%s9 + $0x78] sm:$0xff]
    %v956 = vld [vmem:[%s10] sm:$0x3]
    %v957 = vld [vmem:[#allocation3] sm:$0xff]
    %v958 = vld [vmem:[#allocation3 + $0x8] sm:$0xff]
    %v960 = vperm.slane %v956, 0
    %v961 = vperm.slane %v956, 1
    %v965 = vsel %vm156, 0.0, 0
    %967 = vmatpush.msra.mxu0 0.0
    %968 = vmatpush.msra.mxu0 0.0
    %969 = vmatpush.msra.mxu0 0.0
    %970 = vmatpush.msra.mxu0 0.0
    %971 = vmatpush.msra.mxu0 0.0
    %972 = vmatpush.msra.mxu0 0.0
    %973 = vmatpush.msra.mxu0 0.0
    %974 = vmatpush.msra.mxu0 0.0
    %975 = vmatpush.msra.mxu0 %v954
    %976 = vmatpush.msra.mxu0 %v952
    %977 = vmatpush.msra.mxu0 %v950
    %978 = vmatpush.msra.mxu0 %v948
    %979 = vmatpush.msra.mxu0 %v946
    %980 = vmatpush.msra.mxu0 %v944
    %981 = vmatpush.msra.mxu0 %v942
    %982 = vmatpush.msra.mxu0 %v940
    %983 = vmatmul.f32.gmra.mxu0 %v965
    %v984 = vpop.f32.mrf.mxu0
    %v985 = vadd.f32 %v960, %v984
    %986 = vdwg.mxu0
    %987 = vmatpush.msra.mxu0 0.0
    %988 = vmatpush.msra.mxu0 0.0
    %989 = vmatpush.msra.mxu0 0.0
    %990 = vmatpush.msra.mxu0 0.0
    %991 = vmatpush.msra.mxu0 0.0
    %992 = vmatpush.msra.mxu0 0.0
    %993 = vmatpush.msra.mxu0 0.0
    %994 = vmatpush.msra.mxu0 0.0
    %995 = vmatpush.msra.mxu0 %v955
    %996 = vmatpush.msra.mxu0 %v953
    %997 = vmatpush.msra.mxu0 %v951
    %998 = vmatpush.msra.mxu0 %v949
    %999 = vmatpush.msra.mxu0 %v947
    %1000 = vmatpush.msra.mxu0 %v945
    %1001 = vmatpush.msra.mxu0 %v943
    %1002 = vmatpush.msra.mxu0 %v941
    %1003 = vmatmul.f32.gmra.mxu0 %v965
    %v1004 = vpop.f32.mrf.mxu0
    %v1005 = vadd.f32 %v961, %v1004
    %1006 = vdwg.mxu0
    %v1007 = vadd.f32 %v957, %v985
    %v1008 = vxor.u32 %v1007, 2147483648
    %v1009 = vmul.f32 %v1008, 1.442695
    %v1010 = vpow.pop %v1009
    %v1011 = vadd.f32 %v1010, 1.0
    %v1012 = vrcp.pop %v1011
    %v1013 = vmul.f32 %v1011, %v1012
    %v1014 = vsub.f32 1.0, %v1013
    %v1015 = vmul.f32 %v1012, %v1014
    %v1016 = vadd.f32 %v1012, %v1015
    %vm1017 = vweird.f32 %v1011
    %vm1018 = vweird.f32 %v1012
    %vm1019 = vmor %vm1017, %vm1018
    %v1020 = vsel %vm1019, %v1012, %v1016
    %v1021 = vand.u32 2147483647, %v1011
    %vm1022 = vcmp.eq.f32.partialorder %v1021, 8.507059e+37
    %v1023 = vand.u32 %v1011, 2147483648
    %v1024 = vor.u32 1.1754944e-38, %v1023
    %v1025 = vsel %vm1022, %v1024, %v1020
    %v1026 = vmul.f32 1.0, %v1025
    %v1027 = vmul.f32 %v1026, %v1005
    %v1028 = vadd.f32 %v958, %v1027
    %v1029 = vtanh.pop %v1028
    %v1030 = vsub.f32 1.0, %v1026
    %1032 = vrot.lane.b32.xlu0 %v1029, 64
    %v1033 = vpop.permute.xlu0 %1032
    %v1035 = vmul.f32 %v1030, %v1033
    %v1036 = vmul.f32 %v1026, 0.0
    %v1037 = vadd.f32 %v1035, %v1036
    %1039 = vrot.lane.b32.xlu0 %v1037, 64
    %v1040 = vpop.permute.xlu0 %1039
    %1042 = vst.msk [vmem:[#allocation4] sm:$0xff] %vm156, %v1040
    %v1043 = vld [vmem:[#allocation3 + $0x10] sm:$0xff]
    %v1044 = vld [vmem:[#allocation3 + $0x18] sm:$0xff]
    %v1045 = vsel %vm156, %v1040, 0
    %1047 = vmatpush.msra.mxu0 0.0
    %1048 = vmatpush.msra.mxu0 0.0
    %1049 = vmatpush.msra.mxu0 0.0
    %1050 = vmatpush.msra.mxu0 0.0
    %1051 = vmatpush.msra.mxu0 0.0
    %1052 = vmatpush.msra.mxu0 0.0
    %1053 = vmatpush.msra.mxu0 0.0
    %1054 = vmatpush.msra.mxu0 0.0
    %1055 = vmatpush.msra.mxu0 %v954
    %1056 = vmatpush.msra.mxu0 %v952
    %1057 = vmatpush.msra.mxu0 %v950
    %1058 = vmatpush.msra.mxu0 %v948
    %1059 = vmatpush.msra.mxu0 %v946
    %1060 = vmatpush.msra.mxu0 %v944
    %1061 = vmatpush.msra.mxu0 %v942
    %1062 = vmatpush.msra.mxu0 %v940
    %1063 = vmatmul.f32.gmra.mxu0 %v1045
    %v1064 = vpop.f32.mrf.mxu0
    %v1065 = vadd.f32 %v960, %v1064
    %1066 = vdwg.mxu0
    %1067 = vmatpush.msra.mxu0 0.0
    %1068 = vmatpush.msra.mxu0 0.0
    %1069 = vmatpush.msra.mxu0 0.0
    %1070 = vmatpush.msra.mxu0 0.0
    %1071 = vmatpush.msra.mxu0 0.0
    %1072 = vmatpush.msra.mxu0 0.0
    %1073 = vmatpush.msra.mxu0 0.0
    %1074 = vmatpush.msra.mxu0 0.0
    %1075 = vmatpush.msra.mxu0 %v955
    %1076 = vmatpush.msra.mxu0 %v953
    %1077 = vmatpush.msra.mxu0 %v951
    %1078 = vmatpush.msra.mxu0 %v949
    %1079 = vmatpush.msra.mxu0 %v947
    %1080 = vmatpush.msra.mxu0 %v945
    %1081 = vmatpush.msra.mxu0 %v943
    %1082 = vmatpush.msra.mxu0 %v941
    %1083 = vmatmul.f32.gmra.mxu0 %v1045
    %v1084 = vpop.f32.mrf.mxu0
    %v1085 = vadd.f32 %v961, %v1084
    %1086 = vdwg.mxu0
    %v1087 = vadd.f32 %v1043, %v1065
    %v1088 = vxor.u32 %v1087, 2147483648
    %v1089 = vmul.f32 %v1088, 1.442695
    %v1090 = vpow.pop %v1089
    %v1091 = vadd.f32 %v1090, 1.0
    %v1092 = vrcp.pop %v1091
    %v1093 = vmul.f32 %v1091, %v1092
    %v1094 = vsub.f32 1.0, %v1093
    %v1095 = vmul.f32 %v1092, %v1094
    %v1096 = vadd.f32 %v1092, %v1095
    %vm1097 = vweird.f32 %v1091
    %vm1098 = vweird.f32 %v1092
    %vm1099 = vmor %vm1097, %vm1098
    %v1100 = vsel %vm1099, %v1092, %v1096
    %v1101 = vand.u32 2147483647, %v1091
    %vm1102 = vcmp.eq.f32.partialorder %v1101, 8.507059e+37
    %v1103 = vand.u32 %v1091, 2147483648
    %v1104 = vor.u32 1.1754944e-38, %v1103
    %v1105 = vsel %vm1102, %v1104, %v1100
    %v1106 = vmul.f32 1.0, %v1105
    %v1107 = vmul.f32 %v1106, %v1085
    %v1108 = vadd.f32 %v1044, %v1107
    %v1109 = vtanh.pop %v1108
    %v1110 = vsub.f32 1.0, %v1106
    %1112 = vrot.lane.b32.xlu0 %v1109, 64
    %v1113 = vpop.permute.xlu0 %1112
    %v1115 = vmul.f32 %v1110, %v1113
    %v1116 = vmul.f32 %v1106, %v1037
    %v1117 = vadd.f32 %v1115, %v1116
    %1119 = vrot.lane.b32.xlu0 %v1117, 64
    %v1120 = vpop.permute.xlu0 %1119
    %1122 = vst.msk [vmem:[#allocation4 + $0x8] sm:$0xff] %vm156, %v1120
    %v1123 = vld [vmem:[#allocation3 + $0x20] sm:$0xff]
    %v1124 = vld [vmem:[#allocation3 + $0x28] sm:$0xff]
    %v1125 = vsel %vm156, %v1120, 0
    %1127 = vmatpush.msra.mxu0 0.0
    %1128 = vmatpush.msra.mxu0 0.0
    %1129 = vmatpush.msra.mxu0 0.0
    %1130 = vmatpush.msra.mxu0 0.0
    %1131 = vmatpush.msra.mxu0 0.0
    %1132 = vmatpush.msra.mxu0 0.0
    %1133 = vmatpush.msra.mxu0 0.0
    %1134 = vmatpush.msra.mxu0 0.0
    %1135 = vmatpush.msra.mxu0 %v954
    %1136 = vmatpush.msra.mxu0 %v952
    %1137 = vmatpush.msra.mxu0 %v950
    %1138 = vmatpush.msra.mxu0 %v948
    %1139 = vmatpush.msra.mxu0 %v946
    %1140 = vmatpush.msra.mxu0 %v944
    %1141 = vmatpush.msra.mxu0 %v942
    %1142 = vmatpush.msra.mxu0 %v940
    %1143 = vmatmul.f32.gmra.mxu0 %v1125
    %v1144 = vpop.f32.mrf.mxu0
    %v1145 = vadd.f32 %v960, %v1144
    %1146 = vdwg.mxu0
    %1147 = vmatpush.msra.mxu0 0.0
    %1148 = vmatpush.msra.mxu0 0.0
    %1149 = vmatpush.msra.mxu0 0.0
    %1150 = vmatpush.msra.mxu0 0.0
    %1151 = vmatpush.msra.mxu0 0.0
    %1152 = vmatpush.msra.mxu0 0.0
    %1153 = vmatpush.msra.mxu0 0.0
    %1154 = vmatpush.msra.mxu0 0.0
    %1155 = vmatpush.msra.mxu0 %v955
    %1156 = vmatpush.msra.mxu0 %v953
    %1157 = vmatpush.msra.mxu0 %v951
    %1158 = vmatpush.msra.mxu0 %v949
    %1159 = vmatpush.msra.mxu0 %v947
    %1160 = vmatpush.msra.mxu0 %v945
    %1161 = vmatpush.msra.mxu0 %v943
    %1162 = vmatpush.msra.mxu0 %v941
    %1163 = vmatmul.f32.gmra.mxu0 %v1125
    %v1164 = vpop.f32.mrf.mxu0
    %v1165 = vadd.f32 %v961, %v1164
    %1166 = vdwg.mxu0
    %v1167 = vadd.f32 %v1123, %v1145
    %v1168 = vxor.u32 %v1167, 2147483648
    %v1169 = vmul.f32 %v1168, 1.442695
    %v1170 = vpow.pop %v1169
    %v1171 = vadd.f32 %v1170, 1.0
    %v1172 = vrcp.pop %v1171
    %v1173 = vmul.f32 %v1171, %v1172
    %v1174 = vsub.f32 1.0, %v1173
    %v1175 = vmul.f32 %v1172, %v1174
    %v1176 = vadd.f32 %v1172, %v1175
    %vm1177 = vweird.f32 %v1171
    %vm1178 = vweird.f32 %v1172
    %vm1179 = vmor %vm1177, %vm1178
    %v1180 = vsel %vm1179, %v1172, %v1176
    %v1181 = vand.u32 2147483647, %v1171
    %vm1182 = vcmp.eq.f32.partialorder %v1181, 8.507059e+37
    %v1183 = vand.u32 %v1171, 2147483648
    %v1184 = vor.u32 1.1754944e-38, %v1183
    %v1185 = vsel %vm1182, %v1184, %v1180
    %v1186 = vmul.f32 1.0, %v1185
    %v1187 = vmul.f32 %v1186, %v1165
    %v1188 = vadd.f32 %v1124, %v1187
    %v1189 = vtanh.pop %v1188
    %v1190 = vsub.f32 1.0, %v1186
    %1192 = vrot.lane.b32.xlu0 %v1189, 64
    %v1193 = vpop.permute.xlu0 %1192
    %v1195 = vmul.f32 %v1190, %v1193
    %v1196 = vmul.f32 %v1186, %v1117
    %v1197 = vadd.f32 %v1195, %v1196
    %1199 = vrot.lane.b32.xlu0 %v1197, 64
    %v1200 = vpop.permute.xlu0 %1199
    %1202 = vst.msk [vmem:[#allocation4 + $0x10] sm:$0xff] %vm156, %v1200
    %v1203 = vld [vmem:[#allocation3 + $0x30] sm:$0xff]
    %v1204 = vld [vmem:[#allocation3 + $0x38] sm:$0xff]
    %v1205 = vsel %vm156, %v1200, 0
    %1207 = vmatpush.msra.mxu0 0.0
    %1208 = vmatpush.msra.mxu0 0.0
    %1209 = vmatpush.msra.mxu0 0.0
    %1210 = vmatpush.msra.mxu0 0.0
    %1211 = vmatpush.msra.mxu0 0.0
    %1212 = vmatpush.msra.mxu0 0.0
    %1213 = vmatpush.msra.mxu0 0.0
    %1214 = vmatpush.msra.mxu0 0.0
    %1215 = vmatpush.msra.mxu0 %v954
    %1216 = vmatpush.msra.mxu0 %v952
    %1217 = vmatpush.msra.mxu0 %v950
    %1218 = vmatpush.msra.mxu0 %v948
    %1219 = vmatpush.msra.mxu0 %v946
    %1220 = vmatpush.msra.mxu0 %v944
    %1221 = vmatpush.msra.mxu0 %v942
    %1222 = vmatpush.msra.mxu0 %v940
    %1223 = vmatmul.f32.gmra.mxu0 %v1205
    %v1224 = vpop.f32.mrf.mxu0
    %v1225 = vadd.f32 %v960, %v1224
    %1226 = vdwg.mxu0
    %1227 = vmatpush.msra.mxu0 0.0
    %1228 = vmatpush.msra.mxu0 0.0
    %1229 = vmatpush.msra.mxu0 0.0
    %1230 = vmatpush.msra.mxu0 0.0
    %1231 = vmatpush.msra.mxu0 0.0
    %1232 = vmatpush.msra.mxu0 0.0
    %1233 = vmatpush.msra.mxu0 0.0
    %1234 = vmatpush.msra.mxu0 0.0
    %1235 = vmatpush.msra.mxu0 %v955
    %1236 = vmatpush.msra.mxu0 %v953
    %1237 = vmatpush.msra.mxu0 %v951
    %1238 = vmatpush.msra.mxu0 %v949
    %1239 = vmatpush.msra.mxu0 %v947
    %1240 = vmatpush.msra.mxu0 %v945
    %1241 = vmatpush.msra.mxu0 %v943
    %1242 = vmatpush.msra.mxu0 %v941
    %1243 = vmatmul.f32.gmra.mxu0 %v1205
    %v1244 = vpop.f32.mrf.mxu0
    %v1245 = vadd.f32 %v961, %v1244
    %1246 = vdwg.mxu0
    %v1247 = vadd.f32 %v1203, %v1225
    %v1248 = vxor.u32 %v1247, 2147483648
    %v1249 = vmul.f32 %v1248, 1.442695
    %v1250 = vpow.pop %v1249
    %v1251 = vadd.f32 %v1250, 1.0
    %v1252 = vrcp.pop %v1251
    %v1253 = vmul.f32 %v1251, %v1252
    %v1254 = vsub.f32 1.0, %v1253
    %v1255 = vmul.f32 %v1252, %v1254
    %v1256 = vadd.f32 %v1252, %v1255
    %vm1257 = vweird.f32 %v1251
    %vm1258 = vweird.f32 %v1252
    %vm1259 = vmor %vm1257, %vm1258
    %v1260 = vsel %vm1259, %v1252, %v1256
    %v1261 = vand.u32 2147483647, %v1251
    %vm1262 = vcmp.eq.f32.partialorder %v1261, 8.507059e+37
    %v1263 = vand.u32 %v1251, 2147483648
    %v1264 = vor.u32 1.1754944e-38, %v1263
    %v1265 = vsel %vm1262, %v1264, %v1260
    %v1266 = vmul.f32 1.0, %v1265
    %v1267 = vmul.f32 %v1266, %v1245
    %v1268 = vadd.f32 %v1204, %v1267
    %v1269 = vtanh.pop %v1268
    %v1270 = vsub.f32 1.0, %v1266
    %1272 = vrot.lane.b32.xlu0 %v1269, 64
    %v1273 = vpop.permute.xlu0 %1272
    %v1275 = vmul.f32 %v1270, %v1273
    %v1276 = vmul.f32 %v1266, %v1197
    %v1277 = vadd.f32 %v1275, %v1276
    %1279 = vrot.lane.b32.xlu0 %v1277, 64
    %v1280 = vpop.permute.xlu0 %1279
    %1282 = vst.msk [vmem:[#allocation4 + $0x18] sm:$0xff] %vm156, %v1280
    %v1283 = vld [vmem:[#allocation3 + $0x40] sm:$0xff]
    %v1284 = vld [vmem:[#allocation3 + $0x48] sm:$0xff]
    %v1285 = vsel %vm156, %v1280, 0
    %1287 = vmatpush.msra.mxu0 0.0
    %1288 = vmatpush.msra.mxu0 0.0
    %1289 = vmatpush.msra.mxu0 0.0
    %1290 = vmatpush.msra.mxu0 0.0
    %1291 = vmatpush.msra.mxu0 0.0
    %1292 = vmatpush.msra.mxu0 0.0
    %1293 = vmatpush.msra.mxu0 0.0
    %1294 = vmatpush.msra.mxu0 0.0
    %1295 = vmatpush.msra.mxu0 %v954
    %1296 = vmatpush.msra.mxu0 %v952
    %1297 = vmatpush.msra.mxu0 %v950
    %1298 = vmatpush.msra.mxu0 %v948
    %1299 = vmatpush.msra.mxu0 %v946
    %1300 = vmatpush.msra.mxu0 %v944
    %1301 = vmatpush.msra.mxu0 %v942
    %1302 = vmatpush.msra.mxu0 %v940
    %1303 = vmatmul.f32.gmra.mxu0 %v1285
    %v1304 = vpop.f32.mrf.mxu0
    %v1305 = vadd.f32 %v960, %v1304
    %1306 = vdwg.mxu0
    %1307 = vmatpush.msra.mxu0 0.0
    %1308 = vmatpush.msra.mxu0 0.0
    %1309 = vmatpush.msra.mxu0 0.0
    %1310 = vmatpush.msra.mxu0 0.0
    %1311 = vmatpush.msra.mxu0 0.0
    %1312 = vmatpush.msra.mxu0 0.0
    %1313 = vmatpush.msra.mxu0 0.0
    %1314 = vmatpush.msra.mxu0 0.0
    %1315 = vmatpush.msra.mxu0 %v955
    %1316 = vmatpush.msra.mxu0 %v953
    %1317 = vmatpush.msra.mxu0 %v951
    %1318 = vmatpush.msra.mxu0 %v949
    %1319 = vmatpush.msra.mxu0 %v947
    %1320 = vmatpush.msra.mxu0 %v945
    %1321 = vmatpush.msra.mxu0 %v943
    %1322 = vmatpush.msra.mxu0 %v941
    %1323 = vmatmul.f32.gmra.mxu0 %v1285
    %v1324 = vpop.f32.mrf.mxu0
    %v1325 = vadd.f32 %v961, %v1324
    %1326 = vdwg.mxu0
    %v1327 = vadd.f32 %v1283, %v1305
    %v1328 = vxor.u32 %v1327, 2147483648
    %v1329 = vmul.f32 %v1328, 1.442695
    %v1330 = vpow.pop %v1329
    %v1331 = vadd.f32 %v1330, 1.0
    %v1332 = vrcp.pop %v1331
    %v1333 = vmul.f32 %v1331, %v1332
    %v1334 = vsub.f32 1.0, %v1333
    %v1335 = vmul.f32 %v1332, %v1334
    %v1336 = vadd.f32 %v1332, %v1335
    %vm1337 = vweird.f32 %v1331
    %vm1338 = vweird.f32 %v1332
    %vm1339 = vmor %vm1337, %vm1338
    %v1340 = vsel %vm1339, %v1332, %v1336
    %v1341 = vand.u32 2147483647, %v1331
    %vm1342 = vcmp.eq.f32.partialorder %v1341, 8.507059e+37
    %v1343 = vand.u32 %v1331, 2147483648
    %v1344 = vor.u32 1.1754944e-38, %v1343
    %v1345 = vsel %vm1342, %v1344, %v1340
    %v1346 = vmul.f32 1.0, %v1345
    %v1347 = vmul.f32 %v1346, %v1325
    %v1348 = vadd.f32 %v1284, %v1347
    %v1349 = vtanh.pop %v1348
    %v1350 = vsub.f32 1.0, %v1346
    %1352 = vrot.lane.b32.xlu0 %v1349, 64
    %v1353 = vpop.permute.xlu0 %1352
    %v1355 = vmul.f32 %v1350, %v1353
    %v1356 = vmul.f32 %v1346, %v1277
    %v1357 = vadd.f32 %v1355, %v1356
    %1359 = vrot.lane.b32.xlu0 %v1357, 64
    %v1360 = vpop.permute.xlu0 %1359
    %1362 = vst.msk [vmem:[#allocation4 + $0x20] sm:$0xff] %vm156, %v1360
    %v1363 = vld [vmem:[#allocation3 + $0x50] sm:$0xff]
    %v1364 = vld [vmem:[#allocation3 + $0x58] sm:$0xff]
    %v1365 = vsel %vm156, %v1360, 0
    %1367 = vmatpush.msra.mxu0 0.0
    %1368 = vmatpush.msra.mxu0 0.0
    %1369 = vmatpush.msra.mxu0 0.0
    %1370 = vmatpush.msra.mxu0 0.0
    %1371 = vmatpush.msra.mxu0 0.0
    %1372 = vmatpush.msra.mxu0 0.0
    %1373 = vmatpush.msra.mxu0 0.0
    %1374 = vmatpush.msra.mxu0 0.0
    %1375 = vmatpush.msra.mxu0 %v954
    %1376 = vmatpush.msra.mxu0 %v952
    %1377 = vmatpush.msra.mxu0 %v950
    %1378 = vmatpush.msra.mxu0 %v948
    %1379 = vmatpush.msra.mxu0 %v946
    %1380 = vmatpush.msra.mxu0 %v944
    %1381 = vmatpush.msra.mxu0 %v942
    %1382 = vmatpush.msra.mxu0 %v940
    %1383 = vmatmul.f32.gmra.mxu0 %v1365
    %v1384 = vpop.f32.mrf.mxu0
    %v1385 = vadd.f32 %v960, %v1384
    %1386 = vdwg.mxu0
    %1387 = vmatpush.msra.mxu0 0.0
    %1388 = vmatpush.msra.mxu0 0.0
    %1389 = vmatpush.msra.mxu0 0.0
    %1390 = vmatpush.msra.mxu0 0.0
    %1391 = vmatpush.msra.mxu0 0.0
    %1392 = vmatpush.msra.mxu0 0.0
    %1393 = vmatpush.msra.mxu0 0.0
    %1394 = vmatpush.msra.mxu0 0.0
    %1395 = vmatpush.msra.mxu0 %v955
    %1396 = vmatpush.msra.mxu0 %v953
    %1397 = vmatpush.msra.mxu0 %v951
    %1398 = vmatpush.msra.mxu0 %v949
    %1399 = vmatpush.msra.mxu0 %v947
    %1400 = vmatpush.msra.mxu0 %v945
    %1401 = vmatpush.msra.mxu0 %v943
    %1402 = vmatpush.msra.mxu0 %v941
    %1403 = vmatmul.f32.gmra.mxu0 %v1365
    %v1404 = vpop.f32.mrf.mxu0
    %v1405 = vadd.f32 %v961, %v1404
    %1406 = vdwg.mxu0
    %v1407 = vadd.f32 %v1363, %v1385
    %v1408 = vxor.u32 %v1407, 2147483648
    %v1409 = vmul.f32 %v1408, 1.442695
    %v1410 = vpow.pop %v1409
    %v1411 = vadd.f32 %v1410, 1.0
    %v1412 = vrcp.pop %v1411
    %v1413 = vmul.f32 %v1411, %v1412
    %v1414 = vsub.f32 1.0, %v1413
    %v1415 = vmul.f32 %v1412, %v1414
    %v1416 = vadd.f32 %v1412, %v1415
    %vm1417 = vweird.f32 %v1411
    %vm1418 = vweird.f32 %v1412
    %vm1419 = vmor %vm1417, %vm1418
    %v1420 = vsel %vm1419, %v1412, %v1416
    %v1421 = vand.u32 2147483647, %v1411
    %vm1422 = vcmp.eq.f32.partialorder %v1421, 8.507059e+37
    %v1423 = vand.u32 %v1411, 2147483648
    %v1424 = vor.u32 1.1754944e-38, %v1423
    %v1425 = vsel %vm1422, %v1424, %v1420
    %v1426 = vmul.f32 1.0, %v1425
    %v1427 = vmul.f32 %v1426, %v1405
    %v1428 = vadd.f32 %v1364, %v1427
    %v1429 = vtanh.pop %v1428
    %v1430 = vsub.f32 1.0, %v1426
    %1432 = vrot.lane.b32.xlu0 %v1429, 64
    %v1433 = vpop.permute.xlu0 %1432
    %v1435 = vmul.f32 %v1430, %v1433
    %v1436 = vmul.f32 %v1426, %v1357
    %v1437 = vadd.f32 %v1435, %v1436
    %1439 = vrot.lane.b32.xlu0 %v1437, 64
    %v1440 = vpop.permute.xlu0 %1439
    %1442 = vst.msk [vmem:[#allocation4 + $0x28] sm:$0xff] %vm156, %v1440
    %v1443 = vld [vmem:[#allocation3 + $0x60] sm:$0xff]
    %v1444 = vld [vmem:[#allocation3 + $0x68] sm:$0xff]
    %v1445 = vsel %vm156, %v1440, 0
    %1447 = vmatpush.msra.mxu0 0.0
    %1448 = vmatpush.msra.mxu0 0.0
    %1449 = vmatpush.msra.mxu0 0.0
    %1450 = vmatpush.msra.mxu0 0.0
    %1451 = vmatpush.msra.mxu0 0.0
    %1452 = vmatpush.msra.mxu0 0.0
    %1453 = vmatpush.msra.mxu0 0.0
    %1454 = vmatpush.msra.mxu0 0.0
    %1455 = vmatpush.msra.mxu0 %v954
    %1456 = vmatpush.msra.mxu0 %v952
    %1457 = vmatpush.msra.mxu0 %v950
    %1458 = vmatpush.msra.mxu0 %v948
    %1459 = vmatpush.msra.mxu0 %v946
    %1460 = vmatpush.msra.mxu0 %v944
    %1461 = vmatpush.msra.mxu0 %v942
    %1462 = vmatpush.msra.mxu0 %v940
    %1463 = vmatmul.f32.gmra.mxu0 %v1445
    %v1464 = vpop.f32.mrf.mxu0
    %v1465 = vadd.f32 %v960, %v1464
    %1466 = vdwg.mxu0
    %1467 = vmatpush.msra.mxu0 0.0
    %1468 = vmatpush.msra.mxu0 0.0
    %1469 = vmatpush.msra.mxu0 0.0
    %1470 = vmatpush.msra.mxu0 0.0
    %1471 = vmatpush.msra.mxu0 0.0
    %1472 = vmatpush.msra.mxu0 0.0
    %1473 = vmatpush.msra.mxu0 0.0
    %1474 = vmatpush.msra.mxu0 0.0
    %1475 = vmatpush.msra.mxu0 %v955
    %1476 = vmatpush.msra.mxu0 %v953
    %1477 = vmatpush.msra.mxu0 %v951
    %1478 = vmatpush.msra.mxu0 %v949
    %1479 = vmatpush.msra.mxu0 %v947
    %1480 = vmatpush.msra.mxu0 %v945
    %1481 = vmatpush.msra.mxu0 %v943
    %1482 = vmatpush.msra.mxu0 %v941
    %1483 = vmatmul.f32.gmra.mxu0 %v1445
    %v1484 = vpop.f32.mrf.mxu0
    %v1485 = vadd.f32 %v961, %v1484
    %1486 = vdwg.mxu0
    %v1487 = vadd.f32 %v1443, %v1465
    %v1488 = vxor.u32 %v1487, 2147483648
    %v1489 = vmul.f32 %v1488, 1.442695
    %v1490 = vpow.pop %v1489
    %v1491 = vadd.f32 %v1490, 1.0
    %v1492 = vrcp.pop %v1491
    %v1493 = vmul.f32 %v1491, %v1492
    %v1494 = vsub.f32 1.0, %v1493
    %v1495 = vmul.f32 %v1492, %v1494
    %v1496 = vadd.f32 %v1492, %v1495
    %vm1497 = vweird.f32 %v1491
    %vm1498 = vweird.f32 %v1492
    %vm1499 = vmor %vm1497, %vm1498
    %v1500 = vsel %vm1499, %v1492, %v1496
    %v1501 = vand.u32 2147483647, %v1491
    %vm1502 = vcmp.eq.f32.partialorder %v1501, 8.507059e+37
    %v1503 = vand.u32 %v1491, 2147483648
    %v1504 = vor.u32 1.1754944e-38, %v1503
    %v1505 = vsel %vm1502, %v1504, %v1500
    %v1506 = vmul.f32 1.0, %v1505
    %v1507 = vmul.f32 %v1506, %v1485
    %v1508 = vadd.f32 %v1444, %v1507
    %v1509 = vtanh.pop %v1508
    %v1510 = vsub.f32 1.0, %v1506
    %1512 = vrot.lane.b32.xlu0 %v1509, 64
    %v1513 = vpop.permute.xlu0 %1512
    %v1515 = vmul.f32 %v1510, %v1513
    %v1516 = vmul.f32 %v1506, %v1437
    %v1517 = vadd.f32 %v1515, %v1516
    %1519 = vrot.lane.b32.xlu0 %v1517, 64
    %v1520 = vpop.permute.xlu0 %1519
    %1522 = vst.msk [vmem:[#allocation4 + $0x30] sm:$0xff] %vm156, %v1520
    %v1523 = vld [vmem:[#allocation3 + $0x70] sm:$0xff]
    %v1524 = vld [vmem:[#allocation3 + $0x78] sm:$0xff]
    %v1525 = vsel %vm156, %v1520, 0
    %1527 = vmatpush.msra.mxu0 0.0
    %1528 = vmatpush.msra.mxu0 0.0
    %1529 = vmatpush.msra.mxu0 0.0
    %1530 = vmatpush.msra.mxu0 0.0
    %1531 = vmatpush.msra.mxu0 0.0
    %1532 = vmatpush.msra.mxu0 0.0
    %1533 = vmatpush.msra.mxu0 0.0
    %1534 = vmatpush.msra.mxu0 0.0
    %1535 = vmatpush.msra.mxu0 %v954
    %1536 = vmatpush.msra.mxu0 %v952
    %1537 = vmatpush.msra.mxu0 %v950
    %1538 = vmatpush.msra.mxu0 %v948
    %1539 = vmatpush.msra.mxu0 %v946
    %1540 = vmatpush.msra.mxu0 %v944
    %1541 = vmatpush.msra.mxu0 %v942
    %1542 = vmatpush.msra.mxu0 %v940
    %1543 = vmatmul.f32.gmra.mxu0 %v1525
    %v1544 = vpop.f32.mrf.mxu0
    %v1545 = vadd.f32 %v960, %v1544
    %1546 = vdwg.mxu0
    %1547 = vmatpush.msra.mxu0 0.0
    %1548 = vmatpush.msra.mxu0 0.0
    %1549 = vmatpush.msra.mxu0 0.0
    %1550 = vmatpush.msra.mxu0 0.0
    %1551 = vmatpush.msra.mxu0 0.0
    %1552 = vmatpush.msra.mxu0 0.0
    %1553 = vmatpush.msra.mxu0 0.0
    %1554 = vmatpush.msra.mxu0 0.0
    %1555 = vmatpush.msra.mxu0 %v955
    %1556 = vmatpush.msra.mxu0 %v953
    %1557 = vmatpush.msra.mxu0 %v951
    %1558 = vmatpush.msra.mxu0 %v949
    %1559 = vmatpush.msra.mxu0 %v947
    %1560 = vmatpush.msra.mxu0 %v945
    %1561 = vmatpush.msra.mxu0 %v943
    %1562 = vmatpush.msra.mxu0 %v941
    %1563 = vmatmul.f32.gmra.mxu0 %v1525
    %v1564 = vpop.f32.mrf.mxu0
    %v1565 = vadd.f32 %v961, %v1564
    %1566 = vdwg.mxu0
    %v1567 = vadd.f32 %v1523, %v1545
    %v1568 = vxor.u32 %v1567, 2147483648
    %v1569 = vmul.f32 %v1568, 1.442695
    %v1570 = vpow.pop %v1569
    %v1571 = vadd.f32 %v1570, 1.0
    %v1572 = vrcp.pop %v1571
    %v1573 = vmul.f32 %v1571, %v1572
    %v1574 = vsub.f32 1.0, %v1573
    %v1575 = vmul.f32 %v1572, %v1574
    %v1576 = vadd.f32 %v1572, %v1575
    %vm1577 = vweird.f32 %v1571
    %vm1578 = vweird.f32 %v1572
    %vm1579 = vmor %vm1577, %vm1578
    %v1580 = vsel %vm1579, %v1572, %v1576
    %v1581 = vand.u32 2147483647, %v1571
    %vm1582 = vcmp.eq.f32.partialorder %v1581, 8.507059e+37
    %v1583 = vand.u32 %v1571, 2147483648
    %v1584 = vor.u32 1.1754944e-38, %v1583
    %v1585 = vsel %vm1582, %v1584, %v1580
    %v1586 = vmul.f32 1.0, %v1585
    %v1587 = vmul.f32 %v1586, %v1565
    %v1588 = vadd.f32 %v1524, %v1587
    %v1589 = vtanh.pop %v1588
    %v1590 = vsub.f32 1.0, %v1586
    %1592 = vrot.lane.b32.xlu0 %v1589, 64
    %v1593 = vpop.permute.xlu0 %1592
    %v1595 = vmul.f32 %v1590, %v1593
    %v1596 = vmul.f32 %v1586, %v1517
    %v1597 = vadd.f32 %v1595, %v1596
    %1599 = vrot.lane.b32.xlu0 %v1597, 64
    %v1600 = vpop.permute.xlu0 %1599
    %1602 = vst.msk [vmem:[#allocation4 + $0x38] sm:$0xff] %vm156, %v1600
    %v1603 = vld [vmem:[#allocation3 + $0x80] sm:$0xff]
    %v1604 = vld [vmem:[#allocation3 + $0x88] sm:$0xff]
    %v1605 = vsel %vm156, %v1600, 0
    %1607 = vmatpush.msra.mxu0 0.0
    %1608 = vmatpush.msra.mxu0 0.0
    %1609 = vmatpush.msra.mxu0 0.0
    %1610 = vmatpush.msra.mxu0 0.0
    %1611 = vmatpush.msra.mxu0 0.0
    %1612 = vmatpush.msra.mxu0 0.0
    %1613 = vmatpush.msra.mxu0 0.0
    %1614 = vmatpush.msra.mxu0 0.0
    %1615 = vmatpush.msra.mxu0 %v954
    %1616 = vmatpush.msra.mxu0 %v952
    %1617 = vmatpush.msra.mxu0 %v950
    %1618 = vmatpush.msra.mxu0 %v948
    %1619 = vmatpush.msra.mxu0 %v946
    %1620 = vmatpush.msra.mxu0 %v944
    %1621 = vmatpush.msra.mxu0 %v942
    %1622 = vmatpush.msra.mxu0 %v940
    %1623 = vmatmul.f32.gmra.mxu0 %v1605
    %v1624 = vpop.f32.mrf.mxu0
    %v1625 = vadd.f32 %v960, %v1624
    %1626 = vdwg.mxu0
    %1627 = vmatpush.msra.mxu0 0.0
    %1628 = vmatpush.msra.mxu0 0.0
    %1629 = vmatpush.msra.mxu0 0.0
    %1630 = vmatpush.msra.mxu0 0.0
    %1631 = vmatpush.msra.mxu0 0.0
    %1632 = vmatpush.msra.mxu0 0.0
    %1633 = vmatpush.msra.mxu0 0.0
    %1634 = vmatpush.msra.mxu0 0.0
    %1635 = vmatpush.msra.mxu0 %v955
    %1636 = vmatpush.msra.mxu0 %v953
    %1637 = vmatpush.msra.mxu0 %v951
    %1638 = vmatpush.msra.mxu0 %v949
    %1639 = vmatpush.msra.mxu0 %v947
    %1640 = vmatpush.msra.mxu0 %v945
    %1641 = vmatpush.msra.mxu0 %v943
    %1642 = vmatpush.msra.mxu0 %v941
    %1643 = vmatmul.f32.gmra.mxu0 %v1605
    %v1644 = vpop.f32.mrf.mxu0
    %v1645 = vadd.f32 %v961, %v1644
    %1646 = vdwg.mxu0
    %v1647 = vadd.f32 %v1603, %v1625
    %v1648 = vxor.u32 %v1647, 2147483648
    %v1649 = vmul.f32 %v1648, 1.442695
    %v1650 = vpow.pop %v1649
    %v1651 = vadd.f32 %v1650, 1.0
    %v1652 = vrcp.pop %v1651
    %v1653 = vmul.f32 %v1651, %v1652
    %v1654 = vsub.f32 1.0, %v1653
    %v1655 = vmul.f32 %v1652, %v1654
    %v1656 = vadd.f32 %v1652, %v1655
    %vm1657 = vweird.f32 %v1651
    %vm1658 = vweird.f32 %v1652
    %vm1659 = vmor %vm1657, %vm1658
    %v1660 = vsel %vm1659, %v1652, %v1656
    %v1661 = vand.u32 2147483647, %v1651
    %vm1662 = vcmp.eq.f32.partialorder %v1661, 8.507059e+37
    %v1663 = vand.u32 %v1651, 2147483648
    %v1664 = vor.u32 1.1754944e-38, %v1663
    %v1665 = vsel %vm1662, %v1664, %v1660
    %v1666 = vmul.f32 1.0, %v1665
    %v1667 = vmul.f32 %v1666, %v1645
    %v1668 = vadd.f32 %v1604, %v1667
    %v1669 = vtanh.pop %v1668
    %v1670 = vsub.f32 1.0, %v1666
    %1672 = vrot.lane.b32.xlu0 %v1669, 64
    %v1673 = vpop.permute.xlu0 %1672
    %v1675 = vmul.f32 %v1670, %v1673
    %v1676 = vmul.f32 %v1666, %v1597
    %v1677 = vadd.f32 %v1675, %v1676
    %1679 = vrot.lane.b32.xlu0 %v1677, 64
    %v1680 = vpop.permute.xlu0 %1679
    %1682 = vst.msk [vmem:[#allocation4 + $0x40] sm:$0xff] %vm156, %v1680
    %v1683 = vld [vmem:[#allocation3 + $0x90] sm:$0xff]
    %v1684 = vld [vmem:[#allocation3 + $0x98] sm:$0xff]
    %v1685 = vsel %vm156, %v1680, 0
    %1687 = vmatpush.msra.mxu0 0.0
    %1688 = vmatpush.msra.mxu0 0.0
    %1689 = vmatpush.msra.mxu0 0.0
    %1690 = vmatpush.msra.mxu0 0.0
    %1691 = vmatpush.msra.mxu0 0.0
    %1692 = vmatpush.msra.mxu0 0.0
    %1693 = vmatpush.msra.mxu0 0.0
    %1694 = vmatpush.msra.mxu0 0.0
    %1695 = vmatpush.msra.mxu0 %v954
    %1696 = vmatpush.msra.mxu0 %v952
    %1697 = vmatpush.msra.mxu0 %v950
    %1698 = vmatpush.msra.mxu0 %v948
    %1699 = vmatpush.msra.mxu0 %v946
    %1700 = vmatpush.msra.mxu0 %v944
    %1701 = vmatpush.msra.mxu0 %v942
    %1702 = vmatpush.msra.mxu0 %v940
    %1703 = vmatmul.f32.gmra.mxu0 %v1685
    %v1704 = vpop.f32.mrf.mxu0
    %v1705 = vadd.f32 %v960, %v1704
    %1706 = vdwg.mxu0
    %1707 = vmatpush.msra.mxu0 0.0
    %1708 = vmatpush.msra.mxu0 0.0
    %1709 = vmatpush.msra.mxu0 0.0
    %1710 = vmatpush.msra.mxu0 0.0
    %1711 = vmatpush.msra.mxu0 0.0
    %1712 = vmatpush.msra.mxu0 0.0
    %1713 = vmatpush.msra.mxu0 0.0
    %1714 = vmatpush.msra.mxu0 0.0
    %1715 = vmatpush.msra.mxu0 %v955
    %1716 = vmatpush.msra.mxu0 %v953
    %1717 = vmatpush.msra.mxu0 %v951
    %1718 = vmatpush.msra.mxu0 %v949
    %1719 = vmatpush.msra.mxu0 %v947
    %1720 = vmatpush.msra.mxu0 %v945
    %1721 = vmatpush.msra.mxu0 %v943
    %1722 = vmatpush.msra.mxu0 %v941
    %1723 = vmatmul.f32.gmra.mxu0 %v1685
    %v1724 = vpop.f32.mrf.mxu0
    %v1725 = vadd.f32 %v961, %v1724
    %1726 = vdwg.mxu0
    %v1727 = vadd.f32 %v1683, %v1705
    %v1728 = vxor.u32 %v1727, 2147483648
    %v1729 = vmul.f32 %v1728, 1.442695
    %v1730 = vpow.pop %v1729
    %v1731 = vadd.f32 %v1730, 1.0
    %v1732 = vrcp.pop %v1731
    %v1733 = vmul.f32 %v1731, %v1732
    %v1734 = vsub.f32 1.0, %v1733
    %v1735 = vmul.f32 %v1732, %v1734
    %v1736 = vadd.f32 %v1732, %v1735
    %vm1737 = vweird.f32 %v1731
    %vm1738 = vweird.f32 %v1732
    %vm1739 = vmor %vm1737, %vm1738
    %v1740 = vsel %vm1739, %v1732, %v1736
    %v1741 = vand.u32 2147483647, %v1731
    %vm1742 = vcmp.eq.f32.partialorder %v1741, 8.507059e+37
    %v1743 = vand.u32 %v1731, 2147483648
    %v1744 = vor.u32 1.1754944e-38, %v1743
    %v1745 = vsel %vm1742, %v1744, %v1740
    %v1746 = vmul.f32 1.0, %v1745
    %v1747 = vmul.f32 %v1746, %v1725
    %v1748 = vadd.f32 %v1684, %v1747
    %v1749 = vtanh.pop %v1748
    %v1750 = vsub.f32 1.0, %v1746
    %1752 = vrot.lane.b32.xlu0 %v1749, 64
    %v1753 = vpop.permute.xlu0 %1752
    %v1755 = vmul.f32 %v1750, %v1753
    %v1756 = vmul.f32 %v1746, %v1677
    %v1757 = vadd.f32 %v1755, %v1756
    %1759 = vrot.lane.b32.xlu0 %v1757, 64
    %v1760 = vpop.permute.xlu0 %1759
    %1762 = vst.msk [vmem:[#allocation4 + $0x48] sm:$0xff] %vm156, %v1760
    %v1763 = vld [vmem:[#allocation3 + $0xa0] sm:$0xff]
    %v1764 = vld [vmem:[#allocation3 + $0xa8] sm:$0xff]
    %v1765 = vsel %vm156, %v1760, 0
    %1767 = vmatpush.msra.mxu0 0.0
    %1768 = vmatpush.msra.mxu0 0.0
    %1769 = vmatpush.msra.mxu0 0.0
    %1770 = vmatpush.msra.mxu0 0.0
    %1771 = vmatpush.msra.mxu0 0.0
    %1772 = vmatpush.msra.mxu0 0.0
    %1773 = vmatpush.msra.mxu0 0.0
    %1774 = vmatpush.msra.mxu0 0.0
    %1775 = vmatpush.msra.mxu0 %v954
    %1776 = vmatpush.msra.mxu0 %v952
    %1777 = vmatpush.msra.mxu0 %v950
    %1778 = vmatpush.msra.mxu0 %v948
    %1779 = vmatpush.msra.mxu0 %v946
    %1780 = vmatpush.msra.mxu0 %v944
    %1781 = vmatpush.msra.mxu0 %v942
    %1782 = vmatpush.msra.mxu0 %v940
    %1783 = vmatmul.f32.gmra.mxu0 %v1765
    %v1784 = vpop.f32.mrf.mxu0
    %v1785 = vadd.f32 %v960, %v1784
    %1786 = vdwg.mxu0
    %1787 = vmatpush.msra.mxu0 0.0
    %1788 = vmatpush.msra.mxu0 0.0
    %1789 = vmatpush.msra.mxu0 0.0
    %1790 = vmatpush.msra.mxu0 0.0
    %1791 = vmatpush.msra.mxu0 0.0
    %1792 = vmatpush.msra.mxu0 0.0
    %1793 = vmatpush.msra.mxu0 0.0
    %1794 = vmatpush.msra.mxu0 0.0
    %1795 = vmatpush.msra.mxu0 %v955
    %1796 = vmatpush.msra.mxu0 %v953
    %1797 = vmatpush.msra.mxu0 %v951
    %1798 = vmatpush.msra.mxu0 %v949
    %1799 = vmatpush.msra.mxu0 %v947
    %1800 = vmatpush.msra.mxu0 %v945
    %1801 = vmatpush.msra.mxu0 %v943
    %1802 = vmatpush.msra.mxu0 %v941
    %1803 = vmatmul.f32.gmra.mxu0 %v1765
    %v1804 = vpop.f32.mrf.mxu0
    %v1805 = vadd.f32 %v961, %v1804
    %1806 = vdwg.mxu0
    %v1807 = vadd.f32 %v1763, %v1785
    %v1808 = vxor.u32 %v1807, 2147483648
    %v1809 = vmul.f32 %v1808, 1.442695
    %v1810 = vpow.pop %v1809
    %v1811 = vadd.f32 %v1810, 1.0
    %v1812 = vrcp.pop %v1811
    %v1813 = vmul.f32 %v1811, %v1812
    %v1814 = vsub.f32 1.0, %v1813
    %v1815 = vmul.f32 %v1812, %v1814
    %v1816 = vadd.f32 %v1812, %v1815
    %vm1817 = vweird.f32 %v1811
    %vm1818 = vweird.f32 %v1812
    %vm1819 = vmor %vm1817, %vm1818
    %v1820 = vsel %vm1819, %v1812, %v1816
    %v1821 = vand.u32 2147483647, %v1811
    %vm1822 = vcmp.eq.f32.partialorder %v1821, 8.507059e+37
    %v1823 = vand.u32 %v1811, 2147483648
    %v1824 = vor.u32 1.1754944e-38, %v1823
    %v1825 = vsel %vm1822, %v1824, %v1820
    %v1826 = vmul.f32 1.0, %v1825
    %v1827 = vmul.f32 %v1826, %v1805
    %v1828 = vadd.f32 %v1764, %v1827
    %v1829 = vtanh.pop %v1828
    %v1830 = vsub.f32 1.0, %v1826
    %1832 = vrot.lane.b32.xlu0 %v1829, 64
    %v1833 = vpop.permute.xlu0 %1832
    %v1835 = vmul.f32 %v1830, %v1833
    %v1836 = vmul.f32 %v1826, %v1757
    %v1837 = vadd.f32 %v1835, %v1836
    %1839 = vrot.lane.b32.xlu0 %v1837, 64
    %v1840 = vpop.permute.xlu0 %1839
    %1842 = vst.msk [vmem:[#allocation4 + $0x50] sm:$0xff] %vm156, %v1840
    %v1843 = vld [vmem:[#allocation3 + $0xb0] sm:$0xff]
    %v1844 = vld [vmem:[#allocation3 + $0xb8] sm:$0xff]
    %v1845 = vsel %vm156, %v1840, 0
    %1847 = vmatpush.msra.mxu0 0.0
    %1848 = vmatpush.msra.mxu0 0.0
    %1849 = vmatpush.msra.mxu0 0.0
    %1850 = vmatpush.msra.mxu0 0.0
    %1851 = vmatpush.msra.mxu0 0.0
    %1852 = vmatpush.msra.mxu0 0.0
    %1853 = vmatpush.msra.mxu0 0.0
    %1854 = vmatpush.msra.mxu0 0.0
    %1855 = vmatpush.msra.mxu0 %v954
    %1856 = vmatpush.msra.mxu0 %v952
    %1857 = vmatpush.msra.mxu0 %v950
    %1858 = vmatpush.msra.mxu0 %v948
    %1859 = vmatpush.msra.mxu0 %v946
    %1860 = vmatpush.msra.mxu0 %v944
    %1861 = vmatpush.msra.mxu0 %v942
    %1862 = vmatpush.msra.mxu0 %v940
    %1863 = vmatmul.f32.gmra.mxu0 %v1845
    %v1864 = vpop.f32.mrf.mxu0
    %v1865 = vadd.f32 %v960, %v1864
    %1866 = vdwg.mxu0
    %1867 = vmatpush.msra.mxu0 0.0
    %1868 = vmatpush.msra.mxu0 0.0
    %1869 = vmatpush.msra.mxu0 0.0
    %1870 = vmatpush.msra.mxu0 0.0
    %1871 = vmatpush.msra.mxu0 0.0
    %1872 = vmatpush.msra.mxu0 0.0
    %1873 = vmatpush.msra.mxu0 0.0
    %1874 = vmatpush.msra.mxu0 0.0
    %1875 = vmatpush.msra.mxu0 %v955
    %1876 = vmatpush.msra.mxu0 %v953
    %1877 = vmatpush.msra.mxu0 %v951
    %1878 = vmatpush.msra.mxu0 %v949
    %1879 = vmatpush.msra.mxu0 %v947
    %1880 = vmatpush.msra.mxu0 %v945
    %1881 = vmatpush.msra.mxu0 %v943
    %1882 = vmatpush.msra.mxu0 %v941
    %1883 = vmatmul.f32.gmra.mxu0 %v1845
    %v1884 = vpop.f32.mrf.mxu0
    %v1885 = vadd.f32 %v961, %v1884
    %1886 = vdwg.mxu0
    %v1887 = vadd.f32 %v1843, %v1865
    %v1888 = vxor.u32 %v1887, 2147483648
    %v1889 = vmul.f32 %v1888, 1.442695
    %v1890 = vpow.pop %v1889
    %v1891 = vadd.f32 %v1890, 1.0
    %v1892 = vrcp.pop %v1891
    %v1893 = vmul.f32 %v1891, %v1892
    %v1894 = vsub.f32 1.0, %v1893
    %v1895 = vmul.f32 %v1892, %v1894
    %v1896 = vadd.f32 %v1892, %v1895
    %vm1897 = vweird.f32 %v1891
    %vm1898 = vweird.f32 %v1892
    %vm1899 = vmor %vm1897, %vm1898
    %v1900 = vsel %vm1899, %v1892, %v1896
    %v1901 = vand.u32 2147483647, %v1891
    %vm1902 = vcmp.eq.f32.partialorder %v1901, 8.507059e+37
    %v1903 = vand.u32 %v1891, 2147483648
    %v1904 = vor.u32 1.1754944e-38, %v1903
    %v1905 = vsel %vm1902, %v1904, %v1900
    %v1906 = vmul.f32 1.0, %v1905
    %v1907 = vmul.f32 %v1906, %v1885
    %v1908 = vadd.f32 %v1844, %v1907
    %v1909 = vtanh.pop %v1908
    %v1910 = vsub.f32 1.0, %v1906
    %1912 = vrot.lane.b32.xlu0 %v1909, 64
    %v1913 = vpop.permute.xlu0 %1912
    %v1915 = vmul.f32 %v1910, %v1913
    %v1916 = vmul.f32 %v1906, %v1837
    %v1917 = vadd.f32 %v1915, %v1916
    %1919 = vrot.lane.b32.xlu0 %v1917, 64
    %v1920 = vpop.permute.xlu0 %1919
    %1922 = vst.msk [vmem:[#allocation4 + $0x58] sm:$0xff] %vm156, %v1920
    %v1923 = vld [vmem:[#allocation3 + $0xc0] sm:$0xff]
    %v1924 = vld [vmem:[#allocation3 + $0xc8] sm:$0xff]
    %v1925 = vsel %vm156, %v1920, 0
    %1927 = vmatpush.msra.mxu0 0.0
    %1928 = vmatpush.msra.mxu0 0.0
    %1929 = vmatpush.msra.mxu0 0.0
    %1930 = vmatpush.msra.mxu0 0.0
    %1931 = vmatpush.msra.mxu0 0.0
    %1932 = vmatpush.msra.mxu0 0.0
    %1933 = vmatpush.msra.mxu0 0.0
    %1934 = vmatpush.msra.mxu0 0.0
    %1935 = vmatpush.msra.mxu0 %v954
    %1936 = vmatpush.msra.mxu0 %v952
    %1937 = vmatpush.msra.mxu0 %v950
    %1938 = vmatpush.msra.mxu0 %v948
    %1939 = vmatpush.msra.mxu0 %v946
    %1940 = vmatpush.msra.mxu0 %v944
    %1941 = vmatpush.msra.mxu0 %v942
    %1942 = vmatpush.msra.mxu0 %v940
    %1943 = vmatmul.f32.gmra.mxu0 %v1925
    %v1944 = vpop.f32.mrf.mxu0
    %v1945 = vadd.f32 %v960, %v1944
    %1946 = vdwg.mxu0
    %1947 = vmatpush.msra.mxu0 0.0
    %1948 = vmatpush.msra.mxu0 0.0
    %1949 = vmatpush.msra.mxu0 0.0
    %1950 = vmatpush.msra.mxu0 0.0
    %1951 = vmatpush.msra.mxu0 0.0
    %1952 = vmatpush.msra.mxu0 0.0
    %1953 = vmatpush.msra.mxu0 0.0
    %1954 = vmatpush.msra.mxu0 0.0
    %1955 = vmatpush.msra.mxu0 %v955
    %1956 = vmatpush.msra.mxu0 %v953
    %1957 = vmatpush.msra.mxu0 %v951
    %1958 = vmatpush.msra.mxu0 %v949
    %1959 = vmatpush.msra.mxu0 %v947
    %1960 = vmatpush.msra.mxu0 %v945
    %1961 = vmatpush.msra.mxu0 %v943
    %1962 = vmatpush.msra.mxu0 %v941
    %1963 = vmatmul.f32.gmra.mxu0 %v1925
    %v1964 = vpop.f32.mrf.mxu0
    %v1965 = vadd.f32 %v961, %v1964
    %1966 = vdwg.mxu0
    %v1967 = vadd.f32 %v1923, %v1945
    %v1968 = vxor.u32 %v1967, 2147483648
    %v1969 = vmul.f32 %v1968, 1.442695
    %v1970 = vpow.pop %v1969
    %v1971 = vadd.f32 %v1970, 1.0
    %v1972 = vrcp.pop %v1971
    %v1973 = vmul.f32 %v1971, %v1972
    %v1974 = vsub.f32 1.0, %v1973
    %v1975 = vmul.f32 %v1972, %v1974
    %v1976 = vadd.f32 %v1972, %v1975
    %vm1977 = vweird.f32 %v1971
    %vm1978 = vweird.f32 %v1972
    %vm1979 = vmor %vm1977, %vm1978
    %v1980 = vsel %vm1979, %v1972, %v1976
    %v1981 = vand.u32 2147483647, %v1971
    %vm1982 = vcmp.eq.f32.partialorder %v1981, 8.507059e+37
    %v1983 = vand.u32 %v1971, 2147483648
    %v1984 = vor.u32 1.1754944e-38, %v1983
    %v1985 = vsel %vm1982, %v1984, %v1980
    %v1986 = vmul.f32 1.0, %v1985
    %v1987 = vmul.f32 %v1986, %v1965
    %v1988 = vadd.f32 %v1924, %v1987
    %v1989 = vtanh.pop %v1988
    %v1990 = vsub.f32 1.0, %v1986
    %1992 = vrot.lane.b32.xlu0 %v1989, 64
    %v1993 = vpop.permute.xlu0 %1992
    %v1995 = vmul.f32 %v1990, %v1993
    %v1996 = vmul.f32 %v1986, %v1917
    %v1997 = vadd.f32 %v1995, %v1996
    %1999 = vrot.lane.b32.xlu0 %v1997, 64
    %v2000 = vpop.permute.xlu0 %1999
    %2002 = vst.msk [vmem:[#allocation4 + $0x60] sm:$0xff] %vm156, %v2000
    %v2003 = vld [vmem:[#allocation3 + $0xd0] sm:$0xff]
    %v2004 = vld [vmem:[#allocation3 + $0xd8] sm:$0xff]
    %v2005 = vsel %vm156, %v2000, 0
    %2007 = vmatpush.msra.mxu0 0.0
    %2008 = vmatpush.msra.mxu0 0.0
    %2009 = vmatpush.msra.mxu0 0.0
    %2010 = vmatpush.msra.mxu0 0.0
    %2011 = vmatpush.msra.mxu0 0.0
    %2012 = vmatpush.msra.mxu0 0.0
    %2013 = vmatpush.msra.mxu0 0.0
    %2014 = vmatpush.msra.mxu0 0.0
    %2015 = vmatpush.msra.mxu0 %v954
    %2016 = vmatpush.msra.mxu0 %v952
    %2017 = vmatpush.msra.mxu0 %v950
    %2018 = vmatpush.msra.mxu0 %v948
    %2019 = vmatpush.msra.mxu0 %v946
    %2020 = vmatpush.msra.mxu0 %v944
    %2021 = vmatpush.msra.mxu0 %v942
    %2022 = vmatpush.msra.mxu0 %v940
    %2023 = vmatmul.f32.gmra.mxu0 %v2005
    %v2024 = vpop.f32.mrf.mxu0
    %v2025 = vadd.f32 %v960, %v2024
    %2026 = vdwg.mxu0
    %2027 = vmatpush.msra.mxu0 0.0
    %2028 = vmatpush.msra.mxu0 0.0
    %2029 = vmatpush.msra.mxu0 0.0
    %2030 = vmatpush.msra.mxu0 0.0
    %2031 = vmatpush.msra.mxu0 0.0
    %2032 = vmatpush.msra.mxu0 0.0
    %2033 = vmatpush.msra.mxu0 0.0
    %2034 = vmatpush.msra.mxu0 0.0
    %2035 = vmatpush.msra.mxu0 %v955
    %2036 = vmatpush.msra.mxu0 %v953
    %2037 = vmatpush.msra.mxu0 %v951
    %2038 = vmatpush.msra.mxu0 %v949
    %2039 = vmatpush.msra.mxu0 %v947
    %2040 = vmatpush.msra.mxu0 %v945
    %2041 = vmatpush.msra.mxu0 %v943
    %2042 = vmatpush.msra.mxu0 %v941
    %2043 = vmatmul.f32.gmra.mxu0 %v2005
    %v2044 = vpop.f32.mrf.mxu0
    %v2045 = vadd.f32 %v961, %v2044
    %2046 = vdwg.mxu0
    %v2047 = vadd.f32 %v2003, %v2025
    %v2048 = vxor.u32 %v2047, 2147483648
    %v2049 = vmul.f32 %v2048, 1.442695
    %v2050 = vpow.pop %v2049
    %v2051 = vadd.f32 %v2050, 1.0
    %v2052 = vrcp.pop %v2051
    %v2053 = vmul.f32 %v2051, %v2052
    %v2054 = vsub.f32 1.0, %v2053
    %v2055 = vmul.f32 %v2052, %v2054
    %v2056 = vadd.f32 %v2052, %v2055
    %vm2057 = vweird.f32 %v2051
    %vm2058 = vweird.f32 %v2052
    %vm2059 = vmor %vm2057, %vm2058
    %v2060 = vsel %vm2059, %v2052, %v2056
    %v2061 = vand.u32 2147483647, %v2051
    %vm2062 = vcmp.eq.f32.partialorder %v2061, 8.507059e+37
    %v2063 = vand.u32 %v2051, 2147483648
    %v2064 = vor.u32 1.1754944e-38, %v2063
    %v2065 = vsel %vm2062, %v2064, %v2060
    %v2066 = vmul.f32 1.0, %v2065
    %v2067 = vmul.f32 %v2066, %v2045
    %v2068 = vadd.f32 %v2004, %v2067
    %v2069 = vtanh.pop %v2068
    %v2070 = vsub.f32 1.0, %v2066
    %2072 = vrot.lane.b32.xlu0 %v2069, 64
    %v2073 = vpop.permute.xlu0 %2072
    %v2075 = vmul.f32 %v2070, %v2073
    %v2076 = vmul.f32 %v2066, %v1997
    %v2077 = vadd.f32 %v2075, %v2076
    %2079 = vrot.lane.b32.xlu0 %v2077, 64
    %v2080 = vpop.permute.xlu0 %2079
    %2082 = vst.msk [vmem:[#allocation4 + $0x68] sm:$0xff] %vm156, %v2080
    %v2083 = vld [vmem:[#allocation3 + $0xe0] sm:$0xff]
    %v2084 = vld [vmem:[#allocation3 + $0xe8] sm:$0xff]
    %v2085 = vsel %vm156, %v2080, 0
    %2087 = vmatpush.msra.mxu0 0.0
    %2088 = vmatpush.msra.mxu0 0.0
    %2089 = vmatpush.msra.mxu0 0.0
    %2090 = vmatpush.msra.mxu0 0.0
    %2091 = vmatpush.msra.mxu0 0.0
    %2092 = vmatpush.msra.mxu0 0.0
    %2093 = vmatpush.msra.mxu0 0.0
    %2094 = vmatpush.msra.mxu0 0.0
    %2095 = vmatpush.msra.mxu0 %v954
    %2096 = vmatpush.msra.mxu0 %v952
    %2097 = vmatpush.msra.mxu0 %v950
    %2098 = vmatpush.msra.mxu0 %v948
    %2099 = vmatpush.msra.mxu0 %v946
    %2100 = vmatpush.msra.mxu0 %v944
    %2101 = vmatpush.msra.mxu0 %v942
    %2102 = vmatpush.msra.mxu0 %v940
    %2103 = vmatmul.f32.gmra.mxu0 %v2085
    %v2104 = vpop.f32.mrf.mxu0
    %v2105 = vadd.f32 %v960, %v2104
    %2106 = vdwg.mxu0
    %2107 = vmatpush.msra.mxu0 0.0
    %2108 = vmatpush.msra.mxu0 0.0
    %2109 = vmatpush.msra.mxu0 0.0
    %2110 = vmatpush.msra.mxu0 0.0
    %2111 = vmatpush.msra.mxu0 0.0
    %2112 = vmatpush.msra.mxu0 0.0
    %2113 = vmatpush.msra.mxu0 0.0
    %2114 = vmatpush.msra.mxu0 0.0
    %2115 = vmatpush.msra.mxu0 %v955
    %2116 = vmatpush.msra.mxu0 %v953
    %2117 = vmatpush.msra.mxu0 %v951
    %2118 = vmatpush.msra.mxu0 %v949
    %2119 = vmatpush.msra.mxu0 %v947
    %2120 = vmatpush.msra.mxu0 %v945
    %2121 = vmatpush.msra.mxu0 %v943
    %2122 = vmatpush.msra.mxu0 %v941
    %2123 = vmatmul.f32.gmra.mxu0 %v2085
    %v2124 = vpop.f32.mrf.mxu0
    %v2125 = vadd.f32 %v961, %v2124
    %2126 = vdwg.mxu0
    %v2127 = vadd.f32 %v2083, %v2105
    %v2128 = vxor.u32 %v2127, 2147483648
    %v2129 = vmul.f32 %v2128, 1.442695
    %v2130 = vpow.pop %v2129
    %v2131 = vadd.f32 %v2130, 1.0
    %v2132 = vrcp.pop %v2131
    %v2133 = vmul.f32 %v2131, %v2132
    %v2134 = vsub.f32 1.0, %v2133
    %v2135 = vmul.f32 %v2132, %v2134
    %v2136 = vadd.f32 %v2132, %v2135
    %vm2137 = vweird.f32 %v2131
    %vm2138 = vweird.f32 %v2132
    %vm2139 = vmor %vm2137, %vm2138
    %v2140 = vsel %vm2139, %v2132, %v2136
    %v2141 = vand.u32 2147483647, %v2131
    %vm2142 = vcmp.eq.f32.partialorder %v2141, 8.507059e+37
    %v2143 = vand.u32 %v2131, 2147483648
    %v2144 = vor.u32 1.1754944e-38, %v2143
    %v2145 = vsel %vm2142, %v2144, %v2140
    %v2146 = vmul.f32 1.0, %v2145
    %v2147 = vmul.f32 %v2146, %v2125
    %v2148 = vadd.f32 %v2084, %v2147
    %v2149 = vtanh.pop %v2148
    %v2150 = vsub.f32 1.0, %v2146
    %2152 = vrot.lane.b32.xlu0 %v2149, 64
    %v2153 = vpop.permute.xlu0 %2152
    %v2155 = vmul.f32 %v2150, %v2153
    %v2156 = vmul.f32 %v2146, %v2077
    %v2157 = vadd.f32 %v2155, %v2156
    %2159 = vrot.lane.b32.xlu0 %v2157, 64
    %v2160 = vpop.permute.xlu0 %2159
    %2162 = vst.msk [vmem:[#allocation4 + $0x70] sm:$0xff] %vm156, %v2160
    %v2163 = vld [vmem:[#allocation3 + $0xf0] sm:$0xff]
    %v2164 = vld [vmem:[#allocation3 + $0xf8] sm:$0xff]
    %v2165 = vsel %vm156, %v2160, 0
    %2167 = vmatpush.msra.mxu0 0.0
    %2168 = vmatpush.msra.mxu0 0.0
    %2169 = vmatpush.msra.mxu0 0.0
    %2170 = vmatpush.msra.mxu0 0.0
    %2171 = vmatpush.msra.mxu0 0.0
    %2172 = vmatpush.msra.mxu0 0.0
    %2173 = vmatpush.msra.mxu0 0.0
    %2174 = vmatpush.msra.mxu0 0.0
    %2175 = vmatpush.msra.mxu0 %v954
    %2176 = vmatpush.msra.mxu0 %v952
    %2177 = vmatpush.msra.mxu0 %v950
    %2178 = vmatpush.msra.mxu0 %v948
    %2179 = vmatpush.msra.mxu0 %v946
    %2180 = vmatpush.msra.mxu0 %v944
    %2181 = vmatpush.msra.mxu0 %v942
    %2182 = vmatpush.msra.mxu0 %v940
    %2183 = vmatmul.f32.gmra.mxu0 %v2165
    %v2184 = vpop.f32.mrf.mxu0
    %v2185 = vadd.f32 %v960, %v2184
    %2186 = vdwg.mxu0
    %2187 = vmatpush.msra.mxu0 0.0
    %2188 = vmatpush.msra.mxu0 0.0
    %2189 = vmatpush.msra.mxu0 0.0
    %2190 = vmatpush.msra.mxu0 0.0
    %2191 = vmatpush.msra.mxu0 0.0
    %2192 = vmatpush.msra.mxu0 0.0
    %2193 = vmatpush.msra.mxu0 0.0
    %2194 = vmatpush.msra.mxu0 0.0
    %2195 = vmatpush.msra.mxu0 %v955
    %2196 = vmatpush.msra.mxu0 %v953
    %2197 = vmatpush.msra.mxu0 %v951
    %2198 = vmatpush.msra.mxu0 %v949
    %2199 = vmatpush.msra.mxu0 %v947
    %2200 = vmatpush.msra.mxu0 %v945
    %2201 = vmatpush.msra.mxu0 %v943
    %2202 = vmatpush.msra.mxu0 %v941
    %2203 = vmatmul.f32.gmra.mxu0 %v2165
    %v2204 = vpop.f32.mrf.mxu0
    %v2205 = vadd.f32 %v961, %v2204
    %2206 = vdwg.mxu0
    %v2207 = vadd.f32 %v2163, %v2185
    %v2208 = vxor.u32 %v2207, 2147483648
    %v2209 = vmul.f32 %v2208, 1.442695
    %v2210 = vpow.pop %v2209
    %v2211 = vadd.f32 %v2210, 1.0
    %v2212 = vrcp.pop %v2211
    %v2213 = vmul.f32 %v2211, %v2212
    %v2214 = vsub.f32 1.0, %v2213
    %v2215 = vmul.f32 %v2212, %v2214
    %v2216 = vadd.f32 %v2212, %v2215
    %vm2217 = vweird.f32 %v2211
    %vm2218 = vweird.f32 %v2212
    %vm2219 = vmor %vm2217, %vm2218
    %v2220 = vsel %vm2219, %v2212, %v2216
    %v2221 = vand.u32 2147483647, %v2211
    %vm2222 = vcmp.eq.f32.partialorder %v2221, 8.507059e+37
    %v2223 = vand.u32 %v2211, 2147483648
    %v2224 = vor.u32 1.1754944e-38, %v2223
    %v2225 = vsel %vm2222, %v2224, %v2220
    %v2226 = vmul.f32 1.0, %v2225
    %v2227 = vmul.f32 %v2226, %v2205
    %v2228 = vadd.f32 %v2164, %v2227
    %v2229 = vtanh.pop %v2228
    %v2230 = vsub.f32 1.0, %v2226
    %2232 = vrot.lane.b32.xlu0 %v2229, 64
    %v2233 = vpop.permute.xlu0 %2232
    %v2235 = vmul.f32 %v2230, %v2233
    %v2236 = vmul.f32 %v2226, %v2157
    %v2237 = vadd.f32 %v2235, %v2236
    %2239 = vrot.lane.b32.xlu0 %v2237, 64
    %v2240 = vpop.permute.xlu0 %2239
    %2242 = vst.msk [vmem:[#allocation4 + $0x78] sm:$0xff] %vm156, %v2240
    %v2243 = vld [vmem:[#allocation3 + $0x100] sm:$0xff]
    %v2244 = vld [vmem:[#allocation3 + $0x108] sm:$0xff]
    %v2245 = vsel %vm156, %v2240, 0
    %2247 = vmatpush.msra.mxu0 0.0
    %2248 = vmatpush.msra.mxu0 0.0
    %2249 = vmatpush.msra.mxu0 0.0
    %2250 = vmatpush.msra.mxu0 0.0
    %2251 = vmatpush.msra.mxu0 0.0
    %2252 = vmatpush.msra.mxu0 0.0
    %2253 = vmatpush.msra.mxu0 0.0
    %2254 = vmatpush.msra.mxu0 0.0
    %2255 = vmatpush.msra.mxu0 %v954
    %2256 = vmatpush.msra.mxu0 %v952
    %2257 = vmatpush.msra.mxu0 %v950
    %2258 = vmatpush.msra.mxu0 %v948
    %2259 = vmatpush.msra.mxu0 %v946
    %2260 = vmatpush.msra.mxu0 %v944
    %2261 = vmatpush.msra.mxu0 %v942
    %2262 = vmatpush.msra.mxu0 %v940
    %2263 = vmatmul.f32.gmra.mxu0 %v2245
    %v2264 = vpop.f32.mrf.mxu0
    %v2265 = vadd.f32 %v960, %v2264
    %2266 = vdwg.mxu0
    %2267 = vmatpush.msra.mxu0 0.0
    %2268 = vmatpush.msra.mxu0 0.0
    %2269 = vmatpush.msra.mxu0 0.0
    %2270 = vmatpush.msra.mxu0 0.0
    %2271 = vmatpush.msra.mxu0 0.0
    %2272 = vmatpush.msra.mxu0 0.0
    %2273 = vmatpush.msra.mxu0 0.0
    %2274 = vmatpush.msra.mxu0 0.0
    %2275 = vmatpush.msra.mxu0 %v955
    %2276 = vmatpush.msra.mxu0 %v953
    %2277 = vmatpush.msra.mxu0 %v951
    %2278 = vmatpush.msra.mxu0 %v949
    %2279 = vmatpush.msra.mxu0 %v947
    %2280 = vmatpush.msra.mxu0 %v945
    %2281 = vmatpush.msra.mxu0 %v943
    %2282 = vmatpush.msra.mxu0 %v941
    %2283 = vmatmul.f32.gmra.mxu0 %v2245
    %v2284 = vpop.f32.mrf.mxu0
    %v2285 = vadd.f32 %v961, %v2284
    %2286 = vdwg.mxu0
    %v2287 = vadd.f32 %v2243, %v2265
    %v2288 = vxor.u32 %v2287, 2147483648
    %v2289 = vmul.f32 %v2288, 1.442695
    %v2290 = vpow.pop %v2289
    %v2291 = vadd.f32 %v2290, 1.0
    %v2292 = vrcp.pop %v2291
    %v2293 = vmul.f32 %v2291, %v2292
    %v2294 = vsub.f32 1.0, %v2293
    %v2295 = vmul.f32 %v2292, %v2294
    %v2296 = vadd.f32 %v2292, %v2295
    %vm2297 = vweird.f32 %v2291
    %vm2298 = vweird.f32 %v2292
    %vm2299 = vmor %vm2297, %vm2298
    %v2300 = vsel %vm2299, %v2292, %v2296
    %v2301 = vand.u32 2147483647, %v2291
    %vm2302 = vcmp.eq.f32.partialorder %v2301, 8.507059e+37
    %v2303 = vand.u32 %v2291, 2147483648
    %v2304 = vor.u32 1.1754944e-38, %v2303
    %v2305 = vsel %vm2302, %v2304, %v2300
    %v2306 = vmul.f32 1.0, %v2305
    %v2307 = vmul.f32 %v2306, %v2285
    %v2308 = vadd.f32 %v2244, %v2307
    %v2309 = vtanh.pop %v2308
    %v2310 = vsub.f32 1.0, %v2306
    %2312 = vrot.lane.b32.xlu0 %v2309, 64
    %v2313 = vpop.permute.xlu0 %2312
    %v2315 = vmul.f32 %v2310, %v2313
    %v2316 = vmul.f32 %v2306, %v2237
    %v2317 = vadd.f32 %v2315, %v2316
    %2319 = vrot.lane.b32.xlu0 %v2317, 64
    %v2320 = vpop.permute.xlu0 %2319
    %2322 = vst.msk [vmem:[#allocation4 + $0x80] sm:$0xff] %vm156, %v2320
    %v2323 = vld [vmem:[#allocation4] sm:$0xff]
    %v2324 = vld [vmem:[#allocation4 + $0x8] sm:$0xff]
    %v2325 = vld [vmem:[#allocation4 + $0x10] sm:$0xff]
    %v2326 = vld [vmem:[#allocation4 + $0x18] sm:$0xff]
    %v2327 = vld [vmem:[#allocation4 + $0x20] sm:$0xff]
    %v2328 = vld [vmem:[#allocation4 + $0x28] sm:$0xff]
    %v2329 = vld [vmem:[#allocation4 + $0x30] sm:$0xff]
    %v2330 = vld [vmem:[#allocation4 + $0x38] sm:$0xff]
    %v2331 = vld [vmem:[#allocation4 + $0x40] sm:$0xff]
    %v2332 = vld [vmem:[#allocation4 + $0x48] sm:$0xff]
    %v2333 = vld [vmem:[#allocation4 + $0x50] sm:$0xff]
    %v2334 = vld [vmem:[#allocation4 + $0x58] sm:$0xff]
    %v2335 = vld [vmem:[#allocation4 + $0x60] sm:$0xff]
    %v2336 = vld [vmem:[#allocation4 + $0x68] sm:$0xff]
    %v2337 = vld [vmem:[#allocation4 + $0x70] sm:$0xff]
    %v2338 = vld [vmem:[#allocation4 + $0x78] sm:$0xff]
    %v2339 = vld [vmem:[#allocation4 + $0x80] sm:$0xff]
    %v2340 = vld [vmem:[%s11] sm:$0xff]
    %v2341 = vld [vmem:[%s11 + $0x8] sm:$0xff]
    %v2342 = vld [vmem:[%s11 + $0x10] sm:$0xff]
    %v2343 = vld [vmem:[%s11 + $0x18] sm:$0xff]
    %v2344 = vld [vmem:[%s11 + $0x20] sm:$0xff]
    %v2345 = vld [vmem:[%s11 + $0x28] sm:$0xff]
    %v2346 = vld [vmem:[%s11 + $0x30] sm:$0xff]
    %v2347 = vld [vmem:[%s11 + $0x38] sm:$0xff]
    %v2348 = vld [vmem:[%s11 + $0x40] sm:$0xff]
    %v2349 = vld [vmem:[%s11 + $0x48] sm:$0xff]
    %v2350 = vld [vmem:[%s11 + $0x50] sm:$0xff]
    %v2351 = vld [vmem:[%s11 + $0x58] sm:$0xff]
    %v2352 = vld [vmem:[%s11 + $0x60] sm:$0xff]
    %v2353 = vld [vmem:[%s11 + $0x68] sm:$0xff]
    %v2354 = vld [vmem:[%s11 + $0x70] sm:$0xff]
    %v2355 = vld [vmem:[%s11 + $0x78] sm:$0xff]
    %v2356 = vld [vmem:[%s12] sm:$0x3]
    %v2358 = vperm.slane %v2356, 0
    %v2359 = vperm.slane %v2356, 1
    %v2363 = vsel %vm156, %v2323, 0
    %v2366 = vsel %vm156, %v2324, 0
    %v2369 = vsel %vm156, %v2325, 0
    %v2372 = vsel %vm156, %v2326, 0
    %v2375 = vsel %vm156, %v2327, 0
    %v2378 = vsel %vm156, %v2328, 0
    %v2381 = vsel %vm156, %v2329, 0
    %v2384 = vsel %vm156, %v2330, 0
    %v2387 = vsel %vm156, %v2331, 0
    %v2390 = vsel %vm156, %v2332, 0
    %v2393 = vsel %vm156, %v2333, 0
    %v2396 = vsel %vm156, %v2334, 0
    %v2399 = vsel %vm156, %v2335, 0
    %v2402 = vsel %vm156, %v2336, 0
    %v2405 = vsel %vm156, %v2337, 0
    %v2408 = vsel %vm156, %v2338, 0
    %v2411 = vsel %vm156, %v2339, 0
    %2413 = vmatpush.msra.mxu0 0.0
    %2414 = vmatpush.msra.mxu0 0.0
    %2415 = vmatpush.msra.mxu0 0.0
    %2416 = vmatpush.msra.mxu0 0.0
    %2417 = vmatpush.msra.mxu0 0.0
    %2418 = vmatpush.msra.mxu0 0.0
    %2419 = vmatpush.msra.mxu0 0.0
    %2420 = vmatpush.msra.mxu0 0.0
    %2421 = vmatpush.msra.mxu0 %v2354
    %2422 = vmatpush.msra.mxu0 %v2352
    %2423 = vmatpush.msra.mxu0 %v2350
    %2424 = vmatpush.msra.mxu0 %v2348
    %2425 = vmatpush.msra.mxu0 %v2346
    %2426 = vmatpush.msra.mxu0 %v2344
    %2427 = vmatpush.msra.mxu0 %v2342
    %2428 = vmatpush.msra.mxu0 %v2340
    %2429 = vmatmul.f32.gmra.mxu0 %v2363
    %v2430 = vpop.f32.mrf.mxu0
    %v2431 = vadd.f32 %v2358, %v2430
    %2432 = vmatmul.f32.gmra.mxu0 %v2366
    %v2433 = vpop.f32.mrf.mxu0
    %v2434 = vadd.f32 %v2358, %v2433
    %2435 = vmatmul.f32.gmra.mxu0 %v2369
    %v2436 = vpop.f32.mrf.mxu0
    %v2437 = vadd.f32 %v2358, %v2436
    %2438 = vmatmul.f32.gmra.mxu0 %v2372
    %v2439 = vpop.f32.mrf.mxu0
    %v2440 = vadd.f32 %v2358, %v2439
    %2441 = vmatmul.f32.gmra.mxu0 %v2375
    %v2442 = vpop.f32.mrf.mxu0
    %v2443 = vadd.f32 %v2358, %v2442
    %2444 = vmatmul.f32.gmra.mxu0 %v2378
    %v2445 = vpop.f32.mrf.mxu0
    %v2446 = vadd.f32 %v2358, %v2445
    %2447 = vmatmul.f32.gmra.mxu0 %v2381
    %v2448 = vpop.f32.mrf.mxu0
    %v2449 = vadd.f32 %v2358, %v2448
    %2450 = vmatmul.f32.gmra.mxu0 %v2384
    %v2451 = vpop.f32.mrf.mxu0
    %v2452 = vadd.f32 %v2358, %v2451
    %2453 = vmatmul.f32.gmra.mxu0 %v2387
    %v2454 = vpop.f32.mrf.mxu0
    %v2455 = vadd.f32 %v2358, %v2454
    %2456 = vmatmul.f32.gmra.mxu0 %v2390
    %v2457 = vpop.f32.mrf.mxu0
    %v2458 = vadd.f32 %v2358, %v2457
    %2459 = vmatmul.f32.gmra.mxu0 %v2393
    %v2460 = vpop.f32.mrf.mxu0
    %v2461 = vadd.f32 %v2358, %v2460
    %2462 = vmatmul.f32.gmra.mxu0 %v2396
    %v2463 = vpop.f32.mrf.mxu0
    %v2464 = vadd.f32 %v2358, %v2463
    %2465 = vmatmul.f32.gmra.mxu0 %v2399
    %v2466 = vpop.f32.mrf.mxu0
    %v2467 = vadd.f32 %v2358, %v2466
    %2468 = vmatmul.f32.gmra.mxu0 %v2402
    %v2469 = vpop.f32.mrf.mxu0
    %v2470 = vadd.f32 %v2358, %v2469
    %2471 = vmatmul.f32.gmra.mxu0 %v2405
    %v2472 = vpop.f32.mrf.mxu0
    %v2473 = vadd.f32 %v2358, %v2472
    %2474 = vmatmul.f32.gmra.mxu0 %v2408
    %v2475 = vpop.f32.mrf.mxu0
    %v2476 = vadd.f32 %v2358, %v2475
    %2477 = vmatmul.f32.gmra.mxu0 %v2411
    %v2478 = vpop.f32.mrf.mxu0
    %v2479 = vadd.f32 %v2358, %v2478
    %2480 = vdwg.mxu0
    %2481 = vmatpush.msra.mxu0 0.0
    %2482 = vmatpush.msra.mxu0 0.0
    %2483 = vmatpush.msra.mxu0 0.0
    %2484 = vmatpush.msra.mxu0 0.0
    %2485 = vmatpush.msra.mxu0 0.0
    %2486 = vmatpush.msra.mxu0 0.0
    %2487 = vmatpush.msra.mxu0 0.0
    %2488 = vmatpush.msra.mxu0 0.0
    %2489 = vmatpush.msra.mxu0 %v2355
    %2490 = vmatpush.msra.mxu0 %v2353
    %2491 = vmatpush.msra.mxu0 %v2351
    %2492 = vmatpush.msra.mxu0 %v2349
    %2493 = vmatpush.msra.mxu0 %v2347
    %2494 = vmatpush.msra.mxu0 %v2345
    %2495 = vmatpush.msra.mxu0 %v2343
    %2496 = vmatpush.msra.mxu0 %v2341
    %2497 = vmatmul.f32.gmra.mxu0 %v2363
    %v2498 = vpop.f32.mrf.mxu0
    %v2499 = vadd.f32 %v2359, %v2498
    %2500 = vmatmul.f32.gmra.mxu0 %v2366
    %v2501 = vpop.f32.mrf.mxu0
    %v2502 = vadd.f32 %v2359, %v2501
    %2503 = vmatmul.f32.gmra.mxu0 %v2369
    %v2504 = vpop.f32.mrf.mxu0
    %v2505 = vadd.f32 %v2359, %v2504
    %2506 = vmatmul.f32.gmra.mxu0 %v2372
    %v2507 = vpop.f32.mrf.mxu0
    %v2508 = vadd.f32 %v2359, %v2507
    %2509 = vmatmul.f32.gmra.mxu0 %v2375
    %v2510 = vpop.f32.mrf.mxu0
    %v2511 = vadd.f32 %v2359, %v2510
    %2512 = vmatmul.f32.gmra.mxu0 %v2378
    %v2513 = vpop.f32.mrf.mxu0
    %v2514 = vadd.f32 %v2359, %v2513
    %2515 = vmatmul.f32.gmra.mxu0 %v2381
    %v2516 = vpop.f32.mrf.mxu0
    %v2517 = vadd.f32 %v2359, %v2516
    %2518 = vmatmul.f32.gmra.mxu0 %v2384
    %v2519 = vpop.f32.mrf.mxu0
    %v2520 = vadd.f32 %v2359, %v2519
    %2521 = vmatmul.f32.gmra.mxu0 %v2387
    %v2522 = vpop.f32.mrf.mxu0
    %v2523 = vadd.f32 %v2359, %v2522
    %2524 = vmatmul.f32.gmra.mxu0 %v2390
    %v2525 = vpop.f32.mrf.mxu0
    %v2526 = vadd.f32 %v2359, %v2525
    %2527 = vmatmul.f32.gmra.mxu0 %v2393
    %v2528 = vpop.f32.mrf.mxu0
    %v2529 = vadd.f32 %v2359, %v2528
    %2530 = vmatmul.f32.gmra.mxu0 %v2396
    %v2531 = vpop.f32.mrf.mxu0
    %v2532 = vadd.f32 %v2359, %v2531
    %2533 = vmatmul.f32.gmra.mxu0 %v2399
    %v2534 = vpop.f32.mrf.mxu0
    %v2535 = vadd.f32 %v2359, %v2534
    %2536 = vmatmul.f32.gmra.mxu0 %v2402
    %v2537 = vpop.f32.mrf.mxu0
    %v2538 = vadd.f32 %v2359, %v2537
    %2539 = vmatmul.f32.gmra.mxu0 %v2405
    %v2540 = vpop.f32.mrf.mxu0
    %v2541 = vadd.f32 %v2359, %v2540
    %2542 = vmatmul.f32.gmra.mxu0 %v2408
    %v2543 = vpop.f32.mrf.mxu0
    %v2544 = vadd.f32 %v2359, %v2543
    %2545 = vmatmul.f32.gmra.mxu0 %v2411
    %v2546 = vpop.f32.mrf.mxu0
    %v2547 = vadd.f32 %v2359, %v2546
    %2548 = vdwg.mxu0
    %2549 = vst [vmem:[#allocation3] sm:$0xff] %v2431
    %2550 = vst.msk [vmem:[#allocation3 + $0x8] sm:$0xff] %vm156, %v2499
    %2551 = vst [vmem:[#allocation3 + $0x10] sm:$0xff] %v2434
    %2552 = vst.msk [vmem:[#allocation3 + $0x18] sm:$0xff] %vm156, %v2502
    %2553 = vst [vmem:[#allocation3 + $0x20] sm:$0xff] %v2437
    %2554 = vst.msk [vmem:[#allocation3 + $0x28] sm:$0xff] %vm156, %v2505
    %2555 = vst [vmem:[#allocation3 + $0x30] sm:$0xff] %v2440
    %2556 = vst.msk [vmem:[#allocation3 + $0x38] sm:$0xff] %vm156, %v2508
    %2557 = vst [vmem:[#allocation3 + $0x40] sm:$0xff] %v2443
    %2558 = vst.msk [vmem:[#allocation3 + $0x48] sm:$0xff] %vm156, %v2511
    %2559 = vst [vmem:[#allocation3 + $0x50] sm:$0xff] %v2446
    %2560 = vst.msk [vmem:[#allocation3 + $0x58] sm:$0xff] %vm156, %v2514
    %2561 = vst [vmem:[#allocation3 + $0x60] sm:$0xff] %v2449
    %2562 = vst.msk [vmem:[#allocation3 + $0x68] sm:$0xff] %vm156, %v2517
    %2563 = vst [vmem:[#allocation3 + $0x70] sm:$0xff] %v2452
    %2564 = vst.msk [vmem:[#allocation3 + $0x78] sm:$0xff] %vm156, %v2520
    %2565 = vst [vmem:[#allocation3 + $0x80] sm:$0xff] %v2455
    %2566 = vst.msk [vmem:[#allocation3 + $0x88] sm:$0xff] %vm156, %v2523
    %2567 = vst [vmem:[#allocation3 + $0x90] sm:$0xff] %v2458
    %2568 = vst.msk [vmem:[#allocation3 + $0x98] sm:$0xff] %vm156, %v2526
    %2569 = vst [vmem:[#allocation3 + $0xa0] sm:$0xff] %v2461
    %2570 = vst.msk [vmem:[#allocation3 + $0xa8] sm:$0xff] %vm156, %v2529
    %2571 = vst [vmem:[#allocation3 + $0xb0] sm:$0xff] %v2464
    %2572 = vst.msk [vmem:[#allocation3 + $0xb8] sm:$0xff] %vm156, %v2532
    %2573 = vst [vmem:[#allocation3 + $0xc0] sm:$0xff] %v2467
    %2574 = vst.msk [vmem:[#allocation3 + $0xc8] sm:$0xff] %vm156, %v2535
    %2575 = vst [vmem:[#allocation3 + $0xd0] sm:$0xff] %v2470
    %2576 = vst.msk [vmem:[#allocation3 + $0xd8] sm:$0xff] %vm156, %v2538
    %2577 = vst [vmem:[#allocation3 + $0xe0] sm:$0xff] %v2473
    %2578 = vst.msk [vmem:[#allocation3 + $0xe8] sm:$0xff] %vm156, %v2541
    %2579 = vst [vmem:[#allocation3 + $0xf0] sm:$0xff] %v2476
    %2580 = vst.msk [vmem:[#allocation3 + $0xf8] sm:$0xff] %vm156, %v2544
    %2581 = vst [vmem:[#allocation3 + $0x100] sm:$0xff] %v2479
    %2582 = vst.msk [vmem:[#allocation3 + $0x108] sm:$0xff] %vm156, %v2547
    %v2583 = vld [vmem:[#allocation12] sm:$0xff]
    %v2584 = vld [vmem:[#allocation12 + $0x8] sm:$0xff]
    %v2585 = vld [vmem:[#allocation12 + $0x10] sm:$0xff]
    %v2586 = vld [vmem:[#allocation12 + $0x18] sm:$0xff]
    %v2587 = vld [vmem:[#allocation12 + $0x20] sm:$0xff]
    %v2588 = vld [vmem:[#allocation12 + $0x28] sm:$0xff]
    %v2589 = vld [vmem:[#allocation12 + $0x30] sm:$0xff]
    %v2590 = vld [vmem:[#allocation12 + $0x38] sm:$0xff]
    %v2591 = vld [vmem:[#allocation12 + $0x40] sm:$0xff]
    %v2592 = vld [vmem:[#allocation12 + $0x48] sm:$0xff]
    %v2593 = vld [vmem:[#allocation12 + $0x50] sm:$0xff]
    %v2594 = vld [vmem:[#allocation12 + $0x58] sm:$0xff]
    %v2595 = vld [vmem:[#allocation12 + $0x60] sm:$0xff]
    %v2596 = vld [vmem:[#allocation12 + $0x68] sm:$0xff]
    %v2597 = vld [vmem:[#allocation12 + $0x70] sm:$0xff]
    %v2598 = vld [vmem:[#allocation12 + $0x78] sm:$0xff]
    %v2599 = vld [vmem:[%s14] sm:$0x3]
    %v2600 = vld [vmem:[#allocation3] sm:$0xff]
    %v2601 = vld [vmem:[#allocation3 + $0x8] sm:$0xff]
    %v2603 = vperm.slane %v2599, 0
    %v2604 = vperm.slane %v2599, 1
    %2607 = vmatpush.msra.mxu0 0.0
    %2608 = vmatpush.msra.mxu0 0.0
    %2609 = vmatpush.msra.mxu0 0.0
    %2610 = vmatpush.msra.mxu0 0.0
    %2611 = vmatpush.msra.mxu0 0.0
    %2612 = vmatpush.msra.mxu0 0.0
    %2613 = vmatpush.msra.mxu0 0.0
    %2614 = vmatpush.msra.mxu0 0.0
    %2615 = vmatpush.msra.mxu0 %v2597
    %2616 = vmatpush.msra.mxu0 %v2595
    %2617 = vmatpush.msra.mxu0 %v2593
    %2618 = vmatpush.msra.mxu0 %v2591
    %2619 = vmatpush.msra.mxu0 %v2589
    %2620 = vmatpush.msra.mxu0 %v2587
    %2621 = vmatpush.msra.mxu0 %v2585
    %2622 = vmatpush.msra.mxu0 %v2583
    %2623 = vmatmul.f32.gmra.mxu0 %v965
    %v2624 = vpop.f32.mrf.mxu0
    %v2625 = vadd.f32 %v2603, %v2624
    %2626 = vdwg.mxu0
    %2627 = vmatpush.msra.mxu0 0.0
    %2628 = vmatpush.msra.mxu0 0.0
    %2629 = vmatpush.msra.mxu0 0.0
    %2630 = vmatpush.msra.mxu0 0.0
    %2631 = vmatpush.msra.mxu0 0.0
    %2632 = vmatpush.msra.mxu0 0.0
    %2633 = vmatpush.msra.mxu0 0.0
    %2634 = vmatpush.msra.mxu0 0.0
    %2635 = vmatpush.msra.mxu0 %v2598
    %2636 = vmatpush.msra.mxu0 %v2596
    %2637 = vmatpush.msra.mxu0 %v2594
    %2638 = vmatpush.msra.mxu0 %v2592
    %2639 = vmatpush.msra.mxu0 %v2590
    %2640 = vmatpush.msra.mxu0 %v2588
    %2641 = vmatpush.msra.mxu0 %v2586
    %2642 = vmatpush.msra.mxu0 %v2584
    %2643 = vmatmul.f32.gmra.mxu0 %v965
    %v2644 = vpop.f32.mrf.mxu0
    %v2645 = vadd.f32 %v2604, %v2644
    %2646 = vdwg.mxu0
    %v2647 = vadd.f32 %v2600, %v2625
    %v2648 = vxor.u32 %v2647, 2147483648
    %v2649 = vmul.f32 %v2648, 1.442695
    %v2650 = vpow.pop %v2649
    %v2651 = vadd.f32 %v2650, 1.0
    %v2652 = vrcp.pop %v2651
    %v2653 = vmul.f32 %v2651, %v2652
    %v2654 = vsub.f32 1.0, %v2653
    %v2655 = vmul.f32 %v2652, %v2654
    %v2656 = vadd.f32 %v2652, %v2655
    %vm2657 = vweird.f32 %v2651
    %vm2658 = vweird.f32 %v2652
    %vm2659 = vmor %vm2657, %vm2658
    %v2660 = vsel %vm2659, %v2652, %v2656
    %v2661 = vand.u32 2147483647, %v2651
    %vm2662 = vcmp.eq.f32.partialorder %v2661, 8.507059e+37
    %v2663 = vand.u32 %v2651, 2147483648
    %v2664 = vor.u32 1.1754944e-38, %v2663
    %v2665 = vsel %vm2662, %v2664, %v2660
    %v2666 = vmul.f32 1.0, %v2665
    %v2667 = vmul.f32 %v2666, %v2645
    %v2668 = vadd.f32 %v2601, %v2667
    %v2669 = vtanh.pop %v2668
    %v2670 = vsub.f32 1.0, %v2666
    %2672 = vrot.lane.b32.xlu0 %v2669, 64
    %v2673 = vpop.permute.xlu0 %2672
    %v2675 = vmul.f32 %v2670, %v2673
    %v2676 = vmul.f32 %v2666, 0.0
    %v2677 = vadd.f32 %v2675, %v2676
    %2679 = vrot.lane.b32.xlu0 %v2677, 64
    %v2680 = vpop.permute.xlu0 %2679
    %2682 = vst.msk [vmem:[#allocation5] sm:$0xff] %vm156, %v2680
    %v2683 = vld [vmem:[#allocation3 + $0x10] sm:$0xff]
    %v2684 = vld [vmem:[#allocation3 + $0x18] sm:$0xff]
    %v2685 = vsel %vm156, %v2680, 0
    %2687 = vmatpush.msra.mxu0 0.0
    %2688 = vmatpush.msra.mxu0 0.0
    %2689 = vmatpush.msra.mxu0 0.0
    %2690 = vmatpush.msra.mxu0 0.0
    %2691 = vmatpush.msra.mxu0 0.0
    %2692 = vmatpush.msra.mxu0 0.0
    %2693 = vmatpush.msra.mxu0 0.0
    %2694 = vmatpush.msra.mxu0 0.0
    %2695 = vmatpush.msra.mxu0 %v2597
    %2696 = vmatpush.msra.mxu0 %v2595
    %2697 = vmatpush.msra.mxu0 %v2593
    %2698 = vmatpush.msra.mxu0 %v2591
    %2699 = vmatpush.msra.mxu0 %v2589
    %2700 = vmatpush.msra.mxu0 %v2587
    %2701 = vmatpush.msra.mxu0 %v2585
    %2702 = vmatpush.msra.mxu0 %v2583
    %2703 = vmatmul.f32.gmra.mxu0 %v2685
    %v2704 = vpop.f32.mrf.mxu0
    %v2705 = vadd.f32 %v2603, %v2704
    %2706 = vdwg.mxu0
    %2707 = vmatpush.msra.mxu0 0.0
    %2708 = vmatpush.msra.mxu0 0.0
    %2709 = vmatpush.msra.mxu0 0.0
    %2710 = vmatpush.msra.mxu0 0.0
    %2711 = vmatpush.msra.mxu0 0.0
    %2712 = vmatpush.msra.mxu0 0.0
    %2713 = vmatpush.msra.mxu0 0.0
    %2714 = vmatpush.msra.mxu0 0.0
    %2715 = vmatpush.msra.mxu0 %v2598
    %2716 = vmatpush.msra.mxu0 %v2596
    %2717 = vmatpush.msra.mxu0 %v2594
    %2718 = vmatpush.msra.mxu0 %v2592
    %2719 = vmatpush.msra.mxu0 %v2590
    %2720 = vmatpush.msra.mxu0 %v2588
    %2721 = vmatpush.msra.mxu0 %v2586
    %2722 = vmatpush.msra.mxu0 %v2584
    %2723 = vmatmul.f32.gmra.mxu0 %v2685
    %v2724 = vpop.f32.mrf.mxu0
    %v2725 = vadd.f32 %v2604, %v2724
    %2726 = vdwg.mxu0
    %v2727 = vadd.f32 %v2683, %v2705
    %v2728 = vxor.u32 %v2727, 2147483648
    %v2729 = vmul.f32 %v2728, 1.442695
    %v2730 = vpow.pop %v2729
    %v2731 = vadd.f32 %v2730, 1.0
    %v2732 = vrcp.pop %v2731
    %v2733 = vmul.f32 %v2731, %v2732
    %v2734 = vsub.f32 1.0, %v2733
    %v2735 = vmul.f32 %v2732, %v2734
    %v2736 = vadd.f32 %v2732, %v2735
    %vm2737 = vweird.f32 %v2731
    %vm2738 = vweird.f32 %v2732
    %vm2739 = vmor %vm2737, %vm2738
    %v2740 = vsel %vm2739, %v2732, %v2736
    %v2741 = vand.u32 2147483647, %v2731
    %vm2742 = vcmp.eq.f32.partialorder %v2741, 8.507059e+37
    %v2743 = vand.u32 %v2731, 2147483648
    %v2744 = vor.u32 1.1754944e-38, %v2743
    %v2745 = vsel %vm2742, %v2744, %v2740
    %v2746 = vmul.f32 1.0, %v2745
    %v2747 = vmul.f32 %v2746, %v2725
    %v2748 = vadd.f32 %v2684, %v2747
    %v2749 = vtanh.pop %v2748
    %v2750 = vsub.f32 1.0, %v2746
    %2752 = vrot.lane.b32.xlu0 %v2749, 64
    %v2753 = vpop.permute.xlu0 %2752
    %v2755 = vmul.f32 %v2750, %v2753
    %v2756 = vmul.f32 %v2746, %v2677
    %v2757 = vadd.f32 %v2755, %v2756
    %2759 = vrot.lane.b32.xlu0 %v2757, 64
    %v2760 = vpop.permute.xlu0 %2759
    %2762 = vst.msk [vmem:[#allocation5 + $0x8] sm:$0xff] %vm156, %v2760
    %v2763 = vld [vmem:[#allocation3 + $0x20] sm:$0xff]
    %v2764 = vld [vmem:[#allocation3 + $0x28] sm:$0xff]
    %v2765 = vsel %vm156, %v2760, 0
    %2767 = vmatpush.msra.mxu0 0.0
    %2768 = vmatpush.msra.mxu0 0.0
    %2769 = vmatpush.msra.mxu0 0.0
    %2770 = vmatpush.msra.mxu0 0.0
    %2771 = vmatpush.msra.mxu0 0.0
    %2772 = vmatpush.msra.mxu0 0.0
    %2773 = vmatpush.msra.mxu0 0.0
    %2774 = vmatpush.msra.mxu0 0.0
    %2775 = vmatpush.msra.mxu0 %v2597
    %2776 = vmatpush.msra.mxu0 %v2595
    %2777 = vmatpush.msra.mxu0 %v2593
    %2778 = vmatpush.msra.mxu0 %v2591
    %2779 = vmatpush.msra.mxu0 %v2589
    %2780 = vmatpush.msra.mxu0 %v2587
    %2781 = vmatpush.msra.mxu0 %v2585
    %2782 = vmatpush.msra.mxu0 %v2583
    %2783 = vmatmul.f32.gmra.mxu0 %v2765
    %v2784 = vpop.f32.mrf.mxu0
    %v2785 = vadd.f32 %v2603, %v2784
    %2786 = vdwg.mxu0
    %2787 = vmatpush.msra.mxu0 0.0
    %2788 = vmatpush.msra.mxu0 0.0
    %2789 = vmatpush.msra.mxu0 0.0
    %2790 = vmatpush.msra.mxu0 0.0
    %2791 = vmatpush.msra.mxu0 0.0
    %2792 = vmatpush.msra.mxu0 0.0
    %2793 = vmatpush.msra.mxu0 0.0
    %2794 = vmatpush.msra.mxu0 0.0
    %2795 = vmatpush.msra.mxu0 %v2598
    %2796 = vmatpush.msra.mxu0 %v2596
    %2797 = vmatpush.msra.mxu0 %v2594
    %2798 = vmatpush.msra.mxu0 %v2592
    %2799 = vmatpush.msra.mxu0 %v2590
    %2800 = vmatpush.msra.mxu0 %v2588
    %2801 = vmatpush.msra.mxu0 %v2586
    %2802 = vmatpush.msra.mxu0 %v2584
    %2803 = vmatmul.f32.gmra.mxu0 %v2765
    %v2804 = vpop.f32.mrf.mxu0
    %v2805 = vadd.f32 %v2604, %v2804
    %2806 = vdwg.mxu0
    %v2807 = vadd.f32 %v2763, %v2785
    %v2808 = vxor.u32 %v2807, 2147483648
    %v2809 = vmul.f32 %v2808, 1.442695
    %v2810 = vpow.pop %v2809
    %v2811 = vadd.f32 %v2810, 1.0
    %v2812 = vrcp.pop %v2811
    %v2813 = vmul.f32 %v2811, %v2812
    %v2814 = vsub.f32 1.0, %v2813
    %v2815 = vmul.f32 %v2812, %v2814
    %v2816 = vadd.f32 %v2812, %v2815
    %vm2817 = vweird.f32 %v2811
    %vm2818 = vweird.f32 %v2812
    %vm2819 = vmor %vm2817, %vm2818
    %v2820 = vsel %vm2819, %v2812, %v2816
    %v2821 = vand.u32 2147483647, %v2811
    %vm2822 = vcmp.eq.f32.partialorder %v2821, 8.507059e+37
    %v2823 = vand.u32 %v2811, 2147483648
    %v2824 = vor.u32 1.1754944e-38, %v2823
    %v2825 = vsel %vm2822, %v2824, %v2820
    %v2826 = vmul.f32 1.0, %v2825
    %v2827 = vmul.f32 %v2826, %v2805
    %v2828 = vadd.f32 %v2764, %v2827
    %v2829 = vtanh.pop %v2828
    %v2830 = vsub.f32 1.0, %v2826
    %2832 = vrot.lane.b32.xlu0 %v2829, 64
    %v2833 = vpop.permute.xlu0 %2832
    %v2835 = vmul.f32 %v2830, %v2833
    %v2836 = vmul.f32 %v2826, %v2757
    %v2837 = vadd.f32 %v2835, %v2836
    %2839 = vrot.lane.b32.xlu0 %v2837, 64
    %v2840 = vpop.permute.xlu0 %2839
    %2842 = vst.msk [vmem:[#allocation5 + $0x10] sm:$0xff] %vm156, %v2840
    %v2843 = vld [vmem:[#allocation3 + $0x30] sm:$0xff]
    %v2844 = vld [vmem:[#allocation3 + $0x38] sm:$0xff]
    %v2845 = vsel %vm156, %v2840, 0
    %2847 = vmatpush.msra.mxu0 0.0
    %2848 = vmatpush.msra.mxu0 0.0
    %2849 = vmatpush.msra.mxu0 0.0
    %2850 = vmatpush.msra.mxu0 0.0
    %2851 = vmatpush.msra.mxu0 0.0
    %2852 = vmatpush.msra.mxu0 0.0
    %2853 = vmatpush.msra.mxu0 0.0
    %2854 = vmatpush.msra.mxu0 0.0
    %2855 = vmatpush.msra.mxu0 %v2597
    %2856 = vmatpush.msra.mxu0 %v2595
    %2857 = vmatpush.msra.mxu0 %v2593
    %2858 = vmatpush.msra.mxu0 %v2591
    %2859 = vmatpush.msra.mxu0 %v2589
    %2860 = vmatpush.msra.mxu0 %v2587
    %2861 = vmatpush.msra.mxu0 %v2585
    %2862 = vmatpush.msra.mxu0 %v2583
    %2863 = vmatmul.f32.gmra.mxu0 %v2845
    %v2864 = vpop.f32.mrf.mxu0
    %v2865 = vadd.f32 %v2603, %v2864
    %2866 = vdwg.mxu0
    %2867 = vmatpush.msra.mxu0 0.0
    %2868 = vmatpush.msra.mxu0 0.0
    %2869 = vmatpush.msra.mxu0 0.0
    %2870 = vmatpush.msra.mxu0 0.0
    %2871 = vmatpush.msra.mxu0 0.0
    %2872 = vmatpush.msra.mxu0 0.0
    %2873 = vmatpush.msra.mxu0 0.0
    %2874 = vmatpush.msra.mxu0 0.0
    %2875 = vmatpush.msra.mxu0 %v2598
    %2876 = vmatpush.msra.mxu0 %v2596
    %2877 = vmatpush.msra.mxu0 %v2594
    %2878 = vmatpush.msra.mxu0 %v2592
    %2879 = vmatpush.msra.mxu0 %v2590
    %2880 = vmatpush.msra.mxu0 %v2588
    %2881 = vmatpush.msra.mxu0 %v2586
    %2882 = vmatpush.msra.mxu0 %v2584
    %2883 = vmatmul.f32.gmra.mxu0 %v2845
    %v2884 = vpop.f32.mrf.mxu0
    %v2885 = vadd.f32 %v2604, %v2884
    %2886 = vdwg.mxu0
    %v2887 = vadd.f32 %v2843, %v2865
    %v2888 = vxor.u32 %v2887, 2147483648
    %v2889 = vmul.f32 %v2888, 1.442695
    %v2890 = vpow.pop %v2889
    %v2891 = vadd.f32 %v2890, 1.0
    %v2892 = vrcp.pop %v2891
    %v2893 = vmul.f32 %v2891, %v2892
    %v2894 = vsub.f32 1.0, %v2893
    %v2895 = vmul.f32 %v2892, %v2894
    %v2896 = vadd.f32 %v2892, %v2895
    %vm2897 = vweird.f32 %v2891
    %vm2898 = vweird.f32 %v2892
    %vm2899 = vmor %vm2897, %vm2898
    %v2900 = vsel %vm2899, %v2892, %v2896
    %v2901 = vand.u32 2147483647, %v2891
    %vm2902 = vcmp.eq.f32.partialorder %v2901, 8.507059e+37
    %v2903 = vand.u32 %v2891, 2147483648
    %v2904 = vor.u32 1.1754944e-38, %v2903
    %v2905 = vsel %vm2902, %v2904, %v2900
    %v2906 = vmul.f32 1.0, %v2905
    %v2907 = vmul.f32 %v2906, %v2885
    %v2908 = vadd.f32 %v2844, %v2907
    %v2909 = vtanh.pop %v2908
    %v2910 = vsub.f32 1.0, %v2906
    %2912 = vrot.lane.b32.xlu0 %v2909, 64
    %v2913 = vpop.permute.xlu0 %2912
    %v2915 = vmul.f32 %v2910, %v2913
    %v2916 = vmul.f32 %v2906, %v2837
    %v2917 = vadd.f32 %v2915, %v2916
    %2919 = vrot.lane.b32.xlu0 %v2917, 64
    %v2920 = vpop.permute.xlu0 %2919
    %2922 = vst.msk [vmem:[#allocation5 + $0x18] sm:$0xff] %vm156, %v2920
    %v2923 = vld [vmem:[#allocation3 + $0x40] sm:$0xff]
    %v2924 = vld [vmem:[#allocation3 + $0x48] sm:$0xff]
    %v2925 = vsel %vm156, %v2920, 0
    %2927 = vmatpush.msra.mxu0 0.0
    %2928 = vmatpush.msra.mxu0 0.0
    %2929 = vmatpush.msra.mxu0 0.0
    %2930 = vmatpush.msra.mxu0 0.0
    %2931 = vmatpush.msra.mxu0 0.0
    %2932 = vmatpush.msra.mxu0 0.0
    %2933 = vmatpush.msra.mxu0 0.0
    %2934 = vmatpush.msra.mxu0 0.0
    %2935 = vmatpush.msra.mxu0 %v2597
    %2936 = vmatpush.msra.mxu0 %v2595
    %2937 = vmatpush.msra.mxu0 %v2593
    %2938 = vmatpush.msra.mxu0 %v2591
    %2939 = vmatpush.msra.mxu0 %v2589
    %2940 = vmatpush.msra.mxu0 %v2587
    %2941 = vmatpush.msra.mxu0 %v2585
    %2942 = vmatpush.msra.mxu0 %v2583
    %2943 = vmatmul.f32.gmra.mxu0 %v2925
    %v2944 = vpop.f32.mrf.mxu0
    %v2945 = vadd.f32 %v2603, %v2944
    %2946 = vdwg.mxu0
    %2947 = vmatpush.msra.mxu0 0.0
    %2948 = vmatpush.msra.mxu0 0.0
    %2949 = vmatpush.msra.mxu0 0.0
    %2950 = vmatpush.msra.mxu0 0.0
    %2951 = vmatpush.msra.mxu0 0.0
    %2952 = vmatpush.msra.mxu0 0.0
    %2953 = vmatpush.msra.mxu0 0.0
    %2954 = vmatpush.msra.mxu0 0.0
    %2955 = vmatpush.msra.mxu0 %v2598
    %2956 = vmatpush.msra.mxu0 %v2596
    %2957 = vmatpush.msra.mxu0 %v2594
    %2958 = vmatpush.msra.mxu0 %v2592
    %2959 = vmatpush.msra.mxu0 %v2590
    %2960 = vmatpush.msra.mxu0 %v2588
    %2961 = vmatpush.msra.mxu0 %v2586
    %2962 = vmatpush.msra.mxu0 %v2584
    %2963 = vmatmul.f32.gmra.mxu0 %v2925
    %v2964 = vpop.f32.mrf.mxu0
    %v2965 = vadd.f32 %v2604, %v2964
    %2966 = vdwg.mxu0
    %v2967 = vadd.f32 %v2923, %v2945
    %v2968 = vxor.u32 %v2967, 2147483648
    %v2969 = vmul.f32 %v2968, 1.442695
    %v2970 = vpow.pop %v2969
    %v2971 = vadd.f32 %v2970, 1.0
    %v2972 = vrcp.pop %v2971
    %v2973 = vmul.f32 %v2971, %v2972
    %v2974 = vsub.f32 1.0, %v2973
    %v2975 = vmul.f32 %v2972, %v2974
    %v2976 = vadd.f32 %v2972, %v2975
    %vm2977 = vweird.f32 %v2971
    %vm2978 = vweird.f32 %v2972
    %vm2979 = vmor %vm2977, %vm2978
    %v2980 = vsel %vm2979, %v2972, %v2976
    %v2981 = vand.u32 2147483647, %v2971
    %vm2982 = vcmp.eq.f32.partialorder %v2981, 8.507059e+37
    %v2983 = vand.u32 %v2971, 2147483648
    %v2984 = vor.u32 1.1754944e-38, %v2983
    %v2985 = vsel %vm2982, %v2984, %v2980
    %v2986 = vmul.f32 1.0, %v2985
    %v2987 = vmul.f32 %v2986, %v2965
    %v2988 = vadd.f32 %v2924, %v2987
    %v2989 = vtanh.pop %v2988
    %v2990 = vsub.f32 1.0, %v2986
    %2992 = vrot.lane.b32.xlu0 %v2989, 64
    %v2993 = vpop.permute.xlu0 %2992
    %v2995 = vmul.f32 %v2990, %v2993
    %v2996 = vmul.f32 %v2986, %v2917
    %v2997 = vadd.f32 %v2995, %v2996
    %2999 = vrot.lane.b32.xlu0 %v2997, 64
    %v3000 = vpop.permute.xlu0 %2999
    %3002 = vst.msk [vmem:[#allocation5 + $0x20] sm:$0xff] %vm156, %v3000
    %v3003 = vld [vmem:[#allocation3 + $0x50] sm:$0xff]
    %v3004 = vld [vmem:[#allocation3 + $0x58] sm:$0xff]
    %v3005 = vsel %vm156, %v3000, 0
    %3007 = vmatpush.msra.mxu0 0.0
    %3008 = vmatpush.msra.mxu0 0.0
    %3009 = vmatpush.msra.mxu0 0.0
    %3010 = vmatpush.msra.mxu0 0.0
    %3011 = vmatpush.msra.mxu0 0.0
    %3012 = vmatpush.msra.mxu0 0.0
    %3013 = vmatpush.msra.mxu0 0.0
    %3014 = vmatpush.msra.mxu0 0.0
    %3015 = vmatpush.msra.mxu0 %v2597
    %3016 = vmatpush.msra.mxu0 %v2595
    %3017 = vmatpush.msra.mxu0 %v2593
    %3018 = vmatpush.msra.mxu0 %v2591
    %3019 = vmatpush.msra.mxu0 %v2589
    %3020 = vmatpush.msra.mxu0 %v2587
    %3021 = vmatpush.msra.mxu0 %v2585
    %3022 = vmatpush.msra.mxu0 %v2583
    %3023 = vmatmul.f32.gmra.mxu0 %v3005
    %v3024 = vpop.f32.mrf.mxu0
    %v3025 = vadd.f32 %v2603, %v3024
    %3026 = vdwg.mxu0
    %3027 = vmatpush.msra.mxu0 0.0
    %3028 = vmatpush.msra.mxu0 0.0
    %3029 = vmatpush.msra.mxu0 0.0
    %3030 = vmatpush.msra.mxu0 0.0
    %3031 = vmatpush.msra.mxu0 0.0
    %3032 = vmatpush.msra.mxu0 0.0
    %3033 = vmatpush.msra.mxu0 0.0
    %3034 = vmatpush.msra.mxu0 0.0
    %3035 = vmatpush.msra.mxu0 %v2598
    %3036 = vmatpush.msra.mxu0 %v2596
    %3037 = vmatpush.msra.mxu0 %v2594
    %3038 = vmatpush.msra.mxu0 %v2592
    %3039 = vmatpush.msra.mxu0 %v2590
    %3040 = vmatpush.msra.mxu0 %v2588
    %3041 = vmatpush.msra.mxu0 %v2586
    %3042 = vmatpush.msra.mxu0 %v2584
    %3043 = vmatmul.f32.gmra.mxu0 %v3005
    %v3044 = vpop.f32.mrf.mxu0
    %v3045 = vadd.f32 %v2604, %v3044
    %3046 = vdwg.mxu0
    %v3047 = vadd.f32 %v3003, %v3025
    %v3048 = vxor.u32 %v3047, 2147483648
    %v3049 = vmul.f32 %v3048, 1.442695
    %v3050 = vpow.pop %v3049
    %v3051 = vadd.f32 %v3050, 1.0
    %v3052 = vrcp.pop %v3051
    %v3053 = vmul.f32 %v3051, %v3052
    %v3054 = vsub.f32 1.0, %v3053
    %v3055 = vmul.f32 %v3052, %v3054
    %v3056 = vadd.f32 %v3052, %v3055
    %vm3057 = vweird.f32 %v3051
    %vm3058 = vweird.f32 %v3052
    %vm3059 = vmor %vm3057, %vm3058
    %v3060 = vsel %vm3059, %v3052, %v3056
    %v3061 = vand.u32 2147483647, %v3051
    %vm3062 = vcmp.eq.f32.partialorder %v3061, 8.507059e+37
    %v3063 = vand.u32 %v3051, 2147483648
    %v3064 = vor.u32 1.1754944e-38, %v3063
    %v3065 = vsel %vm3062, %v3064, %v3060
    %v3066 = vmul.f32 1.0, %v3065
    %v3067 = vmul.f32 %v3066, %v3045
    %v3068 = vadd.f32 %v3004, %v3067
    %v3069 = vtanh.pop %v3068
    %v3070 = vsub.f32 1.0, %v3066
    %3072 = vrot.lane.b32.xlu0 %v3069, 64
    %v3073 = vpop.permute.xlu0 %3072
    %v3075 = vmul.f32 %v3070, %v3073
    %v3076 = vmul.f32 %v3066, %v2997
    %v3077 = vadd.f32 %v3075, %v3076
    %3079 = vrot.lane.b32.xlu0 %v3077, 64
    %v3080 = vpop.permute.xlu0 %3079
    %3082 = vst.msk [vmem:[#allocation5 + $0x28] sm:$0xff] %vm156, %v3080
    %v3083 = vld [vmem:[#allocation3 + $0x60] sm:$0xff]
    %v3084 = vld [vmem:[#allocation3 + $0x68] sm:$0xff]
    %v3085 = vsel %vm156, %v3080, 0
    %3087 = vmatpush.msra.mxu0 0.0
    %3088 = vmatpush.msra.mxu0 0.0
    %3089 = vmatpush.msra.mxu0 0.0
    %3090 = vmatpush.msra.mxu0 0.0
    %3091 = vmatpush.msra.mxu0 0.0
    %3092 = vmatpush.msra.mxu0 0.0
    %3093 = vmatpush.msra.mxu0 0.0
    %3094 = vmatpush.msra.mxu0 0.0
    %3095 = vmatpush.msra.mxu0 %v2597
    %3096 = vmatpush.msra.mxu0 %v2595
    %3097 = vmatpush.msra.mxu0 %v2593
    %3098 = vmatpush.msra.mxu0 %v2591
    %3099 = vmatpush.msra.mxu0 %v2589
    %3100 = vmatpush.msra.mxu0 %v2587
    %3101 = vmatpush.msra.mxu0 %v2585
    %3102 = vmatpush.msra.mxu0 %v2583
    %3103 = vmatmul.f32.gmra.mxu0 %v3085
    %v3104 = vpop.f32.mrf.mxu0
    %v3105 = vadd.f32 %v2603, %v3104
    %3106 = vdwg.mxu0
    %3107 = vmatpush.msra.mxu0 0.0
    %3108 = vmatpush.msra.mxu0 0.0
    %3109 = vmatpush.msra.mxu0 0.0
    %3110 = vmatpush.msra.mxu0 0.0
    %3111 = vmatpush.msra.mxu0 0.0
    %3112 = vmatpush.msra.mxu0 0.0
    %3113 = vmatpush.msra.mxu0 0.0
    %3114 = vmatpush.msra.mxu0 0.0
    %3115 = vmatpush.msra.mxu0 %v2598
    %3116 = vmatpush.msra.mxu0 %v2596
    %3117 = vmatpush.msra.mxu0 %v2594
    %3118 = vmatpush.msra.mxu0 %v2592
    %3119 = vmatpush.msra.mxu0 %v2590
    %3120 = vmatpush.msra.mxu0 %v2588
    %3121 = vmatpush.msra.mxu0 %v2586
    %3122 = vmatpush.msra.mxu0 %v2584
    %3123 = vmatmul.f32.gmra.mxu0 %v3085
    %v3124 = vpop.f32.mrf.mxu0
    %v3125 = vadd.f32 %v2604, %v3124
    %3126 = vdwg.mxu0
    %v3127 = vadd.f32 %v3083, %v3105
    %v3128 = vxor.u32 %v3127, 2147483648
    %v3129 = vmul.f32 %v3128, 1.442695
    %v3130 = vpow.pop %v3129
    %v3131 = vadd.f32 %v3130, 1.0
    %v3132 = vrcp.pop %v3131
    %v3133 = vmul.f32 %v3131, %v3132
    %v3134 = vsub.f32 1.0, %v3133
    %v3135 = vmul.f32 %v3132, %v3134
    %v3136 = vadd.f32 %v3132, %v3135
    %vm3137 = vweird.f32 %v3131
    %vm3138 = vweird.f32 %v3132
    %vm3139 = vmor %vm3137, %vm3138
    %v3140 = vsel %vm3139, %v3132, %v3136
    %v3141 = vand.u32 2147483647, %v3131
    %vm3142 = vcmp.eq.f32.partialorder %v3141, 8.507059e+37
    %v3143 = vand.u32 %v3131, 2147483648
    %v3144 = vor.u32 1.1754944e-38, %v3143
    %v3145 = vsel %vm3142, %v3144, %v3140
    %v3146 = vmul.f32 1.0, %v3145
    %v3147 = vmul.f32 %v3146, %v3125
    %v3148 = vadd.f32 %v3084, %v3147
    %v3149 = vtanh.pop %v3148
    %v3150 = vsub.f32 1.0, %v3146
    %3152 = vrot.lane.b32.xlu0 %v3149, 64
    %v3153 = vpop.permute.xlu0 %3152
    %v3155 = vmul.f32 %v3150, %v3153
    %v3156 = vmul.f32 %v3146, %v3077
    %v3157 = vadd.f32 %v3155, %v3156
    %3159 = vrot.lane.b32.xlu0 %v3157, 64
    %v3160 = vpop.permute.xlu0 %3159
    %3162 = vst.msk [vmem:[#allocation5 + $0x30] sm:$0xff] %vm156, %v3160
    %v3163 = vld [vmem:[#allocation3 + $0x70] sm:$0xff]
    %v3164 = vld [vmem:[#allocation3 + $0x78] sm:$0xff]
    %v3165 = vsel %vm156, %v3160, 0
    %3167 = vmatpush.msra.mxu0 0.0
    %3168 = vmatpush.msra.mxu0 0.0
    %3169 = vmatpush.msra.mxu0 0.0
    %3170 = vmatpush.msra.mxu0 0.0
    %3171 = vmatpush.msra.mxu0 0.0
    %3172 = vmatpush.msra.mxu0 0.0
    %3173 = vmatpush.msra.mxu0 0.0
    %3174 = vmatpush.msra.mxu0 0.0
    %3175 = vmatpush.msra.mxu0 %v2597
    %3176 = vmatpush.msra.mxu0 %v2595
    %3177 = vmatpush.msra.mxu0 %v2593
    %3178 = vmatpush.msra.mxu0 %v2591
    %3179 = vmatpush.msra.mxu0 %v2589
    %3180 = vmatpush.msra.mxu0 %v2587
    %3181 = vmatpush.msra.mxu0 %v2585
    %3182 = vmatpush.msra.mxu0 %v2583
    %3183 = vmatmul.f32.gmra.mxu0 %v3165
    %v3184 = vpop.f32.mrf.mxu0
    %v3185 = vadd.f32 %v2603, %v3184
    %3186 = vdwg.mxu0
    %3187 = vmatpush.msra.mxu0 0.0
    %3188 = vmatpush.msra.mxu0 0.0
    %3189 = vmatpush.msra.mxu0 0.0
    %3190 = vmatpush.msra.mxu0 0.0
    %3191 = vmatpush.msra.mxu0 0.0
    %3192 = vmatpush.msra.mxu0 0.0
    %3193 = vmatpush.msra.mxu0 0.0
    %3194 = vmatpush.msra.mxu0 0.0
    %3195 = vmatpush.msra.mxu0 %v2598
    %3196 = vmatpush.msra.mxu0 %v2596
    %3197 = vmatpush.msra.mxu0 %v2594
    %3198 = vmatpush.msra.mxu0 %v2592
    %3199 = vmatpush.msra.mxu0 %v2590
    %3200 = vmatpush.msra.mxu0 %v2588
    %3201 = vmatpush.msra.mxu0 %v2586
    %3202 = vmatpush.msra.mxu0 %v2584
    %3203 = vmatmul.f32.gmra.mxu0 %v3165
    %v3204 = vpop.f32.mrf.mxu0
    %v3205 = vadd.f32 %v2604, %v3204
    %3206 = vdwg.mxu0
    %v3207 = vadd.f32 %v3163, %v3185
    %v3208 = vxor.u32 %v3207, 2147483648
    %v3209 = vmul.f32 %v3208, 1.442695
    %v3210 = vpow.pop %v3209
    %v3211 = vadd.f32 %v3210, 1.0
    %v3212 = vrcp.pop %v3211
    %v3213 = vmul.f32 %v3211, %v3212
    %v3214 = vsub.f32 1.0, %v3213
    %v3215 = vmul.f32 %v3212, %v3214
    %v3216 = vadd.f32 %v3212, %v3215
    %vm3217 = vweird.f32 %v3211
    %vm3218 = vweird.f32 %v3212
    %vm3219 = vmor %vm3217, %vm3218
    %v3220 = vsel %vm3219, %v3212, %v3216
    %v3221 = vand.u32 2147483647, %v3211
    %vm3222 = vcmp.eq.f32.partialorder %v3221, 8.507059e+37
    %v3223 = vand.u32 %v3211, 2147483648
    %v3224 = vor.u32 1.1754944e-38, %v3223
    %v3225 = vsel %vm3222, %v3224, %v3220
    %v3226 = vmul.f32 1.0, %v3225
    %v3227 = vmul.f32 %v3226, %v3205
    %v3228 = vadd.f32 %v3164, %v3227
    %v3229 = vtanh.pop %v3228
    %v3230 = vsub.f32 1.0, %v3226
    %3232 = vrot.lane.b32.xlu0 %v3229, 64
    %v3233 = vpop.permute.xlu0 %3232
    %v3235 = vmul.f32 %v3230, %v3233
    %v3236 = vmul.f32 %v3226, %v3157
    %v3237 = vadd.f32 %v3235, %v3236
    %3239 = vrot.lane.b32.xlu0 %v3237, 64
    %v3240 = vpop.permute.xlu0 %3239
    %3242 = vst.msk [vmem:[#allocation5 + $0x38] sm:$0xff] %vm156, %v3240
    %v3243 = vld [vmem:[#allocation3 + $0x80] sm:$0xff]
    %v3244 = vld [vmem:[#allocation3 + $0x88] sm:$0xff]
    %v3245 = vsel %vm156, %v3240, 0
    %3247 = vmatpush.msra.mxu0 0.0
    %3248 = vmatpush.msra.mxu0 0.0
    %3249 = vmatpush.msra.mxu0 0.0
    %3250 = vmatpush.msra.mxu0 0.0
    %3251 = vmatpush.msra.mxu0 0.0
    %3252 = vmatpush.msra.mxu0 0.0
    %3253 = vmatpush.msra.mxu0 0.0
    %3254 = vmatpush.msra.mxu0 0.0
    %3255 = vmatpush.msra.mxu0 %v2597
    %3256 = vmatpush.msra.mxu0 %v2595
    %3257 = vmatpush.msra.mxu0 %v2593
    %3258 = vmatpush.msra.mxu0 %v2591
    %3259 = vmatpush.msra.mxu0 %v2589
    %3260 = vmatpush.msra.mxu0 %v2587
    %3261 = vmatpush.msra.mxu0 %v2585
    %3262 = vmatpush.msra.mxu0 %v2583
    %3263 = vmatmul.f32.gmra.mxu0 %v3245
    %v3264 = vpop.f32.mrf.mxu0
    %v3265 = vadd.f32 %v2603, %v3264
    %3266 = vdwg.mxu0
    %3267 = vmatpush.msra.mxu0 0.0
    %3268 = vmatpush.msra.mxu0 0.0
    %3269 = vmatpush.msra.mxu0 0.0
    %3270 = vmatpush.msra.mxu0 0.0
    %3271 = vmatpush.msra.mxu0 0.0
    %3272 = vmatpush.msra.mxu0 0.0
    %3273 = vmatpush.msra.mxu0 0.0
    %3274 = vmatpush.msra.mxu0 0.0
    %3275 = vmatpush.msra.mxu0 %v2598
    %3276 = vmatpush.msra.mxu0 %v2596
    %3277 = vmatpush.msra.mxu0 %v2594
    %3278 = vmatpush.msra.mxu0 %v2592
    %3279 = vmatpush.msra.mxu0 %v2590
    %3280 = vmatpush.msra.mxu0 %v2588
    %3281 = vmatpush.msra.mxu0 %v2586
    %3282 = vmatpush.msra.mxu0 %v2584
    %3283 = vmatmul.f32.gmra.mxu0 %v3245
    %v3284 = vpop.f32.mrf.mxu0
    %v3285 = vadd.f32 %v2604, %v3284
    %3286 = vdwg.mxu0
    %v3287 = vadd.f32 %v3243, %v3265
    %v3288 = vxor.u32 %v3287, 2147483648
    %v3289 = vmul.f32 %v3288, 1.442695
    %v3290 = vpow.pop %v3289
    %v3291 = vadd.f32 %v3290, 1.0
    %v3292 = vrcp.pop %v3291
    %v3293 = vmul.f32 %v3291, %v3292
    %v3294 = vsub.f32 1.0, %v3293
    %v3295 = vmul.f32 %v3292, %v3294
    %v3296 = vadd.f32 %v3292, %v3295
    %vm3297 = vweird.f32 %v3291
    %vm3298 = vweird.f32 %v3292
    %vm3299 = vmor %vm3297, %vm3298
    %v3300 = vsel %vm3299, %v3292, %v3296
    %v3301 = vand.u32 2147483647, %v3291
    %vm3302 = vcmp.eq.f32.partialorder %v3301, 8.507059e+37
    %v3303 = vand.u32 %v3291, 2147483648
    %v3304 = vor.u32 1.1754944e-38, %v3303
    %v3305 = vsel %vm3302, %v3304, %v3300
    %v3306 = vmul.f32 1.0, %v3305
    %v3307 = vmul.f32 %v3306, %v3285
    %v3308 = vadd.f32 %v3244, %v3307
    %v3309 = vtanh.pop %v3308
    %v3310 = vsub.f32 1.0, %v3306
    %3312 = vrot.lane.b32.xlu0 %v3309, 64
    %v3313 = vpop.permute.xlu0 %3312
    %v3315 = vmul.f32 %v3310, %v3313
    %v3316 = vmul.f32 %v3306, %v3237
    %v3317 = vadd.f32 %v3315, %v3316
    %3319 = vrot.lane.b32.xlu0 %v3317, 64
    %v3320 = vpop.permute.xlu0 %3319
    %3322 = vst.msk [vmem:[#allocation5 + $0x40] sm:$0xff] %vm156, %v3320
    %v3323 = vld [vmem:[#allocation3 + $0x90] sm:$0xff]
    %v3324 = vld [vmem:[#allocation3 + $0x98] sm:$0xff]
    %v3325 = vsel %vm156, %v3320, 0
    %3327 = vmatpush.msra.mxu0 0.0
    %3328 = vmatpush.msra.mxu0 0.0
    %3329 = vmatpush.msra.mxu0 0.0
    %3330 = vmatpush.msra.mxu0 0.0
    %3331 = vmatpush.msra.mxu0 0.0
    %3332 = vmatpush.msra.mxu0 0.0
    %3333 = vmatpush.msra.mxu0 0.0
    %3334 = vmatpush.msra.mxu0 0.0
    %3335 = vmatpush.msra.mxu0 %v2597
    %3336 = vmatpush.msra.mxu0 %v2595
    %3337 = vmatpush.msra.mxu0 %v2593
    %3338 = vmatpush.msra.mxu0 %v2591
    %3339 = vmatpush.msra.mxu0 %v2589
    %3340 = vmatpush.msra.mxu0 %v2587
    %3341 = vmatpush.msra.mxu0 %v2585
    %3342 = vmatpush.msra.mxu0 %v2583
    %3343 = vmatmul.f32.gmra.mxu0 %v3325
    %v3344 = vpop.f32.mrf.mxu0
    %v3345 = vadd.f32 %v2603, %v3344
    %3346 = vdwg.mxu0
    %3347 = vmatpush.msra.mxu0 0.0
    %3348 = vmatpush.msra.mxu0 0.0
    %3349 = vmatpush.msra.mxu0 0.0
    %3350 = vmatpush.msra.mxu0 0.0
    %3351 = vmatpush.msra.mxu0 0.0
    %3352 = vmatpush.msra.mxu0 0.0
    %3353 = vmatpush.msra.mxu0 0.0
    %3354 = vmatpush.msra.mxu0 0.0
    %3355 = vmatpush.msra.mxu0 %v2598
    %3356 = vmatpush.msra.mxu0 %v2596
    %3357 = vmatpush.msra.mxu0 %v2594
    %3358 = vmatpush.msra.mxu0 %v2592
    %3359 = vmatpush.msra.mxu0 %v2590
    %3360 = vmatpush.msra.mxu0 %v2588
    %3361 = vmatpush.msra.mxu0 %v2586
    %3362 = vmatpush.msra.mxu0 %v2584
    %3363 = vmatmul.f32.gmra.mxu0 %v3325
    %v3364 = vpop.f32.mrf.mxu0
    %v3365 = vadd.f32 %v2604, %v3364
    %3366 = vdwg.mxu0
    %v3367 = vadd.f32 %v3323, %v3345
    %v3368 = vxor.u32 %v3367, 2147483648
    %v3369 = vmul.f32 %v3368, 1.442695
    %v3370 = vpow.pop %v3369
    %v3371 = vadd.f32 %v3370, 1.0
    %v3372 = vrcp.pop %v3371
    %v3373 = vmul.f32 %v3371, %v3372
    %v3374 = vsub.f32 1.0, %v3373
    %v3375 = vmul.f32 %v3372, %v3374
    %v3376 = vadd.f32 %v3372, %v3375
    %vm3377 = vweird.f32 %v3371
    %vm3378 = vweird.f32 %v3372
    %vm3379 = vmor %vm3377, %vm3378
    %v3380 = vsel %vm3379, %v3372, %v3376
    %v3381 = vand.u32 2147483647, %v3371
    %vm3382 = vcmp.eq.f32.partialorder %v3381, 8.507059e+37
    %v3383 = vand.u32 %v3371, 2147483648
    %v3384 = vor.u32 1.1754944e-38, %v3383
    %v3385 = vsel %vm3382, %v3384, %v3380
    %v3386 = vmul.f32 1.0, %v3385
    %v3387 = vmul.f32 %v3386, %v3365
    %v3388 = vadd.f32 %v3324, %v3387
    %v3389 = vtanh.pop %v3388
    %v3390 = vsub.f32 1.0, %v3386
    %3392 = vrot.lane.b32.xlu0 %v3389, 64
    %v3393 = vpop.permute.xlu0 %3392
    %v3395 = vmul.f32 %v3390, %v3393
    %v3396 = vmul.f32 %v3386, %v3317
    %v3397 = vadd.f32 %v3395, %v3396
    %3399 = vrot.lane.b32.xlu0 %v3397, 64
    %v3400 = vpop.permute.xlu0 %3399
    %3402 = vst.msk [vmem:[#allocation5 + $0x48] sm:$0xff] %vm156, %v3400
    %v3403 = vld [vmem:[#allocation3 + $0xa0] sm:$0xff]
    %v3404 = vld [vmem:[#allocation3 + $0xa8] sm:$0xff]
    %v3405 = vsel %vm156, %v3400, 0
    %3407 = vmatpush.msra.mxu0 0.0
    %3408 = vmatpush.msra.mxu0 0.0
    %3409 = vmatpush.msra.mxu0 0.0
    %3410 = vmatpush.msra.mxu0 0.0
    %3411 = vmatpush.msra.mxu0 0.0
    %3412 = vmatpush.msra.mxu0 0.0
    %3413 = vmatpush.msra.mxu0 0.0
    %3414 = vmatpush.msra.mxu0 0.0
    %3415 = vmatpush.msra.mxu0 %v2597
    %3416 = vmatpush.msra.mxu0 %v2595
    %3417 = vmatpush.msra.mxu0 %v2593
    %3418 = vmatpush.msra.mxu0 %v2591
    %3419 = vmatpush.msra.mxu0 %v2589
    %3420 = vmatpush.msra.mxu0 %v2587
    %3421 = vmatpush.msra.mxu0 %v2585
    %3422 = vmatpush.msra.mxu0 %v2583
    %3423 = vmatmul.f32.gmra.mxu0 %v3405
    %v3424 = vpop.f32.mrf.mxu0
    %v3425 = vadd.f32 %v2603, %v3424
    %3426 = vdwg.mxu0
    %3427 = vmatpush.msra.mxu0 0.0
    %3428 = vmatpush.msra.mxu0 0.0
    %3429 = vmatpush.msra.mxu0 0.0
    %3430 = vmatpush.msra.mxu0 0.0
    %3431 = vmatpush.msra.mxu0 0.0
    %3432 = vmatpush.msra.mxu0 0.0
    %3433 = vmatpush.msra.mxu0 0.0
    %3434 = vmatpush.msra.mxu0 0.0
    %3435 = vmatpush.msra.mxu0 %v2598
    %3436 = vmatpush.msra.mxu0 %v2596
    %3437 = vmatpush.msra.mxu0 %v2594
    %3438 = vmatpush.msra.mxu0 %v2592
    %3439 = vmatpush.msra.mxu0 %v2590
    %3440 = vmatpush.msra.mxu0 %v2588
    %3441 = vmatpush.msra.mxu0 %v2586
    %3442 = vmatpush.msra.mxu0 %v2584
    %3443 = vmatmul.f32.gmra.mxu0 %v3405
    %v3444 = vpop.f32.mrf.mxu0
    %v3445 = vadd.f32 %v2604, %v3444
    %3446 = vdwg.mxu0
    %v3447 = vadd.f32 %v3403, %v3425
    %v3448 = vxor.u32 %v3447, 2147483648
    %v3449 = vmul.f32 %v3448, 1.442695
    %v3450 = vpow.pop %v3449
    %v3451 = vadd.f32 %v3450, 1.0
    %v3452 = vrcp.pop %v3451
    %v3453 = vmul.f32 %v3451, %v3452
    %v3454 = vsub.f32 1.0, %v3453
    %v3455 = vmul.f32 %v3452, %v3454
    %v3456 = vadd.f32 %v3452, %v3455
    %vm3457 = vweird.f32 %v3451
    %vm3458 = vweird.f32 %v3452
    %vm3459 = vmor %vm3457, %vm3458
    %v3460 = vsel %vm3459, %v3452, %v3456
    %v3461 = vand.u32 2147483647, %v3451
    %vm3462 = vcmp.eq.f32.partialorder %v3461, 8.507059e+37
    %v3463 = vand.u32 %v3451, 2147483648
    %v3464 = vor.u32 1.1754944e-38, %v3463
    %v3465 = vsel %vm3462, %v3464, %v3460
    %v3466 = vmul.f32 1.0, %v3465
    %v3467 = vmul.f32 %v3466, %v3445
    %v3468 = vadd.f32 %v3404, %v3467
    %v3469 = vtanh.pop %v3468
    %v3470 = vsub.f32 1.0, %v3466
    %3472 = vrot.lane.b32.xlu0 %v3469, 64
    %v3473 = vpop.permute.xlu0 %3472
    %v3475 = vmul.f32 %v3470, %v3473
    %v3476 = vmul.f32 %v3466, %v3397
    %v3477 = vadd.f32 %v3475, %v3476
    %3479 = vrot.lane.b32.xlu0 %v3477, 64
    %v3480 = vpop.permute.xlu0 %3479
    %3482 = vst.msk [vmem:[#allocation5 + $0x50] sm:$0xff] %vm156, %v3480
    %v3483 = vld [vmem:[#allocation3 + $0xb0] sm:$0xff]
    %v3484 = vld [vmem:[#allocation3 + $0xb8] sm:$0xff]
    %v3485 = vsel %vm156, %v3480, 0
    %3487 = vmatpush.msra.mxu0 0.0
    %3488 = vmatpush.msra.mxu0 0.0
    %3489 = vmatpush.msra.mxu0 0.0
    %3490 = vmatpush.msra.mxu0 0.0
    %3491 = vmatpush.msra.mxu0 0.0
    %3492 = vmatpush.msra.mxu0 0.0
    %3493 = vmatpush.msra.mxu0 0.0
    %3494 = vmatpush.msra.mxu0 0.0
    %3495 = vmatpush.msra.mxu0 %v2597
    %3496 = vmatpush.msra.mxu0 %v2595
    %3497 = vmatpush.msra.mxu0 %v2593
    %3498 = vmatpush.msra.mxu0 %v2591
    %3499 = vmatpush.msra.mxu0 %v2589
    %3500 = vmatpush.msra.mxu0 %v2587
    %3501 = vmatpush.msra.mxu0 %v2585
    %3502 = vmatpush.msra.mxu0 %v2583
    %3503 = vmatmul.f32.gmra.mxu0 %v3485
    %v3504 = vpop.f32.mrf.mxu0
    %v3505 = vadd.f32 %v2603, %v3504
    %3506 = vdwg.mxu0
    %3507 = vmatpush.msra.mxu0 0.0
    %3508 = vmatpush.msra.mxu0 0.0
    %3509 = vmatpush.msra.mxu0 0.0
    %3510 = vmatpush.msra.mxu0 0.0
    %3511 = vmatpush.msra.mxu0 0.0
    %3512 = vmatpush.msra.mxu0 0.0
    %3513 = vmatpush.msra.mxu0 0.0
    %3514 = vmatpush.msra.mxu0 0.0
    %3515 = vmatpush.msra.mxu0 %v2598
    %3516 = vmatpush.msra.mxu0 %v2596
    %3517 = vmatpush.msra.mxu0 %v2594
    %3518 = vmatpush.msra.mxu0 %v2592
    %3519 = vmatpush.msra.mxu0 %v2590
    %3520 = vmatpush.msra.mxu0 %v2588
    %3521 = vmatpush.msra.mxu0 %v2586
    %3522 = vmatpush.msra.mxu0 %v2584
    %3523 = vmatmul.f32.gmra.mxu0 %v3485
    %v3524 = vpop.f32.mrf.mxu0
    %v3525 = vadd.f32 %v2604, %v3524
    %3526 = vdwg.mxu0
    %v3527 = vadd.f32 %v3483, %v3505
    %v3528 = vxor.u32 %v3527, 2147483648
    %v3529 = vmul.f32 %v3528, 1.442695
    %v3530 = vpow.pop %v3529
    %v3531 = vadd.f32 %v3530, 1.0
    %v3532 = vrcp.pop %v3531
    %v3533 = vmul.f32 %v3531, %v3532
    %v3534 = vsub.f32 1.0, %v3533
    %v3535 = vmul.f32 %v3532, %v3534
    %v3536 = vadd.f32 %v3532, %v3535
    %vm3537 = vweird.f32 %v3531
    %vm3538 = vweird.f32 %v3532
    %vm3539 = vmor %vm3537, %vm3538
    %v3540 = vsel %vm3539, %v3532, %v3536
    %v3541 = vand.u32 2147483647, %v3531
    %vm3542 = vcmp.eq.f32.partialorder %v3541, 8.507059e+37
    %v3543 = vand.u32 %v3531, 2147483648
    %v3544 = vor.u32 1.1754944e-38, %v3543
    %v3545 = vsel %vm3542, %v3544, %v3540
    %v3546 = vmul.f32 1.0, %v3545
    %v3547 = vmul.f32 %v3546, %v3525
    %v3548 = vadd.f32 %v3484, %v3547
    %v3549 = vtanh.pop %v3548
    %v3550 = vsub.f32 1.0, %v3546
    %3552 = vrot.lane.b32.xlu0 %v3549, 64
    %v3553 = vpop.permute.xlu0 %3552
    %v3555 = vmul.f32 %v3550, %v3553
    %v3556 = vmul.f32 %v3546, %v3477
    %v3557 = vadd.f32 %v3555, %v3556
    %3559 = vrot.lane.b32.xlu0 %v3557, 64
    %v3560 = vpop.permute.xlu0 %3559
    %3562 = vst.msk [vmem:[#allocation5 + $0x58] sm:$0xff] %vm156, %v3560
    %v3563 = vld [vmem:[#allocation3 + $0xc0] sm:$0xff]
    %v3564 = vld [vmem:[#allocation3 + $0xc8] sm:$0xff]
    %v3565 = vsel %vm156, %v3560, 0
    %3567 = vmatpush.msra.mxu0 0.0
    %3568 = vmatpush.msra.mxu0 0.0
    %3569 = vmatpush.msra.mxu0 0.0
    %3570 = vmatpush.msra.mxu0 0.0
    %3571 = vmatpush.msra.mxu0 0.0
    %3572 = vmatpush.msra.mxu0 0.0
    %3573 = vmatpush.msra.mxu0 0.0
    %3574 = vmatpush.msra.mxu0 0.0
    %3575 = vmatpush.msra.mxu0 %v2597
    %3576 = vmatpush.msra.mxu0 %v2595
    %3577 = vmatpush.msra.mxu0 %v2593
    %3578 = vmatpush.msra.mxu0 %v2591
    %3579 = vmatpush.msra.mxu0 %v2589
    %3580 = vmatpush.msra.mxu0 %v2587
    %3581 = vmatpush.msra.mxu0 %v2585
    %3582 = vmatpush.msra.mxu0 %v2583
    %3583 = vmatmul.f32.gmra.mxu0 %v3565
    %v3584 = vpop.f32.mrf.mxu0
    %v3585 = vadd.f32 %v2603, %v3584
    %3586 = vdwg.mxu0
    %3587 = vmatpush.msra.mxu0 0.0
    %3588 = vmatpush.msra.mxu0 0.0
    %3589 = vmatpush.msra.mxu0 0.0
    %3590 = vmatpush.msra.mxu0 0.0
    %3591 = vmatpush.msra.mxu0 0.0
    %3592 = vmatpush.msra.mxu0 0.0
    %3593 = vmatpush.msra.mxu0 0.0
    %3594 = vmatpush.msra.mxu0 0.0
    %3595 = vmatpush.msra.mxu0 %v2598
    %3596 = vmatpush.msra.mxu0 %v2596
    %3597 = vmatpush.msra.mxu0 %v2594
    %3598 = vmatpush.msra.mxu0 %v2592
    %3599 = vmatpush.msra.mxu0 %v2590
    %3600 = vmatpush.msra.mxu0 %v2588
    %3601 = vmatpush.msra.mxu0 %v2586
    %3602 = vmatpush.msra.mxu0 %v2584
    %3603 = vmatmul.f32.gmra.mxu0 %v3565
    %v3604 = vpop.f32.mrf.mxu0
    %v3605 = vadd.f32 %v2604, %v3604
    %3606 = vdwg.mxu0
    %v3607 = vadd.f32 %v3563, %v3585
    %v3608 = vxor.u32 %v3607, 2147483648
    %v3609 = vmul.f32 %v3608, 1.442695
    %v3610 = vpow.pop %v3609
    %v3611 = vadd.f32 %v3610, 1.0
    %v3612 = vrcp.pop %v3611
    %v3613 = vmul.f32 %v3611, %v3612
    %v3614 = vsub.f32 1.0, %v3613
    %v3615 = vmul.f32 %v3612, %v3614
    %v3616 = vadd.f32 %v3612, %v3615
    %vm3617 = vweird.f32 %v3611
    %vm3618 = vweird.f32 %v3612
    %vm3619 = vmor %vm3617, %vm3618
    %v3620 = vsel %vm3619, %v3612, %v3616
    %v3621 = vand.u32 2147483647, %v3611
    %vm3622 = vcmp.eq.f32.partialorder %v3621, 8.507059e+37
    %v3623 = vand.u32 %v3611, 2147483648
    %v3624 = vor.u32 1.1754944e-38, %v3623
    %v3625 = vsel %vm3622, %v3624, %v3620
    %v3626 = vmul.f32 1.0, %v3625
    %v3627 = vmul.f32 %v3626, %v3605
    %v3628 = vadd.f32 %v3564, %v3627
    %v3629 = vtanh.pop %v3628
    %v3630 = vsub.f32 1.0, %v3626
    %3632 = vrot.lane.b32.xlu0 %v3629, 64
    %v3633 = vpop.permute.xlu0 %3632
    %v3635 = vmul.f32 %v3630, %v3633
    %v3636 = vmul.f32 %v3626, %v3557
    %v3637 = vadd.f32 %v3635, %v3636
    %3639 = vrot.lane.b32.xlu0 %v3637, 64
    %v3640 = vpop.permute.xlu0 %3639
    %3642 = vst.msk [vmem:[#allocation5 + $0x60] sm:$0xff] %vm156, %v3640
    %v3643 = vld [vmem:[#allocation3 + $0xd0] sm:$0xff]
    %v3644 = vld [vmem:[#allocation3 + $0xd8] sm:$0xff]
    %v3645 = vsel %vm156, %v3640, 0
    %3647 = vmatpush.msra.mxu0 0.0
    %3648 = vmatpush.msra.mxu0 0.0
    %3649 = vmatpush.msra.mxu0 0.0
    %3650 = vmatpush.msra.mxu0 0.0
    %3651 = vmatpush.msra.mxu0 0.0
    %3652 = vmatpush.msra.mxu0 0.0
    %3653 = vmatpush.msra.mxu0 0.0
    %3654 = vmatpush.msra.mxu0 0.0
    %3655 = vmatpush.msra.mxu0 %v2597
    %3656 = vmatpush.msra.mxu0 %v2595
    %3657 = vmatpush.msra.mxu0 %v2593
    %3658 = vmatpush.msra.mxu0 %v2591
    %3659 = vmatpush.msra.mxu0 %v2589
    %3660 = vmatpush.msra.mxu0 %v2587
    %3661 = vmatpush.msra.mxu0 %v2585
    %3662 = vmatpush.msra.mxu0 %v2583
    %3663 = vmatmul.f32.gmra.mxu0 %v3645
    %v3664 = vpop.f32.mrf.mxu0
    %v3665 = vadd.f32 %v2603, %v3664
    %3666 = vdwg.mxu0
    %3667 = vmatpush.msra.mxu0 0.0
    %3668 = vmatpush.msra.mxu0 0.0
    %3669 = vmatpush.msra.mxu0 0.0
    %3670 = vmatpush.msra.mxu0 0.0
    %3671 = vmatpush.msra.mxu0 0.0
    %3672 = vmatpush.msra.mxu0 0.0
    %3673 = vmatpush.msra.mxu0 0.0
    %3674 = vmatpush.msra.mxu0 0.0
    %3675 = vmatpush.msra.mxu0 %v2598
    %3676 = vmatpush.msra.mxu0 %v2596
    %3677 = vmatpush.msra.mxu0 %v2594
    %3678 = vmatpush.msra.mxu0 %v2592
    %3679 = vmatpush.msra.mxu0 %v2590
    %3680 = vmatpush.msra.mxu0 %v2588
    %3681 = vmatpush.msra.mxu0 %v2586
    %3682 = vmatpush.msra.mxu0 %v2584
    %3683 = vmatmul.f32.gmra.mxu0 %v3645
    %v3684 = vpop.f32.mrf.mxu0
    %v3685 = vadd.f32 %v2604, %v3684
    %3686 = vdwg.mxu0
    %v3687 = vadd.f32 %v3643, %v3665
    %v3688 = vxor.u32 %v3687, 2147483648
    %v3689 = vmul.f32 %v3688, 1.442695
    %v3690 = vpow.pop %v3689
    %v3691 = vadd.f32 %v3690, 1.0
    %v3692 = vrcp.pop %v3691
    %v3693 = vmul.f32 %v3691, %v3692
    %v3694 = vsub.f32 1.0, %v3693
    %v3695 = vmul.f32 %v3692, %v3694
    %v3696 = vadd.f32 %v3692, %v3695
    %vm3697 = vweird.f32 %v3691
    %vm3698 = vweird.f32 %v3692
    %vm3699 = vmor %vm3697, %vm3698
    %v3700 = vsel %vm3699, %v3692, %v3696
    %v3701 = vand.u32 2147483647, %v3691
    %vm3702 = vcmp.eq.f32.partialorder %v3701, 8.507059e+37
    %v3703 = vand.u32 %v3691, 2147483648
    %v3704 = vor.u32 1.1754944e-38, %v3703
    %v3705 = vsel %vm3702, %v3704, %v3700
    %v3706 = vmul.f32 1.0, %v3705
    %v3707 = vmul.f32 %v3706, %v3685
    %v3708 = vadd.f32 %v3644, %v3707
    %v3709 = vtanh.pop %v3708
    %v3710 = vsub.f32 1.0, %v3706
    %3712 = vrot.lane.b32.xlu0 %v3709, 64
    %v3713 = vpop.permute.xlu0 %3712
    %v3715 = vmul.f32 %v3710, %v3713
    %v3716 = vmul.f32 %v3706, %v3637
    %v3717 = vadd.f32 %v3715, %v3716
    %3719 = vrot.lane.b32.xlu0 %v3717, 64
    %v3720 = vpop.permute.xlu0 %3719
    %3722 = vst.msk [vmem:[#allocation5 + $0x68] sm:$0xff] %vm156, %v3720
    %v3723 = vld [vmem:[#allocation3 + $0xe0] sm:$0xff]
    %v3724 = vld [vmem:[#allocation3 + $0xe8] sm:$0xff]
    %v3725 = vsel %vm156, %v3720, 0
    %3727 = vmatpush.msra.mxu0 0.0
    %3728 = vmatpush.msra.mxu0 0.0
    %3729 = vmatpush.msra.mxu0 0.0
    %3730 = vmatpush.msra.mxu0 0.0
    %3731 = vmatpush.msra.mxu0 0.0
    %3732 = vmatpush.msra.mxu0 0.0
    %3733 = vmatpush.msra.mxu0 0.0
    %3734 = vmatpush.msra.mxu0 0.0
    %3735 = vmatpush.msra.mxu0 %v2597
    %3736 = vmatpush.msra.mxu0 %v2595
    %3737 = vmatpush.msra.mxu0 %v2593
    %3738 = vmatpush.msra.mxu0 %v2591
    %3739 = vmatpush.msra.mxu0 %v2589
    %3740 = vmatpush.msra.mxu0 %v2587
    %3741 = vmatpush.msra.mxu0 %v2585
    %3742 = vmatpush.msra.mxu0 %v2583
    %3743 = vmatmul.f32.gmra.mxu0 %v3725
    %v3744 = vpop.f32.mrf.mxu0
    %v3745 = vadd.f32 %v2603, %v3744
    %3746 = vdwg.mxu0
    %3747 = vmatpush.msra.mxu0 0.0
    %3748 = vmatpush.msra.mxu0 0.0
    %3749 = vmatpush.msra.mxu0 0.0
    %3750 = vmatpush.msra.mxu0 0.0
    %3751 = vmatpush.msra.mxu0 0.0
    %3752 = vmatpush.msra.mxu0 0.0
    %3753 = vmatpush.msra.mxu0 0.0
    %3754 = vmatpush.msra.mxu0 0.0
    %3755 = vmatpush.msra.mxu0 %v2598
    %3756 = vmatpush.msra.mxu0 %v2596
    %3757 = vmatpush.msra.mxu0 %v2594
    %3758 = vmatpush.msra.mxu0 %v2592
    %3759 = vmatpush.msra.mxu0 %v2590
    %3760 = vmatpush.msra.mxu0 %v2588
    %3761 = vmatpush.msra.mxu0 %v2586
    %3762 = vmatpush.msra.mxu0 %v2584
    %3763 = vmatmul.f32.gmra.mxu0 %v3725
    %v3764 = vpop.f32.mrf.mxu0
    %v3765 = vadd.f32 %v2604, %v3764
    %3766 = vdwg.mxu0
    %v3767 = vadd.f32 %v3723, %v3745
    %v3768 = vxor.u32 %v3767, 2147483648
    %v3769 = vmul.f32 %v3768, 1.442695
    %v3770 = vpow.pop %v3769
    %v3771 = vadd.f32 %v3770, 1.0
    %v3772 = vrcp.pop %v3771
    %v3773 = vmul.f32 %v3771, %v3772
    %v3774 = vsub.f32 1.0, %v3773
    %v3775 = vmul.f32 %v3772, %v3774
    %v3776 = vadd.f32 %v3772, %v3775
    %vm3777 = vweird.f32 %v3771
    %vm3778 = vweird.f32 %v3772
    %vm3779 = vmor %vm3777, %vm3778
    %v3780 = vsel %vm3779, %v3772, %v3776
    %v3781 = vand.u32 2147483647, %v3771
    %vm3782 = vcmp.eq.f32.partialorder %v3781, 8.507059e+37
    %v3783 = vand.u32 %v3771, 2147483648
    %v3784 = vor.u32 1.1754944e-38, %v3783
    %v3785 = vsel %vm3782, %v3784, %v3780
    %v3786 = vmul.f32 1.0, %v3785
    %v3787 = vmul.f32 %v3786, %v3765
    %v3788 = vadd.f32 %v3724, %v3787
    %v3789 = vtanh.pop %v3788
    %v3790 = vsub.f32 1.0, %v3786
    %3792 = vrot.lane.b32.xlu0 %v3789, 64
    %v3793 = vpop.permute.xlu0 %3792
    %v3795 = vmul.f32 %v3790, %v3793
    %v3796 = vmul.f32 %v3786, %v3717
    %v3797 = vadd.f32 %v3795, %v3796
    %3799 = vrot.lane.b32.xlu0 %v3797, 64
    %v3800 = vpop.permute.xlu0 %3799
    %3802 = vst.msk [vmem:[#allocation5 + $0x70] sm:$0xff] %vm156, %v3800
    %v3803 = vld [vmem:[#allocation3 + $0xf0] sm:$0xff]
    %v3804 = vld [vmem:[#allocation3 + $0xf8] sm:$0xff]
    %v3805 = vsel %vm156, %v3800, 0
    %3807 = vmatpush.msra.mxu0 0.0
    %3808 = vmatpush.msra.mxu0 0.0
    %3809 = vmatpush.msra.mxu0 0.0
    %3810 = vmatpush.msra.mxu0 0.0
    %3811 = vmatpush.msra.mxu0 0.0
    %3812 = vmatpush.msra.mxu0 0.0
    %3813 = vmatpush.msra.mxu0 0.0
    %3814 = vmatpush.msra.mxu0 0.0
    %3815 = vmatpush.msra.mxu0 %v2597
    %3816 = vmatpush.msra.mxu0 %v2595
    %3817 = vmatpush.msra.mxu0 %v2593
    %3818 = vmatpush.msra.mxu0 %v2591
    %3819 = vmatpush.msra.mxu0 %v2589
    %3820 = vmatpush.msra.mxu0 %v2587
    %3821 = vmatpush.msra.mxu0 %v2585
    %3822 = vmatpush.msra.mxu0 %v2583
    %3823 = vmatmul.f32.gmra.mxu0 %v3805
    %v3824 = vpop.f32.mrf.mxu0
    %v3825 = vadd.f32 %v2603, %v3824
    %3826 = vdwg.mxu0
    %3827 = vmatpush.msra.mxu0 0.0
    %3828 = vmatpush.msra.mxu0 0.0
    %3829 = vmatpush.msra.mxu0 0.0
    %3830 = vmatpush.msra.mxu0 0.0
    %3831 = vmatpush.msra.mxu0 0.0
    %3832 = vmatpush.msra.mxu0 0.0
    %3833 = vmatpush.msra.mxu0 0.0
    %3834 = vmatpush.msra.mxu0 0.0
    %3835 = vmatpush.msra.mxu0 %v2598
    %3836 = vmatpush.msra.mxu0 %v2596
    %3837 = vmatpush.msra.mxu0 %v2594
    %3838 = vmatpush.msra.mxu0 %v2592
    %3839 = vmatpush.msra.mxu0 %v2590
    %3840 = vmatpush.msra.mxu0 %v2588
    %3841 = vmatpush.msra.mxu0 %v2586
    %3842 = vmatpush.msra.mxu0 %v2584
    %3843 = vmatmul.f32.gmra.mxu0 %v3805
    %v3844 = vpop.f32.mrf.mxu0
    %v3845 = vadd.f32 %v2604, %v3844
    %3846 = vdwg.mxu0
    %v3847 = vadd.f32 %v3803, %v3825
    %v3848 = vxor.u32 %v3847, 2147483648
    %v3849 = vmul.f32 %v3848, 1.442695
    %v3850 = vpow.pop %v3849
    %v3851 = vadd.f32 %v3850, 1.0
    %v3852 = vrcp.pop %v3851
    %v3853 = vmul.f32 %v3851, %v3852
    %v3854 = vsub.f32 1.0, %v3853
    %v3855 = vmul.f32 %v3852, %v3854
    %v3856 = vadd.f32 %v3852, %v3855
    %vm3857 = vweird.f32 %v3851
    %vm3858 = vweird.f32 %v3852
    %vm3859 = vmor %vm3857, %vm3858
    %v3860 = vsel %vm3859, %v3852, %v3856
    %v3861 = vand.u32 2147483647, %v3851
    %vm3862 = vcmp.eq.f32.partialorder %v3861, 8.507059e+37
    %v3863 = vand.u32 %v3851, 2147483648
    %v3864 = vor.u32 1.1754944e-38, %v3863
    %v3865 = vsel %vm3862, %v3864, %v3860
    %v3866 = vmul.f32 1.0, %v3865
    %v3867 = vmul.f32 %v3866, %v3845
    %v3868 = vadd.f32 %v3804, %v3867
    %v3869 = vtanh.pop %v3868
    %v3870 = vsub.f32 1.0, %v3866
    %3872 = vrot.lane.b32.xlu0 %v3869, 64
    %v3873 = vpop.permute.xlu0 %3872
    %v3875 = vmul.f32 %v3870, %v3873
    %v3876 = vmul.f32 %v3866, %v3797
    %v3877 = vadd.f32 %v3875, %v3876
    %3879 = vrot.lane.b32.xlu0 %v3877, 64
    %v3880 = vpop.permute.xlu0 %3879
    %3882 = vst.msk [vmem:[#allocation5 + $0x78] sm:$0xff] %vm156, %v3880
    %v3883 = vld [vmem:[#allocation3 + $0x100] sm:$0xff]
    %v3884 = vld [vmem:[#allocation3 + $0x108] sm:$0xff]
    %v3885 = vsel %vm156, %v3880, 0
    %3887 = vmatpush.msra.mxu0 0.0
    %3888 = vmatpush.msra.mxu0 0.0
    %3889 = vmatpush.msra.mxu0 0.0
    %3890 = vmatpush.msra.mxu0 0.0
    %3891 = vmatpush.msra.mxu0 0.0
    %3892 = vmatpush.msra.mxu0 0.0
    %3893 = vmatpush.msra.mxu0 0.0
    %3894 = vmatpush.msra.mxu0 0.0
    %3895 = vmatpush.msra.mxu0 %v2597
    %3896 = vmatpush.msra.mxu0 %v2595
    %3897 = vmatpush.msra.mxu0 %v2593
    %3898 = vmatpush.msra.mxu0 %v2591
    %3899 = vmatpush.msra.mxu0 %v2589
    %3900 = vmatpush.msra.mxu0 %v2587
    %3901 = vmatpush.msra.mxu0 %v2585
    %3902 = vmatpush.msra.mxu0 %v2583
    %3903 = vmatmul.f32.gmra.mxu0 %v3885
    %v3904 = vpop.f32.mrf.mxu0
    %v3905 = vadd.f32 %v2603, %v3904
    %3906 = vdwg.mxu0
    %3907 = vmatpush.msra.mxu0 0.0
    %3908 = vmatpush.msra.mxu0 0.0
    %3909 = vmatpush.msra.mxu0 0.0
    %3910 = vmatpush.msra.mxu0 0.0
    %3911 = vmatpush.msra.mxu0 0.0
    %3912 = vmatpush.msra.mxu0 0.0
    %3913 = vmatpush.msra.mxu0 0.0
    %3914 = vmatpush.msra.mxu0 0.0
    %3915 = vmatpush.msra.mxu0 %v2598
    %3916 = vmatpush.msra.mxu0 %v2596
    %3917 = vmatpush.msra.mxu0 %v2594
    %3918 = vmatpush.msra.mxu0 %v2592
    %3919 = vmatpush.msra.mxu0 %v2590
    %3920 = vmatpush.msra.mxu0 %v2588
    %3921 = vmatpush.msra.mxu0 %v2586
    %3922 = vmatpush.msra.mxu0 %v2584
    %3923 = vmatmul.f32.gmra.mxu0 %v3885
    %v3924 = vpop.f32.mrf.mxu0
    %v3925 = vadd.f32 %v2604, %v3924
    %3926 = vdwg.mxu0
    %v3927 = vadd.f32 %v3883, %v3905
    %v3928 = vxor.u32 %v3927, 2147483648
    %v3929 = vmul.f32 %v3928, 1.442695
    %v3930 = vpow.pop %v3929
    %v3931 = vadd.f32 %v3930, 1.0
    %v3932 = vrcp.pop %v3931
    %v3933 = vmul.f32 %v3931, %v3932
    %v3934 = vsub.f32 1.0, %v3933
    %v3935 = vmul.f32 %v3932, %v3934
    %v3936 = vadd.f32 %v3932, %v3935
    %vm3937 = vweird.f32 %v3931
    %vm3938 = vweird.f32 %v3932
    %vm3939 = vmor %vm3937, %vm3938
    %v3940 = vsel %vm3939, %v3932, %v3936
    %v3941 = vand.u32 2147483647, %v3931
    %vm3942 = vcmp.eq.f32.partialorder %v3941, 8.507059e+37
    %v3943 = vand.u32 %v3931, 2147483648
    %v3944 = vor.u32 1.1754944e-38, %v3943
    %v3945 = vsel %vm3942, %v3944, %v3940
    %v3946 = vmul.f32 1.0, %v3945
    %v3947 = vmul.f32 %v3946, %v3925
    %v3948 = vadd.f32 %v3884, %v3947
    %v3949 = vtanh.pop %v3948
    %v3950 = vsub.f32 1.0, %v3946
    %3952 = vrot.lane.b32.xlu0 %v3949, 64
    %v3953 = vpop.permute.xlu0 %3952
    %v3955 = vmul.f32 %v3950, %v3953
    %v3956 = vmul.f32 %v3946, %v3877
    %v3957 = vadd.f32 %v3955, %v3956
    %3959 = vrot.lane.b32.xlu0 %v3957, 64
    %v3960 = vpop.permute.xlu0 %3959
    %3962 = vst.msk [vmem:[#allocation5 + $0x80] sm:$0xff] %vm156, %v3960
    %v3963 = vld [vmem:[#allocation5] sm:$0xff]
    %v3964 = vld [vmem:[#allocation5 + $0x8] sm:$0xff]
    %v3965 = vld [vmem:[#allocation5 + $0x10] sm:$0xff]
    %v3966 = vld [vmem:[#allocation5 + $0x18] sm:$0xff]
    %v3967 = vld [vmem:[#allocation5 + $0x20] sm:$0xff]
    %v3968 = vld [vmem:[#allocation5 + $0x28] sm:$0xff]
    %v3969 = vld [vmem:[#allocation5 + $0x30] sm:$0xff]
    %v3970 = vld [vmem:[#allocation5 + $0x38] sm:$0xff]
    %v3971 = vld [vmem:[#allocation5 + $0x40] sm:$0xff]
    %v3972 = vld [vmem:[#allocation5 + $0x48] sm:$0xff]
    %v3973 = vld [vmem:[#allocation5 + $0x50] sm:$0xff]
    %v3974 = vld [vmem:[#allocation5 + $0x58] sm:$0xff]
    %v3975 = vld [vmem:[#allocation5 + $0x60] sm:$0xff]
    %v3976 = vld [vmem:[#allocation5 + $0x68] sm:$0xff]
    %v3977 = vld [vmem:[#allocation5 + $0x70] sm:$0xff]
    %v3978 = vld [vmem:[#allocation5 + $0x78] sm:$0xff]
    %v3979 = vld [vmem:[#allocation5 + $0x80] sm:$0xff]
    %v3980 = vld [vmem:[#allocation13] sm:$0xff]
    %v3981 = vld [vmem:[#allocation13 + $0x8] sm:$0xff]
    %v3982 = vld [vmem:[#allocation13 + $0x10] sm:$0xff]
    %v3983 = vld [vmem:[#allocation13 + $0x18] sm:$0xff]
    %v3984 = vld [vmem:[#allocation13 + $0x20] sm:$0xff]
    %v3985 = vld [vmem:[#allocation13 + $0x28] sm:$0xff]
    %v3986 = vld [vmem:[#allocation13 + $0x30] sm:$0xff]
    %v3987 = vld [vmem:[#allocation13 + $0x38] sm:$0xff]
    %v3988 = vld [vmem:[%s16] sm:$0x1]
    %v3990 = vperm.slane %v3988, 0
    %v3993 = vsel %vm156, %v3963, 0
    %v3996 = vsel %vm156, %v3964, 0
    %v3999 = vsel %vm156, %v3965, 0
    %v4002 = vsel %vm156, %v3966, 0
    %v4005 = vsel %vm156, %v3967, 0
    %v4008 = vsel %vm156, %v3968, 0
    %v4011 = vsel %vm156, %v3969, 0
    %v4014 = vsel %vm156, %v3970, 0
    %v4017 = vsel %vm156, %v3971, 0
    %v4020 = vsel %vm156, %v3972, 0
    %v4023 = vsel %vm156, %v3973, 0
    %v4026 = vsel %vm156, %v3974, 0
    %v4029 = vsel %vm156, %v3975, 0
    %v4032 = vsel %vm156, %v3976, 0
    %v4035 = vsel %vm156, %v3977, 0
    %v4038 = vsel %vm156, %v3978, 0
    %v4041 = vsel %vm156, %v3979, 0
    %4043 = vmatpush.msra.mxu0 0.0
    %4044 = vmatpush.msra.mxu0 0.0
    %4045 = vmatpush.msra.mxu0 0.0
    %4046 = vmatpush.msra.mxu0 0.0
    %4047 = vmatpush.msra.mxu0 0.0
    %4048 = vmatpush.msra.mxu0 0.0
    %4049 = vmatpush.msra.mxu0 0.0
    %4050 = vmatpush.msra.mxu0 0.0
    %4051 = vmatpush.msra.mxu0 %v3987
    %4052 = vmatpush.msra.mxu0 %v3986
    %4053 = vmatpush.msra.mxu0 %v3985
    %4054 = vmatpush.msra.mxu0 %v3984
    %4055 = vmatpush.msra.mxu0 %v3983
    %4056 = vmatpush.msra.mxu0 %v3982
    %4057 = vmatpush.msra.mxu0 %v3981
    %4058 = vmatpush.msra.mxu0 %v3980
    %4059 = vmatmul.f32.gmra.mxu0 %v3993
    %v4060 = vpop.f32.mrf.mxu0
    %v4061 = vadd.f32 %v3990, %v4060
    %4062 = vmatmul.f32.gmra.mxu0 %v3996
    %v4063 = vpop.f32.mrf.mxu0
    %v4064 = vadd.f32 %v3990, %v4063
    %4065 = vmatmul.f32.gmra.mxu0 %v3999
    %v4066 = vpop.f32.mrf.mxu0
    %v4067 = vadd.f32 %v3990, %v4066
    %4068 = vmatmul.f32.gmra.mxu0 %v4002
    %v4069 = vpop.f32.mrf.mxu0
    %v4070 = vadd.f32 %v3990, %v4069
    %4071 = vmatmul.f32.gmra.mxu0 %v4005
    %v4072 = vpop.f32.mrf.mxu0
    %v4073 = vadd.f32 %v3990, %v4072
    %4074 = vmatmul.f32.gmra.mxu0 %v4008
    %v4075 = vpop.f32.mrf.mxu0
    %v4076 = vadd.f32 %v3990, %v4075
    %4077 = vmatmul.f32.gmra.mxu0 %v4011
    %v4078 = vpop.f32.mrf.mxu0
    %v4079 = vadd.f32 %v3990, %v4078
    %4080 = vmatmul.f32.gmra.mxu0 %v4014
    %v4081 = vpop.f32.mrf.mxu0
    %v4082 = vadd.f32 %v3990, %v4081
    %4083 = vmatmul.f32.gmra.mxu0 %v4017
    %v4084 = vpop.f32.mrf.mxu0
    %v4085 = vadd.f32 %v3990, %v4084
    %4086 = vmatmul.f32.gmra.mxu0 %v4020
    %v4087 = vpop.f32.mrf.mxu0
    %v4088 = vadd.f32 %v3990, %v4087
    %4089 = vmatmul.f32.gmra.mxu0 %v4023
    %v4090 = vpop.f32.mrf.mxu0
    %v4091 = vadd.f32 %v3990, %v4090
    %4092 = vmatmul.f32.gmra.mxu0 %v4026
    %v4093 = vpop.f32.mrf.mxu0
    %v4094 = vadd.f32 %v3990, %v4093
    %4095 = vmatmul.f32.gmra.mxu0 %v4029
    %v4096 = vpop.f32.mrf.mxu0
    %v4097 = vadd.f32 %v3990, %v4096
    %4098 = vmatmul.f32.gmra.mxu0 %v4032
    %v4099 = vpop.f32.mrf.mxu0
    %v4100 = vadd.f32 %v3990, %v4099
    %4101 = vmatmul.f32.gmra.mxu0 %v4035
    %v4102 = vpop.f32.mrf.mxu0
    %v4103 = vadd.f32 %v3990, %v4102
    %4104 = vmatmul.f32.gmra.mxu0 %v4038
    %v4105 = vpop.f32.mrf.mxu0
    %v4106 = vadd.f32 %v3990, %v4105
    %4107 = vmatmul.f32.gmra.mxu0 %v4041
    %v4108 = vpop.f32.mrf.mxu0
    %v4109 = vadd.f32 %v3990, %v4108
    %4110 = vdwg.mxu0
    %v4111 = vmax.f32 %v4061, 0.0
    %v4112 = vmax.f32 %v4064, 0.0
    %v4113 = vmax.f32 %v4067, 0.0
    %v4114 = vmax.f32 %v4070, 0.0
    %v4115 = vmax.f32 %v4073, 0.0
    %v4116 = vmax.f32 %v4076, 0.0
    %v4117 = vmax.f32 %v4079, 0.0
    %v4118 = vmax.f32 %v4082, 0.0
    %v4119 = vmax.f32 %v4085, 0.0
    %v4120 = vmax.f32 %v4088, 0.0
    %v4121 = vmax.f32 %v4091, 0.0
    %v4122 = vmax.f32 %v4094, 0.0
    %v4123 = vmax.f32 %v4097, 0.0
    %v4124 = vmax.f32 %v4100, 0.0
    %v4125 = vmax.f32 %v4103, 0.0
    %v4126 = vmax.f32 %v4106, 0.0
    %v4127 = vmax.f32 %v4109, 0.0
    %v4128 = vld [vmem:[%s17] sm:$0xff]
    %v4129 = vld [vmem:[%s17 + $0x8] sm:$0xff]
    %v4130 = vld [vmem:[%s17 + $0x10] sm:$0xff]
    %v4131 = vld [vmem:[%s17 + $0x18] sm:$0xff]
    %v4132 = vld [vmem:[%s17 + $0x20] sm:$0xff]
    %v4133 = vld [vmem:[%s17 + $0x28] sm:$0xff]
    %v4134 = vld [vmem:[%s17 + $0x30] sm:$0xff]
    %v4135 = vld [vmem:[%s17 + $0x38] sm:$0xff]
    %v4136 = vld [vmem:[%s17 + $0x40] sm:$0xff]
    %v4137 = vld [vmem:[%s17 + $0x48] sm:$0xff]
    %v4138 = vld [vmem:[%s17 + $0x50] sm:$0xff]
    %v4139 = vld [vmem:[%s17 + $0x58] sm:$0xff]
    %v4140 = vld [vmem:[%s18] sm:$0x1]
    %v4142 = vperm.slane %v4140, 0
    %vm4144 = vcmask 785408
    %v4146 = vsel %vm4144, %v4111, 0
    %v4149 = vsel %vm4144, %v4112, 0
    %v4152 = vsel %vm4144, %v4113, 0
    %v4155 = vsel %vm4144, %v4114, 0
    %v4158 = vsel %vm4144, %v4115, 0
    %v4161 = vsel %vm4144, %v4116, 0
    %v4164 = vsel %vm4144, %v4117, 0
    %v4167 = vsel %vm4144, %v4118, 0
    %v4170 = vsel %vm4144, %v4119, 0
    %v4173 = vsel %vm4144, %v4120, 0
    %v4176 = vsel %vm4144, %v4121, 0
    %v4179 = vsel %vm4144, %v4122, 0
    %v4182 = vsel %vm4144, %v4123, 0
    %v4185 = vsel %vm4144, %v4124, 0
    %v4188 = vsel %vm4144, %v4125, 0
    %v4191 = vsel %vm4144, %v4126, 0
    %v4194 = vsel %vm4144, %v4127, 0
    %4196 = vmatpush.msra.mxu0 0.0
    %4197 = vmatpush.msra.mxu0 0.0
    %4198 = vmatpush.msra.mxu0 0.0
    %4199 = vmatpush.msra.mxu0 0.0
    %4200 = vmatpush.msra.mxu0 %v4139
    %4201 = vmatpush.msra.mxu0 %v4138
    %4202 = vmatpush.msra.mxu0 %v4137
    %4203 = vmatpush.msra.mxu0 %v4136
    %4204 = vmatpush.msra.mxu0 %v4135
    %4205 = vmatpush.msra.mxu0 %v4134
    %4206 = vmatpush.msra.mxu0 %v4133
    %4207 = vmatpush.msra.mxu0 %v4132
    %4208 = vmatpush.msra.mxu0 %v4131
    %4209 = vmatpush.msra.mxu0 %v4130
    %4210 = vmatpush.msra.mxu0 %v4129
    %4211 = vmatpush.msra.mxu0 %v4128
    %4212 = vmatmul.f32.gmra.mxu0 %v4146
    %v4213 = vpop.f32.mrf.mxu0
    %v4214 = vadd.f32 %v4142, %v4213
    %4215 = vmatmul.f32.gmra.mxu0 %v4149
    %v4216 = vpop.f32.mrf.mxu0
    %v4217 = vadd.f32 %v4142, %v4216
    %4218 = vmatmul.f32.gmra.mxu0 %v4152
    %v4219 = vpop.f32.mrf.mxu0
    %v4220 = vadd.f32 %v4142, %v4219
    %4221 = vmatmul.f32.gmra.mxu0 %v4155
    %v4222 = vpop.f32.mrf.mxu0
    %v4223 = vadd.f32 %v4142, %v4222
    %4224 = vmatmul.f32.gmra.mxu0 %v4158
    %v4225 = vpop.f32.mrf.mxu0
    %v4226 = vadd.f32 %v4142, %v4225
    %4227 = vmatmul.f32.gmra.mxu0 %v4161
    %v4228 = vpop.f32.mrf.mxu0
    %v4229 = vadd.f32 %v4142, %v4228
    %4230 = vmatmul.f32.gmra.mxu0 %v4164
    %v4231 = vpop.f32.mrf.mxu0
    %v4232 = vadd.f32 %v4142, %v4231
    %4233 = vmatmul.f32.gmra.mxu0 %v4167
    %v4234 = vpop.f32.mrf.mxu0
    %v4235 = vadd.f32 %v4142, %v4234
    %4236 = vmatmul.f32.gmra.mxu0 %v4170
    %v4237 = vpop.f32.mrf.mxu0
    %v4238 = vadd.f32 %v4142, %v4237
    %4239 = vmatmul.f32.gmra.mxu0 %v4173
    %v4240 = vpop.f32.mrf.mxu0
    %v4241 = vadd.f32 %v4142, %v4240
    %4242 = vmatmul.f32.gmra.mxu0 %v4176
    %v4243 = vpop.f32.mrf.mxu0
    %v4244 = vadd.f32 %v4142, %v4243
    %4245 = vmatmul.f32.gmra.mxu0 %v4179
    %v4246 = vpop.f32.mrf.mxu0
    %v4247 = vadd.f32 %v4142, %v4246
    %4248 = vmatmul.f32.gmra.mxu0 %v4182
    %v4249 = vpop.f32.mrf.mxu0
    %v4250 = vadd.f32 %v4142, %v4249
    %4251 = vmatmul.f32.gmra.mxu0 %v4185
    %v4252 = vpop.f32.mrf.mxu0
    %v4253 = vadd.f32 %v4142, %v4252
    %4254 = vmatmul.f32.gmra.mxu0 %v4188
    %v4255 = vpop.f32.mrf.mxu0
    %v4256 = vadd.f32 %v4142, %v4255
    %4257 = vmatmul.f32.gmra.mxu0 %v4191
    %v4258 = vpop.f32.mrf.mxu0
    %v4259 = vadd.f32 %v4142, %v4258
    %4260 = vmatmul.f32.gmra.mxu0 %v4194
    %v4261 = vpop.f32.mrf.mxu0
    %v4262 = vadd.f32 %v4142, %v4261
    %4263 = vdwg.mxu0
    %v4264 = vmax.f32 %v4214, 0.0
    %v4265 = vmax.f32 %v4217, 0.0
    %v4266 = vmax.f32 %v4220, 0.0
    %v4267 = vmax.f32 %v4223, 0.0
    %v4268 = vmax.f32 %v4226, 0.0
    %v4269 = vmax.f32 %v4229, 0.0
    %v4270 = vmax.f32 %v4232, 0.0
    %v4271 = vmax.f32 %v4235, 0.0
    %v4272 = vmax.f32 %v4238, 0.0
    %v4273 = vmax.f32 %v4241, 0.0
    %v4274 = vmax.f32 %v4244, 0.0
    %v4275 = vmax.f32 %v4247, 0.0
    %v4276 = vmax.f32 %v4250, 0.0
    %v4277 = vmax.f32 %v4253, 0.0
    %v4278 = vmax.f32 %v4256, 0.0
    %v4279 = vmax.f32 %v4259, 0.0
    %v4280 = vmax.f32 %v4262, 0.0
    %v4281 = vld [vmem:[%s19] sm:$0xff]
    %v4282 = vld [vmem:[%s19 + $0x8] sm:$0xff]
    %v4283 = vld [vmem:[%s19 + $0x10] sm:$0xff]
    %v4284 = vld [vmem:[%s19 + $0x18] sm:$0xff]
    %v4285 = vld [vmem:[%s19 + $0x20] sm:$0xff]
    %v4286 = vld [vmem:[%s19 + $0x28] sm:$0xff]
    %v4287 = vld [vmem:[%s19 + $0x30] sm:$0xff]
    %v4288 = vld [vmem:[%s19 + $0x38] sm:$0xff]
    %v4289 = vld [vmem:[%s19 + $0x40] sm:$0xff]
    %v4290 = vld [vmem:[%s19 + $0x48] sm:$0xff]
    %v4291 = vld [vmem:[%s19 + $0x50] sm:$0xff]
    %v4292 = vld [vmem:[%s19 + $0x58] sm:$0xff]
    %v4293 = vld [vmem:[%s20] sm:$0x1]
    %v4295 = vperm.slane %v4293, 0
    %v4298 = vsel %vm4144, %v4264, 0
    %v4301 = vsel %vm4144, %v4265, 0
    %v4304 = vsel %vm4144, %v4266, 0
    %v4307 = vsel %vm4144, %v4267, 0
    %v4310 = vsel %vm4144, %v4268, 0
    %v4313 = vsel %vm4144, %v4269, 0
    %v4316 = vsel %vm4144, %v4270, 0
    %v4319 = vsel %vm4144, %v4271, 0
    %v4322 = vsel %vm4144, %v4272, 0
    %v4325 = vsel %vm4144, %v4273, 0
    %v4328 = vsel %vm4144, %v4274, 0
    %v4331 = vsel %vm4144, %v4275, 0
    %v4334 = vsel %vm4144, %v4276, 0
    %v4337 = vsel %vm4144, %v4277, 0
    %v4340 = vsel %vm4144, %v4278, 0
    %v4343 = vsel %vm4144, %v4279, 0
    %v4346 = vsel %vm4144, %v4280, 0
    %4348 = vmatpush.msra.mxu0 0.0
    %4349 = vmatpush.msra.mxu0 0.0
    %4350 = vmatpush.msra.mxu0 0.0
    %4351 = vmatpush.msra.mxu0 0.0
    %4352 = vmatpush.msra.mxu0 %v4292
    %4353 = vmatpush.msra.mxu0 %v4291
    %4354 = vmatpush.msra.mxu0 %v4290
    %4355 = vmatpush.msra.mxu0 %v4289
    %4356 = vmatpush.msra.mxu0 %v4288
    %4357 = vmatpush.msra.mxu0 %v4287
    %4358 = vmatpush.msra.mxu0 %v4286
    %4359 = vmatpush.msra.mxu0 %v4285
    %4360 = vmatpush.msra.mxu0 %v4284
    %4361 = vmatpush.msra.mxu0 %v4283
    %4362 = vmatpush.msra.mxu0 %v4282
    %4363 = vmatpush.msra.mxu0 %v4281
    %4364 = vmatmul.f32.gmra.mxu0 %v4298
    %v4365 = vpop.f32.mrf.mxu0
    %v4366 = vadd.f32 %v4295, %v4365
    %4367 = vmatmul.f32.gmra.mxu0 %v4301
    %v4368 = vpop.f32.mrf.mxu0
    %v4369 = vadd.f32 %v4295, %v4368
    %4370 = vmatmul.f32.gmra.mxu0 %v4304
    %v4371 = vpop.f32.mrf.mxu0
    %v4372 = vadd.f32 %v4295, %v4371
    %4373 = vmatmul.f32.gmra.mxu0 %v4307
    %v4374 = vpop.f32.mrf.mxu0
    %v4375 = vadd.f32 %v4295, %v4374
    %4376 = vmatmul.f32.gmra.mxu0 %v4310
    %v4377 = vpop.f32.mrf.mxu0
    %v4378 = vadd.f32 %v4295, %v4377
    %4379 = vmatmul.f32.gmra.mxu0 %v4313
    %v4380 = vpop.f32.mrf.mxu0
    %v4381 = vadd.f32 %v4295, %v4380
    %4382 = vmatmul.f32.gmra.mxu0 %v4316
    %v4383 = vpop.f32.mrf.mxu0
    %v4384 = vadd.f32 %v4295, %v4383
    %4385 = vmatmul.f32.gmra.mxu0 %v4319
    %v4386 = vpop.f32.mrf.mxu0
    %v4387 = vadd.f32 %v4295, %v4386
    %4388 = vmatmul.f32.gmra.mxu0 %v4322
    %v4389 = vpop.f32.mrf.mxu0
    %v4390 = vadd.f32 %v4295, %v4389
    %4391 = vmatmul.f32.gmra.mxu0 %v4325
    %v4392 = vpop.f32.mrf.mxu0
    %v4393 = vadd.f32 %v4295, %v4392
    %4394 = vmatmul.f32.gmra.mxu0 %v4328
    %v4395 = vpop.f32.mrf.mxu0
    %v4396 = vadd.f32 %v4295, %v4395
    %4397 = vmatmul.f32.gmra.mxu0 %v4331
    %v4398 = vpop.f32.mrf.mxu0
    %v4399 = vadd.f32 %v4295, %v4398
    %4400 = vmatmul.f32.gmra.mxu0 %v4334
    %v4401 = vpop.f32.mrf.mxu0
    %v4402 = vadd.f32 %v4295, %v4401
    %4403 = vmatmul.f32.gmra.mxu0 %v4337
    %v4404 = vpop.f32.mrf.mxu0
    %v4405 = vadd.f32 %v4295, %v4404
    %4406 = vmatmul.f32.gmra.mxu0 %v4340
    %v4407 = vpop.f32.mrf.mxu0
    %v4408 = vadd.f32 %v4295, %v4407
    %4409 = vmatmul.f32.gmra.mxu0 %v4343
    %v4410 = vpop.f32.mrf.mxu0
    %v4411 = vadd.f32 %v4295, %v4410
    %4412 = vmatmul.f32.gmra.mxu0 %v4346
    %v4413 = vpop.f32.mrf.mxu0
    %v4414 = vadd.f32 %v4295, %v4413
    %4415 = vdwg.mxu0
    %v4416 = vxor.u32 %v4366, 2147483648
    %v4417 = vxor.u32 %v4369, 2147483648
    %v4418 = vxor.u32 %v4372, 2147483648
    %v4419 = vxor.u32 %v4375, 2147483648
    %v4420 = vxor.u32 %v4378, 2147483648
    %v4421 = vxor.u32 %v4381, 2147483648
    %v4422 = vxor.u32 %v4384, 2147483648
    %v4423 = vxor.u32 %v4387, 2147483648
    %v4424 = vxor.u32 %v4390, 2147483648
    %v4425 = vxor.u32 %v4393, 2147483648
    %v4426 = vxor.u32 %v4396, 2147483648
    %v4427 = vxor.u32 %v4399, 2147483648
    %v4428 = vxor.u32 %v4402, 2147483648
    %v4429 = vxor.u32 %v4405, 2147483648
    %v4430 = vxor.u32 %v4408, 2147483648
    %v4431 = vxor.u32 %v4411, 2147483648
    %v4432 = vxor.u32 %v4414, 2147483648
    %v4433 = vmul.f32 %v4416, 1.442695
    %v4434 = vpow.pop %v4433
    %v4435 = vmul.f32 %v4417, 1.442695
    %v4436 = vpow.pop %v4435
    %v4437 = vmul.f32 %v4418, 1.442695
    %v4438 = vpow.pop %v4437
    %v4439 = vmul.f32 %v4419, 1.442695
    %v4440 = vpow.pop %v4439
    %v4441 = vmul.f32 %v4420, 1.442695
    %v4442 = vpow.pop %v4441
    %v4443 = vmul.f32 %v4421, 1.442695
    %v4444 = vpow.pop %v4443
    %v4445 = vmul.f32 %v4422, 1.442695
    %v4446 = vpow.pop %v4445
    %v4447 = vmul.f32 %v4423, 1.442695
    %v4448 = vpow.pop %v4447
    %v4449 = vmul.f32 %v4424, 1.442695
    %v4450 = vpow.pop %v4449
    %v4451 = vmul.f32 %v4425, 1.442695
    %v4452 = vpow.pop %v4451
    %v4453 = vmul.f32 %v4426, 1.442695
    %v4454 = vpow.pop %v4453
    %v4455 = vmul.f32 %v4427, 1.442695
    %v4456 = vpow.pop %v4455
    %v4457 = vmul.f32 %v4428, 1.442695
    %v4458 = vpow.pop %v4457
    %v4459 = vmul.f32 %v4429, 1.442695
    %v4460 = vpow.pop %v4459
    %v4461 = vmul.f32 %v4430, 1.442695
    %v4462 = vpow.pop %v4461
    %v4463 = vmul.f32 %v4431, 1.442695
    %v4464 = vpow.pop %v4463
    %v4465 = vmul.f32 %v4432, 1.442695
    %v4466 = vpow.pop %v4465
    %v4467 = vadd.f32 %v4434, 1.0
    %v4468 = vadd.f32 %v4436, 1.0
    %v4469 = vadd.f32 %v4438, 1.0
    %v4470 = vadd.f32 %v4440, 1.0
    %v4471 = vadd.f32 %v4442, 1.0
    %v4472 = vadd.f32 %v4444, 1.0
    %v4473 = vadd.f32 %v4446, 1.0
    %v4474 = vadd.f32 %v4448, 1.0
    %v4475 = vadd.f32 %v4450, 1.0
    %v4476 = vadd.f32 %v4452, 1.0
    %v4477 = vadd.f32 %v4454, 1.0
    %v4478 = vadd.f32 %v4456, 1.0
    %v4479 = vadd.f32 %v4458, 1.0
    %v4480 = vadd.f32 %v4460, 1.0
    %v4481 = vadd.f32 %v4462, 1.0
    %v4482 = vadd.f32 %v4464, 1.0
    %v4483 = vadd.f32 %v4466, 1.0
    %v4484 = vrcp.pop %v4467
    %v4485 = vmul.f32 %v4467, %v4484
    %v4486 = vsub.f32 1.0, %v4485
    %v4487 = vmul.f32 %v4484, %v4486
    %v4488 = vadd.f32 %v4484, %v4487
    %vm4489 = vweird.f32 %v4467
    %vm4490 = vweird.f32 %v4484
    %vm4491 = vmor %vm4489, %vm4490
    %v4492 = vsel %vm4491, %v4484, %v4488
    %v4493 = vand.u32 2147483647, %v4467
    %vm4494 = vcmp.eq.f32.partialorder %v4493, 8.507059e+37
    %v4495 = vand.u32 %v4467, 2147483648
    %v4496 = vor.u32 1.1754944e-38, %v4495
    %v4497 = vsel %vm4494, %v4496, %v4492
    %v4498 = vmul.f32 1.0, %v4497
    %v4499 = vrcp.pop %v4468
    %v4500 = vmul.f32 %v4468, %v4499
    %v4501 = vsub.f32 1.0, %v4500
    %v4502 = vmul.f32 %v4499, %v4501
    %v4503 = vadd.f32 %v4499, %v4502
    %vm4504 = vweird.f32 %v4468
    %vm4505 = vweird.f32 %v4499
    %vm4506 = vmor %vm4504, %vm4505
    %v4507 = vsel %vm4506, %v4499, %v4503
    %v4508 = vand.u32 2147483647, %v4468
    %vm4509 = vcmp.eq.f32.partialorder %v4508, 8.507059e+37
    %v4510 = vand.u32 %v4468, 2147483648
    %v4511 = vor.u32 1.1754944e-38, %v4510
    %v4512 = vsel %vm4509, %v4511, %v4507
    %v4513 = vmul.f32 1.0, %v4512
    %v4514 = vrcp.pop %v4469
    %v4515 = vmul.f32 %v4469, %v4514
    %v4516 = vsub.f32 1.0, %v4515
    %v4517 = vmul.f32 %v4514, %v4516
    %v4518 = vadd.f32 %v4514, %v4517
    %vm4519 = vweird.f32 %v4469
    %vm4520 = vweird.f32 %v4514
    %vm4521 = vmor %vm4519, %vm4520
    %v4522 = vsel %vm4521, %v4514, %v4518
    %v4523 = vand.u32 2147483647, %v4469
    %vm4524 = vcmp.eq.f32.partialorder %v4523, 8.507059e+37
    %v4525 = vand.u32 %v4469, 2147483648
    %v4526 = vor.u32 1.1754944e-38, %v4525
    %v4527 = vsel %vm4524, %v4526, %v4522
    %v4528 = vmul.f32 1.0, %v4527
    %v4529 = vrcp.pop %v4470
    %v4530 = vmul.f32 %v4470, %v4529
    %v4531 = vsub.f32 1.0, %v4530
    %v4532 = vmul.f32 %v4529, %v4531
    %v4533 = vadd.f32 %v4529, %v4532
    %vm4534 = vweird.f32 %v4470
    %vm4535 = vweird.f32 %v4529
    %vm4536 = vmor %vm4534, %vm4535
    %v4537 = vsel %vm4536, %v4529, %v4533
    %v4538 = vand.u32 2147483647, %v4470
    %vm4539 = vcmp.eq.f32.partialorder %v4538, 8.507059e+37
    %v4540 = vand.u32 %v4470, 2147483648
    %v4541 = vor.u32 1.1754944e-38, %v4540
    %v4542 = vsel %vm4539, %v4541, %v4537
    %v4543 = vmul.f32 1.0, %v4542
    %v4544 = vrcp.pop %v4471
    %v4545 = vmul.f32 %v4471, %v4544
    %v4546 = vsub.f32 1.0, %v4545
    %v4547 = vmul.f32 %v4544, %v4546
    %v4548 = vadd.f32 %v4544, %v4547
    %vm4549 = vweird.f32 %v4471
    %vm4550 = vweird.f32 %v4544
    %vm4551 = vmor %vm4549, %vm4550
    %v4552 = vsel %vm4551, %v4544, %v4548
    %v4553 = vand.u32 2147483647, %v4471
    %vm4554 = vcmp.eq.f32.partialorder %v4553, 8.507059e+37
    %v4555 = vand.u32 %v4471, 2147483648
    %v4556 = vor.u32 1.1754944e-38, %v4555
    %v4557 = vsel %vm4554, %v4556, %v4552
    %v4558 = vmul.f32 1.0, %v4557
    %v4559 = vrcp.pop %v4472
    %v4560 = vmul.f32 %v4472, %v4559
    %v4561 = vsub.f32 1.0, %v4560
    %v4562 = vmul.f32 %v4559, %v4561
    %v4563 = vadd.f32 %v4559, %v4562
    %vm4564 = vweird.f32 %v4472
    %vm4565 = vweird.f32 %v4559
    %vm4566 = vmor %vm4564, %vm4565
    %v4567 = vsel %vm4566, %v4559, %v4563
    %v4568 = vand.u32 2147483647, %v4472
    %vm4569 = vcmp.eq.f32.partialorder %v4568, 8.507059e+37
    %v4570 = vand.u32 %v4472, 2147483648
    %v4571 = vor.u32 1.1754944e-38, %v4570
    %v4572 = vsel %vm4569, %v4571, %v4567
    %v4573 = vmul.f32 1.0, %v4572
    %v4574 = vrcp.pop %v4473
    %v4575 = vmul.f32 %v4473, %v4574
    %v4576 = vsub.f32 1.0, %v4575
    %v4577 = vmul.f32 %v4574, %v4576
    %v4578 = vadd.f32 %v4574, %v4577
    %vm4579 = vweird.f32 %v4473
    %vm4580 = vweird.f32 %v4574
    %vm4581 = vmor %vm4579, %vm4580
    %v4582 = vsel %vm4581, %v4574, %v4578
    %v4583 = vand.u32 2147483647, %v4473
    %vm4584 = vcmp.eq.f32.partialorder %v4583, 8.507059e+37
    %v4585 = vand.u32 %v4473, 2147483648
    %v4586 = vor.u32 1.1754944e-38, %v4585
    %v4587 = vsel %vm4584, %v4586, %v4582
    %v4588 = vmul.f32 1.0, %v4587
    %v4589 = vrcp.pop %v4474
    %v4590 = vmul.f32 %v4474, %v4589
    %v4591 = vsub.f32 1.0, %v4590
    %v4592 = vmul.f32 %v4589, %v4591
    %v4593 = vadd.f32 %v4589, %v4592
    %vm4594 = vweird.f32 %v4474
    %vm4595 = vweird.f32 %v4589
    %vm4596 = vmor %vm4594, %vm4595
    %v4597 = vsel %vm4596, %v4589, %v4593
    %v4598 = vand.u32 2147483647, %v4474
    %vm4599 = vcmp.eq.f32.partialorder %v4598, 8.507059e+37
    %v4600 = vand.u32 %v4474, 2147483648
    %v4601 = vor.u32 1.1754944e-38, %v4600
    %v4602 = vsel %vm4599, %v4601, %v4597
    %v4603 = vmul.f32 1.0, %v4602
    %v4604 = vrcp.pop %v4475
    %v4605 = vmul.f32 %v4475, %v4604
    %v4606 = vsub.f32 1.0, %v4605
    %v4607 = vmul.f32 %v4604, %v4606
    %v4608 = vadd.f32 %v4604, %v4607
    %vm4609 = vweird.f32 %v4475
    %vm4610 = vweird.f32 %v4604
    %vm4611 = vmor %vm4609, %vm4610
    %v4612 = vsel %vm4611, %v4604, %v4608
    %v4613 = vand.u32 2147483647, %v4475
    %vm4614 = vcmp.eq.f32.partialorder %v4613, 8.507059e+37
    %v4615 = vand.u32 %v4475, 2147483648
    %v4616 = vor.u32 1.1754944e-38, %v4615
    %v4617 = vsel %vm4614, %v4616, %v4612
    %v4618 = vmul.f32 1.0, %v4617
    %v4619 = vrcp.pop %v4476
    %v4620 = vmul.f32 %v4476, %v4619
    %v4621 = vsub.f32 1.0, %v4620
    %v4622 = vmul.f32 %v4619, %v4621
    %v4623 = vadd.f32 %v4619, %v4622
    %vm4624 = vweird.f32 %v4476
    %vm4625 = vweird.f32 %v4619
    %vm4626 = vmor %vm4624, %vm4625
    %v4627 = vsel %vm4626, %v4619, %v4623
    %v4628 = vand.u32 2147483647, %v4476
    %vm4629 = vcmp.eq.f32.partialorder %v4628, 8.507059e+37
    %v4630 = vand.u32 %v4476, 2147483648
    %v4631 = vor.u32 1.1754944e-38, %v4630
    %v4632 = vsel %vm4629, %v4631, %v4627
    %v4633 = vmul.f32 1.0, %v4632
    %v4634 = vrcp.pop %v4477
    %v4635 = vmul.f32 %v4477, %v4634
    %v4636 = vsub.f32 1.0, %v4635
    %v4637 = vmul.f32 %v4634, %v4636
    %v4638 = vadd.f32 %v4634, %v4637
    %vm4639 = vweird.f32 %v4477
    %vm4640 = vweird.f32 %v4634
    %vm4641 = vmor %vm4639, %vm4640
    %v4642 = vsel %vm4641, %v4634, %v4638
    %v4643 = vand.u32 2147483647, %v4477
    %vm4644 = vcmp.eq.f32.partialorder %v4643, 8.507059e+37
    %v4645 = vand.u32 %v4477, 2147483648
    %v4646 = vor.u32 1.1754944e-38, %v4645
    %v4647 = vsel %vm4644, %v4646, %v4642
    %v4648 = vmul.f32 1.0, %v4647
    %v4649 = vrcp.pop %v4478
    %v4650 = vmul.f32 %v4478, %v4649
    %v4651 = vsub.f32 1.0, %v4650
    %v4652 = vmul.f32 %v4649, %v4651
    %v4653 = vadd.f32 %v4649, %v4652
    %vm4654 = vweird.f32 %v4478
    %vm4655 = vweird.f32 %v4649
    %vm4656 = vmor %vm4654, %vm4655
    %v4657 = vsel %vm4656, %v4649, %v4653
    %v4658 = vand.u32 2147483647, %v4478
    %vm4659 = vcmp.eq.f32.partialorder %v4658, 8.507059e+37
    %v4660 = vand.u32 %v4478, 2147483648
    %v4661 = vor.u32 1.1754944e-38, %v4660
    %v4662 = vsel %vm4659, %v4661, %v4657
    %v4663 = vmul.f32 1.0, %v4662
    %v4664 = vrcp.pop %v4479
    %v4665 = vmul.f32 %v4479, %v4664
    %v4666 = vsub.f32 1.0, %v4665
    %v4667 = vmul.f32 %v4664, %v4666
    %v4668 = vadd.f32 %v4664, %v4667
    %vm4669 = vweird.f32 %v4479
    %vm4670 = vweird.f32 %v4664
    %vm4671 = vmor %vm4669, %vm4670
    %v4672 = vsel %vm4671, %v4664, %v4668
    %v4673 = vand.u32 2147483647, %v4479
    %vm4674 = vcmp.eq.f32.partialorder %v4673, 8.507059e+37
    %v4675 = vand.u32 %v4479, 2147483648
    %v4676 = vor.u32 1.1754944e-38, %v4675
    %v4677 = vsel %vm4674, %v4676, %v4672
    %v4678 = vmul.f32 1.0, %v4677
    %v4679 = vrcp.pop %v4480
    %v4680 = vmul.f32 %v4480, %v4679
    %v4681 = vsub.f32 1.0, %v4680
    %v4682 = vmul.f32 %v4679, %v4681
    %v4683 = vadd.f32 %v4679, %v4682
    %vm4684 = vweird.f32 %v4480
    %vm4685 = vweird.f32 %v4679
    %vm4686 = vmor %vm4684, %vm4685
    %v4687 = vsel %vm4686, %v4679, %v4683
    %v4688 = vand.u32 2147483647, %v4480
    %vm4689 = vcmp.eq.f32.partialorder %v4688, 8.507059e+37
    %v4690 = vand.u32 %v4480, 2147483648
    %v4691 = vor.u32 1.1754944e-38, %v4690
    %v4692 = vsel %vm4689, %v4691, %v4687
    %v4693 = vmul.f32 1.0, %v4692
    %v4694 = vrcp.pop %v4481
    %v4695 = vmul.f32 %v4481, %v4694
    %v4696 = vsub.f32 1.0, %v4695
    %v4697 = vmul.f32 %v4694, %v4696
    %v4698 = vadd.f32 %v4694, %v4697
    %vm4699 = vweird.f32 %v4481
    %vm4700 = vweird.f32 %v4694
    %vm4701 = vmor %vm4699, %vm4700
    %v4702 = vsel %vm4701, %v4694, %v4698
    %v4703 = vand.u32 2147483647, %v4481
    %vm4704 = vcmp.eq.f32.partialorder %v4703, 8.507059e+37
    %v4705 = vand.u32 %v4481, 2147483648
    %v4706 = vor.u32 1.1754944e-38, %v4705
    %v4707 = vsel %vm4704, %v4706, %v4702
    %v4708 = vmul.f32 1.0, %v4707
    %v4709 = vrcp.pop %v4482
    %v4710 = vmul.f32 %v4482, %v4709
    %v4711 = vsub.f32 1.0, %v4710
    %v4712 = vmul.f32 %v4709, %v4711
    %v4713 = vadd.f32 %v4709, %v4712
    %vm4714 = vweird.f32 %v4482
    %vm4715 = vweird.f32 %v4709
    %vm4716 = vmor %vm4714, %vm4715
    %v4717 = vsel %vm4716, %v4709, %v4713
    %v4718 = vand.u32 2147483647, %v4482
    %vm4719 = vcmp.eq.f32.partialorder %v4718, 8.507059e+37
    %v4720 = vand.u32 %v4482, 2147483648
    %v4721 = vor.u32 1.1754944e-38, %v4720
    %v4722 = vsel %vm4719, %v4721, %v4717
    %v4723 = vmul.f32 1.0, %v4722
    %v4724 = vrcp.pop %v4483
    %v4725 = vmul.f32 %v4483, %v4724
    %v4726 = vsub.f32 1.0, %v4725
    %v4727 = vmul.f32 %v4724, %v4726
    %v4728 = vadd.f32 %v4724, %v4727
    %vm4729 = vweird.f32 %v4483
    %vm4730 = vweird.f32 %v4724
    %vm4731 = vmor %vm4729, %vm4730
    %v4732 = vsel %vm4731, %v4724, %v4728
    %v4733 = vand.u32 2147483647, %v4483
    %vm4734 = vcmp.eq.f32.partialorder %v4733, 8.507059e+37
    %v4735 = vand.u32 %v4483, 2147483648
    %v4736 = vor.u32 1.1754944e-38, %v4735
    %v4737 = vsel %vm4734, %v4736, %v4732
    %v4738 = vmul.f32 1.0, %v4737
    %v4739 = vld [vmem:[#allocation2] sm:$0xff]
    %v4740 = vld [vmem:[#allocation2 + $0x8] sm:$0xff]
    %v4741 = vld [vmem:[#allocation2 + $0x10] sm:$0xff]
    %v4742 = vld [vmem:[#allocation2 + $0x18] sm:$0xff]
    %v4743 = vld [vmem:[#allocation2 + $0x20] sm:$0xff]
    %v4744 = vld [vmem:[#allocation2 + $0x28] sm:$0xff]
    %v4745 = vld [vmem:[#allocation2 + $0x30] sm:$0xff]
    %v4746 = vld [vmem:[#allocation2 + $0x38] sm:$0xff]
    %v4747 = vld [vmem:[#allocation2 + $0x40] sm:$0xff]
    %v4748 = vld [vmem:[#allocation2 + $0x48] sm:$0xff]
    %v4749 = vld [vmem:[#allocation2 + $0x50] sm:$0xff]
    %v4750 = vld [vmem:[#allocation2 + $0x58] sm:$0xff]
    %v4751 = vld [vmem:[#allocation2 + $0x60] sm:$0xff]
    %v4752 = vld [vmem:[#allocation2 + $0x68] sm:$0xff]
    %v4753 = vld [vmem:[#allocation2 + $0x70] sm:$0xff]
    %v4754 = vld [vmem:[#allocation2 + $0x78] sm:$0xff]
    %v4755 = vld [vmem:[#allocation2 + $0x80] sm:$0xff]
    %4757 = vset.pattern.permute.xlu0 64
    %4758 = vperm.xlu0 %4757, %v4739
    %v4759 = vpop.permute.xlu0 %4758
    %4762 = vset.pattern.permute.xlu0 64
    %4763 = vperm.xlu0 %4762, %v4740
    %v4764 = vpop.permute.xlu0 %4763
    %4767 = vset.pattern.permute.xlu0 64
    %4768 = vperm.xlu0 %4767, %v4741
    %v4769 = vpop.permute.xlu0 %4768
    %4772 = vset.pattern.permute.xlu0 64
    %4773 = vperm.xlu0 %4772, %v4742
    %v4774 = vpop.permute.xlu0 %4773
    %4777 = vset.pattern.permute.xlu0 64
    %4778 = vperm.xlu0 %4777, %v4743
    %v4779 = vpop.permute.xlu0 %4778
    %4782 = vset.pattern.permute.xlu0 64
    %4783 = vperm.xlu0 %4782, %v4744
    %v4784 = vpop.permute.xlu0 %4783
    %4787 = vset.pattern.permute.xlu0 64
    %4788 = vperm.xlu0 %4787, %v4745
    %v4789 = vpop.permute.xlu0 %4788
    %4792 = vset.pattern.permute.xlu0 64
    %4793 = vperm.xlu0 %4792, %v4746
    %v4794 = vpop.permute.xlu0 %4793
    %4797 = vset.pattern.permute.xlu0 64
    %4798 = vperm.xlu0 %4797, %v4747
    %v4799 = vpop.permute.xlu0 %4798
    %4802 = vset.pattern.permute.xlu0 64
    %4803 = vperm.xlu0 %4802, %v4748
    %v4804 = vpop.permute.xlu0 %4803
    %4807 = vset.pattern.permute.xlu0 64
    %4808 = vperm.xlu0 %4807, %v4749
    %v4809 = vpop.permute.xlu0 %4808
    %4812 = vset.pattern.permute.xlu0 64
    %4813 = vperm.xlu0 %4812, %v4750
    %v4814 = vpop.permute.xlu0 %4813
    %4817 = vset.pattern.permute.xlu0 64
    %4818 = vperm.xlu0 %4817, %v4751
    %v4819 = vpop.permute.xlu0 %4818
    %4822 = vset.pattern.permute.xlu0 64
    %4823 = vperm.xlu0 %4822, %v4752
    %v4824 = vpop.permute.xlu0 %4823
    %4827 = vset.pattern.permute.xlu0 64
    %4828 = vperm.xlu0 %4827, %v4753
    %v4829 = vpop.permute.xlu0 %4828
    %4832 = vset.pattern.permute.xlu0 64
    %4833 = vperm.xlu0 %4832, %v4754
    %v4834 = vpop.permute.xlu0 %4833
    %4837 = vset.pattern.permute.xlu0 64
    %4838 = vperm.xlu0 %4837, %v4755
    %v4839 = vpop.permute.xlu0 %4838
    %v4841 = vmul.f32 %v4739, %v4498
    %v4842 = vmul.f32 %v4740, %v4513
    %v4843 = vmul.f32 %v4741, %v4528
    %v4844 = vmul.f32 %v4742, %v4543
    %v4845 = vmul.f32 %v4743, %v4558
    %v4846 = vmul.f32 %v4744, %v4573
    %v4847 = vmul.f32 %v4745, %v4588
    %v4848 = vmul.f32 %v4746, %v4603
    %v4849 = vmul.f32 %v4747, %v4618
    %v4850 = vmul.f32 %v4748, %v4633
    %v4851 = vmul.f32 %v4749, %v4648
    %v4852 = vmul.f32 %v4750, %v4663
    %v4853 = vmul.f32 %v4751, %v4678
    %v4854 = vmul.f32 %v4752, %v4693
    %v4855 = vmul.f32 %v4753, %v4708
    %v4856 = vmul.f32 %v4754, %v4723
    %v4857 = vmul.f32 %v4755, %v4738
    %v4858 = vld [vmem:[#allocation10] sm:$0xff]
    %v4859 = vld [vmem:[#allocation10 + $0x8] sm:$0xff]
    %v4860 = vld [vmem:[#allocation10 + $0x10] sm:$0xff]
    %v4861 = vld [vmem:[#allocation10 + $0x18] sm:$0xff]
    %v4862 = vld [vmem:[#allocation10 + $0x20] sm:$0xff]
    %v4863 = vld [vmem:[#allocation10 + $0x28] sm:$0xff]
    %v4864 = vld [vmem:[#allocation10 + $0x30] sm:$0xff]
    %v4865 = vld [vmem:[#allocation10 + $0x38] sm:$0xff]
    %v4866 = vld [vmem:[%s3] sm:$0x1]
    %v4868 = vperm.slane %v4866, 0
    %v4870 = vmul.f32 %v4759, %v4868
    %v4871 = vmul.f32 %v4764, %v4868
    %v4872 = vmul.f32 %v4769, %v4868
    %v4873 = vmul.f32 %v4774, %v4868
    %v4874 = vmul.f32 %v4779, %v4868
    %v4875 = vmul.f32 %v4784, %v4868
    %v4876 = vmul.f32 %v4789, %v4868
    %v4877 = vmul.f32 %v4794, %v4868
    %v4878 = vmul.f32 %v4799, %v4868
    %v4879 = vmul.f32 %v4804, %v4868
    %v4880 = vmul.f32 %v4809, %v4868
    %v4881 = vmul.f32 %v4814, %v4868
    %v4882 = vmul.f32 %v4819, %v4868
    %v4883 = vmul.f32 %v4824, %v4868
    %v4884 = vmul.f32 %v4829, %v4868
    %v4885 = vmul.f32 %v4834, %v4868
    %v4886 = vmul.f32 %v4839, %v4868
    %v4888 = vsel %vm156, %v4841, 0
    %v4891 = vsel %vm156, %v4842, 0
    %v4894 = vsel %vm156, %v4843, 0
    %v4897 = vsel %vm156, %v4844, 0
    %v4900 = vsel %vm156, %v4845, 0
    %v4903 = vsel %vm156, %v4846, 0
    %v4906 = vsel %vm156, %v4847, 0
    %v4909 = vsel %vm156, %v4848, 0
    %v4912 = vsel %vm156, %v4849, 0
    %v4915 = vsel %vm156, %v4850, 0
    %v4918 = vsel %vm156, %v4851, 0
    %v4921 = vsel %vm156, %v4852, 0
    %v4924 = vsel %vm156, %v4853, 0
    %v4927 = vsel %vm156, %v4854, 0
    %v4930 = vsel %vm156, %v4855, 0
    %v4933 = vsel %vm156, %v4856, 0
    %v4936 = vsel %vm156, %v4857, 0
    %4938 = vmatpush.msra.mxu0 0.0
    %4939 = vmatpush.msra.mxu0 0.0
    %4940 = vmatpush.msra.mxu0 0.0
    %4941 = vmatpush.msra.mxu0 0.0
    %4942 = vmatpush.msra.mxu0 0.0
    %4943 = vmatpush.msra.mxu0 0.0
    %4944 = vmatpush.msra.mxu0 0.0
    %4945 = vmatpush.msra.mxu0 0.0
    %4946 = vmatpush.msra.mxu0 %v4865
    %4947 = vmatpush.msra.mxu0 %v4864
    %4948 = vmatpush.msra.mxu0 %v4863
    %4949 = vmatpush.msra.mxu0 %v4862
    %4950 = vmatpush.msra.mxu0 %v4861
    %4951 = vmatpush.msra.mxu0 %v4860
    %4952 = vmatpush.msra.mxu0 %v4859
    %4953 = vmatpush.msra.mxu0 %v4858
    %4954 = vmatmul.f32.gmra.mxu0 %v4888
    %v4955 = vpop.f32.mrf.mxu0
    %v4956 = vadd.f32 %v4870, %v4955
    %4957 = vmatmul.f32.gmra.mxu0 %v4891
    %v4958 = vpop.f32.mrf.mxu0
    %v4959 = vadd.f32 %v4871, %v4958
    %4960 = vmatmul.f32.gmra.mxu0 %v4894
    %v4961 = vpop.f32.mrf.mxu0
    %v4962 = vadd.f32 %v4872, %v4961
    %4963 = vmatmul.f32.gmra.mxu0 %v4897
    %v4964 = vpop.f32.mrf.mxu0
    %v4965 = vadd.f32 %v4873, %v4964
    %4966 = vmatmul.f32.gmra.mxu0 %v4900
    %v4967 = vpop.f32.mrf.mxu0
    %v4968 = vadd.f32 %v4874, %v4967
    %4969 = vmatmul.f32.gmra.mxu0 %v4903
    %v4970 = vpop.f32.mrf.mxu0
    %v4971 = vadd.f32 %v4875, %v4970
    %4972 = vmatmul.f32.gmra.mxu0 %v4906
    %v4973 = vpop.f32.mrf.mxu0
    %v4974 = vadd.f32 %v4876, %v4973
    %4975 = vmatmul.f32.gmra.mxu0 %v4909
    %v4976 = vpop.f32.mrf.mxu0
    %v4977 = vadd.f32 %v4877, %v4976
    %4978 = vmatmul.f32.gmra.mxu0 %v4912
    %v4979 = vpop.f32.mrf.mxu0
    %v4980 = vadd.f32 %v4878, %v4979
    %4981 = vmatmul.f32.gmra.mxu0 %v4915
    %v4982 = vpop.f32.mrf.mxu0
    %v4983 = vadd.f32 %v4879, %v4982
    %4984 = vmatmul.f32.gmra.mxu0 %v4918
    %v4985 = vpop.f32.mrf.mxu0
    %v4986 = vadd.f32 %v4880, %v4985
    %4987 = vmatmul.f32.gmra.mxu0 %v4921
    %v4988 = vpop.f32.mrf.mxu0
    %v4989 = vadd.f32 %v4881, %v4988
    %4990 = vmatmul.f32.gmra.mxu0 %v4924
    %v4991 = vpop.f32.mrf.mxu0
    %v4992 = vadd.f32 %v4882, %v4991
    %4993 = vmatmul.f32.gmra.mxu0 %v4927
    %v4994 = vpop.f32.mrf.mxu0
    %v4995 = vadd.f32 %v4883, %v4994
    %4996 = vmatmul.f32.gmra.mxu0 %v4930
    %v4997 = vpop.f32.mrf.mxu0
    %v4998 = vadd.f32 %v4884, %v4997
    %4999 = vmatmul.f32.gmra.mxu0 %v4933
    %v5000 = vpop.f32.mrf.mxu0
    %v5001 = vadd.f32 %v4885, %v5000
    %5002 = vmatmul.f32.gmra.mxu0 %v4936
    %v5003 = vpop.f32.mrf.mxu0
    %v5004 = vadd.f32 %v4886, %v5003
    %5005 = vdwg.mxu0
    %5006 = vst.msk [vmem:[#allocation6] sm:$0xff] %vm156, %v4956
    %5008 = vrot.lane.b32.xlu0 %v4962, 64
    %v5009 = vpop.permute.xlu0 %5008
    %vm5011 = vcmask 1048064
    %5012 = vst.msk [vmem:[#allocation6] sm:$0xff] %vm5011, %v5009
    %5013 = vst.msk [vmem:[#allocation6 + $0x8] sm:$0xff] %vm156, %v4968
    %5015 = vrot.lane.b32.xlu0 %v4974, 64
    %v5016 = vpop.permute.xlu0 %5015
    %5018 = vst.msk [vmem:[#allocation6 + $0x8] sm:$0xff] %vm5011, %v5016
    %5019 = vst.msk [vmem:[#allocation6 + $0x10] sm:$0xff] %vm156, %v4980
    %5021 = vrot.lane.b32.xlu0 %v4986, 64
    %v5022 = vpop.permute.xlu0 %5021
    %5024 = vst.msk [vmem:[#allocation6 + $0x10] sm:$0xff] %vm5011, %v5022
    %5025 = vst.msk [vmem:[#allocation6 + $0x18] sm:$0xff] %vm156, %v4992
    %5027 = vrot.lane.b32.xlu0 %v4998, 64
    %v5028 = vpop.permute.xlu0 %5027
    %5030 = vst.msk [vmem:[#allocation6 + $0x18] sm:$0xff] %vm5011, %v5028
    %5031 = vst.msk [vmem:[#allocation6 + $0x20] sm:$0xff] %vm156, %v5004
    %5032 = vst.msk [vmem:[#allocation7] sm:$0xff] %vm156, %v4959
    %5034 = vrot.lane.b32.xlu0 %v4965, 64
    %v5035 = vpop.permute.xlu0 %5034
    %5037 = vst.msk [vmem:[#allocation7] sm:$0xff] %vm5011, %v5035
    %5038 = vst.msk [vmem:[#allocation7 + $0x8] sm:$0xff] %vm156, %v4971
    %5040 = vrot.lane.b32.xlu0 %v4977, 64
    %v5041 = vpop.permute.xlu0 %5040
    %5043 = vst.msk [vmem:[#allocation7 + $0x8] sm:$0xff] %vm5011, %v5041
    %5044 = vst.msk [vmem:[#allocation7 + $0x10] sm:$0xff] %vm156, %v4983
    %5046 = vrot.lane.b32.xlu0 %v4989, 64
    %v5047 = vpop.permute.xlu0 %5046
    %5049 = vst.msk [vmem:[#allocation7 + $0x10] sm:$0xff] %vm5011, %v5047
    %5050 = vst.msk [vmem:[#allocation7 + $0x18] sm:$0xff] %vm156, %v4995
    %5052 = vrot.lane.b32.xlu0 %v5001, 64
    %v5053 = vpop.permute.xlu0 %5052
    %5055 = vst.msk [vmem:[#allocation7 + $0x18] sm:$0xff] %vm5011, %v5053
    %v5056 = vld [vmem:[#allocation6] sm:$0xff]
    %v5057 = vld [vmem:[#allocation6 + $0x8] sm:$0xff]
    %v5058 = vld [vmem:[#allocation6 + $0x10] sm:$0xff]
    %v5059 = vld [vmem:[#allocation6 + $0x18] sm:$0xff]
    %v5060 = vld [vmem:[#allocation6 + $0x20] sm:$0xff]
    %v5061 = vld [vmem:[#allocation7] sm:$0xff]
    %v5062 = vld [vmem:[#allocation7 + $0x8] sm:$0xff]
    %v5063 = vld [vmem:[#allocation7 + $0x10] sm:$0xff]
    %v5064 = vld [vmem:[#allocation7 + $0x18] sm:$0xff]
    %5069 = vrot.lane.b32.xlu0 %v5061, 32
    %v5070 = vpop.permute.xlu0 %5069
    %5071 = vrot.lane.b32.xlu0 %v5062, 32
    %v5072 = vpop.permute.xlu0 %5071
    %5073 = vrot.lane.b32.xlu0 %v5063, 32
    %v5074 = vpop.permute.xlu0 %5073
    %5075 = vrot.lane.b32.xlu0 %v5064, 32
    %v5076 = vpop.permute.xlu0 %5075
    %v5077 = vsel %vm560, %v5070, %v5072
    %v5078 = vsel %vm560, %v5072, %v5074
    %v5079 = vsel %vm560, %v5074, %v5076
    %v5085 = vadd.f32 %v5056, %v5070
    %v5086 = vadd.f32 %v5057, %v5077
    %v5087 = vadd.f32 %v5058, %v5078
    %v5088 = vadd.f32 %v5059, %v5079
    %v5089 = vadd.f32 %v5060, %v5076
    %v5090 = vld [vmem:[%s4] sm:$0xf]
    %v5092 = vperm.slane %v5090, 0
    %v5093 = vperm.slane %v5090, 1
    %v5094 = vperm.slane %v5090, 2
    %v5095 = vperm.slane %v5090, 3
    %5096 = vrot.lane.b32.xlu0 %v5092, 32
    %v5097 = vpop.permute.xlu0 %5096
    %5098 = vrot.lane.b32.xlu0 %v5093, 32
    %v5099 = vpop.permute.xlu0 %5098
    %5100 = vrot.lane.b32.xlu0 %v5094, 32
    %v5101 = vpop.permute.xlu0 %5100
    %5102 = vrot.lane.b32.xlu0 %v5095, 32
    %v5103 = vpop.permute.xlu0 %5102
    %v5104 = vsel %vm560, %v5097, %v5099
    %v5105 = vsel %vm560, %v5099, %v5101
    %v5106 = vsel %vm560, %v5101, %v5103
    %v5112 = vmul.f32 %v5085, %v5097
    %v5113 = vmul.f32 %v5086, %v5104
    %v5114 = vmul.f32 %v5087, %v5105
    %v5115 = vmul.f32 %v5088, %v5106
    %v5116 = vmul.f32 %v5089, %v5103
    %5122 = vrot.lane.b32.xlu0 %v5112, 96
    %v5123 = vpop.permute.xlu0 %5122
    %5124 = vrot.lane.b32.xlu0 %v5113, 96
    %v5125 = vpop.permute.xlu0 %5124
    %5126 = vrot.lane.b32.xlu0 %v5114, 96
    %v5127 = vpop.permute.xlu0 %5126
    %5128 = vrot.lane.b32.xlu0 %v5115, 96
    %v5129 = vpop.permute.xlu0 %5128
    %5130 = vrot.lane.b32.xlu0 %v5116, 96
    %v5131 = vpop.permute.xlu0 %5130
    %v5132 = vsel %vm4144, %v5123, %v5125
    %v5133 = vsel %vm4144, %v5125, %v5127
    %v5134 = vsel %vm4144, %v5127, %v5129
    %v5135 = vsel %vm4144, %v5129, %v5131
    %5140 = vst [vmem:[%s21] sm:$0xff] %v5132
    %5141 = vst [vmem:[%s21 + $0x8] sm:$0xff] %v5133
    %5142 = vst [vmem:[%s21 + $0x10] sm:$0xff] %v5134
    %5143 = vst [vmem:[%s21 + $0x18] sm:$0xff] %v5135
    // Predicated region
    $region102: #{fft_model_forward.1} parent=1 // pred_check
      _
    $region103: #{fft_model_forward.1} parent=1 // pred_check_branch
      %5145 = sbr.rel (0) target = $region105
    $region104: #{fft_model_forward.1} parent=1 // pred_region
      _
    $region105: #{fft_model_forward.1} parent=1 // pred_fallthru
      _
    // Predicated region
    $region106: #{fft_model_forward.1} parent=1 // pred_check
      _
    $region107: #{fft_model_forward.1} parent=1 // pred_check_branch
      %5147 = sbr.rel (0) target = $region109
    $region108: #{fft_model_forward.1} parent=1 // pred_region
      _
    $region109: #{fft_model_forward.1} parent=1 // pred_fallthru
      _
    %5148 = vsyncpa [#allocation9], 1
    %5149 = vsyncpa [#allocation11], 1
    %5150 = vsyncpa [#allocation14], 1

</llo_original>
